<compile_context>
chip_gen: v7x
topology: tpu7x:2x2x1
jax: 0.10.0
libtpu: 0.0.40
codegen_flags: <defaults>
</compile_context>

<pallas_src>
import functools

import jax
import jax.numpy as jnp
from jax.experimental import pallas as pl
from jax.experimental.pallas import tpu as pltpu

EPS = 1e-5


def _vmem_limit_bytes():
    """Generation-aware scoped-VMEM limit (<=3/4 physical, capped at 64 MiB)."""
    try:
        cap = getattr(pltpu.get_tpu_info(), "vmem_capacity_bytes", None)
        if cap:
            return int(min(cap * 3 // 4, 64 * 1024 * 1024))
    except Exception:
        pass
    return 32 * 1024 * 1024


_VMEM_LIMIT = _vmem_limit_bytes()


# --------------------------------------------------------------------------
# Pallas kernels
# --------------------------------------------------------------------------
def _mm_kernel(a_ref, b_ref, bias_ref, o_ref):
    """(tm, K) @ (K, Np) + bias(1, Np) -> (tm, Np). bf16 MXU, f32 accumulate."""
    acc = jnp.dot(a_ref[...], b_ref[...], preferred_element_type=jnp.float32)
    o_ref[...] = (acc + bias_ref[...]).astype(o_ref.dtype)


def _mm_head_kernel(a_ref, bt_ref, bias_ref, o_ref):
    """Transposed head matmul: out(channels, M-tile) = tanh(W @ A^T + b).

    Lane-dense along M; only `o_ref.shape[0]` (8) channel rows are stored
    instead of a 128-padded slab.
    """
    acc = jnp.einsum("nk,mk->nm", bt_ref[...], a_ref[...],
                     preferred_element_type=jnp.float32)          # (128, tm)
    rows = o_ref.shape[0]
    o_ref[...] = jnp.tanh(acc[:rows, :] + bias_ref[...])


def _in_stats_kernel(x_ref, sum_ref, sq_ref, sum_sc, sq_sc, *, rows, tr):
    """Chunked per-image (sum, sum-of-squares) over the lane-dense (R, L) view."""
    h = pl.program_id(1)

    @pl.when(h == 0)
    def _():
        sum_sc[...] = jnp.zeros_like(sum_sc)
        sq_sc[...] = jnp.zeros_like(sq_sc)

    x = x_ref[...].astype(jnp.float32)                            # (tr, L)
    if rows % tr != 0:                                            # mask cdiv tail
        rid = jax.lax.broadcasted_iota(jnp.int32, x.shape, 0)
        x = jnp.where(rid < rows - h * tr, x, 0.0)
    sum_sc[...] += jnp.sum(x, axis=0, keepdims=True)
    sq_sc[...] += jnp.sum(x * x, axis=0, keepdims=True)

    @pl.when(h == pl.num_programs(1) - 1)
    def _():
        sum_ref[...] = sum_sc[...]
        sq_ref[...] = sq_sc[...]


def _in_apply_kernel(x_ref, scale_ref, shift_ref, o_ref, *, relu):
    y = x_ref[...].astype(jnp.float32) * scale_ref[...] + shift_ref[...]
    if relu:
        y = jnp.maximum(y, 0.0)
    o_ref[...] = y.astype(o_ref.dtype)


def _in_apply_res_kernel(x_ref, scale_ref, shift_ref, res_ref, o_ref):
    y = x_ref[...].astype(jnp.float32) * scale_ref[...] + shift_ref[...]
    o_ref[...] = (y + res_ref[...].astype(jnp.float32)).astype(o_ref.dtype)


# --------------------------------------------------------------------------
# Matmul wrapper
# --------------------------------------------------------------------------
def _pick_tm(M):
    for t in (512, 256, 128):
        if M >= 2 * t:
            return t
    return 128


def matmul_bias(a, b, bias_row, *, out_dtype=jnp.bfloat16):
    """a (M, K) @ b (K, Nc) + bias (1, Nc); bf16 MXU operands, f32 accum."""
    M, K = a.shape
    _, Nc = b.shape
    tm = _pick_tm(M)
    Mp = pl.cdiv(M, tm) * tm
    Np = pl.cdiv(Nc, 128) * 128
    if Mp != M:
        a = jnp.pad(a, ((0, Mp - M), (0, 0)))
    if Np != Nc:
        b = jnp.pad(b, ((0, 0), (0, Np - Nc)))
        bias_row = jnp.pad(bias_row, ((0, 0), (0, Np - Nc)))

    out = pl.pallas_call(
        _mm_kernel,
        out_shape=jax.ShapeDtypeStruct((Mp, Np), out_dtype),
        grid_spec=pltpu.PrefetchScalarGridSpec(
            num_scalar_prefetch=0,
            grid=(Mp // tm,),
            in_specs=[
                pl.BlockSpec((tm, K), lambda i: (i, 0)),
                pl.BlockSpec((K, Np), lambda i: (0, 0)),
                pl.BlockSpec((1, Np), lambda i: (0, 0)),
            ],
            out_specs=pl.BlockSpec((tm, Np), lambda i: (i, 0)),
        ),
        compiler_params=pltpu.CompilerParams(
            dimension_semantics=("parallel",),
            vmem_limit_bytes=_VMEM_LIMIT,
        ),
    )(a.astype(jnp.bfloat16), b.astype(jnp.bfloat16), bias_row.astype(jnp.float32))
    if Mp != M or Np != Nc:
        out = out[:M, :Nc]
    return out


# --------------------------------------------------------------------------
# InstanceNorm (lane-dense view, folded affine, fused ReLU / residual)
# --------------------------------------------------------------------------
def _choose_view(S, D, C):
    """(N, S, D) -> lane-dense (N, R, L) view; channel identity = lane mod C."""
    if (S * D) % 128 == 0 and 128 % C == 0:
        return (S * D) // 128, 128
    return S, D


def _pick_rows_chunk(R, max_rows=2048):
    if R <= max_rows:
        return R, 1
    return max_rows, pl.cdiv(R, max_rows)


def instance_norm_flat(x, C, gamma, beta, *, relu, residual_flat=None,
                       out_dtype=jnp.bfloat16):
    """x: (N, S, D) with D = G*C (channel = position mod C); per-(n, c) norm."""
    N, S, D = x.shape
    count = S * D // C                      # elements per (n, c)
    R, L = _choose_view(S, D, C)
    x3 = x.reshape(N, R, L)
    res3 = None if residual_flat is None else residual_flat.reshape(N, R, L)
    tr, n_chunks = _pick_rows_chunk(R)

    x_spec = pl.BlockSpec((None, tr, L), lambda n, h: (n, h, 0))
    stat_spec = pl.BlockSpec((None, 1, L), lambda n, h: (n, 0, 0))

    # Pass 1: chunked (masked-tail) per-image lane sums / sums-of-squares.
    sums, sqs = pl.pallas_call(
        functools.partial(_in_stats_kernel, rows=R, tr=tr),
        out_shape=(jax.ShapeDtypeStruct((N, 1, L), jnp.float32),
                   jax.ShapeDtypeStruct((N, 1, L), jnp.float32)),
        grid_spec=pltpu.PrefetchScalarGridSpec(
            num_scalar_prefetch=0,
            grid=(N, n_chunks),
            in_specs=[x_spec],
            out_specs=[stat_spec, stat_spec],
            scratch_shapes=[pltpu.VMEM((1, L), jnp.float32),
                            pltpu.VMEM((1, L), jnp.float32)],
        ),
        compiler_params=pltpu.CompilerParams(
            dimension_semantics=("parallel", "arbitrary"),
            vmem_limit_bytes=_VMEM_LIMIT,
        ),
    )(x3)

    # Tiny per-channel finalize (plain JAX glue): fold lanes -> channels,
    # biased variance, fold gamma/beta into scale/shift, tile back to lanes.
    rep = L // C
    s_c = sums.reshape(N, rep, C).sum(axis=1)
    q_c = sqs.reshape(N, rep, C).sum(axis=1)
    mean = s_c / count
    var = jnp.maximum(q_c / count - mean * mean, 0.0)
    scale_c = jax.lax.rsqrt(var + EPS) * gamma.reshape(1, C).astype(jnp.float32)
    shift_c = beta.reshape(1, C).astype(jnp.float32) - mean * scale_c
    scale = jnp.tile(scale_c, (1, rep)).reshape(N, 1, L)
    shift = jnp.tile(shift_c, (1, rep)).reshape(N, 1, L)

    # Pass 2: y = x*scale + shift with ReLU or the residual add fused in.
    if res3 is None:
        kernel = functools.partial(_in_apply_kernel, relu=relu)
        in_specs = [x_spec, stat_spec, stat_spec]
        args = (x3, scale, shift)
    else:
        kernel = _in_apply_res_kernel
        in_specs = [x_spec, stat_spec, stat_spec, x_spec]
        args = (x3, scale, shift, res3)

    y = pl.pallas_call(
        kernel,
        out_shape=jax.ShapeDtypeStruct((N, R, L), out_dtype),
        grid_spec=pltpu.PrefetchScalarGridSpec(
            num_scalar_prefetch=0,
            grid=(N, n_chunks),
            in_specs=in_specs,
            out_specs=x_spec,
        ),
        compiler_params=pltpu.CompilerParams(
            dimension_semantics=("parallel", "parallel"),
            vmem_limit_bytes=_VMEM_LIMIT,
        ),
    )(*args)
    return y.reshape(N, S, D)


def instance_norm(x, gamma, beta, *, relu, residual=None, out_dtype=jnp.bfloat16):
    N, H, W, C = x.shape
    res = None if residual is None else residual.reshape(N, H * W, C)
    y = instance_norm_flat(x.reshape(N, H * W, C), C, gamma, beta, relu=relu,
                           residual_flat=res, out_dtype=out_dtype)
    return y.reshape(N, H, W, C)


# --------------------------------------------------------------------------
# Conv wrappers (im2col glue in plain JAX, hot path in the Pallas matmul)
# --------------------------------------------------------------------------
def _extract_patches(x, kh, kw, stride):
    """x: (N, Hp, Wp, C) already padded -> (N, Ho, Wo, C*kh*kw) in x.dtype.

    Feature ordering (c, ki, kj) matches PyTorch weight.reshape(O, C*kh*kw).
    """
    N, Hp, Wp, C = x.shape
    Ho = (Hp - kh) // stride + 1
    Wo = (Wp - kw) // stride + 1
    cols = []
    for i in range(kh):
        for j in range(kw):
            cols.append(
                x[:, i: i + stride * Ho: stride, j: j + stride * Wo: stride, :])
    p = jnp.stack(cols, axis=-1)                      # (N, Ho, Wo, C, kh*kw)
    return p.reshape(N, Ho, Wo, C * kh * kw)


def conv2d(x, w, bias=None, *, stride=1, padding=0, pad_mode="constant",
           out_dtype=jnp.bfloat16):
    """x: NHWC bf16, w: (O, C, kh, kw) PyTorch layout. padding int or ((t,b),(l,r))."""
    O, C, kh, kw = w.shape
    if isinstance(padding, int):
        padding = ((padding, padding), (padding, padding))
    ph, pw = padding
    if max(ph) > 0 or max(pw) > 0:
        x = jnp.pad(x, ((0, 0), ph, pw, (0, 0)), mode=pad_mode)
    patches = _extract_patches(x, kh, kw, stride)     # stays bf16
    N, Ho, Wo, K = patches.shape
    a = patches.reshape(N * Ho * Wo, K)
    b = w.reshape(O, K).T
    bias_row = (bias if bias is not None
                else jnp.zeros((O,), jnp.float32)).reshape(1, O)
    y = matmul_bias(a, b, bias_row, out_dtype=out_dtype)
    return y.reshape(N, Ho, Wo, O)


def conv_transpose2d_grouped(x, w_t):
    """ConvTranspose2d(k=4, stride=2, padding=1, bias=False), merged form.

    x: NHWC bf16, w_t: (Cin, Cout, 4, 4) (PyTorch layout).  Returns the
    GROUPED output (N, H*W, 4*Cout) bf16 where group g = dy*2+dx holds
    out[2y+dy, 2x+dx]; the sub-pixel interleave is done by the caller after
    InstanceNorm.  Single matmul: shared 3x3 im2col over a (1,1)-padded input
    against a (9*Cin, 4*Cout) zero-embedded weight.
    """
    Cin, Cout, kh, kw = w_t.shape
    assert kh == 4 and kw == 4
    N, H, W, _ = x.shape
    # flipped, in/out-swapped kernel of the equivalent forward conv
    wf = jnp.transpose(jnp.flip(w_t, axis=(2, 3)), (1, 0, 2, 3))   # (O, I, 4, 4)
    w9 = jnp.zeros((2, 2, Cout, Cin, 3, 3), jnp.float32)
    for dy in range(2):
        for dx in range(2):
            for a in range(2):
                for b in range(2):
                    w9 = w9.at[dy, dx, :, :, dy + a, dx + b].set(
                        wf[:, :, dy + 2 * a, dx + 2 * b])
    b_mat = (w9.reshape(4, Cout, Cin, 3, 3)
               .transpose(2, 3, 4, 0, 1)
               .reshape(Cin * 9, 4 * Cout))
    x_pad = jnp.pad(x, ((0, 0), (1, 1), (1, 1), (0, 0)))
    patches = _extract_patches(x_pad, 3, 3, 1)        # (N, H, W, 9*Cin) bf16
    a_mat = patches.reshape(N * H * W, Cin * 9)
    bias_row = jnp.zeros((1, 4 * Cout), jnp.float32)
    y = matmul_bias(a_mat, b_mat, bias_row, out_dtype=jnp.bfloat16)
    return y.reshape(N, H * W, 4 * Cout), Cout, H, W


def conv2d_head_nchw(x, w, bias, *, padding=3, pad_mode="reflect"):
    """7x7 head conv + bias + tanh, lane-dense (channels, M) output -> NCHW f32."""
    O, C, kh, kw = w.shape
    x = jnp.pad(x, ((0, 0), (padding, padding), (padding, padding), (0, 0)),
                mode=pad_mode)
    patches = _extract_patches(x, kh, kw, 1)
    N, Ho, Wo, K = patches.shape
    M = N * Ho * Wo
    a = patches.reshape(M, K).astype(jnp.bfloat16)
    tm = _pick_tm(M)
    Mp = pl.cdiv(M, tm) * tm
    if Mp != M:
        a = jnp.pad(a, ((0, Mp - M), (0, 0)))
    Or = max(8, -(-O // 8) * 8)                       # sublane-padded output rows
    bt = jnp.zeros((128, K), jnp.float32).at[:O].set(w.reshape(O, K))
    bias_col = jnp.zeros((Or, 1), jnp.float32).at[:O, 0].set(bias)

    out = pl.pallas_call(
        _mm_head_kernel,
        out_shape=jax.ShapeDtypeStruct((Or, Mp), jnp.float32),
        grid_spec=pltpu.PrefetchScalarGridSpec(
            num_scalar_prefetch=0,
            grid=(Mp // tm,),
            in_specs=[
                pl.BlockSpec((tm, K), lambda i: (i, 0)),
                pl.BlockSpec((128, K), lambda i: (0, 0)),
                pl.BlockSpec((Or, 1), lambda i: (0, 0)),
            ],
            out_specs=pl.BlockSpec((Or, tm), lambda i: (0, i)),
        ),
        compiler_params=pltpu.CompilerParams(
            dimension_semantics=("parallel",),
            vmem_limit_bytes=_VMEM_LIMIT,
        ),
    )(a, bt.astype(jnp.bfloat16), bias_col)
    out = out[:O, :M].reshape(O, N, Ho, Wo)
    return jnp.transpose(out, (1, 0, 2, 3))           # -> NCHW f32


# --------------------------------------------------------------------------
# Generator parameters + forward
# --------------------------------------------------------------------------
def init_params(key, conv_dim=64, repeat_num=2):
    keys = iter(jax.random.split(key, 64))

    def conv_w(o, i, k):
        fan_in = i * k * k
        return jax.random.normal(next(keys), (o, i, k, k), jnp.float32) * (
            2.0 / fan_in) ** 0.5

    p = {}
    # stem: ReflectionPad2d(3) + Conv2d(3, conv_dim, 7, bias=True) + IN + ReLU
    p["c1_w"] = conv_w(conv_dim, 3, 7)
    p["c1_b"] = jax.random.normal(next(keys), (conv_dim,), jnp.float32) * 0.01
    p["c1_g"] = jnp.ones((conv_dim,), jnp.float32)
    p["c1_be"] = jnp.zeros((conv_dim,), jnp.float32)

    cur = conv_dim
    for i in range(2):  # downsampling
        p[f"d{i}_w"] = conv_w(cur * 2, cur, 4)
        p[f"d{i}_g"] = jnp.ones((cur * 2,), jnp.float32)
        p[f"d{i}_b"] = jnp.zeros((cur * 2,), jnp.float32)
        cur *= 2

    for i in range(repeat_num):  # residual blocks
        p[f"r{i}_w1"] = conv_w(cur, cur, 3)
        p[f"r{i}_g1"] = jnp.ones((cur,), jnp.float32)
        p[f"r{i}_b1"] = jnp.zeros((cur,), jnp.float32)
        p[f"r{i}_w2"] = conv_w(cur, cur, 3)
        p[f"r{i}_g2"] = jnp.ones((cur,), jnp.float32)
        p[f"r{i}_b2"] = jnp.zeros((cur,), jnp.float32)

    for i in range(2):  # upsampling (ConvTranspose2d weight is (in, out, kh, kw))
        p[f"u{i}_w"] = jax.random.normal(
            next(keys), (cur, cur // 2, 4, 4), jnp.float32) * (2.0 / (cur * 16)) ** 0.5
        p[f"u{i}_g"] = jnp.ones((cur // 2,), jnp.float32)
        p[f"u{i}_b"] = jnp.zeros((cur // 2,), jnp.float32)
        cur //= 2

    # head: ReflectionPad2d(3) + Conv2d(cur, 3, 7, bias=True) + Tanh
    p["co_w"] = conv_w(3, cur, 7)
    p["co_b"] = jnp.zeros((3,), jnp.float32)
    return p


def generator_forward(params, x_nchw):
    x = jnp.transpose(x_nchw, (0, 2, 3, 1)).astype(jnp.bfloat16)   # NHWC bf16

    # stem
    x = conv2d(x, params["c1_w"], params["c1_b"], stride=1, padding=3,
               pad_mode="reflect")
    x = instance_norm(x, params["c1_g"], params["c1_be"], relu=True)

    # downsampling
    for i in range(2):
        x = conv2d(x, params[f"d{i}_w"], None, stride=2, padding=1)
        x = instance_norm(x, params[f"d{i}_g"], params[f"d{i}_b"], relu=True)

    # residual blocks (residual add fused into the second IN kernel)
    num_res = sum(1 for k in params if k.endswith("_w1"))
    for i in range(num_res):
        h = conv2d(x, params[f"r{i}_w1"], None, stride=1, padding=1,
                   pad_mode="reflect")
        h = instance_norm(h, params[f"r{i}_g1"], params[f"r{i}_b1"], relu=True)
        h = conv2d(h, params[f"r{i}_w2"], None, stride=1, padding=1,
                   pad_mode="reflect")
        x = instance_norm(h, params[f"r{i}_g2"], params[f"r{i}_b2"],
                          relu=False, residual=x)

    # upsampling: one merged matmul per layer; IN runs on the grouped layout;
    # sub-pixel interleave is a single bf16 reshape/transpose afterwards.
    for i in range(2):
        xg, cout, hc, wc = conv_transpose2d_grouped(x, params[f"u{i}_w"])
        xg = instance_norm_flat(xg, cout, params[f"u{i}_g"], params[f"u{i}_b"],
                                relu=True)
        n = xg.shape[0]
        x = (xg.reshape(n, hc, wc, 2, 2, cout)
               .transpose(0, 1, 3, 2, 4, 5)
               .reshape(n, 2 * hc, 2 * wc, cout))

    # head: 7x7 conv + tanh, lane-dense transposed output straight to NCHW f32
    return conv2d_head_nchw(x, params["co_w"], params["co_b"])


# --------------------------------------------------------------------------
if __name__ == "__main__":
    key = jax.random.PRNGKey(0)
    pkey, xkey = jax.random.split(key)

    params = init_params(pkey, conv_dim=32, repeat_num=2)
    x = jax.random.normal(xkey, (2, 3, 16, 16), jnp.float32)        # NCHW like PyTorch

    fwd = jax.jit(generator_forward)
    y = jax.block_until_ready(fwd(params, x))

    assert y.shape == (2, 3, 16, 16), y.shape
    assert bool(jnp.all(jnp.isfinite(y)))
    assert bool(jnp.all(jnp.abs(y) <= 1.0))                         # tanh output range
    print("KERNEL_OK")
</pallas_src>

<mosaic_0001>
module attributes {stable_mosaic.version = 11 : i64} {
  func.func @_mm_kernel(%arg0: i32, %arg1: memref<256x147xbf16, #tpu.memory_space<vmem>>, %arg2: memref<147x128xbf16, #tpu.memory_space<vmem>>, %arg3: memref<1x128xf32, #tpu.memory_space<vmem>>, %arg4: memref<256x128xbf16, #tpu.memory_space<vmem>>) attributes {dimension_semantics = [#tpu.dimension_semantics<parallel>], iteration_bounds = array<i64: 2>, scalar_prefetch = 0 : i64, scratch_operands = 0 : i64, tpu.core_type = #tpu.core_type<tc>, window_params = [{transform_indices = @transform_0, window_bounds = array<i64: 256, 147>}, {pipeline_mode = #tpu.pipeline_mode<synchronous>, transform_indices = @transform_1, window_bounds = array<i64: 147, 128>}, {pipeline_mode = #tpu.pipeline_mode<synchronous>, transform_indices = @transform_2, window_bounds = array<i64: 1, 128>}, {transform_indices = @transform_3, window_bounds = array<i64: 256, 128>}]} {
    %c0 = arith.constant 0 : index
    %c0_0 = arith.constant 0 : index
    %0 = vector.load %arg1[%c0, %c0_0] : memref<256x147xbf16, #tpu.memory_space<vmem>>, vector<256x147xbf16>
    %c0_1 = arith.constant 0 : index
    %c0_2 = arith.constant 0 : index
    %1 = vector.load %arg2[%c0_1, %c0_2] : memref<147x128xbf16, #tpu.memory_space<vmem>>, vector<147x128xbf16>
    %cst = arith.constant dense<0.000000e+00> : vector<256x128xf32>
    %2 = tpu.matmul %0, %1, %cst {dimension_numbers = #tpu.dot_dimension_numbers<[1], [0], [0], [1], [0, 0, 1, 1], [], []>} : vector<256x147xbf16>, vector<147x128xbf16>, vector<256x128xf32> -> vector<256x128xf32>
    %c0_3 = arith.constant 0 : index
    %c0_4 = arith.constant 0 : index
    %3 = vector.load %arg3[%c0_3, %c0_4] : memref<1x128xf32, #tpu.memory_space<vmem>>, vector<1x128xf32>
    %4 = vector.broadcast %3 : vector<1x128xf32> to vector<256x128xf32>
    %5 = arith.addf %2, %4 : vector<256x128xf32>
    %6 = arith.truncf %5 : vector<256x128xf32> to vector<256x128xbf16>
    %c0_5 = arith.constant 0 : index
    %c0_6 = arith.constant 0 : index
    %7 = vector.load %arg4[%c0_5, %c0_6] : memref<256x128xbf16, #tpu.memory_space<vmem>>, vector<256x128xbf16>
    tpu.vector_store %arg4[%c0_5, %c0_6], %6 {strides = array<i32>} : memref<256x128xbf16, #tpu.memory_space<vmem>>, vector<256x128xbf16>,
    return
  }
  func.func @transform_0(%arg0: i32) -> (i32, i32) {
    %c0_i32 = arith.constant 0 : i32
    %c0_i32_0 = arith.constant 0 : i32
    return %arg0, %c0_i32 : i32, i32
  }
  func.func @transform_1(%arg0: i32) -> (i32, i32) {
    %c0_i32 = arith.constant 0 : i32
    %c0_i32_0 = arith.constant 0 : i32
    %c0_i32_1 = arith.constant 0 : i32
    return %c0_i32, %c0_i32_0 : i32, i32
  }
  func.func @transform_2(%arg0: i32) -> (i32, i32) {
    %c0_i32 = arith.constant 0 : i32
    %c0_i32_0 = arith.constant 0 : i32
    %c0_i32_1 = arith.constant 0 : i32
    return %c0_i32, %c0_i32_0 : i32, i32
  }
  func.func @transform_3(%arg0: i32) -> (i32, i32) {
    %c0_i32 = arith.constant 0 : i32
    %c0_i32_0 = arith.constant 0 : i32
    return %arg0, %c0_i32 : i32, i32
  }
}

module attributes {stable_mosaic.version = 11 : i64} {
  func.func @_in_stats_kernel(%arg0: i32, %arg1: i32, %arg2: memref<1x64x128xbf16, #tpu.memory_space<vmem>>, %arg3: memref<1x1x128xf32, #tpu.memory_space<vmem>>, %arg4: memref<1x1x128xf32, #tpu.memory_space<vmem>>, %arg5: memref<1x128xf32, #tpu.memory_space<vmem>>, %arg6: memref<1x128xf32, #tpu.memory_space<vmem>>) attributes {dimension_semantics = [#tpu.dimension_semantics<parallel>, #tpu.dimension_semantics<arbitrary>], iteration_bounds = array<i64: 2, 1>, scalar_prefetch = 0 : i64, scratch_operands = 2 : i64, tpu.core_type = #tpu.core_type<tc>, window_params = [{transform_indices = @transform_0, window_bounds = array<i64: 1, 64, 128>}, {transform_indices = @transform_1, window_bounds = array<i64: 1, 1, 128>}, {transform_indices = @transform_2, window_bounds = array<i64: 1, 1, 128>}]} {
    %c0_i32 = arith.constant 0 : i32
    %0 = arith.cmpi eq, %arg1, %c0_i32 : i32
    %1 = arith.extui %0 : i1 to i32
    %c0_i32_0 = arith.constant 0 : i32
    %2 = arith.cmpi ne, %1, %c0_i32_0 : i32
    scf.if %2 {
      %cst_14 = arith.constant 0.000000e+00 : f32
      %20 = vector.broadcast %cst_14 : f32 to vector<1x128xf32>
      %c0_15 = arith.constant 0 : index
      %c0_16 = arith.constant 0 : index
      %21 = vector.load %arg5[%c0_15, %c0_16] : memref<1x128xf32, #tpu.memory_space<vmem>>, vector<1x128xf32>
      tpu.vector_store %arg5[%c0_15, %c0_16], %20 {strides = array<i32>} : memref<1x128xf32, #tpu.memory_space<vmem>>, vector<1x128xf32>,
      %cst_17 = arith.constant 0.000000e+00 : f32
      %22 = vector.broadcast %cst_17 : f32 to vector<1x128xf32>
      %c0_18 = arith.constant 0 : index
      %c0_19 = arith.constant 0 : index
      %23 = vector.load %arg6[%c0_18, %c0_19] : memref<1x128xf32, #tpu.memory_space<vmem>>, vector<1x128xf32>
      tpu.vector_store %arg6[%c0_18, %c0_19], %22 {strides = array<i32>} : memref<1x128xf32, #tpu.memory_space<vmem>>, vector<1x128xf32>,
    } else {
    }
    %c0 = arith.constant 0 : index
    %c0_1 = arith.constant 0 : index
    %c0_2 = arith.constant 0 : index
    %3 = vector.load %arg2[%c0, %c0_1, %c0_2] : memref<1x64x128xbf16, #tpu.memory_space<vmem>>, vector<1x64x128xbf16>
    %4 = vector.shape_cast %3 : vector<1x64x128xbf16> to vector<64x128xbf16>
    %5 = arith.extf %4 : vector<64x128xbf16> to vector<64x128xf32>
    %c0_3 = arith.constant 0 : index
    %c0_4 = arith.constant 0 : index
    %6 = vector.load %arg5[%c0_3, %c0_4] : memref<1x128xf32, #tpu.memory_space<vmem>>, vector<1x128xf32>
    %cst = arith.constant dense<0.000000e+00> : vector<128xf32>
    %7 = vector.multi_reduction <add>, %5, %cst [0] : vector<64x128xf32> to vector<128xf32>
    %8 = vector.shape_cast %7 : vector<128xf32> to vector<1x128xf32>
    %9 = arith.addf %6, %8 : vector<1x128xf32>
    %c0_5 = arith.constant 0 : index
    %c0_6 = arith.constant 0 : index
    %10 = vector.load %arg5[%c0_5, %c0_6] : memref<1x128xf32, #tpu.memory_space<vmem>>, vector<1x128xf32>
    tpu.vector_store %arg5[%c0_5, %c0_6], %9 {strides = array<i32>} : memref<1x128xf32, #tpu.memory_space<vmem>>, vector<1x128xf32>,
    %c0_7 = arith.constant 0 : index
    %c0_8 = arith.constant 0 : index
    %11 = vector.load %arg6[%c0_7, %c0_8] : memref<1x128xf32, #tpu.memory_space<vmem>>, vector<1x128xf32>
    %12 = arith.mulf %5, %5 : vector<64x128xf32>
    %cst_9 = arith.constant dense<0.000000e+00> : vector<128xf32>
    %13 = vector.multi_reduction <add>, %12, %cst_9 [0] : vector<64x128xf32> to vector<128xf32>
    %14 = vector.shape_cast %13 : vector<128xf32> to vector<1x128xf32>
    %15 = arith.addf %11, %14 : vector<1x128xf32>
    %c0_10 = arith.constant 0 : index
    %c0_11 = arith.constant 0 : index
    %16 = vector.load %arg6[%c0_10, %c0_11] : memref<1x128xf32, #tpu.memory_space<vmem>>, vector<1x128xf32>
    tpu.vector_store %arg6[%c0_10, %c0_11], %15 {strides = array<i32>} : memref<1x128xf32, #tpu.memory_space<vmem>>, vector<1x128xf32>,
    %c0_i32_12 = arith.constant 0 : i32
    %17 = arith.cmpi eq, %arg1, %c0_i32_12 : i32
    %18 = arith.extui %17 : i1 to i32
    %c0_i32_13 = arith.constant 0 : i32
    %19 = arith.cmpi ne, %18, %c0_i32_13 : i32
    scf.if %19 {
      %c0_14 = arith.constant 0 : index
      %c0_15 = arith.constant 0 : index
      %20 = vector.load %arg5[%c0_14, %c0_15] : memref<1x128xf32, #tpu.memory_space<vmem>>, vector<1x128xf32>
      %c0_16 = arith.constant 0 : index
      %c0_17 = arith.constant 0 : index
      %c0_18 = arith.constant 0 : index
      %21 = vector.load %arg3[%c0_16, %c0_17, %c0_18] : memref<1x1x128xf32, #tpu.memory_space<vmem>>, vector<1x1x128xf32>
      %22 = vector.shape_cast %21 : vector<1x1x128xf32> to vector<1x128xf32>
      %23 = vector.shape_cast %20 : vector<1x128xf32> to vector<1x1x128xf32>
      tpu.vector_store %arg3[%c0_16, %c0_17, %c0_18], %23 {strides = array<i32>} : memref<1x1x128xf32, #tpu.memory_space<vmem>>, vector<1x1x128xf32>,
      %c0_19 = arith.constant 0 : index
      %c0_20 = arith.constant 0 : index
      %24 = vector.load %arg6[%c0_19, %c0_20] : memref<1x128xf32, #tpu.memory_space<vmem>>, vector<1x128xf32>
      %c0_21 = arith.constant 0 : index
      %c0_22 = arith.constant 0 : index
      %c0_23 = arith.constant 0 : index
      %25 = vector.load %arg4[%c0_21, %c0_22, %c0_23] : memref<1x1x128xf32, #tpu.memory_space<vmem>>, vector<1x1x128xf32>
      %26 = vector.shape_cast %25 : vector<1x1x128xf32> to vector<1x128xf32>
      %27 = vector.shape_cast %24 : vector<1x128xf32> to vector<1x1x128xf32>
      tpu.vector_store %arg4[%c0_21, %c0_22, %c0_23], %27 {strides = array<i32>} : memref<1x1x128xf32, #tpu.memory_space<vmem>>, vector<1x1x128xf32>,
    } else {
    }
    return
  }
  func.func @transform_0(%arg0: i32, %arg1: i32) -> (i32, i32, i32) {
    %c0_i32 = arith.constant 0 : i32
    %c0_i32_0 = arith.constant 0 : i32
    return %arg0, %arg1, %c0_i32 : i32, i32, i32
  }
  func.func @transform_1(%arg0: i32, %arg1: i32) -> (i32, i32, i32) {
    %c0_i32 = arith.constant 0 : i32
    %c0_i32_0 = arith.constant 0 : i32
    %c0_i32_1 = arith.constant 0 : i32
    return %arg0, %c0_i32, %c0_i32_0 : i32, i32, i32
  }
  func.func @transform_2(%arg0: i32, %arg1: i32) -> (i32, i32, i32) {
    %c0_i32 = arith.constant 0 : i32
    %c0_i32_0 = arith.constant 0 : i32
    %c0_i32_1 = arith.constant 0 : i32
    return %arg0, %c0_i32, %c0_i32_0 : i32, i32, i32
  }
}

module attributes {stable_mosaic.version = 11 : i64} {
  func.func @_in_apply_kernel(%arg0: i32, %arg1: i32, %arg2: memref<1x64x128xbf16, #tpu.memory_space<vmem>>, %arg3: memref<1x1x128xf32, #tpu.memory_space<vmem>>, %arg4: memref<1x1x128xf32, #tpu.memory_space<vmem>>, %arg5: memref<1x64x128xbf16, #tpu.memory_space<vmem>>) attributes {dimension_semantics = [#tpu.dimension_semantics<parallel>, #tpu.dimension_semantics<parallel>], iteration_bounds = array<i64: 2, 1>, scalar_prefetch = 0 : i64, scratch_operands = 0 : i64, tpu.core_type = #tpu.core_type<tc>, window_params = [{transform_indices = @transform_0, window_bounds = array<i64: 1, 64, 128>}, {transform_indices = @transform_1, window_bounds = array<i64: 1, 1, 128>}, {transform_indices = @transform_2, window_bounds = array<i64: 1, 1, 128>}, {transform_indices = @transform_3, window_bounds = array<i64: 1, 64, 128>}]} {
    %c0 = arith.constant 0 : index
    %c0_0 = arith.constant 0 : index
    %c0_1 = arith.constant 0 : index
    %0 = vector.load %arg2[%c0, %c0_0, %c0_1] : memref<1x64x128xbf16, #tpu.memory_space<vmem>>, vector<1x64x128xbf16>
    %1 = vector.shape_cast %0 : vector<1x64x128xbf16> to vector<64x128xbf16>
    %2 = arith.extf %1 : vector<64x128xbf16> to vector<64x128xf32>
    %c0_2 = arith.constant 0 : index
    %c0_3 = arith.constant 0 : index
    %c0_4 = arith.constant 0 : index
    %3 = vector.load %arg3[%c0_2, %c0_3, %c0_4] : memref<1x1x128xf32, #tpu.memory_space<vmem>>, vector<1x1x128xf32>
    %4 = vector.shape_cast %3 : vector<1x1x128xf32> to vector<1x128xf32>
    %5 = vector.broadcast %4 : vector<1x128xf32> to vector<64x128xf32>
    %6 = arith.mulf %2, %5 : vector<64x128xf32>
    %c0_5 = arith.constant 0 : index
    %c0_6 = arith.constant 0 : index
    %c0_7 = arith.constant 0 : index
    %7 = vector.load %arg4[%c0_5, %c0_6, %c0_7] : memref<1x1x128xf32, #tpu.memory_space<vmem>>, vector<1x1x128xf32>
    %8 = vector.shape_cast %7 : vector<1x1x128xf32> to vector<1x128xf32>
    %9 = vector.broadcast %8 : vector<1x128xf32> to vector<64x128xf32>
    %10 = arith.addf %6, %9 : vector<64x128xf32>
    %cst = arith.constant 0.000000e+00 : f32
    %11 = vector.broadcast %cst : f32 to vector<64x128xf32>
    %12 = arith.maximumf %10, %11 : vector<64x128xf32>
    %13 = arith.truncf %12 : vector<64x128xf32> to vector<64x128xbf16>
    %c0_8 = arith.constant 0 : index
    %c0_9 = arith.constant 0 : index
    %c0_10 = arith.constant 0 : index
    %14 = vector.load %arg5[%c0_8, %c0_9, %c0_10] : memref<1x64x128xbf16, #tpu.memory_space<vmem>>, vector<1x64x128xbf16>
    %15 = vector.shape_cast %14 : vector<1x64x128xbf16> to vector<64x128xbf16>
    %16 = vector.shape_cast %13 : vector<64x128xbf16> to vector<1x64x128xbf16>
    tpu.vector_store %arg5[%c0_8, %c0_9, %c0_10], %16 {strides = array<i32>} : memref<1x64x128xbf16, #tpu.memory_space<vmem>>, vector<1x64x128xbf16>,
    return
  }
  func.func @transform_0(%arg0: i32, %arg1: i32) -> (i32, i32, i32) {
    %c0_i32 = arith.constant 0 : i32
    %c0_i32_0 = arith.constant 0 : i32
    return %arg0, %arg1, %c0_i32 : i32, i32, i32
  }
  func.func @transform_1(%arg0: i32, %arg1: i32) -> (i32, i32, i32) {
    %c0_i32 = arith.constant 0 : i32
    %c0_i32_0 = arith.constant 0 : i32
    %c0_i32_1 = arith.constant 0 : i32
    return %arg0, %c0_i32, %c0_i32_0 : i32, i32, i32
  }
  func.func @transform_2(%arg0: i32, %arg1: i32) -> (i32, i32, i32) {
    %c0_i32 = arith.constant 0 : i32
    %c0_i32_0 = arith.constant 0 : i32
    %c0_i32_1 = arith.constant 0 : i32
    return %arg0, %c0_i32, %c0_i32_0 : i32, i32, i32
  }
  func.func @transform_3(%arg0: i32, %arg1: i32) -> (i32, i32, i32) {
    %c0_i32 = arith.constant 0 : i32
    %c0_i32_0 = arith.constant 0 : i32
    return %arg0, %arg1, %c0_i32 : i32, i32, i32
  }
}

module attributes {stable_mosaic.version = 11 : i64} {
  func.func @_mm_kernel(%arg0: i32, %arg1: memref<128x512xbf16, #tpu.memory_space<vmem>>, %arg2: memref<512x128xbf16, #tpu.memory_space<vmem>>, %arg3: memref<1x128xf32, #tpu.memory_space<vmem>>, %arg4: memref<128x128xbf16, #tpu.memory_space<vmem>>) attributes {dimension_semantics = [#tpu.dimension_semantics<parallel>], iteration_bounds = array<i64: 1>, scalar_prefetch = 0 : i64, scratch_operands = 0 : i64, tpu.core_type = #tpu.core_type<tc>, window_params = [{transform_indices = @transform_0, window_bounds = array<i64: 128, 512>}, {pipeline_mode = #tpu.pipeline_mode<synchronous>, transform_indices = @transform_1, window_bounds = array<i64: 512, 128>}, {pipeline_mode = #tpu.pipeline_mode<synchronous>, transform_indices = @transform_2, window_bounds = array<i64: 1, 128>}, {transform_indices = @transform_3, window_bounds = array<i64: 128, 128>}]} {
    %c0 = arith.constant 0 : index
    %c0_0 = arith.constant 0 : index
    %0 = vector.load %arg1[%c0, %c0_0] : memref<128x512xbf16, #tpu.memory_space<vmem>>, vector<128x512xbf16>
    %c0_1 = arith.constant 0 : index
    %c0_2 = arith.constant 0 : index
    %1 = vector.load %arg2[%c0_1, %c0_2] : memref<512x128xbf16, #tpu.memory_space<vmem>>, vector<512x128xbf16>
    %cst = arith.constant dense<0.000000e+00> : vector<128x128xf32>
    %2 = tpu.matmul %0, %1, %cst {dimension_numbers = #tpu.dot_dimension_numbers<[1], [0], [0], [1], [0, 0, 1, 1], [], []>} : vector<128x512xbf16>, vector<512x128xbf16>, vector<128x128xf32> -> vector<128x128xf32>
    %c0_3 = arith.constant 0 : index
    %c0_4 = arith.constant 0 : index
    %3 = vector.load %arg3[%c0_3, %c0_4] : memref<1x128xf32, #tpu.memory_space<vmem>>, vector<1x128xf32>
    %4 = vector.broadcast %3 : vector<1x128xf32> to vector<128x128xf32>
    %5 = arith.addf %2, %4 : vector<128x128xf32>
    %6 = arith.truncf %5 : vector<128x128xf32> to vector<128x128xbf16>
    %c0_5 = arith.constant 0 : index
    %c0_6 = arith.constant 0 : index
    %7 = vector.load %arg4[%c0_5, %c0_6] : memref<128x128xbf16, #tpu.memory_space<vmem>>, vector<128x128xbf16>
    tpu.vector_store %arg4[%c0_5, %c0_6], %6 {strides = array<i32>} : memref<128x128xbf16, #tpu.memory_space<vmem>>, vector<128x128xbf16>,
    return
  }
  func.func @transform_0(%arg0: i32) -> (i32, i32) {
    %c0_i32 = arith.constant 0 : i32
    %c0_i32_0 = arith.constant 0 : i32
    return %arg0, %c0_i32 : i32, i32
  }
  func.func @transform_1(%arg0: i32) -> (i32, i32) {
    %c0_i32 = arith.constant 0 : i32
    %c0_i32_0 = arith.constant 0 : i32
    %c0_i32_1 = arith.constant 0 : i32
    return %c0_i32, %c0_i32_0 : i32, i32
  }
  func.func @transform_2(%arg0: i32) -> (i32, i32) {
    %c0_i32 = arith.constant 0 : i32
    %c0_i32_0 = arith.constant 0 : i32
    %c0_i32_1 = arith.constant 0 : i32
    return %c0_i32, %c0_i32_0 : i32, i32
  }
  func.func @transform_3(%arg0: i32) -> (i32, i32) {
    %c0_i32 = arith.constant 0 : i32
    %c0_i32_0 = arith.constant 0 : i32
    return %arg0, %c0_i32 : i32, i32
  }
}

module attributes {stable_mosaic.version = 11 : i64} {
  func.func @_in_stats_kernel(%arg0: i32, %arg1: i32, %arg2: memref<1x32x128xbf16, #tpu.memory_space<vmem>>, %arg3: memref<1x1x128xf32, #tpu.memory_space<vmem>>, %arg4: memref<1x1x128xf32, #tpu.memory_space<vmem>>, %arg5: memref<1x128xf32, #tpu.memory_space<vmem>>, %arg6: memref<1x128xf32, #tpu.memory_space<vmem>>) attributes {dimension_semantics = [#tpu.dimension_semantics<parallel>, #tpu.dimension_semantics<arbitrary>], iteration_bounds = array<i64: 2, 1>, scalar_prefetch = 0 : i64, scratch_operands = 2 : i64, tpu.core_type = #tpu.core_type<tc>, window_params = [{transform_indices = @transform_0, window_bounds = array<i64: 1, 32, 128>}, {transform_indices = @transform_1, window_bounds = array<i64: 1, 1, 128>}, {transform_indices = @transform_2, window_bounds = array<i64: 1, 1, 128>}]} {
    %c0_i32 = arith.constant 0 : i32
    %0 = arith.cmpi eq, %arg1, %c0_i32 : i32
    %1 = arith.extui %0 : i1 to i32
    %c0_i32_0 = arith.constant 0 : i32
    %2 = arith.cmpi ne, %1, %c0_i32_0 : i32
    scf.if %2 {
      %cst_14 = arith.constant 0.000000e+00 : f32
      %20 = vector.broadcast %cst_14 : f32 to vector<1x128xf32>
      %c0_15 = arith.constant 0 : index
      %c0_16 = arith.constant 0 : index
      %21 = vector.load %arg5[%c0_15, %c0_16] : memref<1x128xf32, #tpu.memory_space<vmem>>, vector<1x128xf32>
      tpu.vector_store %arg5[%c0_15, %c0_16], %20 {strides = array<i32>} : memref<1x128xf32, #tpu.memory_space<vmem>>, vector<1x128xf32>,
      %cst_17 = arith.constant 0.000000e+00 : f32
      %22 = vector.broadcast %cst_17 : f32 to vector<1x128xf32>
      %c0_18 = arith.constant 0 : index
      %c0_19 = arith.constant 0 : index
      %23 = vector.load %arg6[%c0_18, %c0_19] : memref<1x128xf32, #tpu.memory_space<vmem>>, vector<1x128xf32>
      tpu.vector_store %arg6[%c0_18, %c0_19], %22 {strides = array<i32>} : memref<1x128xf32, #tpu.memory_space<vmem>>, vector<1x128xf32>,
    } else {
    }
    %c0 = arith.constant 0 : index
    %c0_1 = arith.constant 0 : index
    %c0_2 = arith.constant 0 : index
    %3 = vector.load %arg2[%c0, %c0_1, %c0_2] : memref<1x32x128xbf16, #tpu.memory_space<vmem>>, vector<1x32x128xbf16>
    %4 = vector.shape_cast %3 : vector<1x32x128xbf16> to vector<32x128xbf16>
    %5 = arith.extf %4 : vector<32x128xbf16> to vector<32x128xf32>
    %c0_3 = arith.constant 0 : index
    %c0_4 = arith.constant 0 : index
    %6 = vector.load %arg5[%c0_3, %c0_4] : memref<1x128xf32, #tpu.memory_space<vmem>>, vector<1x128xf32>
    %cst = arith.constant dense<0.000000e+00> : vector<128xf32>
    %7 = vector.multi_reduction <add>, %5, %cst [0] : vector<32x128xf32> to vector<128xf32>
    %8 = vector.shape_cast %7 : vector<128xf32> to vector<1x128xf32>
    %9 = arith.addf %6, %8 : vector<1x128xf32>
    %c0_5 = arith.constant 0 : index
    %c0_6 = arith.constant 0 : index
    %10 = vector.load %arg5[%c0_5, %c0_6] : memref<1x128xf32, #tpu.memory_space<vmem>>, vector<1x128xf32>
    tpu.vector_store %arg5[%c0_5, %c0_6], %9 {strides = array<i32>} : memref<1x128xf32, #tpu.memory_space<vmem>>, vector<1x128xf32>,
    %c0_7 = arith.constant 0 : index
    %c0_8 = arith.constant 0 : index
    %11 = vector.load %arg6[%c0_7, %c0_8] : memref<1x128xf32, #tpu.memory_space<vmem>>, vector<1x128xf32>
    %12 = arith.mulf %5, %5 : vector<32x128xf32>
    %cst_9 = arith.constant dense<0.000000e+00> : vector<128xf32>
    %13 = vector.multi_reduction <add>, %12, %cst_9 [0] : vector<32x128xf32> to vector<128xf32>
    %14 = vector.shape_cast %13 : vector<128xf32> to vector<1x128xf32>
    %15 = arith.addf %11, %14 : vector<1x128xf32>
    %c0_10 = arith.constant 0 : index
    %c0_11 = arith.constant 0 : index
    %16 = vector.load %arg6[%c0_10, %c0_11] : memref<1x128xf32, #tpu.memory_space<vmem>>, vector<1x128xf32>
    tpu.vector_store %arg6[%c0_10, %c0_11], %15 {strides = array<i32>} : memref<1x128xf32, #tpu.memory_space<vmem>>, vector<1x128xf32>,
    %c0_i32_12 = arith.constant 0 : i32
    %17 = arith.cmpi eq, %arg1, %c0_i32_12 : i32
    %18 = arith.extui %17 : i1 to i32
    %c0_i32_13 = arith.constant 0 : i32
    %19 = arith.cmpi ne, %18, %c0_i32_13 : i32
    scf.if %19 {
      %c0_14 = arith.constant 0 : index
      %c0_15 = arith.constant 0 : index
      %20 = vector.load %arg5[%c0_14, %c0_15] : memref<1x128xf32, #tpu.memory_space<vmem>>, vector<1x128xf32>
      %c0_16 = arith.constant 0 : index
      %c0_17 = arith.constant 0 : index
      %c0_18 = arith.constant 0 : index
      %21 = vector.load %arg3[%c0_16, %c0_17, %c0_18] : memref<1x1x128xf32, #tpu.memory_space<vmem>>, vector<1x1x128xf32>
      %22 = vector.shape_cast %21 : vector<1x1x128xf32> to vector<1x128xf32>
      %23 = vector.shape_cast %20 : vector<1x128xf32> to vector<1x1x128xf32>
      tpu.vector_store %arg3[%c0_16, %c0_17, %c0_18], %23 {strides = array<i32>} : memref<1x1x128xf32, #tpu.memory_space<vmem>>, vector<1x1x128xf32>,
      %c0_19 = arith.constant 0 : index
      %c0_20 = arith.constant 0 : index
      %24 = vector.load %arg6[%c0_19, %c0_20] : memref<1x128xf32, #tpu.memory_space<vmem>>, vector<1x128xf32>
      %c0_21 = arith.constant 0 : index
      %c0_22 = arith.constant 0 : index
      %c0_23 = arith.constant 0 : index
      %25 = vector.load %arg4[%c0_21, %c0_22, %c0_23] : memref<1x1x128xf32, #tpu.memory_space<vmem>>, vector<1x1x128xf32>
      %26 = vector.shape_cast %25 : vector<1x1x128xf32> to vector<1x128xf32>
      %27 = vector.shape_cast %24 : vector<1x128xf32> to vector<1x1x128xf32>
      tpu.vector_store %arg4[%c0_21, %c0_22, %c0_23], %27 {strides = array<i32>} : memref<1x1x128xf32, #tpu.memory_space<vmem>>, vector<1x1x128xf32>,
    } else {
    }
    return
  }
  func.func @transform_0(%arg0: i32, %arg1: i32) -> (i32, i32, i32) {
    %c0_i32 = arith.constant 0 : i32
    %c0_i32_0 = arith.constant 0 : i32
    return %arg0, %arg1, %c0_i32 : i32, i32, i32
  }
  func.func @transform_1(%arg0: i32, %arg1: i32) -> (i32, i32, i32) {
    %c0_i32 = arith.constant 0 : i32
    %c0_i32_0 = arith.constant 0 : i32
    %c0_i32_1 = arith.constant 0 : i32
    return %arg0, %c0_i32, %c0_i32_0 : i32, i32, i32
  }
  func.func @transform_2(%arg0: i32, %arg1: i32) -> (i32, i32, i32) {
    %c0_i32 = arith.constant 0 : i32
    %c0_i32_0 = arith.constant 0 : i32
    %c0_i32_1 = arith.constant 0 : i32
    return %arg0, %c0_i32, %c0_i32_0 : i32, i32, i32
  }
}

module attributes {stable_mosaic.version = 11 : i64} {
  func.func @_in_apply_kernel(%arg0: i32, %arg1: i32, %arg2: memref<1x32x128xbf16, #tpu.memory_space<vmem>>, %arg3: memref<1x1x128xf32, #tpu.memory_space<vmem>>, %arg4: memref<1x1x128xf32, #tpu.memory_space<vmem>>, %arg5: memref<1x32x128xbf16, #tpu.memory_space<vmem>>) attributes {dimension_semantics = [#tpu.dimension_semantics<parallel>, #tpu.dimension_semantics<parallel>], iteration_bounds = array<i64: 2, 1>, scalar_prefetch = 0 : i64, scratch_operands = 0 : i64, tpu.core_type = #tpu.core_type<tc>, window_params = [{transform_indices = @transform_0, window_bounds = array<i64: 1, 32, 128>}, {transform_indices = @transform_1, window_bounds = array<i64: 1, 1, 128>}, {transform_indices = @transform_2, window_bounds = array<i64: 1, 1, 128>}, {transform_indices = @transform_3, window_bounds = array<i64: 1, 32, 128>}]} {
    %c0 = arith.constant 0 : index
    %c0_0 = arith.constant 0 : index
    %c0_1 = arith.constant 0 : index
    %0 = vector.load %arg2[%c0, %c0_0, %c0_1] : memref<1x32x128xbf16, #tpu.memory_space<vmem>>, vector<1x32x128xbf16>
    %1 = vector.shape_cast %0 : vector<1x32x128xbf16> to vector<32x128xbf16>
    %2 = arith.extf %1 : vector<32x128xbf16> to vector<32x128xf32>
    %c0_2 = arith.constant 0 : index
    %c0_3 = arith.constant 0 : index
    %c0_4 = arith.constant 0 : index
    %3 = vector.load %arg3[%c0_2, %c0_3, %c0_4] : memref<1x1x128xf32, #tpu.memory_space<vmem>>, vector<1x1x128xf32>
    %4 = vector.shape_cast %3 : vector<1x1x128xf32> to vector<1x128xf32>
    %5 = vector.broadcast %4 : vector<1x128xf32> to vector<32x128xf32>
    %6 = arith.mulf %2, %5 : vector<32x128xf32>
    %c0_5 = arith.constant 0 : index
    %c0_6 = arith.constant 0 : index
    %c0_7 = arith.constant 0 : index
    %7 = vector.load %arg4[%c0_5, %c0_6, %c0_7] : memref<1x1x128xf32, #tpu.memory_space<vmem>>, vector<1x1x128xf32>
    %8 = vector.shape_cast %7 : vector<1x1x128xf32> to vector<1x128xf32>
    %9 = vector.broadcast %8 : vector<1x128xf32> to vector<32x128xf32>
    %10 = arith.addf %6, %9 : vector<32x128xf32>
    %cst = arith.constant 0.000000e+00 : f32
    %11 = vector.broadcast %cst : f32 to vector<32x128xf32>
    %12 = arith.maximumf %10, %11 : vector<32x128xf32>
    %13 = arith.truncf %12 : vector<32x128xf32> to vector<32x128xbf16>
    %c0_8 = arith.constant 0 : index
    %c0_9 = arith.constant 0 : index
    %c0_10 = arith.constant 0 : index
    %14 = vector.load %arg5[%c0_8, %c0_9, %c0_10] : memref<1x32x128xbf16, #tpu.memory_space<vmem>>, vector<1x32x128xbf16>
    %15 = vector.shape_cast %14 : vector<1x32x128xbf16> to vector<32x128xbf16>
    %16 = vector.shape_cast %13 : vector<32x128xbf16> to vector<1x32x128xbf16>
    tpu.vector_store %arg5[%c0_8, %c0_9, %c0_10], %16 {strides = array<i32>} : memref<1x32x128xbf16, #tpu.memory_space<vmem>>, vector<1x32x128xbf16>,
    return
  }
  func.func @transform_0(%arg0: i32, %arg1: i32) -> (i32, i32, i32) {
    %c0_i32 = arith.constant 0 : i32
    %c0_i32_0 = arith.constant 0 : i32
    return %arg0, %arg1, %c0_i32 : i32, i32, i32
  }
  func.func @transform_1(%arg0: i32, %arg1: i32) -> (i32, i32, i32) {
    %c0_i32 = arith.constant 0 : i32
    %c0_i32_0 = arith.constant 0 : i32
    %c0_i32_1 = arith.constant 0 : i32
    return %arg0, %c0_i32, %c0_i32_0 : i32, i32, i32
  }
  func.func @transform_2(%arg0: i32, %arg1: i32) -> (i32, i32, i32) {
    %c0_i32 = arith.constant 0 : i32
    %c0_i32_0 = arith.constant 0 : i32
    %c0_i32_1 = arith.constant 0 : i32
    return %arg0, %c0_i32, %c0_i32_0 : i32, i32, i32
  }
  func.func @transform_3(%arg0: i32, %arg1: i32) -> (i32, i32, i32) {
    %c0_i32 = arith.constant 0 : i32
    %c0_i32_0 = arith.constant 0 : i32
    return %arg0, %arg1, %c0_i32 : i32, i32, i32
  }
}

module attributes {stable_mosaic.version = 11 : i64} {
  func.func @_mm_kernel(%arg0: i32, %arg1: memref<128x1024xbf16, #tpu.memory_space<vmem>>, %arg2: memref<1024x128xbf16, #tpu.memory_space<vmem>>, %arg3: memref<1x128xf32, #tpu.memory_space<vmem>>, %arg4: memref<128x128xbf16, #tpu.memory_space<vmem>>) attributes {dimension_semantics = [#tpu.dimension_semantics<parallel>], iteration_bounds = array<i64: 1>, scalar_prefetch = 0 : i64, scratch_operands = 0 : i64, tpu.core_type = #tpu.core_type<tc>, window_params = [{transform_indices = @transform_0, window_bounds = array<i64: 128, 1024>}, {pipeline_mode = #tpu.pipeline_mode<synchronous>, transform_indices = @transform_1, window_bounds = array<i64: 1024, 128>}, {pipeline_mode = #tpu.pipeline_mode<synchronous>, transform_indices = @transform_2, window_bounds = array<i64: 1, 128>}, {transform_indices = @transform_3, window_bounds = array<i64: 128, 128>}]} {
    %c0 = arith.constant 0 : index
    %c0_0 = arith.constant 0 : index
    %0 = vector.load %arg1[%c0, %c0_0] : memref<128x1024xbf16, #tpu.memory_space<vmem>>, vector<128x1024xbf16>
    %c0_1 = arith.constant 0 : index
    %c0_2 = arith.constant 0 : index
    %1 = vector.load %arg2[%c0_1, %c0_2] : memref<1024x128xbf16, #tpu.memory_space<vmem>>, vector<1024x128xbf16>
    %cst = arith.constant dense<0.000000e+00> : vector<128x128xf32>
    %2 = tpu.matmul %0, %1, %cst {dimension_numbers = #tpu.dot_dimension_numbers<[1], [0], [0], [1], [0, 0, 1, 1], [], []>} : vector<128x1024xbf16>, vector<1024x128xbf16>, vector<128x128xf32> -> vector<128x128xf32>
    %c0_3 = arith.constant 0 : index
    %c0_4 = arith.constant 0 : index
    %3 = vector.load %arg3[%c0_3, %c0_4] : memref<1x128xf32, #tpu.memory_space<vmem>>, vector<1x128xf32>
    %4 = vector.broadcast %3 : vector<1x128xf32> to vector<128x128xf32>
    %5 = arith.addf %2, %4 : vector<128x128xf32>
    %6 = arith.truncf %5 : vector<128x128xf32> to vector<128x128xbf16>
    %c0_5 = arith.constant 0 : index
    %c0_6 = arith.constant 0 : index
    %7 = vector.load %arg4[%c0_5, %c0_6] : memref<128x128xbf16, #tpu.memory_space<vmem>>, vector<128x128xbf16>
    tpu.vector_store %arg4[%c0_5, %c0_6], %6 {strides = array<i32>} : memref<128x128xbf16, #tpu.memory_space<vmem>>, vector<128x128xbf16>,
    return
  }
  func.func @transform_0(%arg0: i32) -> (i32, i32) {
    %c0_i32 = arith.constant 0 : i32
    %c0_i32_0 = arith.constant 0 : i32
    return %arg0, %c0_i32 : i32, i32
  }
  func.func @transform_1(%arg0: i32) -> (i32, i32) {
    %c0_i32 = arith.constant 0 : i32
    %c0_i32_0 = arith.constant 0 : i32
    %c0_i32_1 = arith.constant 0 : i32
    return %c0_i32, %c0_i32_0 : i32, i32
  }
  func.func @transform_2(%arg0: i32) -> (i32, i32) {
    %c0_i32 = arith.constant 0 : i32
    %c0_i32_0 = arith.constant 0 : i32
    %c0_i32_1 = arith.constant 0 : i32
    return %c0_i32, %c0_i32_0 : i32, i32
  }
  func.func @transform_3(%arg0: i32) -> (i32, i32) {
    %c0_i32 = arith.constant 0 : i32
    %c0_i32_0 = arith.constant 0 : i32
    return %arg0, %c0_i32 : i32, i32
  }
}

module attributes {stable_mosaic.version = 11 : i64} {
  func.func @_in_stats_kernel(%arg0: i32, %arg1: i32, %arg2: memref<1x16x128xbf16, #tpu.memory_space<vmem>>, %arg3: memref<1x1x128xf32, #tpu.memory_space<vmem>>, %arg4: memref<1x1x128xf32, #tpu.memory_space<vmem>>, %arg5: memref<1x128xf32, #tpu.memory_space<vmem>>, %arg6: memref<1x128xf32, #tpu.memory_space<vmem>>) attributes {dimension_semantics = [#tpu.dimension_semantics<parallel>, #tpu.dimension_semantics<arbitrary>], iteration_bounds = array<i64: 2, 1>, scalar_prefetch = 0 : i64, scratch_operands = 2 : i64, tpu.core_type = #tpu.core_type<tc>, window_params = [{transform_indices = @transform_0, window_bounds = array<i64: 1, 16, 128>}, {transform_indices = @transform_1, window_bounds = array<i64: 1, 1, 128>}, {transform_indices = @transform_2, window_bounds = array<i64: 1, 1, 128>}]} {
    %c0_i32 = arith.constant 0 : i32
    %0 = arith.cmpi eq, %arg1, %c0_i32 : i32
    %1 = arith.extui %0 : i1 to i32
    %c0_i32_0 = arith.constant 0 : i32
    %2 = arith.cmpi ne, %1, %c0_i32_0 : i32
    scf.if %2 {
      %cst_14 = arith.constant 0.000000e+00 : f32
      %20 = vector.broadcast %cst_14 : f32 to vector<1x128xf32>
      %c0_15 = arith.constant 0 : index
      %c0_16 = arith.constant 0 : index
      %21 = vector.load %arg5[%c0_15, %c0_16] : memref<1x128xf32, #tpu.memory_space<vmem>>, vector<1x128xf32>
      tpu.vector_store %arg5[%c0_15, %c0_16], %20 {strides = array<i32>} : memref<1x128xf32, #tpu.memory_space<vmem>>, vector<1x128xf32>,
      %cst_17 = arith.constant 0.000000e+00 : f32
      %22 = vector.broadcast %cst_17 : f32 to vector<1x128xf32>
      %c0_18 = arith.constant 0 : index
      %c0_19 = arith.constant 0 : index
      %23 = vector.load %arg6[%c0_18, %c0_19] : memref<1x128xf32, #tpu.memory_space<vmem>>, vector<1x128xf32>
      tpu.vector_store %arg6[%c0_18, %c0_19], %22 {strides = array<i32>} : memref<1x128xf32, #tpu.memory_space<vmem>>, vector<1x128xf32>,
    } else {
    }
    %c0 = arith.constant 0 : index
    %c0_1 = arith.constant 0 : index
    %c0_2 = arith.constant 0 : index
    %3 = vector.load %arg2[%c0, %c0_1, %c0_2] : memref<1x16x128xbf16, #tpu.memory_space<vmem>>, vector<1x16x128xbf16>
    %4 = vector.shape_cast %3 : vector<1x16x128xbf16> to vector<16x128xbf16>
    %5 = arith.extf %4 : vector<16x128xbf16> to vector<16x128xf32>
    %c0_3 = arith.constant 0 : index
    %c0_4 = arith.constant 0 : index
    %6 = vector.load %arg5[%c0_3, %c0_4] : memref<1x128xf32, #tpu.memory_space<vmem>>, vector<1x128xf32>
    %cst = arith.constant dense<0.000000e+00> : vector<128xf32>
    %7 = vector.multi_reduction <add>, %5, %cst [0] : vector<16x128xf32> to vector<128xf32>
    %8 = vector.shape_cast %7 : vector<128xf32> to vector<1x128xf32>
    %9 = arith.addf %6, %8 : vector<1x128xf32>
    %c0_5 = arith.constant 0 : index
    %c0_6 = arith.constant 0 : index
    %10 = vector.load %arg5[%c0_5, %c0_6] : memref<1x128xf32, #tpu.memory_space<vmem>>, vector<1x128xf32>
    tpu.vector_store %arg5[%c0_5, %c0_6], %9 {strides = array<i32>} : memref<1x128xf32, #tpu.memory_space<vmem>>, vector<1x128xf32>,
    %c0_7 = arith.constant 0 : index
    %c0_8 = arith.constant 0 : index
    %11 = vector.load %arg6[%c0_7, %c0_8] : memref<1x128xf32, #tpu.memory_space<vmem>>, vector<1x128xf32>
    %12 = arith.mulf %5, %5 : vector<16x128xf32>
    %cst_9 = arith.constant dense<0.000000e+00> : vector<128xf32>
    %13 = vector.multi_reduction <add>, %12, %cst_9 [0] : vector<16x128xf32> to vector<128xf32>
    %14 = vector.shape_cast %13 : vector<128xf32> to vector<1x128xf32>
    %15 = arith.addf %11, %14 : vector<1x128xf32>
    %c0_10 = arith.constant 0 : index
    %c0_11 = arith.constant 0 : index
    %16 = vector.load %arg6[%c0_10, %c0_11] : memref<1x128xf32, #tpu.memory_space<vmem>>, vector<1x128xf32>
    tpu.vector_store %arg6[%c0_10, %c0_11], %15 {strides = array<i32>} : memref<1x128xf32, #tpu.memory_space<vmem>>, vector<1x128xf32>,
    %c0_i32_12 = arith.constant 0 : i32
    %17 = arith.cmpi eq, %arg1, %c0_i32_12 : i32
    %18 = arith.extui %17 : i1 to i32
    %c0_i32_13 = arith.constant 0 : i32
    %19 = arith.cmpi ne, %18, %c0_i32_13 : i32
    scf.if %19 {
      %c0_14 = arith.constant 0 : index
      %c0_15 = arith.constant 0 : index
      %20 = vector.load %arg5[%c0_14, %c0_15] : memref<1x128xf32, #tpu.memory_space<vmem>>, vector<1x128xf32>
      %c0_16 = arith.constant 0 : index
      %c0_17 = arith.constant 0 : index
      %c0_18 = arith.constant 0 : index
      %21 = vector.load %arg3[%c0_16, %c0_17, %c0_18] : memref<1x1x128xf32, #tpu.memory_space<vmem>>, vector<1x1x128xf32>
      %22 = vector.shape_cast %21 : vector<1x1x128xf32> to vector<1x128xf32>
      %23 = vector.shape_cast %20 : vector<1x128xf32> to vector<1x1x128xf32>
      tpu.vector_store %arg3[%c0_16, %c0_17, %c0_18], %23 {strides = array<i32>} : memref<1x1x128xf32, #tpu.memory_space<vmem>>, vector<1x1x128xf32>,
      %c0_19 = arith.constant 0 : index
      %c0_20 = arith.constant 0 : index
      %24 = vector.load %arg6[%c0_19, %c0_20] : memref<1x128xf32, #tpu.memory_space<vmem>>, vector<1x128xf32>
      %c0_21 = arith.constant 0 : index
      %c0_22 = arith.constant 0 : index
      %c0_23 = arith.constant 0 : index
      %25 = vector.load %arg4[%c0_21, %c0_22, %c0_23] : memref<1x1x128xf32, #tpu.memory_space<vmem>>, vector<1x1x128xf32>
      %26 = vector.shape_cast %25 : vector<1x1x128xf32> to vector<1x128xf32>
      %27 = vector.shape_cast %24 : vector<1x128xf32> to vector<1x1x128xf32>
      tpu.vector_store %arg4[%c0_21, %c0_22, %c0_23], %27 {strides = array<i32>} : memref<1x1x128xf32, #tpu.memory_space<vmem>>, vector<1x1x128xf32>,
    } else {
    }
    return
  }
  func.func @transform_0(%arg0: i32, %arg1: i32) -> (i32, i32, i32) {
    %c0_i32 = arith.constant 0 : i32
    %c0_i32_0 = arith.constant 0 : i32
    return %arg0, %arg1, %c0_i32 : i32, i32, i32
  }
  func.func @transform_1(%arg0: i32, %arg1: i32) -> (i32, i32, i32) {
    %c0_i32 = arith.constant 0 : i32
    %c0_i32_0 = arith.constant 0 : i32
    %c0_i32_1 = arith.constant 0 : i32
    return %arg0, %c0_i32, %c0_i32_0 : i32, i32, i32
  }
  func.func @transform_2(%arg0: i32, %arg1: i32) -> (i32, i32, i32) {
    %c0_i32 = arith.constant 0 : i32
    %c0_i32_0 = arith.constant 0 : i32
    %c0_i32_1 = arith.constant 0 : i32
    return %arg0, %c0_i32, %c0_i32_0 : i32, i32, i32
  }
}

module attributes {stable_mosaic.version = 11 : i64} {
  func.func @_in_apply_kernel(%arg0: i32, %arg1: i32, %arg2: memref<1x16x128xbf16, #tpu.memory_space<vmem>>, %arg3: memref<1x1x128xf32, #tpu.memory_space<vmem>>, %arg4: memref<1x1x128xf32, #tpu.memory_space<vmem>>, %arg5: memref<1x16x128xbf16, #tpu.memory_space<vmem>>) attributes {dimension_semantics = [#tpu.dimension_semantics<parallel>, #tpu.dimension_semantics<parallel>], iteration_bounds = array<i64: 2, 1>, scalar_prefetch = 0 : i64, scratch_operands = 0 : i64, tpu.core_type = #tpu.core_type<tc>, window_params = [{transform_indices = @transform_0, window_bounds = array<i64: 1, 16, 128>}, {transform_indices = @transform_1, window_bounds = array<i64: 1, 1, 128>}, {transform_indices = @transform_2, window_bounds = array<i64: 1, 1, 128>}, {transform_indices = @transform_3, window_bounds = array<i64: 1, 16, 128>}]} {
    %c0 = arith.constant 0 : index
    %c0_0 = arith.constant 0 : index
    %c0_1 = arith.constant 0 : index
    %0 = vector.load %arg2[%c0, %c0_0, %c0_1] : memref<1x16x128xbf16, #tpu.memory_space<vmem>>, vector<1x16x128xbf16>
    %1 = vector.shape_cast %0 : vector<1x16x128xbf16> to vector<16x128xbf16>
    %2 = arith.extf %1 : vector<16x128xbf16> to vector<16x128xf32>
    %c0_2 = arith.constant 0 : index
    %c0_3 = arith.constant 0 : index
    %c0_4 = arith.constant 0 : index
    %3 = vector.load %arg3[%c0_2, %c0_3, %c0_4] : memref<1x1x128xf32, #tpu.memory_space<vmem>>, vector<1x1x128xf32>
    %4 = vector.shape_cast %3 : vector<1x1x128xf32> to vector<1x128xf32>
    %5 = vector.broadcast %4 : vector<1x128xf32> to vector<16x128xf32>
    %6 = arith.mulf %2, %5 : vector<16x128xf32>
    %c0_5 = arith.constant 0 : index
    %c0_6 = arith.constant 0 : index
    %c0_7 = arith.constant 0 : index
    %7 = vector.load %arg4[%c0_5, %c0_6, %c0_7] : memref<1x1x128xf32, #tpu.memory_space<vmem>>, vector<1x1x128xf32>
    %8 = vector.shape_cast %7 : vector<1x1x128xf32> to vector<1x128xf32>
    %9 = vector.broadcast %8 : vector<1x128xf32> to vector<16x128xf32>
    %10 = arith.addf %6, %9 : vector<16x128xf32>
    %cst = arith.constant 0.000000e+00 : f32
    %11 = vector.broadcast %cst : f32 to vector<16x128xf32>
    %12 = arith.maximumf %10, %11 : vector<16x128xf32>
    %13 = arith.truncf %12 : vector<16x128xf32> to vector<16x128xbf16>
    %c0_8 = arith.constant 0 : index
    %c0_9 = arith.constant 0 : index
    %c0_10 = arith.constant 0 : index
    %14 = vector.load %arg5[%c0_8, %c0_9, %c0_10] : memref<1x16x128xbf16, #tpu.memory_space<vmem>>, vector<1x16x128xbf16>
    %15 = vector.shape_cast %14 : vector<1x16x128xbf16> to vector<16x128xbf16>
    %16 = vector.shape_cast %13 : vector<16x128xbf16> to vector<1x16x128xbf16>
    tpu.vector_store %arg5[%c0_8, %c0_9, %c0_10], %16 {strides = array<i32>} : memref<1x16x128xbf16, #tpu.memory_space<vmem>>, vector<1x16x128xbf16>,
    return
  }
  func.func @transform_0(%arg0: i32, %arg1: i32) -> (i32, i32, i32) {
    %c0_i32 = arith.constant 0 : i32
    %c0_i32_0 = arith.constant 0 : i32
    return %arg0, %arg1, %c0_i32 : i32, i32, i32
  }
  func.func @transform_1(%arg0: i32, %arg1: i32) -> (i32, i32, i32) {
    %c0_i32 = arith.constant 0 : i32
    %c0_i32_0 = arith.constant 0 : i32
    %c0_i32_1 = arith.constant 0 : i32
    return %arg0, %c0_i32, %c0_i32_0 : i32, i32, i32
  }
  func.func @transform_2(%arg0: i32, %arg1: i32) -> (i32, i32, i32) {
    %c0_i32 = arith.constant 0 : i32
    %c0_i32_0 = arith.constant 0 : i32
    %c0_i32_1 = arith.constant 0 : i32
    return %arg0, %c0_i32, %c0_i32_0 : i32, i32, i32
  }
  func.func @transform_3(%arg0: i32, %arg1: i32) -> (i32, i32, i32) {
    %c0_i32 = arith.constant 0 : i32
    %c0_i32_0 = arith.constant 0 : i32
    return %arg0, %arg1, %c0_i32 : i32, i32, i32
  }
}

module attributes {stable_mosaic.version = 11 : i64} {
  func.func @_mm_kernel(%arg0: i32, %arg1: memref<128x1152xbf16, #tpu.memory_space<vmem>>, %arg2: memref<1152x128xbf16, #tpu.memory_space<vmem>>, %arg3: memref<1x128xf32, #tpu.memory_space<vmem>>, %arg4: memref<128x128xbf16, #tpu.memory_space<vmem>>) attributes {dimension_semantics = [#tpu.dimension_semantics<parallel>], iteration_bounds = array<i64: 1>, scalar_prefetch = 0 : i64, scratch_operands = 0 : i64, tpu.core_type = #tpu.core_type<tc>, window_params = [{transform_indices = @transform_0, window_bounds = array<i64: 128, 1152>}, {pipeline_mode = #tpu.pipeline_mode<synchronous>, transform_indices = @transform_1, window_bounds = array<i64: 1152, 128>}, {pipeline_mode = #tpu.pipeline_mode<synchronous>, transform_indices = @transform_2, window_bounds = array<i64: 1, 128>}, {transform_indices = @transform_3, window_bounds = array<i64: 128, 128>}]} {
    %c0 = arith.constant 0 : index
    %c0_0 = arith.constant 0 : index
    %0 = vector.load %arg1[%c0, %c0_0] : memref<128x1152xbf16, #tpu.memory_space<vmem>>, vector<128x1152xbf16>
    %c0_1 = arith.constant 0 : index
    %c0_2 = arith.constant 0 : index
    %1 = vector.load %arg2[%c0_1, %c0_2] : memref<1152x128xbf16, #tpu.memory_space<vmem>>, vector<1152x128xbf16>
    %cst = arith.constant dense<0.000000e+00> : vector<128x128xf32>
    %2 = tpu.matmul %0, %1, %cst {dimension_numbers = #tpu.dot_dimension_numbers<[1], [0], [0], [1], [0, 0, 1, 1], [], []>} : vector<128x1152xbf16>, vector<1152x128xbf16>, vector<128x128xf32> -> vector<128x128xf32>
    %c0_3 = arith.constant 0 : index
    %c0_4 = arith.constant 0 : index
    %3 = vector.load %arg3[%c0_3, %c0_4] : memref<1x128xf32, #tpu.memory_space<vmem>>, vector<1x128xf32>
    %4 = vector.broadcast %3 : vector<1x128xf32> to vector<128x128xf32>
    %5 = arith.addf %2, %4 : vector<128x128xf32>
    %6 = arith.truncf %5 : vector<128x128xf32> to vector<128x128xbf16>
    %c0_5 = arith.constant 0 : index
    %c0_6 = arith.constant 0 : index
    %7 = vector.load %arg4[%c0_5, %c0_6] : memref<128x128xbf16, #tpu.memory_space<vmem>>, vector<128x128xbf16>
    tpu.vector_store %arg4[%c0_5, %c0_6], %6 {strides = array<i32>} : memref<128x128xbf16, #tpu.memory_space<vmem>>, vector<128x128xbf16>,
    return
  }
  func.func @transform_0(%arg0: i32) -> (i32, i32) {
    %c0_i32 = arith.constant 0 : i32
    %c0_i32_0 = arith.constant 0 : i32
    return %arg0, %c0_i32 : i32, i32
  }
  func.func @transform_1(%arg0: i32) -> (i32, i32) {
    %c0_i32 = arith.constant 0 : i32
    %c0_i32_0 = arith.constant 0 : i32
    %c0_i32_1 = arith.constant 0 : i32
    return %c0_i32, %c0_i32_0 : i32, i32
  }
  func.func @transform_2(%arg0: i32) -> (i32, i32) {
    %c0_i32 = arith.constant 0 : i32
    %c0_i32_0 = arith.constant 0 : i32
    %c0_i32_1 = arith.constant 0 : i32
    return %c0_i32, %c0_i32_0 : i32, i32
  }
  func.func @transform_3(%arg0: i32) -> (i32, i32) {
    %c0_i32 = arith.constant 0 : i32
    %c0_i32_0 = arith.constant 0 : i32
    return %arg0, %c0_i32 : i32, i32
  }
}

module attributes {stable_mosaic.version = 11 : i64} {
  func.func @_in_apply_res_kernel(%arg0: i32, %arg1: i32, %arg2: memref<1x16x128xbf16, #tpu.memory_space<vmem>>, %arg3: memref<1x1x128xf32, #tpu.memory_space<vmem>>, %arg4: memref<1x1x128xf32, #tpu.memory_space<vmem>>, %arg5: memref<1x16x128xbf16, #tpu.memory_space<vmem>>, %arg6: memref<1x16x128xbf16, #tpu.memory_space<vmem>>) attributes {dimension_semantics = [#tpu.dimension_semantics<parallel>, #tpu.dimension_semantics<parallel>], iteration_bounds = array<i64: 2, 1>, scalar_prefetch = 0 : i64, scratch_operands = 0 : i64, tpu.core_type = #tpu.core_type<tc>, window_params = [{transform_indices = @transform_0, window_bounds = array<i64: 1, 16, 128>}, {transform_indices = @transform_1, window_bounds = array<i64: 1, 1, 128>}, {transform_indices = @transform_2, window_bounds = array<i64: 1, 1, 128>}, {transform_indices = @transform_3, window_bounds = array<i64: 1, 16, 128>}, {transform_indices = @transform_4, window_bounds = array<i64: 1, 16, 128>}]} {
    %c0 = arith.constant 0 : index
    %c0_0 = arith.constant 0 : index
    %c0_1 = arith.constant 0 : index
    %0 = vector.load %arg2[%c0, %c0_0, %c0_1] : memref<1x16x128xbf16, #tpu.memory_space<vmem>>, vector<1x16x128xbf16>
    %1 = vector.shape_cast %0 : vector<1x16x128xbf16> to vector<16x128xbf16>
    %2 = arith.extf %1 : vector<16x128xbf16> to vector<16x128xf32>
    %c0_2 = arith.constant 0 : index
    %c0_3 = arith.constant 0 : index
    %c0_4 = arith.constant 0 : index
    %3 = vector.load %arg3[%c0_2, %c0_3, %c0_4] : memref<1x1x128xf32, #tpu.memory_space<vmem>>, vector<1x1x128xf32>
    %4 = vector.shape_cast %3 : vector<1x1x128xf32> to vector<1x128xf32>
    %5 = vector.broadcast %4 : vector<1x128xf32> to vector<16x128xf32>
    %6 = arith.mulf %2, %5 : vector<16x128xf32>
    %c0_5 = arith.constant 0 : index
    %c0_6 = arith.constant 0 : index
    %c0_7 = arith.constant 0 : index
    %7 = vector.load %arg4[%c0_5, %c0_6, %c0_7] : memref<1x1x128xf32, #tpu.memory_space<vmem>>, vector<1x1x128xf32>
    %8 = vector.shape_cast %7 : vector<1x1x128xf32> to vector<1x128xf32>
    %9 = vector.broadcast %8 : vector<1x128xf32> to vector<16x128xf32>
    %10 = arith.addf %6, %9 : vector<16x128xf32>
    %c0_8 = arith.constant 0 : index
    %c0_9 = arith.constant 0 : index
    %c0_10 = arith.constant 0 : index
    %11 = vector.load %arg5[%c0_8, %c0_9, %c0_10] : memref<1x16x128xbf16, #tpu.memory_space<vmem>>, vector<1x16x128xbf16>
    %12 = vector.shape_cast %11 : vector<1x16x128xbf16> to vector<16x128xbf16>
    %13 = arith.extf %12 : vector<16x128xbf16> to vector<16x128xf32>
    %14 = arith.addf %10, %13 : vector<16x128xf32>
    %15 = arith.truncf %14 : vector<16x128xf32> to vector<16x128xbf16>
    %c0_11 = arith.constant 0 : index
    %c0_12 = arith.constant 0 : index
    %c0_13 = arith.constant 0 : index
    %16 = vector.load %arg6[%c0_11, %c0_12, %c0_13] : memref<1x16x128xbf16, #tpu.memory_space<vmem>>, vector<1x16x128xbf16>
    %17 = vector.shape_cast %16 : vector<1x16x128xbf16> to vector<16x128xbf16>
    %18 = vector.shape_cast %15 : vector<16x128xbf16> to vector<1x16x128xbf16>
    tpu.vector_store %arg6[%c0_11, %c0_12, %c0_13], %18 {strides = array<i32>} : memref<1x16x128xbf16, #tpu.memory_space<vmem>>, vector<1x16x128xbf16>,
    return
  }
  func.func @transform_0(%arg0: i32, %arg1: i32) -> (i32, i32, i32) {
    %c0_i32 = arith.constant 0 : i32
    %c0_i32_0 = arith.constant 0 : i32
    return %arg0, %arg1, %c0_i32 : i32, i32, i32
  }
  func.func @transform_1(%arg0: i32, %arg1: i32) -> (i32, i32, i32) {
    %c0_i32 = arith.constant 0 : i32
    %c0_i32_0 = arith.constant 0 : i32
    %c0_i32_1 = arith.constant 0 : i32
    return %arg0, %c0_i32, %c0_i32_0 : i32, i32, i32
  }
  func.func @transform_2(%arg0: i32, %arg1: i32) -> (i32, i32, i32) {
    %c0_i32 = arith.constant 0 : i32
    %c0_i32_0 = arith.constant 0 : i32
    %c0_i32_1 = arith.constant 0 : i32
    return %arg0, %c0_i32, %c0_i32_0 : i32, i32, i32
  }
  func.func @transform_3(%arg0: i32, %arg1: i32) -> (i32, i32, i32) {
    %c0_i32 = arith.constant 0 : i32
    %c0_i32_0 = arith.constant 0 : i32
    return %arg0, %arg1, %c0_i32 : i32, i32, i32
  }
  func.func @transform_4(%arg0: i32, %arg1: i32) -> (i32, i32, i32) {
    %c0_i32 = arith.constant 0 : i32
    %c0_i32_0 = arith.constant 0 : i32
    return %arg0, %arg1, %c0_i32 : i32, i32, i32
  }
}

module attributes {stable_mosaic.version = 11 : i64} {
  func.func @_mm_kernel(%arg0: i32, %arg1: memref<128x1152xbf16, #tpu.memory_space<vmem>>, %arg2: memref<1152x256xbf16, #tpu.memory_space<vmem>>, %arg3: memref<1x256xf32, #tpu.memory_space<vmem>>, %arg4: memref<128x256xbf16, #tpu.memory_space<vmem>>) attributes {dimension_semantics = [#tpu.dimension_semantics<parallel>], iteration_bounds = array<i64: 1>, scalar_prefetch = 0 : i64, scratch_operands = 0 : i64, tpu.core_type = #tpu.core_type<tc>, window_params = [{transform_indices = @transform_0, window_bounds = array<i64: 128, 1152>}, {pipeline_mode = #tpu.pipeline_mode<synchronous>, transform_indices = @transform_1, window_bounds = array<i64: 1152, 256>}, {pipeline_mode = #tpu.pipeline_mode<synchronous>, transform_indices = @transform_2, window_bounds = array<i64: 1, 256>}, {transform_indices = @transform_3, window_bounds = array<i64: 128, 256>}]} {
    %c0 = arith.constant 0 : index
    %c0_0 = arith.constant 0 : index
    %0 = vector.load %arg1[%c0, %c0_0] : memref<128x1152xbf16, #tpu.memory_space<vmem>>, vector<128x1152xbf16>
    %c0_1 = arith.constant 0 : index
    %c0_2 = arith.constant 0 : index
    %1 = vector.load %arg2[%c0_1, %c0_2] : memref<1152x256xbf16, #tpu.memory_space<vmem>>, vector<1152x256xbf16>
    %cst = arith.constant dense<0.000000e+00> : vector<128x256xf32>
    %2 = tpu.matmul %0, %1, %cst {dimension_numbers = #tpu.dot_dimension_numbers<[1], [0], [0], [1], [0, 0, 1, 1], [], []>} : vector<128x1152xbf16>, vector<1152x256xbf16>, vector<128x256xf32> -> vector<128x256xf32>
    %c0_3 = arith.constant 0 : index
    %c0_4 = arith.constant 0 : index
    %3 = vector.load %arg3[%c0_3, %c0_4] : memref<1x256xf32, #tpu.memory_space<vmem>>, vector<1x256xf32>
    %4 = vector.broadcast %3 : vector<1x256xf32> to vector<128x256xf32>
    %5 = arith.addf %2, %4 : vector<128x256xf32>
    %6 = arith.truncf %5 : vector<128x256xf32> to vector<128x256xbf16>
    %c0_5 = arith.constant 0 : index
    %c0_6 = arith.constant 0 : index
    %7 = vector.load %arg4[%c0_5, %c0_6] : memref<128x256xbf16, #tpu.memory_space<vmem>>, vector<128x256xbf16>
    tpu.vector_store %arg4[%c0_5, %c0_6], %6 {strides = array<i32>} : memref<128x256xbf16, #tpu.memory_space<vmem>>, vector<128x256xbf16>,
    return
  }
  func.func @transform_0(%arg0: i32) -> (i32, i32) {
    %c0_i32 = arith.constant 0 : i32
    %c0_i32_0 = arith.constant 0 : i32
    return %arg0, %c0_i32 : i32, i32
  }
  func.func @transform_1(%arg0: i32) -> (i32, i32) {
    %c0_i32 = arith.constant 0 : i32
    %c0_i32_0 = arith.constant 0 : i32
    %c0_i32_1 = arith.constant 0 : i32
    return %c0_i32, %c0_i32_0 : i32, i32
  }
  func.func @transform_2(%arg0: i32) -> (i32, i32) {
    %c0_i32 = arith.constant 0 : i32
    %c0_i32_0 = arith.constant 0 : i32
    %c0_i32_1 = arith.constant 0 : i32
    return %c0_i32, %c0_i32_0 : i32, i32
  }
  func.func @transform_3(%arg0: i32) -> (i32, i32) {
    %c0_i32 = arith.constant 0 : i32
    %c0_i32_0 = arith.constant 0 : i32
    return %arg0, %c0_i32 : i32, i32
  }
}

module attributes {stable_mosaic.version = 11 : i64} {
  func.func @_mm_kernel(%arg0: i32, %arg1: memref<128x576xbf16, #tpu.memory_space<vmem>>, %arg2: memref<576x128xbf16, #tpu.memory_space<vmem>>, %arg3: memref<1x128xf32, #tpu.memory_space<vmem>>, %arg4: memref<128x128xbf16, #tpu.memory_space<vmem>>) attributes {dimension_semantics = [#tpu.dimension_semantics<parallel>], iteration_bounds = array<i64: 1>, scalar_prefetch = 0 : i64, scratch_operands = 0 : i64, tpu.core_type = #tpu.core_type<tc>, window_params = [{transform_indices = @transform_0, window_bounds = array<i64: 128, 576>}, {pipeline_mode = #tpu.pipeline_mode<synchronous>, transform_indices = @transform_1, window_bounds = array<i64: 576, 128>}, {pipeline_mode = #tpu.pipeline_mode<synchronous>, transform_indices = @transform_2, window_bounds = array<i64: 1, 128>}, {transform_indices = @transform_3, window_bounds = array<i64: 128, 128>}]} {
    %c0 = arith.constant 0 : index
    %c0_0 = arith.constant 0 : index
    %0 = vector.load %arg1[%c0, %c0_0] : memref<128x576xbf16, #tpu.memory_space<vmem>>, vector<128x576xbf16>
    %c0_1 = arith.constant 0 : index
    %c0_2 = arith.constant 0 : index
    %1 = vector.load %arg2[%c0_1, %c0_2] : memref<576x128xbf16, #tpu.memory_space<vmem>>, vector<576x128xbf16>
    %cst = arith.constant dense<0.000000e+00> : vector<128x128xf32>
    %2 = tpu.matmul %0, %1, %cst {dimension_numbers = #tpu.dot_dimension_numbers<[1], [0], [0], [1], [0, 0, 1, 1], [], []>} : vector<128x576xbf16>, vector<576x128xbf16>, vector<128x128xf32> -> vector<128x128xf32>
    %c0_3 = arith.constant 0 : index
    %c0_4 = arith.constant 0 : index
    %3 = vector.load %arg3[%c0_3, %c0_4] : memref<1x128xf32, #tpu.memory_space<vmem>>, vector<1x128xf32>
    %4 = vector.broadcast %3 : vector<1x128xf32> to vector<128x128xf32>
    %5 = arith.addf %2, %4 : vector<128x128xf32>
    %6 = arith.truncf %5 : vector<128x128xf32> to vector<128x128xbf16>
    %c0_5 = arith.constant 0 : index
    %c0_6 = arith.constant 0 : index
    %7 = vector.load %arg4[%c0_5, %c0_6] : memref<128x128xbf16, #tpu.memory_space<vmem>>, vector<128x128xbf16>
    tpu.vector_store %arg4[%c0_5, %c0_6], %6 {strides = array<i32>} : memref<128x128xbf16, #tpu.memory_space<vmem>>, vector<128x128xbf16>,
    return
  }
  func.func @transform_0(%arg0: i32) -> (i32, i32) {
    %c0_i32 = arith.constant 0 : i32
    %c0_i32_0 = arith.constant 0 : i32
    return %arg0, %c0_i32 : i32, i32
  }
  func.func @transform_1(%arg0: i32) -> (i32, i32) {
    %c0_i32 = arith.constant 0 : i32
    %c0_i32_0 = arith.constant 0 : i32
    %c0_i32_1 = arith.constant 0 : i32
    return %c0_i32, %c0_i32_0 : i32, i32
  }
  func.func @transform_2(%arg0: i32) -> (i32, i32) {
    %c0_i32 = arith.constant 0 : i32
    %c0_i32_0 = arith.constant 0 : i32
    %c0_i32_1 = arith.constant 0 : i32
    return %c0_i32, %c0_i32_0 : i32, i32
  }
  func.func @transform_3(%arg0: i32) -> (i32, i32) {
    %c0_i32 = arith.constant 0 : i32
    %c0_i32_0 = arith.constant 0 : i32
    return %arg0, %c0_i32 : i32, i32
  }
}

module attributes {stable_mosaic.version = 11 : i64} {
  func.func @_mm_head_kernel(%arg0: i32, %arg1: memref<256x1568xbf16, #tpu.memory_space<vmem>>, %arg2: memref<128x1568xbf16, #tpu.memory_space<vmem>>, %arg3: memref<8x1xf32, #tpu.memory_space<vmem>>, %arg4: memref<8x256xf32, #tpu.memory_space<vmem>>) attributes {dimension_semantics = [#tpu.dimension_semantics<parallel>], iteration_bounds = array<i64: 2>, scalar_prefetch = 0 : i64, scratch_operands = 0 : i64, tpu.core_type = #tpu.core_type<tc>, window_params = [{transform_indices = @transform_0, window_bounds = array<i64: 256, 1568>}, {pipeline_mode = #tpu.pipeline_mode<synchronous>, transform_indices = @transform_1, window_bounds = array<i64: 128, 1568>}, {pipeline_mode = #tpu.pipeline_mode<synchronous>, transform_indices = @transform_2, window_bounds = array<i64: 8, 1>}, {transform_indices = @transform_3, window_bounds = array<i64: 8, 256>}]} {
    %c0 = arith.constant 0 : index
    %c0_0 = arith.constant 0 : index
    %0 = vector.load %arg2[%c0, %c0_0] : memref<128x1568xbf16, #tpu.memory_space<vmem>>, vector<128x1568xbf16>
    %c0_1 = arith.constant 0 : index
    %c0_2 = arith.constant 0 : index
    %1 = vector.load %arg1[%c0_1, %c0_2] : memref<256x1568xbf16, #tpu.memory_space<vmem>>, vector<256x1568xbf16>
    "tpu.trace_start"() <{level = 10 : i32, message = "nk,mk->nm"}> : () -> ()
    %cst = arith.constant dense<0.000000e+00> : vector<128x256xf32>
    %2 = tpu.matmul %0, %1, %cst {dimension_numbers = #tpu.dot_dimension_numbers<[1], [1], [0], [0], [0, 0, 1, 0], [], []>} : vector<128x1568xbf16>, vector<256x1568xbf16>, vector<128x256xf32> -> vector<128x256xf32>
    "tpu.trace_stop"() : () -> ()
    %3 = vector.extract_strided_slice %2 {offsets = [0, 0], sizes = [8, 256], strides = [1, 1]} : vector<128x256xf32> to vector<8x256xf32>
    %c0_3 = arith.constant 0 : index
    %c0_4 = arith.constant 0 : index
    %4 = vector.load %arg3[%c0_3, %c0_4] : memref<8x1xf32, #tpu.memory_space<vmem>>, vector<8x1xf32>
    %5 = vector.broadcast %4 : vector<8x1xf32> to vector<8x256xf32>
    %6 = arith.addf %3, %5 : vector<8x256xf32>
    %7 = math.tanh %6 : vector<8x256xf32>
    %c0_5 = arith.constant 0 : index
    %c0_6 = arith.constant 0 : index
    %8 = vector.load %arg4[%c0_5, %c0_6] : memref<8x256xf32, #tpu.memory_space<vmem>>, vector<8x256xf32>
    tpu.vector_store %arg4[%c0_5, %c0_6], %7 {strides = array<i32>} : memref<8x256xf32, #tpu.memory_space<vmem>>, vector<8x256xf32>,
    return
  }
  func.func @transform_0(%arg0: i32) -> (i32, i32) {
    %c0_i32 = arith.constant 0 : i32
    %c0_i32_0 = arith.constant 0 : i32
    return %arg0, %c0_i32 : i32, i32
  }
  func.func @transform_1(%arg0: i32) -> (i32, i32) {
    %c0_i32 = arith.constant 0 : i32
    %c0_i32_0 = arith.constant 0 : i32
    %c0_i32_1 = arith.constant 0 : i32
    return %c0_i32, %c0_i32_0 : i32, i32
  }
  func.func @transform_2(%arg0: i32) -> (i32, i32) {
    %c0_i32 = arith.constant 0 : i32
    %c0_i32_0 = arith.constant 0 : i32
    %c0_i32_1 = arith.constant 0 : i32
    return %c0_i32, %c0_i32_0 : i32, i32
  }
  func.func @transform_3(%arg0: i32) -> (i32, i32) {
    %c0_i32 = arith.constant 0 : i32
    %c0_i32_0 = arith.constant 0 : i32
    return %c0_i32, %arg0 : i32, i32
  }
}

</mosaic_0001>

<llo_original>
// kernel: generator_forward.29
$region0: #{generator_forward.29}
  #allocation0 [shape = 'u32[]', space=smem, size = 0x4, offset = 0x4, fixed_abs, tag = 'smem constant byte address 0x4 - core index']
  #allocation1 [shape = 'u32[144,128]{1,0:T(1,128)}', space=vmem, size = 0x12000, scoped, tag = 'internal scratch']
  #allocation2 [shape = 'f32[1,128]{1,0:T(1,128)}', space=vmem, size = 0x200, scoped, tag = 'scratch operand']
  #allocation3 [shape = 'f32[1,128]{1,0:T(1,128)}', space=vmem, size = 0x200, scoped, tag = 'scratch operand']
  %s0 = inlined_call_operand.vmem [shape: bf16[2,64,128], index: 0, kind: input, shape index: {}]
  %s1 = inlined_call_operand.vmem [shape: f32[2,1,128], index: 1, kind: output, shape index: {0}]
  %s2 = inlined_call_operand.vmem [shape: f32[2,1,128], index: 2, kind: output, shape index: {1}]
  %3 = xla_tuple %s1, %s2
  %s4 = sld [smem:[#allocation0]]
  $region53: #{generator_forward.29} parent=0
    _
  %s6 = ssub.s32 1, %s4
  %s7 = scalar_select 0, %s6, %s4
  loop: start=0, step=1, limit=4
  $region2: #{generator_forward.29} parent=0 // loop_pre_header
    _
  $region3: #{generator_forward.29} parent=0 // loop_header
    %s9 = sphi 0, %s13
    %p10 = scmp.ge.s32.totalorder %s9, 4
    %s16 = sphi 0, %s28
    %s17 = sphi 0, %s24
    %s18 = sphi 0, %s16
    %s19 = sphi 0, %s17
    %s20 = sphi 0, %s18
    %s21 = sphi 0, %s19
    %s33 = sphi 0, %s35
    %s36 = sphi 0, %s33
    %s37 = sphi 0, %s36
    %s53 = sphi 0, %s37
    %s59 = sphi 0, %s61
    %s62 = sphi 0, %s59
    %s63 = sphi 0, %s62
    %s79 = sphi 0, %s63
    %s85 = sphi 0, %s87
    %s88 = sphi 0, %s85
    %s89 = sphi 0, %s88
    %s105 = sphi 0, %s89
  $region4: #{generator_forward.29} parent=0 // loop_header_branch
    %12 = sbr.rel (%p10) target = $region8
  $region5: #{generator_forward.29} parent=0 // loop_body
    %s14 = ssub.s32 %s9, 1
    %s15 = ssub.s32 %s9, 2
    %s22 = sadd.s32 1, %s17
    %p23 = scmp.ge.s32.totalorder %s22, 1
    %s24 = scalar_select %p23, 0, %s22
    %s25 = sadd.s32 1, %s16
    %s26 = scalar_select %p23, %s25, %s16
    %p27 = scmp.ge.s32.totalorder %s26, 2
    %s28 = scalar_select %p27, 0, %s26
    %s29 = ssub.s32 %s16, %s28
    %s30 = ssub.s32 %s17, %s24
    %s31 = sor.u32 %s29, %s30
    %p32 = scmp.eq.s32.totalorder %s31, 0
    %s34 = sadd.s32 %s33, 1
    %s35 = scalar_select %p32, %s33, %s34
    %p38 = pneg %p32
    %p39 = scmp.eq.s32.totalorder %s9, 1
    %p40 = por %p38, %p39
    %p41 = scmp.ne.s32.totalorder %s33, %s36
    %p42 = scmp.eq.s32.totalorder %s9, 0
    %p43 = por %p41, %p42
    %p44 = scmp.ne.s32.totalorder %s33, %s36
    %p45 = scmp.eq.s32.totalorder %s14, 1
    %p46 = por %p44, %p45
    %p47 = scmp.ne.s32.totalorder %s36, %s37
    %p48 = scmp.eq.s32.totalorder %s14, 0
    %p49 = por %p47, %p48
    %p50 = scmp.ne.s32.totalorder %s36, %s37
    %p51 = scmp.eq.s32.totalorder %s15, 1
    %p52 = por %p50, %p51
    %p54 = scmp.ne.s32.totalorder %s37, %s53
    %p55 = scmp.eq.s32.totalorder %s15, 0
    %p56 = por %p54, %p55
    %s57 = ssub.s32 %s16, %s28
    %p58 = scmp.eq.s32.totalorder %s57, 0
    %s60 = sadd.s32 %s59, 1
    %s61 = scalar_select %p58, %s59, %s60
    %p64 = pneg %p58
    %p65 = scmp.eq.s32.totalorder %s9, 1
    %p66 = por %p64, %p65
    %p67 = scmp.ne.s32.totalorder %s59, %s62
    %p68 = scmp.eq.s32.totalorder %s9, 0
    %p69 = por %p67, %p68
    %p70 = scmp.ne.s32.totalorder %s59, %s62
    %p71 = scmp.eq.s32.totalorder %s14, 1
    %p72 = por %p70, %p71
    %p73 = scmp.ne.s32.totalorder %s62, %s63
    %p74 = scmp.eq.s32.totalorder %s14, 0
    %p75 = por %p73, %p74
    %p76 = scmp.ne.s32.totalorder %s62, %s63
    %p77 = scmp.eq.s32.totalorder %s15, 1
    %p78 = por %p76, %p77
    %p80 = scmp.ne.s32.totalorder %s63, %s79
    %p81 = scmp.eq.s32.totalorder %s15, 0
    %p82 = por %p80, %p81
    %s83 = ssub.s32 %s16, %s28
    %p84 = scmp.eq.s32.totalorder %s83, 0
    %s86 = sadd.s32 %s85, 1
    %s87 = scalar_select %p84, %s85, %s86
    %p90 = pneg %p84
    %p91 = scmp.eq.s32.totalorder %s9, 1
    %p92 = por %p90, %p91
    %p93 = scmp.ne.s32.totalorder %s85, %s88
    %p94 = scmp.eq.s32.totalorder %s9, 0
    %p95 = por %p93, %p94
    %p96 = scmp.ne.s32.totalorder %s85, %s88
    %p97 = scmp.eq.s32.totalorder %s14, 1
    %p98 = por %p96, %p97
    %p99 = scmp.ne.s32.totalorder %s88, %s89
    %p100 = scmp.eq.s32.totalorder %s14, 0
    %p101 = por %p99, %p100
    %p102 = scmp.ne.s32.totalorder %s88, %s89
    %p103 = scmp.eq.s32.totalorder %s15, 1
    %p104 = por %p102, %p103
    %p106 = scmp.ne.s32.totalorder %s89, %s105
    %p107 = scmp.eq.s32.totalorder %s15, 0
    %p108 = por %p106, %p107
    %p109 = scmp.le.s32.totalorder 1, %s9
    %p110 = scmp.lt.s32.totalorder %s9, 3
    %p111 = pnand %p109, %p110
    %p112 = pneg %p111
    // Predicated region
    $region9: #{generator_forward.29} parent=5 // pred_check
      _
    $region10: #{generator_forward.29} parent=5 // pred_check_branch
      %114 = sbr.rel (%p111) target = $region12
    $region11: #{generator_forward.29} parent=5 // pred_region
      %s115 = ssub.s32 %s9, 1
    $region12: #{generator_forward.29} parent=5 // pred_fallthru
      _
    %p116 = scmp.lt.s32.totalorder %s9, 2
    // Predicated region
    $region13: #{generator_forward.29} parent=5 // pred_check
      %p117 = pneg %p116
    $region14: #{generator_forward.29} parent=5 // pred_check_branch
      %119 = sbr.rel (%p117) target = $region16
    $region15: #{generator_forward.29} parent=5 // pred_region
      // Predicated region
      $region17: #{generator_forward.29} parent=15 // pred_check
        %p120 = pneg %p43
      $region18: #{generator_forward.29} parent=15 // pred_check_branch
        %122 = sbr.rel (%p120) target = $region20
      $region19: #{generator_forward.29} parent=15 // pred_region
        %s123 = smul.u32 8, %s17
        %p124 = scmp.lt.s32.totalorder %s16, 1
        %s125 = scalar_select %p124, %s16, 1
        %p126 = scmp.lt.s32.totalorder %s123, 7
        %s127 = scalar_select %p126, %s123, 7
        %s128 = smul.addr %s125, 8
        %s129 = sadd.s32 %s127, %s128
        %s130 = smul.addr %s129, 4
        %s131 = scalar_lea.vmem %s0, %s130
        %s132 = smul.u32 8, %s17
      $region20: #{generator_forward.29} parent=15 // pred_fallthru
        _
    $region16: #{generator_forward.29} parent=5 // pred_fallthru
      _
    %p133 = scmp.le.s32.totalorder 1, %s9
    %p134 = scmp.lt.s32.totalorder %s9, 3
    %p135 = pnand %p133, %p134
    %p136 = pneg %p135
    // Predicated region
    $region21: #{generator_forward.29} parent=5 // pred_check
      _
    $region22: #{generator_forward.29} parent=5 // pred_check_branch
      %138 = sbr.rel (%p135) target = $region24
    $region23: #{generator_forward.29} parent=5 // pred_region
      %s139 = ssub.s32 %s9, 1
      %s140 = smul.u32 8, %s19
      %p141 = scmp.lt.s32.totalorder %s18, 1
      %s142 = scalar_select %p141, %s18, 1
      %p143 = scmp.lt.s32.totalorder %s140, 7
      %s144 = scalar_select %p143, %s140, 7
      %s145 = smul.addr %s142, 8
      %s146 = sadd.s32 %s144, %s145
      %s147 = smul.addr %s146, 4
      %s148 = scalar_lea.vmem %s0, %s147
      %p149 = pneg %p49
      %p150 = pneg %p46
      %p151 = pneg %p75
      %p152 = pneg %p72
      %p153 = scmp.lt.s32.totalorder %s18, 1
      %s154 = scalar_select %p153, %s18, 1
      %s155 = scalar_lea.vmem %s1, %s154
      %p156 = pneg %p101
      %p157 = pneg %p98
      %p158 = scmp.lt.s32.totalorder %s18, 1
      %s159 = scalar_select %p158, %s18, 1
      %s160 = scalar_lea.vmem %s2, %s159
      %s161 = smul.u32 8, %s19
      %p162 = scmp.lt.s32.totalorder %s18, 1
      %s163 = scalar_select %p162, %s18, 1
      %p164 = scmp.lt.s32.totalorder %s161, 7
      %s165 = scalar_select %p164, %s161, 7
      %s166 = smul.addr %s163, 8
      %s167 = sadd.s32 %s165, %s166
      %s168 = smul.addr %s167, 4
      %s169 = scalar_lea.vmem %s0, %s168
      %s170 = smul.u32 8, %s19
      %p171 = scmp.lt.s32.totalorder %s18, 1
      %s172 = scalar_select %p171, %s18, 1
      %s173 = scalar_lea.vmem %s1, %s172
      %p174 = scmp.lt.s32.totalorder %s18, 1
      %s175 = scalar_select %p174, %s18, 1
      %s176 = scalar_lea.vmem %s2, %s175
      %p177 = scmp.eq.s32.totalorder %s19, 0
      // Predicated region
      $region25: #{generator_forward.29} parent=23 // pred_check
        %p178 = pneg %p177
      $region26: #{generator_forward.29} parent=23 // pred_check_branch
        %180 = sbr.rel (%p178) target = $region28
      $region27: #{generator_forward.29} parent=23 // pred_region
        %181 = vst [vmem:[#allocation2] sm:$0x1] 0.0
        %182 = vst [vmem:[#allocation3] sm:$0x1] 0.0
      $region28: #{generator_forward.29} parent=23 // pred_fallthru
        _
      %v183 = vld [vmem:[%s169] sm:$0xf]
      %v184 = vld [vmem:[%s169 + $0x4] sm:$0xf]
      %v185 = vld [vmem:[%s169 + $0x8] sm:$0xf]
      %v186 = vld [vmem:[%s169 + $0xc] sm:$0xf]
      %v187 = vld [vmem:[%s169 + $0x10] sm:$0xf]
      %v188 = vld [vmem:[%s169 + $0x14] sm:$0xf]
      %v189 = vld [vmem:[%s169 + $0x18] sm:$0xf]
      %v190 = vld [vmem:[%s169 + $0x1c] sm:$0xf]
      %v191 = vunpack.c.l.bf16 %v183
      %v192 = vunpack.c.l.bf16 %v184
      %v193 = vunpack.c.l.bf16 %v185
      %v194 = vunpack.c.l.bf16 %v186
      %v195 = vunpack.c.l.bf16 %v187
      %v196 = vunpack.c.l.bf16 %v188
      %v197 = vunpack.c.l.bf16 %v189
      %v198 = vunpack.c.l.bf16 %v190
      %v199 = vld [vmem:[#allocation2] sm:$0x1]
      %v200 = vadd.f32 %v191, %v192
      %v201 = vadd.f32 %v200, %v193
      %v202 = vadd.f32 %v201, %v194
      %v203 = vadd.f32 %v202, %v195
      %v204 = vadd.f32 %v203, %v196
      %v205 = vadd.f32 %v204, %v197
      %v206 = vadd.f32 %v205, %v198
      %v207 = vrot.slane %v206, 4
      %v208 = vadd.f32 %v206, %v207
      %v209 = vrot.slane %v208, 2
      %v210 = vadd.f32 %v208, %v209
      %v211 = vrot.slane %v210, 1
      %v212 = vadd.f32 %v210, %v211
      %v213 = vadd.f32 %v199, %v212
      %214 = vst [vmem:[#allocation2] sm:$0x1] %v213
      %v215 = vld [vmem:[#allocation3] sm:$0x1]
      %v216 = vmul.f32 %v191, %v191
      %v217 = vmul.f32 %v192, %v192
      %v218 = vmul.f32 %v193, %v193
      %v219 = vmul.f32 %v194, %v194
      %v220 = vmul.f32 %v195, %v195
      %v221 = vmul.f32 %v196, %v196
      %v222 = vmul.f32 %v197, %v197
      %v223 = vmul.f32 %v198, %v198
      %v224 = vadd.f32 %v216, %v217
      %v225 = vadd.f32 %v224, %v218
      %v226 = vadd.f32 %v225, %v219
      %v227 = vadd.f32 %v226, %v220
      %v228 = vadd.f32 %v227, %v221
      %v229 = vadd.f32 %v228, %v222
      %v230 = vadd.f32 %v229, %v223
      %v231 = vrot.slane %v230, 4
      %v232 = vadd.f32 %v230, %v231
      %v233 = vrot.slane %v232, 2
      %v234 = vadd.f32 %v232, %v233
      %v235 = vrot.slane %v234, 1
      %v236 = vadd.f32 %v234, %v235
      %v237 = vadd.f32 %v215, %v236
      %238 = vst [vmem:[#allocation3] sm:$0x1] %v237
      // Predicated region
      $region29: #{generator_forward.29} parent=23 // pred_check
        %p239 = pneg %p177
      $region30: #{generator_forward.29} parent=23 // pred_check_branch
        %241 = sbr.rel (%p239) target = $region32
      $region31: #{generator_forward.29} parent=23 // pred_region
        %v242 = vld [vmem:[#allocation2] sm:$0x1]
        %243 = vst [vmem:[%s173] sm:$0x1] %v242
        %v244 = vld [vmem:[#allocation3] sm:$0x1]
        %245 = vst [vmem:[%s176] sm:$0x1] %v244
      $region32: #{generator_forward.29} parent=23 // pred_fallthru
        _
      %p246 = scmp.lt.s32.totalorder %s18, 1
      %s247 = scalar_select %p246, %s18, 1
      %s248 = scalar_lea.vmem %s1, %s247
      %p249 = scmp.lt.s32.totalorder %s18, 1
      %s250 = scalar_select %p249, %s18, 1
      %s251 = scalar_lea.vmem %s2, %s250
      // Predicated region
      $region33: #{generator_forward.29} parent=23 // pred_check
        %p252 = pneg %p72
      $region34: #{generator_forward.29} parent=23 // pred_check_branch
        %254 = sbr.rel (%p252) target = $region36
      $region35: #{generator_forward.29} parent=23 // pred_region
        _
      $region36: #{generator_forward.29} parent=23 // pred_fallthru
        _
      // Predicated region
      $region37: #{generator_forward.29} parent=23 // pred_check
        %p255 = pneg %p98
      $region38: #{generator_forward.29} parent=23 // pred_check_branch
        %257 = sbr.rel (%p255) target = $region40
      $region39: #{generator_forward.29} parent=23 // pred_region
        _
      $region40: #{generator_forward.29} parent=23 // pred_fallthru
        _
    $region24: #{generator_forward.29} parent=5 // pred_fallthru
      _
    %p258 = scmp.le.s32.totalorder 2, %s9
    // Predicated region
    $region41: #{generator_forward.29} parent=5 // pred_check
      %p259 = pneg %p258
    $region42: #{generator_forward.29} parent=5 // pred_check_branch
      %261 = sbr.rel (%p259) target = $region44
    $region43: #{generator_forward.29} parent=5 // pred_region
      %s262 = ssub.s32 %s9, 2
      // Predicated region
      $region45: #{generator_forward.29} parent=43 // pred_check
        %p263 = pneg %p78
      $region46: #{generator_forward.29} parent=43 // pred_check_branch
        %265 = sbr.rel (%p263) target = $region48
      $region47: #{generator_forward.29} parent=43 // pred_region
        %p266 = scmp.lt.s32.totalorder %s20, 1
        %s267 = scalar_select %p266, %s20, 1
        %s268 = scalar_lea.vmem %s1, %s267
      $region48: #{generator_forward.29} parent=43 // pred_fallthru
        _
      // Predicated region
      $region49: #{generator_forward.29} parent=43 // pred_check
        %p269 = pneg %p104
      $region50: #{generator_forward.29} parent=43 // pred_check_branch
        %271 = sbr.rel (%p269) target = $region52
      $region51: #{generator_forward.29} parent=43 // pred_region
        %p272 = scmp.lt.s32.totalorder %s20, 1
        %s273 = scalar_select %p272, %s20, 1
        %s274 = scalar_lea.vmem %s2, %s273
      $region52: #{generator_forward.29} parent=43 // pred_fallthru
        _
    $region44: #{generator_forward.29} parent=5 // pred_fallthru
      _
  $region6: #{generator_forward.29} parent=0 // loop_footer
    %s13 = sadd.s32 1, %s9
  $region7: #{generator_forward.29} parent=0 // loop_footer_branch
    %8 = sbr.rel target = $region3
  $region8: #{generator_forward.29} parent=0 // loop_exit
    _

// kernel: generator_forward.28
$region0: #{generator_forward.28}
  #allocation0 [shape = 'u32[]', space=smem, size = 0x4, offset = 0x4, fixed_abs, tag = 'smem constant byte address 0x4 - core index']
  #allocation1 [shape = 'u32[144,128]{1,0:T(1,128)}', space=vmem, size = 0x12000, scoped, tag = 'internal scratch']
  %s0 = inlined_call_operand.vmem [shape: bf16[512,147], index: 0, kind: input, shape index: {}]
  %s1 = inlined_call_operand.vmem [shape: bf16[147,128], index: 1, kind: input, shape index: {}]
  %s2 = inlined_call_operand.vmem [shape: f32[1,128], index: 2, kind: input, shape index: {}]
  %s3 = inlined_call_operand.vmem [shape: bf16[512,128], index: 3, kind: output, shape index: {}]
  %s4 = sld [smem:[#allocation0]]
  $region45: #{generator_forward.28} parent=0
    _
  %s6 = ssub.s32 1, %s4
  %s7 = scalar_select 0, %s6, %s4
  loop: start=0, step=1, limit=4
  $region2: #{generator_forward.28} parent=0 // loop_pre_header
    _
  $region3: #{generator_forward.28} parent=0 // loop_header
    %s9 = sphi 0, %s13
    %p10 = scmp.ge.s32.totalorder %s9, 4
    %s19 = sphi 0, %s21
    %s22 = sphi 0, %s19
    %s23 = sphi 0, %s22
    %s39 = sphi 0, %s23
    %s43 = sphi 0, %s43
    %s45 = sphi 0, %s43
    %s46 = sphi 0, %s45
    %s60 = sphi 0, %s46
    %s64 = sphi 0, %s64
    %s66 = sphi 0, %s64
    %s67 = sphi 0, %s66
    %s81 = sphi 0, %s67
    %s87 = sphi 0, %s89
    %s90 = sphi 0, %s87
    %s91 = sphi 0, %s90
    %s107 = sphi 0, %s91
  $region4: #{generator_forward.28} parent=0 // loop_header_branch
    %12 = sbr.rel (%p10) target = $region8
  $region5: #{generator_forward.28} parent=0 // loop_body
    %s14 = ssub.s32 %s9, 1
    %s15 = ssub.s32 %s9, 2
    %s16 = sadd.s32 %s9, 1
    %s17 = ssub.s32 %s9, %s16
    %p18 = scmp.eq.s32.totalorder %s17, 0
    %s20 = sadd.s32 %s19, 1
    %s21 = scalar_select %p18, %s19, %s20
    %p24 = pneg %p18
    %p25 = scmp.eq.s32.totalorder %s9, 1
    %p26 = por %p24, %p25
    %p27 = scmp.ne.s32.totalorder %s19, %s22
    %p28 = scmp.eq.s32.totalorder %s9, 0
    %p29 = por %p27, %p28
    %p30 = scmp.ne.s32.totalorder %s19, %s22
    %p31 = scmp.eq.s32.totalorder %s14, 1
    %p32 = por %p30, %p31
    %p33 = scmp.ne.s32.totalorder %s22, %s23
    %p34 = scmp.eq.s32.totalorder %s14, 0
    %p35 = por %p33, %p34
    %p36 = scmp.ne.s32.totalorder %s22, %s23
    %p37 = scmp.eq.s32.totalorder %s15, 1
    %p38 = por %p36, %p37
    %p40 = scmp.ne.s32.totalorder %s23, %s39
    %p41 = scmp.eq.s32.totalorder %s15, 0
    %p42 = por %p40, %p41
    %s44 = sadd.s32 %s43, 1
    %p47 = scmp.eq.s32.totalorder %s9, 1
    %p48 = scmp.ne.s32.totalorder %s43, %s45
    %p49 = scmp.eq.s32.totalorder %s9, 0
    %p50 = por %p48, %p49
    %p51 = scmp.ne.s32.totalorder %s43, %s45
    %p52 = scmp.eq.s32.totalorder %s14, 1
    %p53 = por %p51, %p52
    %p54 = scmp.ne.s32.totalorder %s45, %s46
    %p55 = scmp.eq.s32.totalorder %s14, 0
    %p56 = por %p54, %p55
    %p57 = scmp.ne.s32.totalorder %s45, %s46
    %p58 = scmp.eq.s32.totalorder %s15, 1
    %p59 = por %p57, %p58
    %p61 = scmp.ne.s32.totalorder %s46, %s60
    %p62 = scmp.eq.s32.totalorder %s15, 0
    %p63 = por %p61, %p62
    %s65 = sadd.s32 %s64, 1
    %p68 = scmp.eq.s32.totalorder %s9, 1
    %p69 = scmp.ne.s32.totalorder %s64, %s66
    %p70 = scmp.eq.s32.totalorder %s9, 0
    %p71 = por %p69, %p70
    %p72 = scmp.ne.s32.totalorder %s64, %s66
    %p73 = scmp.eq.s32.totalorder %s14, 1
    %p74 = por %p72, %p73
    %p75 = scmp.ne.s32.totalorder %s66, %s67
    %p76 = scmp.eq.s32.totalorder %s14, 0
    %p77 = por %p75, %p76
    %p78 = scmp.ne.s32.totalorder %s66, %s67
    %p79 = scmp.eq.s32.totalorder %s15, 1
    %p80 = por %p78, %p79
    %p82 = scmp.ne.s32.totalorder %s67, %s81
    %p83 = scmp.eq.s32.totalorder %s15, 0
    %p84 = por %p82, %p83
    %s85 = ssub.s32 %s9, %s16
    %p86 = scmp.eq.s32.totalorder %s85, 0
    %s88 = sadd.s32 %s87, 1
    %s89 = scalar_select %p86, %s87, %s88
    %p92 = pneg %p86
    %p93 = scmp.eq.s32.totalorder %s9, 1
    %p94 = por %p92, %p93
    %p95 = scmp.ne.s32.totalorder %s87, %s90
    %p96 = scmp.eq.s32.totalorder %s9, 0
    %p97 = por %p95, %p96
    %p98 = scmp.ne.s32.totalorder %s87, %s90
    %p99 = scmp.eq.s32.totalorder %s14, 1
    %p100 = por %p98, %p99
    %p101 = scmp.ne.s32.totalorder %s90, %s91
    %p102 = scmp.eq.s32.totalorder %s14, 0
    %p103 = por %p101, %p102
    %p104 = scmp.ne.s32.totalorder %s90, %s91
    %p105 = scmp.eq.s32.totalorder %s15, 1
    %p106 = por %p104, %p105
    %p108 = scmp.ne.s32.totalorder %s91, %s107
    %p109 = scmp.eq.s32.totalorder %s15, 0
    %p110 = por %p108, %p109
    %p111 = scmp.le.s32.totalorder 1, %s9
    %p112 = scmp.lt.s32.totalorder %s9, 3
    %p113 = pnand %p111, %p112
    %p114 = pneg %p113
    // Predicated region
    $region9: #{generator_forward.28} parent=5 // pred_check
      _
    $region10: #{generator_forward.28} parent=5 // pred_check_branch
      %116 = sbr.rel (%p113) target = $region12
    $region11: #{generator_forward.28} parent=5 // pred_region
      %s117 = ssub.s32 %s9, 1
      // Predicated region
      $region13: #{generator_forward.28} parent=11 // pred_check
        %p118 = pneg %p56
      $region14: #{generator_forward.28} parent=11 // pred_check_branch
        %120 = sbr.rel (%p118) target = $region16
      $region15: #{generator_forward.28} parent=11 // pred_region
        _
      $region16: #{generator_forward.28} parent=11 // pred_fallthru
        _
      // Predicated region
      $region17: #{generator_forward.28} parent=11 // pred_check
        %p121 = pneg %p77
      $region18: #{generator_forward.28} parent=11 // pred_check_branch
        %123 = sbr.rel (%p121) target = $region20
      $region19: #{generator_forward.28} parent=11 // pred_region
        _
      $region20: #{generator_forward.28} parent=11 // pred_fallthru
        _
    $region12: #{generator_forward.28} parent=5 // pred_fallthru
      _
    %p124 = scmp.lt.s32.totalorder %s9, 2
    // Predicated region
    $region21: #{generator_forward.28} parent=5 // pred_check
      %p125 = pneg %p124
    $region22: #{generator_forward.28} parent=5 // pred_check_branch
      %127 = sbr.rel (%p125) target = $region24
    $region23: #{generator_forward.28} parent=5 // pred_region
      // Predicated region
      $region25: #{generator_forward.28} parent=23 // pred_check
        %p128 = pneg %p29
      $region26: #{generator_forward.28} parent=23 // pred_check_branch
        %130 = sbr.rel (%p128) target = $region28
      $region27: #{generator_forward.28} parent=23 // pred_region
        %s131 = smul.u32 32, %s9
        %p132 = scmp.lt.s32.totalorder %s131, 63
        %s133 = scalar_select %p132, %s131, 63
        %s134 = smul.addr %s133, 2
        %s135 = smul.addr %s134, 4
        %s136 = scalar_lea.vmem %s0, %s135
        %s137 = smul.u32 32, %s9
      $region28: #{generator_forward.28} parent=23 // pred_fallthru
        _
    $region24: #{generator_forward.28} parent=5 // pred_fallthru
      _
    %p138 = scmp.le.s32.totalorder 1, %s9
    %p139 = scmp.lt.s32.totalorder %s9, 3
    %p140 = pnand %p138, %p139
    %p141 = pneg %p140
    // Predicated region
    $region29: #{generator_forward.28} parent=5 // pred_check
      _
    $region30: #{generator_forward.28} parent=5 // pred_check_branch
      %143 = sbr.rel (%p140) target = $region32
    $region31: #{generator_forward.28} parent=5 // pred_region
      %s144 = ssub.s32 %s9, 1
      %s145 = smul.u32 32, %s14
      %p146 = scmp.lt.s32.totalorder %s145, 63
      %s147 = scalar_select %p146, %s145, 63
      %s148 = smul.addr %s147, 2
      %s149 = smul.addr %s148, 4
      %s150 = scalar_lea.vmem %s0, %s149
      %p151 = pneg %p35
      %p152 = pneg %p32
      %p153 = pneg %p56
      %p154 = pneg %p53
      %p155 = pneg %p77
      %p156 = pneg %p74
      %p157 = pneg %p103
      %p158 = pneg %p100
      %s159 = smul.u32 32, %s14
      %p160 = scmp.lt.s32.totalorder %s159, 63
      %s161 = scalar_select %p160, %s159, 63
      %s162 = smul.addr %s161, 4
      %s163 = scalar_lea.vmem %s3, %s162
      %s164 = smul.u32 32, %s14
      %p165 = scmp.lt.s32.totalorder %s164, 63
      %s166 = scalar_select %p165, %s164, 63
      %s167 = smul.addr %s166, 2
      %s168 = smul.addr %s167, 4
      %s169 = scalar_lea.vmem %s0, %s168
      %s170 = smul.u32 32, %s14
      %s171 = smul.u32 32, %s14
      %p172 = scmp.lt.s32.totalorder %s171, 63
      %s173 = scalar_select %p172, %s171, 63
      %s174 = smul.addr %s173, 4
      %s175 = scalar_lea.vmem %s3, %s174
      %s176 = smul.u32 32, %s14
      %v178 = vld [vmem:[%s169] sm:$0xff]
      %v179 = vld [vmem:[%s169 + $0x8] sm:$0xff]
      %v180 = vld [vmem:[%s169 + $0x10] sm:$0xff]
      %v181 = vld [vmem:[%s169 + $0x18] sm:$0xff]
      %v182 = vld [vmem:[%s169 + $0x20] sm:$0xff]
      %v183 = vld [vmem:[%s169 + $0x28] sm:$0xff]
      %v184 = vld [vmem:[%s169 + $0x30] sm:$0xff]
      %v185 = vld [vmem:[%s169 + $0x38] sm:$0xff]
      %v186 = vld [vmem:[%s169 + $0x40] sm:$0xff]
      %v187 = vld [vmem:[%s169 + $0x48] sm:$0xff]
      %v188 = vld [vmem:[%s169 + $0x50] sm:$0xff]
      %v189 = vld [vmem:[%s169 + $0x58] sm:$0xff]
      %v190 = vld [vmem:[%s169 + $0x60] sm:$0xff]
      %v191 = vld [vmem:[%s169 + $0x68] sm:$0xff]
      %v192 = vld [vmem:[%s169 + $0x70] sm:$0xff]
      %v193 = vld [vmem:[%s169 + $0x78] sm:$0xff]
      %v194 = vld [vmem:[%s169 + $0x80] sm:$0xff]
      %v195 = vld [vmem:[%s169 + $0x88] sm:$0xff]
      %v196 = vld [vmem:[%s169 + $0x90] sm:$0xff]
      %v197 = vld [vmem:[%s169 + $0x98] sm:$0xff]
      %v198 = vld [vmem:[%s169 + $0xa0] sm:$0xff]
      %v199 = vld [vmem:[%s169 + $0xa8] sm:$0xff]
      %v200 = vld [vmem:[%s169 + $0xb0] sm:$0xff]
      %v201 = vld [vmem:[%s169 + $0xb8] sm:$0xff]
      %v202 = vld [vmem:[%s169 + $0xc0] sm:$0xff]
      %v203 = vld [vmem:[%s169 + $0xc8] sm:$0xff]
      %v204 = vld [vmem:[%s169 + $0xd0] sm:$0xff]
      %v205 = vld [vmem:[%s169 + $0xd8] sm:$0xff]
      %v206 = vld [vmem:[%s169 + $0xe0] sm:$0xff]
      %v207 = vld [vmem:[%s169 + $0xe8] sm:$0xff]
      %v208 = vld [vmem:[%s169 + $0xf0] sm:$0xff]
      %v209 = vld [vmem:[%s169 + $0xf8] sm:$0xff]
      %v210 = vld [vmem:[%s1] sm:$0xf]
      %v211 = vld [vmem:[%s1 + $0x4] sm:$0xf]
      %v212 = vld [vmem:[%s1 + $0x8] sm:$0xf]
      %v213 = vld [vmem:[%s1 + $0xc] sm:$0xf]
      %v214 = vld [vmem:[%s1 + $0x10] sm:$0xf]
      %v215 = vld [vmem:[%s1 + $0x14] sm:$0xf]
      %v216 = vld [vmem:[%s1 + $0x18] sm:$0xf]
      %v217 = vld [vmem:[%s1 + $0x1c] sm:$0xf]
      %v218 = vld [vmem:[%s1 + $0x20] sm:$0xf]
      %v219 = vld [vmem:[%s1 + $0x24] sm:$0xf]
      %v220 = vld [vmem:[%s1 + $0x28] sm:$0xf]
      %v221 = vld [vmem:[%s1 + $0x2c] sm:$0xf]
      %v222 = vld [vmem:[%s1 + $0x30] sm:$0xf]
      %v223 = vld [vmem:[%s1 + $0x34] sm:$0xf]
      %v224 = vld [vmem:[%s1 + $0x38] sm:$0xf]
      %v225 = vld [vmem:[%s1 + $0x3c] sm:$0xf]
      %v226 = vld [vmem:[%s1 + $0x40] sm:$0xf]
      %v227 = vld [vmem:[%s1 + $0x44] sm:$0xf]
      %v228 = vld [vmem:[%s1 + $0x48] sm:$0x3]
      %v229 = vld [vmem:[%s2] sm:$0x1]
      %v231 = vlaneseq
      %v232 = vshrl.u32 %v231, 7
      %v233 = vsub.s32 0, %v232
      %v234 = vrot.slane %v229, %v233
      %v268 = vunpack.c.l.b16 %v178
      %v269 = vunpack.c.h.b16 %v178
      %v270 = vunpack.c.l.b16 %v179
      %v271 = vunpack.c.h.b16 %v179
      %v272 = vunpack.c.l.b16 %v180
      %v273 = vunpack.c.h.b16 %v180
      %v274 = vunpack.c.l.b16 %v181
      %v275 = vunpack.c.h.b16 %v181
      %v276 = vunpack.c.l.b16 %v182
      %v277 = vunpack.c.h.b16 %v182
      %v278 = vunpack.c.l.b16 %v183
      %v279 = vunpack.c.h.b16 %v183
      %v280 = vunpack.c.l.b16 %v184
      %v281 = vunpack.c.h.b16 %v184
      %v282 = vunpack.c.l.b16 %v185
      %v283 = vunpack.c.h.b16 %v185
      %v284 = vunpack.c.l.b16 %v186
      %v285 = vunpack.c.h.b16 %v186
      %v286 = vunpack.c.l.b16 %v187
      %v287 = vunpack.c.h.b16 %v187
      %v288 = vunpack.c.l.b16 %v188
      %v289 = vunpack.c.h.b16 %v188
      %v290 = vunpack.c.l.b16 %v189
      %v291 = vunpack.c.h.b16 %v189
      %v292 = vunpack.c.l.b16 %v190
      %v293 = vunpack.c.h.b16 %v190
      %v294 = vunpack.c.l.b16 %v191
      %v295 = vunpack.c.h.b16 %v191
      %v296 = vunpack.c.l.b16 %v192
      %v297 = vunpack.c.h.b16 %v192
      %v298 = vunpack.c.l.b16 %v193
      %v299 = vunpack.c.h.b16 %v193
      %v300 = vunpack.c.l.b16 %v194
      %v301 = vunpack.c.h.b16 %v194
      %v302 = vunpack.c.l.b16 %v195
      %v303 = vunpack.c.h.b16 %v195
      %v304 = vunpack.c.l.b16 %v196
      %v305 = vunpack.c.h.b16 %v196
      %v306 = vunpack.c.l.b16 %v197
      %v307 = vunpack.c.h.b16 %v197
      %v308 = vunpack.c.l.b16 %v198
      %v309 = vunpack.c.h.b16 %v198
      %v310 = vunpack.c.l.b16 %v199
      %v311 = vunpack.c.h.b16 %v199
      %v312 = vunpack.c.l.b16 %v200
      %v313 = vunpack.c.h.b16 %v200
      %v314 = vunpack.c.l.b16 %v201
      %v315 = vunpack.c.h.b16 %v201
      %v316 = vunpack.c.l.b16 %v202
      %v317 = vunpack.c.h.b16 %v202
      %v318 = vunpack.c.l.b16 %v203
      %v319 = vunpack.c.h.b16 %v203
      %v320 = vunpack.c.l.b16 %v204
      %v321 = vunpack.c.h.b16 %v204
      %v322 = vunpack.c.l.b16 %v205
      %v323 = vunpack.c.h.b16 %v205
      %v324 = vunpack.c.l.b16 %v206
      %v325 = vunpack.c.h.b16 %v206
      %v326 = vunpack.c.l.b16 %v207
      %v327 = vunpack.c.h.b16 %v207
      %v328 = vunpack.c.l.b16 %v208
      %v329 = vunpack.c.h.b16 %v208
      %v330 = vunpack.c.l.b16 %v209
      %v331 = vunpack.c.h.b16 %v209
      %v332 = vpack.c.b16 %v270, %v268
      %v333 = vpack.c.b16 %v271, %v269
      %v334 = vpack.c.b16 %v274, %v272
      %v335 = vpack.c.b16 %v275, %v273
      %v336 = vpack.c.b16 %v278, %v276
      %v337 = vpack.c.b16 %v279, %v277
      %v338 = vpack.c.b16 %v282, %v280
      %v339 = vpack.c.b16 %v283, %v281
      %v340 = vpack.c.b16 %v286, %v284
      %v341 = vpack.c.b16 %v287, %v285
      %v342 = vpack.c.b16 %v290, %v288
      %v343 = vpack.c.b16 %v291, %v289
      %v344 = vpack.c.b16 %v294, %v292
      %v345 = vpack.c.b16 %v295, %v293
      %v346 = vpack.c.b16 %v298, %v296
      %v347 = vpack.c.b16 %v299, %v297
      %v348 = vpack.c.b16 %v302, %v300
      %v349 = vpack.c.b16 %v303, %v301
      %v350 = vpack.c.b16 %v306, %v304
      %v351 = vpack.c.b16 %v307, %v305
      %v352 = vpack.c.b16 %v310, %v308
      %v353 = vpack.c.b16 %v311, %v309
      %v354 = vpack.c.b16 %v314, %v312
      %v355 = vpack.c.b16 %v315, %v313
      %v356 = vpack.c.b16 %v318, %v316
      %v357 = vpack.c.b16 %v319, %v317
      %v358 = vpack.c.b16 %v322, %v320
      %v359 = vpack.c.b16 %v323, %v321
      %v360 = vpack.c.b16 %v326, %v324
      %v361 = vpack.c.b16 %v327, %v325
      %v362 = vpack.c.b16 %v330, %v328
      %v363 = vpack.c.b16 %v331, %v329
      %v399 = vunpack.c.l.b16 %v210
      %v400 = vunpack.c.l.b16 %v211
      %v401 = vunpack.c.l.b16 %v212
      %v402 = vunpack.c.l.b16 %v213
      %v403 = vunpack.c.l.b16 %v214
      %v404 = vunpack.c.l.b16 %v215
      %v405 = vunpack.c.l.b16 %v216
      %v406 = vunpack.c.l.b16 %v217
      %v407 = vunpack.c.l.b16 %v218
      %v408 = vunpack.c.l.b16 %v219
      %v409 = vunpack.c.l.b16 %v220
      %v410 = vunpack.c.l.b16 %v221
      %v411 = vunpack.c.l.b16 %v222
      %v412 = vunpack.c.l.b16 %v223
      %v413 = vunpack.c.l.b16 %v224
      %v414 = vunpack.c.l.b16 %v225
      %v415 = vunpack.c.l.b16 %v226
      %v416 = vunpack.c.l.b16 %v227
      %v417 = vunpack.c.l.b16 %v228
      %v418 = vpack.c.b16 %v400, %v399
      %v419 = vpack.c.b16 %v402, %v401
      %v420 = vpack.c.b16 %v404, %v403
      %v421 = vpack.c.b16 %v406, %v405
      %v422 = vpack.c.b16 %v408, %v407
      %v423 = vpack.c.b16 %v410, %v409
      %v424 = vpack.c.b16 %v412, %v411
      %v425 = vpack.c.b16 %v414, %v413
      %v426 = vpack.c.b16 %v416, %v415
      %v427 = vpack.c.b16 %v417, %v417
      %vm437 = vcmask 154624
      %v439 = vsel %vm437, %v333, 0
      %v442 = vsel %vm437, %v335, 0
      %v445 = vsel %vm437, %v337, 0
      %v448 = vsel %vm437, %v339, 0
      %v451 = vsel %vm437, %v341, 0
      %v454 = vsel %vm437, %v343, 0
      %v457 = vsel %vm437, %v345, 0
      %v460 = vsel %vm437, %v347, 0
      %v463 = vsel %vm437, %v349, 0
      %v466 = vsel %vm437, %v351, 0
      %v469 = vsel %vm437, %v353, 0
      %v472 = vsel %vm437, %v355, 0
      %v475 = vsel %vm437, %v357, 0
      %v478 = vsel %vm437, %v359, 0
      %v481 = vsel %vm437, %v361, 0
      %v484 = vsel %vm437, %v363, 0
      %vm486 = vcmask 1040384
      %vm487 = vcmask 1041408
      %v488 = vsel %vm486, 4294967295, 65535
      %v489 = vsel %vm487, %v488, 0
      %v491 = vand.u32 %v427, %v489
      %493 = vmatprep.subr.bf16.mxu0 0
      %494 = vmatpush1.bf16.msra.mxu0 %v418
      %495 = vmatprep.subr.bf16.mxu0 0
      %496 = vmatpush1.bf16.msra.mxu0 %v419
      %497 = vmatprep.subr.bf16.mxu0 0
      %498 = vmatpush1.bf16.msra.mxu0 %v420
      %499 = vmatprep.subr.bf16.mxu0 0
      %500 = vmatpush1.bf16.msra.mxu0 %v421
      %501 = vmatprep.subr.bf16.mxu0 0
      %502 = vmatpush1.bf16.msra.mxu0 %v422
      %503 = vmatprep.subr.bf16.mxu0 0
      %504 = vmatpush1.bf16.msra.mxu0 %v423
      %505 = vmatprep.subr.bf16.mxu0 0
      %506 = vmatpush1.bf16.msra.mxu0 %v424
      %507 = vmatprep.subr.bf16.mxu0 0
      %508 = vmatpush1.bf16.msra.mxu0 %v425
      %509 = vmatprep.subr.bf16.mxu0 0
      %510 = vmatpush1.bf16.msra.mxu0 %v426
      %511 = vmatprep.subr.bf16.mxu0 0
      %512 = vmatpush1.bf16.msra.mxu0 %v491
      %513 = vmatprep.subr.bf16.mxu0 0
      %514 = vmatpush1.bf16.msra.mxu0 0
      %515 = vmatprep.subr.bf16.mxu0 0
      %516 = vmatpush1.bf16.msra.mxu0 0
      %517 = vmatprep.subr.bf16.mxu0 0
      %518 = vmatpush1.bf16.msra.mxu0 0
      %519 = vmatprep.subr.bf16.mxu0 0
      %520 = vmatpush1.bf16.msra.mxu0 0
      %521 = vmatprep.subr.bf16.mxu0 0
      %522 = vmatpush1.bf16.msra.mxu0 0
      %523 = vmatprep.subr.bf16.mxu0 0
      %524 = vmatpush1.bf16.msra.mxu0 0
      %525 = vmatprep.mubr.bf16.mxu0 %v439
      %526 = vmatmul.mubr.bf16.gmra.mrb[0].mxu0 %v332
      %v527 = vpop.f32.mrb[0].mxu0
      %v528 = vadd.f32 %v234, %v527
      %v529 = vpop.f32.mrb[0].mxu0
      %v530 = vpop.f32.mrb[0].mxu0
      %v531 = vadd.f32 %v234, %v530
      %v532 = vpop.f32.mrb[0].mxu0
      %533 = vmatprep.mubr.bf16.mxu0 %v442
      %534 = vmatmul.mubr.bf16.gmra.mrb[0].mxu0 %v334
      %v535 = vpop.f32.mrb[0].mxu0
      %v536 = vadd.f32 %v234, %v535
      %v537 = vpop.f32.mrb[0].mxu0
      %v538 = vpop.f32.mrb[0].mxu0
      %v539 = vadd.f32 %v234, %v538
      %v540 = vpop.f32.mrb[0].mxu0
      %541 = vmatprep.mubr.bf16.mxu0 %v445
      %542 = vmatmul.mubr.bf16.gmra.mrb[0].mxu0 %v336
      %v543 = vpop.f32.mrb[0].mxu0
      %v544 = vadd.f32 %v234, %v543
      %v545 = vpop.f32.mrb[0].mxu0
      %v546 = vpop.f32.mrb[0].mxu0
      %v547 = vadd.f32 %v234, %v546
      %v548 = vpop.f32.mrb[0].mxu0
      %549 = vmatprep.mubr.bf16.mxu0 %v448
      %550 = vmatmul.mubr.bf16.gmra.mrb[0].mxu0 %v338
      %v551 = vpop.f32.mrb[0].mxu0
      %v552 = vadd.f32 %v234, %v551
      %v553 = vpop.f32.mrb[0].mxu0
      %v554 = vpop.f32.mrb[0].mxu0
      %v555 = vadd.f32 %v234, %v554
      %v556 = vpop.f32.mrb[0].mxu0
      %557 = vmatprep.mubr.bf16.mxu0 %v451
      %558 = vmatmul.mubr.bf16.gmra.mrb[0].mxu0 %v340
      %v559 = vpop.f32.mrb[0].mxu0
      %v560 = vadd.f32 %v234, %v559
      %v561 = vpop.f32.mrb[0].mxu0
      %v562 = vpop.f32.mrb[0].mxu0
      %v563 = vadd.f32 %v234, %v562
      %v564 = vpop.f32.mrb[0].mxu0
      %565 = vmatprep.mubr.bf16.mxu0 %v454
      %566 = vmatmul.mubr.bf16.gmra.mrb[0].mxu0 %v342
      %v567 = vpop.f32.mrb[0].mxu0
      %v568 = vadd.f32 %v234, %v567
      %v569 = vpop.f32.mrb[0].mxu0
      %v570 = vpop.f32.mrb[0].mxu0
      %v571 = vadd.f32 %v234, %v570
      %v572 = vpop.f32.mrb[0].mxu0
      %573 = vmatprep.mubr.bf16.mxu0 %v457
      %574 = vmatmul.mubr.bf16.gmra.mrb[0].mxu0 %v344
      %v575 = vpop.f32.mrb[0].mxu0
      %v576 = vadd.f32 %v234, %v575
      %v577 = vpop.f32.mrb[0].mxu0
      %v578 = vpop.f32.mrb[0].mxu0
      %v579 = vadd.f32 %v234, %v578
      %v580 = vpop.f32.mrb[0].mxu0
      %581 = vmatprep.mubr.bf16.mxu0 %v460
      %582 = vmatmul.mubr.bf16.gmra.mrb[0].mxu0 %v346
      %v583 = vpop.f32.mrb[0].mxu0
      %v584 = vadd.f32 %v234, %v583
      %v585 = vpop.f32.mrb[0].mxu0
      %v586 = vpop.f32.mrb[0].mxu0
      %v587 = vadd.f32 %v234, %v586
      %v588 = vpop.f32.mrb[0].mxu0
      %589 = vmatprep.mubr.bf16.mxu0 %v463
      %590 = vmatmul.mubr.bf16.gmra.mrb[0].mxu0 %v348
      %v591 = vpop.f32.mrb[0].mxu0
      %v592 = vadd.f32 %v234, %v591
      %v593 = vpop.f32.mrb[0].mxu0
      %v594 = vpop.f32.mrb[0].mxu0
      %v595 = vadd.f32 %v234, %v594
      %v596 = vpop.f32.mrb[0].mxu0
      %597 = vmatprep.mubr.bf16.mxu0 %v466
      %598 = vmatmul.mubr.bf16.gmra.mrb[0].mxu0 %v350
      %v599 = vpop.f32.mrb[0].mxu0
      %v600 = vadd.f32 %v234, %v599
      %v601 = vpop.f32.mrb[0].mxu0
      %v602 = vpop.f32.mrb[0].mxu0
      %v603 = vadd.f32 %v234, %v602
      %v604 = vpop.f32.mrb[0].mxu0
      %605 = vmatprep.mubr.bf16.mxu0 %v469
      %606 = vmatmul.mubr.bf16.gmra.mrb[0].mxu0 %v352
      %v607 = vpop.f32.mrb[0].mxu0
      %v608 = vadd.f32 %v234, %v607
      %v609 = vpop.f32.mrb[0].mxu0
      %v610 = vpop.f32.mrb[0].mxu0
      %v611 = vadd.f32 %v234, %v610
      %v612 = vpop.f32.mrb[0].mxu0
      %613 = vmatprep.mubr.bf16.mxu0 %v472
      %614 = vmatmul.mubr.bf16.gmra.mrb[0].mxu0 %v354
      %v615 = vpop.f32.mrb[0].mxu0
      %v616 = vadd.f32 %v234, %v615
      %v617 = vpop.f32.mrb[0].mxu0
      %v618 = vpop.f32.mrb[0].mxu0
      %v619 = vadd.f32 %v234, %v618
      %v620 = vpop.f32.mrb[0].mxu0
      %621 = vmatprep.mubr.bf16.mxu0 %v475
      %622 = vmatmul.mubr.bf16.gmra.mrb[0].mxu0 %v356
      %v623 = vpop.f32.mrb[0].mxu0
      %v624 = vadd.f32 %v234, %v623
      %v625 = vpop.f32.mrb[0].mxu0
      %v626 = vpop.f32.mrb[0].mxu0
      %v627 = vadd.f32 %v234, %v626
      %v628 = vpop.f32.mrb[0].mxu0
      %629 = vmatprep.mubr.bf16.mxu0 %v478
      %630 = vmatmul.mubr.bf16.gmra.mrb[0].mxu0 %v358
      %v631 = vpop.f32.mrb[0].mxu0
      %v632 = vadd.f32 %v234, %v631
      %v633 = vpop.f32.mrb[0].mxu0
      %v634 = vpop.f32.mrb[0].mxu0
      %v635 = vadd.f32 %v234, %v634
      %v636 = vpop.f32.mrb[0].mxu0
      %637 = vmatprep.mubr.bf16.mxu0 %v481
      %638 = vmatmul.mubr.bf16.gmra.mrb[0].mxu0 %v360
      %v639 = vpop.f32.mrb[0].mxu0
      %v640 = vadd.f32 %v234, %v639
      %v641 = vpop.f32.mrb[0].mxu0
      %v642 = vpop.f32.mrb[0].mxu0
      %v643 = vadd.f32 %v234, %v642
      %v644 = vpop.f32.mrb[0].mxu0
      %645 = vmatprep.mubr.bf16.mxu0 %v484
      %646 = vmatmul.mubr.bf16.gmra.mrb[0].mxu0 %v362
      %v647 = vpop.f32.mrb[0].mxu0
      %v648 = vadd.f32 %v234, %v647
      %v649 = vpop.f32.mrb[0].mxu0
      %v650 = vpop.f32.mrb[0].mxu0
      %v651 = vadd.f32 %v234, %v650
      %v652 = vpop.f32.mrb[0].mxu0
      %653 = vdwg.mxu0
      %v654 = vpack.c.bf16 %v531, %v528
      %v655 = vpack.c.bf16 %v539, %v536
      %v656 = vpack.c.bf16 %v547, %v544
      %v657 = vpack.c.bf16 %v555, %v552
      %v658 = vpack.c.bf16 %v563, %v560
      %v659 = vpack.c.bf16 %v571, %v568
      %v660 = vpack.c.bf16 %v579, %v576
      %v661 = vpack.c.bf16 %v587, %v584
      %v662 = vpack.c.bf16 %v595, %v592
      %v663 = vpack.c.bf16 %v603, %v600
      %v664 = vpack.c.bf16 %v611, %v608
      %v665 = vpack.c.bf16 %v619, %v616
      %v666 = vpack.c.bf16 %v627, %v624
      %v667 = vpack.c.bf16 %v635, %v632
      %v668 = vpack.c.bf16 %v643, %v640
      %v669 = vpack.c.bf16 %v651, %v648
      %v686 = vunpack.c.l.b16 %v654
      %v687 = vunpack.c.h.b16 %v654
      %v688 = vunpack.c.l.b16 %v655
      %v689 = vunpack.c.h.b16 %v655
      %v690 = vunpack.c.l.b16 %v656
      %v691 = vunpack.c.h.b16 %v656
      %v692 = vunpack.c.l.b16 %v657
      %v693 = vunpack.c.h.b16 %v657
      %v694 = vunpack.c.l.b16 %v658
      %v695 = vunpack.c.h.b16 %v658
      %v696 = vunpack.c.l.b16 %v659
      %v697 = vunpack.c.h.b16 %v659
      %v698 = vunpack.c.l.b16 %v660
      %v699 = vunpack.c.h.b16 %v660
      %v700 = vunpack.c.l.b16 %v661
      %v701 = vunpack.c.h.b16 %v661
      %v702 = vunpack.c.l.b16 %v662
      %v703 = vunpack.c.h.b16 %v662
      %v704 = vunpack.c.l.b16 %v663
      %v705 = vunpack.c.h.b16 %v663
      %v706 = vunpack.c.l.b16 %v664
      %v707 = vunpack.c.h.b16 %v664
      %v708 = vunpack.c.l.b16 %v665
      %v709 = vunpack.c.h.b16 %v665
      %v710 = vunpack.c.l.b16 %v666
      %v711 = vunpack.c.h.b16 %v666
      %v712 = vunpack.c.l.b16 %v667
      %v713 = vunpack.c.h.b16 %v667
      %v714 = vunpack.c.l.b16 %v668
      %v715 = vunpack.c.h.b16 %v668
      %v716 = vunpack.c.l.b16 %v669
      %v717 = vunpack.c.h.b16 %v669
      %v718 = vpack.c.b16 %v686, %v686
      %v719 = vpack.c.b16 %v687, %v687
      %v720 = vpack.c.b16 %v688, %v688
      %v721 = vpack.c.b16 %v689, %v689
      %v722 = vpack.c.b16 %v690, %v690
      %v723 = vpack.c.b16 %v691, %v691
      %v724 = vpack.c.b16 %v692, %v692
      %v725 = vpack.c.b16 %v693, %v693
      %v726 = vpack.c.b16 %v694, %v694
      %v727 = vpack.c.b16 %v695, %v695
      %v728 = vpack.c.b16 %v696, %v696
      %v729 = vpack.c.b16 %v697, %v697
      %v730 = vpack.c.b16 %v698, %v698
      %v731 = vpack.c.b16 %v699, %v699
      %v732 = vpack.c.b16 %v700, %v700
      %v733 = vpack.c.b16 %v701, %v701
      %v734 = vpack.c.b16 %v702, %v702
      %v735 = vpack.c.b16 %v703, %v703
      %v736 = vpack.c.b16 %v704, %v704
      %v737 = vpack.c.b16 %v705, %v705
      %v738 = vpack.c.b16 %v706, %v706
      %v739 = vpack.c.b16 %v707, %v707
      %v740 = vpack.c.b16 %v708, %v708
      %v741 = vpack.c.b16 %v709, %v709
      %v742 = vpack.c.b16 %v710, %v710
      %v743 = vpack.c.b16 %v711, %v711
      %v744 = vpack.c.b16 %v712, %v712
      %v745 = vpack.c.b16 %v713, %v713
      %v746 = vpack.c.b16 %v714, %v714
      %v747 = vpack.c.b16 %v715, %v715
      %v748 = vpack.c.b16 %v716, %v716
      %v749 = vpack.c.b16 %v717, %v717
      %782 = vst [vmem:[%s175] sm:$0xf] %v718
      %783 = vst [vmem:[%s175 + $0x4] sm:$0xf] %v719
      %784 = vst [vmem:[%s175 + $0x8] sm:$0xf] %v720
      %785 = vst [vmem:[%s175 + $0xc] sm:$0xf] %v721
      %786 = vst [vmem:[%s175 + $0x10] sm:$0xf] %v722
      %787 = vst [vmem:[%s175 + $0x14] sm:$0xf] %v723
      %788 = vst [vmem:[%s175 + $0x18] sm:$0xf] %v724
      %789 = vst [vmem:[%s175 + $0x1c] sm:$0xf] %v725
      %790 = vst [vmem:[%s175 + $0x20] sm:$0xf] %v726
      %791 = vst [vmem:[%s175 + $0x24] sm:$0xf] %v727
      %792 = vst [vmem:[%s175 + $0x28] sm:$0xf] %v728
      %793 = vst [vmem:[%s175 + $0x2c] sm:$0xf] %v729
      %794 = vst [vmem:[%s175 + $0x30] sm:$0xf] %v730
      %795 = vst [vmem:[%s175 + $0x34] sm:$0xf] %v731
      %796 = vst [vmem:[%s175 + $0x38] sm:$0xf] %v732
      %797 = vst [vmem:[%s175 + $0x3c] sm:$0xf] %v733
      %798 = vst [vmem:[%s175 + $0x40] sm:$0xf] %v734
      %799 = vst [vmem:[%s175 + $0x44] sm:$0xf] %v735
      %800 = vst [vmem:[%s175 + $0x48] sm:$0xf] %v736
      %801 = vst [vmem:[%s175 + $0x4c] sm:$0xf] %v737
      %802 = vst [vmem:[%s175 + $0x50] sm:$0xf] %v738
      %803 = vst [vmem:[%s175 + $0x54] sm:$0xf] %v739
      %804 = vst [vmem:[%s175 + $0x58] sm:$0xf] %v740
      %805 = vst [vmem:[%s175 + $0x5c] sm:$0xf] %v741
      %806 = vst [vmem:[%s175 + $0x60] sm:$0xf] %v742
      %807 = vst [vmem:[%s175 + $0x64] sm:$0xf] %v743
      %808 = vst [vmem:[%s175 + $0x68] sm:$0xf] %v744
      %809 = vst [vmem:[%s175 + $0x6c] sm:$0xf] %v745
      %810 = vst [vmem:[%s175 + $0x70] sm:$0xf] %v746
      %811 = vst [vmem:[%s175 + $0x74] sm:$0xf] %v747
      %812 = vst [vmem:[%s175 + $0x78] sm:$0xf] %v748
      %813 = vst [vmem:[%s175 + $0x7c] sm:$0xf] %v749
      %s814 = smul.u32 32, %s14
      %p815 = scmp.lt.s32.totalorder %s814, 63
      %s816 = scalar_select %p815, %s814, 63
      %s817 = smul.addr %s816, 4
      %s818 = scalar_lea.vmem %s3, %s817
      // Predicated region
      $region33: #{generator_forward.28} parent=31 // pred_check
        %p819 = pneg %p100
      $region34: #{generator_forward.28} parent=31 // pred_check_branch
        %821 = sbr.rel (%p819) target = $region36
      $region35: #{generator_forward.28} parent=31 // pred_region
        %s822 = smul.u32 32, %s14
      $region36: #{generator_forward.28} parent=31 // pred_fallthru
        _
    $region32: #{generator_forward.28} parent=5 // pred_fallthru
      _
    %p823 = scmp.le.s32.totalorder 2, %s9
    // Predicated region
    $region37: #{generator_forward.28} parent=5 // pred_check
      %p824 = pneg %p823
    $region38: #{generator_forward.28} parent=5 // pred_check_branch
      %826 = sbr.rel (%p824) target = $region40
    $region39: #{generator_forward.28} parent=5 // pred_region
      %s827 = ssub.s32 %s9, 2
      // Predicated region
      $region41: #{generator_forward.28} parent=39 // pred_check
        %p828 = pneg %p106
      $region42: #{generator_forward.28} parent=39 // pred_check_branch
        %830 = sbr.rel (%p828) target = $region44
      $region43: #{generator_forward.28} parent=39 // pred_region
        %s831 = smul.u32 32, %s15
        %p832 = scmp.lt.s32.totalorder %s831, 63
        %s833 = scalar_select %p832, %s831, 63
        %s834 = smul.addr %s833, 4
        %s835 = scalar_lea.vmem %s3, %s834
      $region44: #{generator_forward.28} parent=39 // pred_fallthru
        _
    $region40: #{generator_forward.28} parent=5 // pred_fallthru
      _
  $region6: #{generator_forward.28} parent=0 // loop_footer
    %s13 = sadd.s32 1, %s9
  $region7: #{generator_forward.28} parent=0 // loop_footer_branch
    %8 = sbr.rel target = $region3
  $region8: #{generator_forward.28} parent=0 // loop_exit
    _

// kernel: generator_forward.30
$region0: #{generator_forward.30}
  #allocation0 [shape = 'u32[]', space=smem, size = 0x4, offset = 0x4, fixed_abs, tag = 'smem constant byte address 0x4 - core index']
  #allocation1 [shape = 'u32[144,128]{1,0:T(1,128)}', space=vmem, size = 0x12000, scoped, tag = 'internal scratch']
  %s0 = inlined_call_operand.vmem [shape: bf16[2,64,128], index: 0, kind: input, shape index: {}]
  %s1 = inlined_call_operand.vmem [shape: f32[2,1,128], index: 1, kind: input, shape index: {}]
  %s2 = inlined_call_operand.vmem [shape: f32[2,1,128], index: 2, kind: input, shape index: {}]
  %s3 = inlined_call_operand.vmem [shape: bf16[2,64,128], index: 3, kind: output, shape index: {}]
  %s4 = sld [smem:[#allocation0]]
  $region45: #{generator_forward.30} parent=0
    _
  %s6 = ssub.s32 1, %s4
  %s7 = scalar_select 0, %s6, %s4
  loop: start=0, step=1, limit=4
  $region2: #{generator_forward.30} parent=0 // loop_pre_header
    _
  $region3: #{generator_forward.30} parent=0 // loop_header
    %s9 = sphi 0, %s13
    %p10 = scmp.ge.s32.totalorder %s9, 4
    %s16 = sphi 0, %s28
    %s17 = sphi 0, %s24
    %s18 = sphi 0, %s16
    %s19 = sphi 0, %s17
    %s20 = sphi 0, %s18
    %s21 = sphi 0, %s19
    %s33 = sphi 0, %s35
    %s36 = sphi 0, %s33
    %s37 = sphi 0, %s36
    %s53 = sphi 0, %s37
    %s59 = sphi 0, %s61
    %s62 = sphi 0, %s59
    %s63 = sphi 0, %s62
    %s79 = sphi 0, %s63
    %s85 = sphi 0, %s87
    %s88 = sphi 0, %s85
    %s89 = sphi 0, %s88
    %s105 = sphi 0, %s89
    %s113 = sphi 0, %s115
    %s116 = sphi 0, %s113
    %s117 = sphi 0, %s116
    %s133 = sphi 0, %s117
  $region4: #{generator_forward.30} parent=0 // loop_header_branch
    %12 = sbr.rel (%p10) target = $region8
  $region5: #{generator_forward.30} parent=0 // loop_body
    %s14 = ssub.s32 %s9, 1
    %s15 = ssub.s32 %s9, 2
    %s22 = sadd.s32 1, %s17
    %p23 = scmp.ge.s32.totalorder %s22, 1
    %s24 = scalar_select %p23, 0, %s22
    %s25 = sadd.s32 1, %s16
    %s26 = scalar_select %p23, %s25, %s16
    %p27 = scmp.ge.s32.totalorder %s26, 2
    %s28 = scalar_select %p27, 0, %s26
    %s29 = ssub.s32 %s16, %s28
    %s30 = ssub.s32 %s17, %s24
    %s31 = sor.u32 %s29, %s30
    %p32 = scmp.eq.s32.totalorder %s31, 0
    %s34 = sadd.s32 %s33, 1
    %s35 = scalar_select %p32, %s33, %s34
    %p38 = pneg %p32
    %p39 = scmp.eq.s32.totalorder %s9, 1
    %p40 = por %p38, %p39
    %p41 = scmp.ne.s32.totalorder %s33, %s36
    %p42 = scmp.eq.s32.totalorder %s9, 0
    %p43 = por %p41, %p42
    %p44 = scmp.ne.s32.totalorder %s33, %s36
    %p45 = scmp.eq.s32.totalorder %s14, 1
    %p46 = por %p44, %p45
    %p47 = scmp.ne.s32.totalorder %s36, %s37
    %p48 = scmp.eq.s32.totalorder %s14, 0
    %p49 = por %p47, %p48
    %p50 = scmp.ne.s32.totalorder %s36, %s37
    %p51 = scmp.eq.s32.totalorder %s15, 1
    %p52 = por %p50, %p51
    %p54 = scmp.ne.s32.totalorder %s37, %s53
    %p55 = scmp.eq.s32.totalorder %s15, 0
    %p56 = por %p54, %p55
    %s57 = ssub.s32 %s16, %s28
    %p58 = scmp.eq.s32.totalorder %s57, 0
    %s60 = sadd.s32 %s59, 1
    %s61 = scalar_select %p58, %s59, %s60
    %p64 = pneg %p58
    %p65 = scmp.eq.s32.totalorder %s9, 1
    %p66 = por %p64, %p65
    %p67 = scmp.ne.s32.totalorder %s59, %s62
    %p68 = scmp.eq.s32.totalorder %s9, 0
    %p69 = por %p67, %p68
    %p70 = scmp.ne.s32.totalorder %s59, %s62
    %p71 = scmp.eq.s32.totalorder %s14, 1
    %p72 = por %p70, %p71
    %p73 = scmp.ne.s32.totalorder %s62, %s63
    %p74 = scmp.eq.s32.totalorder %s14, 0
    %p75 = por %p73, %p74
    %p76 = scmp.ne.s32.totalorder %s62, %s63
    %p77 = scmp.eq.s32.totalorder %s15, 1
    %p78 = por %p76, %p77
    %p80 = scmp.ne.s32.totalorder %s63, %s79
    %p81 = scmp.eq.s32.totalorder %s15, 0
    %p82 = por %p80, %p81
    %s83 = ssub.s32 %s16, %s28
    %p84 = scmp.eq.s32.totalorder %s83, 0
    %s86 = sadd.s32 %s85, 1
    %s87 = scalar_select %p84, %s85, %s86
    %p90 = pneg %p84
    %p91 = scmp.eq.s32.totalorder %s9, 1
    %p92 = por %p90, %p91
    %p93 = scmp.ne.s32.totalorder %s85, %s88
    %p94 = scmp.eq.s32.totalorder %s9, 0
    %p95 = por %p93, %p94
    %p96 = scmp.ne.s32.totalorder %s85, %s88
    %p97 = scmp.eq.s32.totalorder %s14, 1
    %p98 = por %p96, %p97
    %p99 = scmp.ne.s32.totalorder %s88, %s89
    %p100 = scmp.eq.s32.totalorder %s14, 0
    %p101 = por %p99, %p100
    %p102 = scmp.ne.s32.totalorder %s88, %s89
    %p103 = scmp.eq.s32.totalorder %s15, 1
    %p104 = por %p102, %p103
    %p106 = scmp.ne.s32.totalorder %s89, %s105
    %p107 = scmp.eq.s32.totalorder %s15, 0
    %p108 = por %p106, %p107
    %s109 = ssub.s32 %s16, %s28
    %s110 = ssub.s32 %s17, %s24
    %s111 = sor.u32 %s109, %s110
    %p112 = scmp.eq.s32.totalorder %s111, 0
    %s114 = sadd.s32 %s113, 1
    %s115 = scalar_select %p112, %s113, %s114
    %p118 = pneg %p112
    %p119 = scmp.eq.s32.totalorder %s9, 1
    %p120 = por %p118, %p119
    %p121 = scmp.ne.s32.totalorder %s113, %s116
    %p122 = scmp.eq.s32.totalorder %s9, 0
    %p123 = por %p121, %p122
    %p124 = scmp.ne.s32.totalorder %s113, %s116
    %p125 = scmp.eq.s32.totalorder %s14, 1
    %p126 = por %p124, %p125
    %p127 = scmp.ne.s32.totalorder %s116, %s117
    %p128 = scmp.eq.s32.totalorder %s14, 0
    %p129 = por %p127, %p128
    %p130 = scmp.ne.s32.totalorder %s116, %s117
    %p131 = scmp.eq.s32.totalorder %s15, 1
    %p132 = por %p130, %p131
    %p134 = scmp.ne.s32.totalorder %s117, %s133
    %p135 = scmp.eq.s32.totalorder %s15, 0
    %p136 = por %p134, %p135
    %p137 = scmp.le.s32.totalorder 1, %s9
    %p138 = scmp.lt.s32.totalorder %s9, 3
    %p139 = pnand %p137, %p138
    %p140 = pneg %p139
    // Predicated region
    $region9: #{generator_forward.30} parent=5 // pred_check
      _
    $region10: #{generator_forward.30} parent=5 // pred_check_branch
      %142 = sbr.rel (%p139) target = $region12
    $region11: #{generator_forward.30} parent=5 // pred_region
      %s143 = ssub.s32 %s9, 1
    $region12: #{generator_forward.30} parent=5 // pred_fallthru
      _
    %p144 = scmp.lt.s32.totalorder %s9, 2
    // Predicated region
    $region13: #{generator_forward.30} parent=5 // pred_check
      %p145 = pneg %p144
    $region14: #{generator_forward.30} parent=5 // pred_check_branch
      %147 = sbr.rel (%p145) target = $region16
    $region15: #{generator_forward.30} parent=5 // pred_region
      // Predicated region
      $region17: #{generator_forward.30} parent=15 // pred_check
        %p148 = pneg %p43
      $region18: #{generator_forward.30} parent=15 // pred_check_branch
        %150 = sbr.rel (%p148) target = $region20
      $region19: #{generator_forward.30} parent=15 // pred_region
        %s151 = smul.u32 8, %s17
        %p152 = scmp.lt.s32.totalorder %s16, 1
        %s153 = scalar_select %p152, %s16, 1
        %p154 = scmp.lt.s32.totalorder %s151, 7
        %s155 = scalar_select %p154, %s151, 7
        %s156 = smul.addr %s153, 8
        %s157 = sadd.s32 %s155, %s156
        %s158 = smul.addr %s157, 4
        %s159 = scalar_lea.vmem %s0, %s158
        %s160 = smul.u32 8, %s17
      $region20: #{generator_forward.30} parent=15 // pred_fallthru
        _
      // Predicated region
      $region21: #{generator_forward.30} parent=15 // pred_check
        %p161 = pneg %p69
      $region22: #{generator_forward.30} parent=15 // pred_check_branch
        %163 = sbr.rel (%p161) target = $region24
      $region23: #{generator_forward.30} parent=15 // pred_region
        %p164 = scmp.lt.s32.totalorder %s16, 1
        %s165 = scalar_select %p164, %s16, 1
        %s166 = scalar_lea.vmem %s1, %s165
      $region24: #{generator_forward.30} parent=15 // pred_fallthru
        _
      // Predicated region
      $region25: #{generator_forward.30} parent=15 // pred_check
        %p167 = pneg %p95
      $region26: #{generator_forward.30} parent=15 // pred_check_branch
        %169 = sbr.rel (%p167) target = $region28
      $region27: #{generator_forward.30} parent=15 // pred_region
        %p170 = scmp.lt.s32.totalorder %s16, 1
        %s171 = scalar_select %p170, %s16, 1
        %s172 = scalar_lea.vmem %s2, %s171
      $region28: #{generator_forward.30} parent=15 // pred_fallthru
        _
    $region16: #{generator_forward.30} parent=5 // pred_fallthru
      _
    %p173 = scmp.le.s32.totalorder 1, %s9
    %p174 = scmp.lt.s32.totalorder %s9, 3
    %p175 = pnand %p173, %p174
    %p176 = pneg %p175
    // Predicated region
    $region29: #{generator_forward.30} parent=5 // pred_check
      _
    $region30: #{generator_forward.30} parent=5 // pred_check_branch
      %178 = sbr.rel (%p175) target = $region32
    $region31: #{generator_forward.30} parent=5 // pred_region
      %s179 = ssub.s32 %s9, 1
      %s180 = smul.u32 8, %s19
      %p181 = scmp.lt.s32.totalorder %s18, 1
      %s182 = scalar_select %p181, %s18, 1
      %p183 = scmp.lt.s32.totalorder %s180, 7
      %s184 = scalar_select %p183, %s180, 7
      %s185 = smul.addr %s182, 8
      %s186 = sadd.s32 %s184, %s185
      %s187 = smul.addr %s186, 4
      %s188 = scalar_lea.vmem %s0, %s187
      %p189 = pneg %p49
      %p190 = pneg %p46
      %p191 = scmp.lt.s32.totalorder %s18, 1
      %s192 = scalar_select %p191, %s18, 1
      %s193 = scalar_lea.vmem %s1, %s192
      %p194 = pneg %p75
      %p195 = pneg %p72
      %p196 = scmp.lt.s32.totalorder %s18, 1
      %s197 = scalar_select %p196, %s18, 1
      %s198 = scalar_lea.vmem %s2, %s197
      %p199 = pneg %p101
      %p200 = pneg %p98
      %p201 = pneg %p129
      %p202 = pneg %p126
      %s203 = smul.u32 8, %s19
      %p204 = scmp.lt.s32.totalorder %s18, 1
      %s205 = scalar_select %p204, %s18, 1
      %p206 = scmp.lt.s32.totalorder %s203, 7
      %s207 = scalar_select %p206, %s203, 7
      %s208 = smul.addr %s205, 8
      %s209 = sadd.s32 %s207, %s208
      %s210 = smul.addr %s209, 4
      %s211 = scalar_lea.vmem %s3, %s210
      %s212 = smul.u32 8, %s19
      %p213 = scmp.lt.s32.totalorder %s18, 1
      %s214 = scalar_select %p213, %s18, 1
      %p215 = scmp.lt.s32.totalorder %s212, 7
      %s216 = scalar_select %p215, %s212, 7
      %s217 = smul.addr %s214, 8
      %s218 = sadd.s32 %s216, %s217
      %s219 = smul.addr %s218, 4
      %s220 = scalar_lea.vmem %s0, %s219
      %s221 = smul.u32 8, %s19
      %p222 = scmp.lt.s32.totalorder %s18, 1
      %s223 = scalar_select %p222, %s18, 1
      %s224 = scalar_lea.vmem %s1, %s223
      %p225 = scmp.lt.s32.totalorder %s18, 1
      %s226 = scalar_select %p225, %s18, 1
      %s227 = scalar_lea.vmem %s2, %s226
      %s228 = smul.u32 8, %s19
      %p229 = scmp.lt.s32.totalorder %s18, 1
      %s230 = scalar_select %p229, %s18, 1
      %p231 = scmp.lt.s32.totalorder %s228, 7
      %s232 = scalar_select %p231, %s228, 7
      %s233 = smul.addr %s230, 8
      %s234 = sadd.s32 %s232, %s233
      %s235 = smul.addr %s234, 4
      %s236 = scalar_lea.vmem %s3, %s235
      %s237 = smul.u32 8, %s19
      %v238 = vld [vmem:[%s220] sm:$0xf]
      %v239 = vld [vmem:[%s220 + $0x4] sm:$0xf]
      %v240 = vld [vmem:[%s220 + $0x8] sm:$0xf]
      %v241 = vld [vmem:[%s220 + $0xc] sm:$0xf]
      %v242 = vld [vmem:[%s220 + $0x10] sm:$0xf]
      %v243 = vld [vmem:[%s220 + $0x14] sm:$0xf]
      %v244 = vld [vmem:[%s220 + $0x18] sm:$0xf]
      %v245 = vld [vmem:[%s220 + $0x1c] sm:$0xf]
      %v246 = vunpack.c.l.bf16 %v238
      %v247 = vunpack.c.l.bf16 %v239
      %v248 = vunpack.c.l.bf16 %v240
      %v249 = vunpack.c.l.bf16 %v241
      %v250 = vunpack.c.l.bf16 %v242
      %v251 = vunpack.c.l.bf16 %v243
      %v252 = vunpack.c.l.bf16 %v244
      %v253 = vunpack.c.l.bf16 %v245
      %v254 = vld [vmem:[%s224] sm:$0x1]
      %v256 = vlaneseq
      %v257 = vshrl.u32 %v256, 7
      %v258 = vsub.s32 0, %v257
      %v259 = vrot.slane %v254, %v258
      %v261 = vmul.f32 %v246, %v259
      %v262 = vmul.f32 %v247, %v259
      %v263 = vmul.f32 %v248, %v259
      %v264 = vmul.f32 %v249, %v259
      %v265 = vmul.f32 %v250, %v259
      %v266 = vmul.f32 %v251, %v259
      %v267 = vmul.f32 %v252, %v259
      %v268 = vmul.f32 %v253, %v259
      %v269 = vld [vmem:[%s227] sm:$0x1]
      %v271 = vlaneseq
      %v272 = vshrl.u32 %v271, 7
      %v273 = vsub.s32 0, %v272
      %v274 = vrot.slane %v269, %v273
      %v276 = vadd.f32 %v261, %v274
      %v277 = vadd.f32 %v262, %v274
      %v278 = vadd.f32 %v263, %v274
      %v279 = vadd.f32 %v264, %v274
      %v280 = vadd.f32 %v265, %v274
      %v281 = vadd.f32 %v266, %v274
      %v282 = vadd.f32 %v267, %v274
      %v283 = vadd.f32 %v268, %v274
      %v284 = vmax.f32 %v276, 0.0
      %v285 = vmax.f32 %v277, 0.0
      %v286 = vmax.f32 %v278, 0.0
      %v287 = vmax.f32 %v279, 0.0
      %v288 = vmax.f32 %v280, 0.0
      %v289 = vmax.f32 %v281, 0.0
      %v290 = vmax.f32 %v282, 0.0
      %v291 = vmax.f32 %v283, 0.0
      %v292 = vpack.c.bf16 %v285, %v284
      %v293 = vpack.c.bf16 %v287, %v286
      %v294 = vpack.c.bf16 %v289, %v288
      %v295 = vpack.c.bf16 %v291, %v290
      %v300 = vunpack.c.l.b16 %v292
      %v301 = vunpack.c.h.b16 %v292
      %v302 = vunpack.c.l.b16 %v293
      %v303 = vunpack.c.h.b16 %v293
      %v304 = vunpack.c.l.b16 %v294
      %v305 = vunpack.c.h.b16 %v294
      %v306 = vunpack.c.l.b16 %v295
      %v307 = vunpack.c.h.b16 %v295
      %v308 = vpack.c.b16 %v300, %v300
      %v309 = vpack.c.b16 %v301, %v301
      %v310 = vpack.c.b16 %v302, %v302
      %v311 = vpack.c.b16 %v303, %v303
      %v312 = vpack.c.b16 %v304, %v304
      %v313 = vpack.c.b16 %v305, %v305
      %v314 = vpack.c.b16 %v306, %v306
      %v315 = vpack.c.b16 %v307, %v307
      %324 = vst [vmem:[%s236] sm:$0xf] %v308
      %325 = vst [vmem:[%s236 + $0x4] sm:$0xf] %v309
      %326 = vst [vmem:[%s236 + $0x8] sm:$0xf] %v310
      %327 = vst [vmem:[%s236 + $0xc] sm:$0xf] %v311
      %328 = vst [vmem:[%s236 + $0x10] sm:$0xf] %v312
      %329 = vst [vmem:[%s236 + $0x14] sm:$0xf] %v313
      %330 = vst [vmem:[%s236 + $0x18] sm:$0xf] %v314
      %331 = vst [vmem:[%s236 + $0x1c] sm:$0xf] %v315
      %s332 = smul.u32 8, %s19
      %p333 = scmp.lt.s32.totalorder %s18, 1
      %s334 = scalar_select %p333, %s18, 1
      %p335 = scmp.lt.s32.totalorder %s332, 7
      %s336 = scalar_select %p335, %s332, 7
      %s337 = smul.addr %s334, 8
      %s338 = sadd.s32 %s336, %s337
      %s339 = smul.addr %s338, 4
      %s340 = scalar_lea.vmem %s3, %s339
      // Predicated region
      $region33: #{generator_forward.30} parent=31 // pred_check
        %p341 = pneg %p126
      $region34: #{generator_forward.30} parent=31 // pred_check_branch
        %343 = sbr.rel (%p341) target = $region36
      $region35: #{generator_forward.30} parent=31 // pred_region
        %s344 = smul.u32 8, %s19
      $region36: #{generator_forward.30} parent=31 // pred_fallthru
        _
    $region32: #{generator_forward.30} parent=5 // pred_fallthru
      _
    %p345 = scmp.le.s32.totalorder 2, %s9
    // Predicated region
    $region37: #{generator_forward.30} parent=5 // pred_check
      %p346 = pneg %p345
    $region38: #{generator_forward.30} parent=5 // pred_check_branch
      %348 = sbr.rel (%p346) target = $region40
    $region39: #{generator_forward.30} parent=5 // pred_region
      %s349 = ssub.s32 %s9, 2
      // Predicated region
      $region41: #{generator_forward.30} parent=39 // pred_check
        %p350 = pneg %p132
      $region42: #{generator_forward.30} parent=39 // pred_check_branch
        %352 = sbr.rel (%p350) target = $region44
      $region43: #{generator_forward.30} parent=39 // pred_region
        %s353 = smul.u32 8, %s21
        %p354 = scmp.lt.s32.totalorder %s20, 1
        %s355 = scalar_select %p354, %s20, 1
        %p356 = scmp.lt.s32.totalorder %s353, 7
        %s357 = scalar_select %p356, %s353, 7
        %s358 = smul.addr %s355, 8
        %s359 = sadd.s32 %s357, %s358
        %s360 = smul.addr %s359, 4
        %s361 = scalar_lea.vmem %s3, %s360
      $region44: #{generator_forward.30} parent=39 // pred_fallthru
        _
    $region40: #{generator_forward.30} parent=5 // pred_fallthru
      _
  $region6: #{generator_forward.30} parent=0 // loop_footer
    %s13 = sadd.s32 1, %s9
  $region7: #{generator_forward.30} parent=0 // loop_footer_branch
    %8 = sbr.rel target = $region3
  $region8: #{generator_forward.30} parent=0 // loop_exit
    _

// kernel: generator_forward.31
$region0: #{generator_forward.31}
  #allocation0 [shape = 'u32[]', space=smem, size = 0x4, offset = 0x4, fixed_abs, tag = 'smem constant byte address 0x4 - core index']
  #allocation1 [shape = 'u32[144,128]{1,0:T(1,128)}', space=vmem, size = 0x12000, scoped, tag = 'internal scratch']
  %s0 = inlined_call_operand.vmem [shape: bf16[128,512], index: 0, kind: input, shape index: {}]
  %s1 = inlined_call_operand.vmem [shape: bf16[512,128], index: 1, kind: input, shape index: {}]
  %s2 = inlined_call_operand.vmem [shape: f32[1,128], index: 2, kind: input, shape index: {}]
  %s3 = inlined_call_operand.vmem [shape: bf16[128,128], index: 3, kind: output, shape index: {}]
  %s4 = sld [smem:[#allocation0]]
  $region22: #{generator_forward.31} parent=0
    _
  %s6 = ssub.s32 1, %s4
  %s7 = scalar_select 0, %s6, %s4
  // Predicated region
  $region2: #{generator_forward.31} parent=0 // pred_check
    _
  $region3: #{generator_forward.31} parent=0 // pred_check_branch
    %9 = sbr.rel (0) target = $region5
  $region4: #{generator_forward.31} parent=0 // pred_region
    _
  $region5: #{generator_forward.31} parent=0 // pred_fallthru
    _
  // Predicated region
  $region6: #{generator_forward.31} parent=0 // pred_check
    _
  $region7: #{generator_forward.31} parent=0 // pred_check_branch
    %11 = sbr.rel (0) target = $region9
  $region8: #{generator_forward.31} parent=0 // pred_region
    _
  $region9: #{generator_forward.31} parent=0 // pred_fallthru
    _
  // Predicated region
  $region10: #{generator_forward.31} parent=0 // pred_check
    _
  $region11: #{generator_forward.31} parent=0 // pred_check_branch
    %13 = sbr.rel (0) target = $region13
  $region12: #{generator_forward.31} parent=0 // pred_region
    _
  $region13: #{generator_forward.31} parent=0 // pred_fallthru
    _
  %v15 = vld [vmem:[%s0] sm:$0xff]
  %v16 = vld [vmem:[%s0 + $0x8] sm:$0xff]
  %v17 = vld [vmem:[%s0 + $0x10] sm:$0xff]
  %v18 = vld [vmem:[%s0 + $0x18] sm:$0xff]
  %v19 = vld [vmem:[%s0 + $0x20] sm:$0xff]
  %v20 = vld [vmem:[%s0 + $0x28] sm:$0xff]
  %v21 = vld [vmem:[%s0 + $0x30] sm:$0xff]
  %v22 = vld [vmem:[%s0 + $0x38] sm:$0xff]
  %v23 = vld [vmem:[%s0 + $0x40] sm:$0xff]
  %v24 = vld [vmem:[%s0 + $0x48] sm:$0xff]
  %v25 = vld [vmem:[%s0 + $0x50] sm:$0xff]
  %v26 = vld [vmem:[%s0 + $0x58] sm:$0xff]
  %v27 = vld [vmem:[%s0 + $0x60] sm:$0xff]
  %v28 = vld [vmem:[%s0 + $0x68] sm:$0xff]
  %v29 = vld [vmem:[%s0 + $0x70] sm:$0xff]
  %v30 = vld [vmem:[%s0 + $0x78] sm:$0xff]
  %v31 = vld [vmem:[%s0 + $0x80] sm:$0xff]
  %v32 = vld [vmem:[%s0 + $0x88] sm:$0xff]
  %v33 = vld [vmem:[%s0 + $0x90] sm:$0xff]
  %v34 = vld [vmem:[%s0 + $0x98] sm:$0xff]
  %v35 = vld [vmem:[%s0 + $0xa0] sm:$0xff]
  %v36 = vld [vmem:[%s0 + $0xa8] sm:$0xff]
  %v37 = vld [vmem:[%s0 + $0xb0] sm:$0xff]
  %v38 = vld [vmem:[%s0 + $0xb8] sm:$0xff]
  %v39 = vld [vmem:[%s0 + $0xc0] sm:$0xff]
  %v40 = vld [vmem:[%s0 + $0xc8] sm:$0xff]
  %v41 = vld [vmem:[%s0 + $0xd0] sm:$0xff]
  %v42 = vld [vmem:[%s0 + $0xd8] sm:$0xff]
  %v43 = vld [vmem:[%s0 + $0xe0] sm:$0xff]
  %v44 = vld [vmem:[%s0 + $0xe8] sm:$0xff]
  %v45 = vld [vmem:[%s0 + $0xf0] sm:$0xff]
  %v46 = vld [vmem:[%s0 + $0xf8] sm:$0xff]
  %v47 = vld [vmem:[%s1] sm:$0xf]
  %v48 = vld [vmem:[%s1 + $0x4] sm:$0xf]
  %v49 = vld [vmem:[%s1 + $0x8] sm:$0xf]
  %v50 = vld [vmem:[%s1 + $0xc] sm:$0xf]
  %v51 = vld [vmem:[%s1 + $0x10] sm:$0xf]
  %v52 = vld [vmem:[%s1 + $0x14] sm:$0xf]
  %v53 = vld [vmem:[%s1 + $0x18] sm:$0xf]
  %v54 = vld [vmem:[%s1 + $0x1c] sm:$0xf]
  %v55 = vld [vmem:[%s1 + $0x20] sm:$0xf]
  %v56 = vld [vmem:[%s1 + $0x24] sm:$0xf]
  %v57 = vld [vmem:[%s1 + $0x28] sm:$0xf]
  %v58 = vld [vmem:[%s1 + $0x2c] sm:$0xf]
  %v59 = vld [vmem:[%s1 + $0x30] sm:$0xf]
  %v60 = vld [vmem:[%s1 + $0x34] sm:$0xf]
  %v61 = vld [vmem:[%s1 + $0x38] sm:$0xf]
  %v62 = vld [vmem:[%s1 + $0x3c] sm:$0xf]
  %v63 = vld [vmem:[%s1 + $0x40] sm:$0xf]
  %v64 = vld [vmem:[%s1 + $0x44] sm:$0xf]
  %v65 = vld [vmem:[%s1 + $0x48] sm:$0xf]
  %v66 = vld [vmem:[%s1 + $0x4c] sm:$0xf]
  %v67 = vld [vmem:[%s1 + $0x50] sm:$0xf]
  %v68 = vld [vmem:[%s1 + $0x54] sm:$0xf]
  %v69 = vld [vmem:[%s1 + $0x58] sm:$0xf]
  %v70 = vld [vmem:[%s1 + $0x5c] sm:$0xf]
  %v71 = vld [vmem:[%s1 + $0x60] sm:$0xf]
  %v72 = vld [vmem:[%s1 + $0x64] sm:$0xf]
  %v73 = vld [vmem:[%s1 + $0x68] sm:$0xf]
  %v74 = vld [vmem:[%s1 + $0x6c] sm:$0xf]
  %v75 = vld [vmem:[%s1 + $0x70] sm:$0xf]
  %v76 = vld [vmem:[%s1 + $0x74] sm:$0xf]
  %v77 = vld [vmem:[%s1 + $0x78] sm:$0xf]
  %v78 = vld [vmem:[%s1 + $0x7c] sm:$0xf]
  %v79 = vld [vmem:[%s1 + $0x80] sm:$0xf]
  %v80 = vld [vmem:[%s1 + $0x84] sm:$0xf]
  %v81 = vld [vmem:[%s1 + $0x88] sm:$0xf]
  %v82 = vld [vmem:[%s1 + $0x8c] sm:$0xf]
  %v83 = vld [vmem:[%s1 + $0x90] sm:$0xf]
  %v84 = vld [vmem:[%s1 + $0x94] sm:$0xf]
  %v85 = vld [vmem:[%s1 + $0x98] sm:$0xf]
  %v86 = vld [vmem:[%s1 + $0x9c] sm:$0xf]
  %v87 = vld [vmem:[%s1 + $0xa0] sm:$0xf]
  %v88 = vld [vmem:[%s1 + $0xa4] sm:$0xf]
  %v89 = vld [vmem:[%s1 + $0xa8] sm:$0xf]
  %v90 = vld [vmem:[%s1 + $0xac] sm:$0xf]
  %v91 = vld [vmem:[%s1 + $0xb0] sm:$0xf]
  %v92 = vld [vmem:[%s1 + $0xb4] sm:$0xf]
  %v93 = vld [vmem:[%s1 + $0xb8] sm:$0xf]
  %v94 = vld [vmem:[%s1 + $0xbc] sm:$0xf]
  %v95 = vld [vmem:[%s1 + $0xc0] sm:$0xf]
  %v96 = vld [vmem:[%s1 + $0xc4] sm:$0xf]
  %v97 = vld [vmem:[%s1 + $0xc8] sm:$0xf]
  %v98 = vld [vmem:[%s1 + $0xcc] sm:$0xf]
  %v99 = vld [vmem:[%s1 + $0xd0] sm:$0xf]
  %v100 = vld [vmem:[%s1 + $0xd4] sm:$0xf]
  %v101 = vld [vmem:[%s1 + $0xd8] sm:$0xf]
  %v102 = vld [vmem:[%s1 + $0xdc] sm:$0xf]
  %v103 = vld [vmem:[%s1 + $0xe0] sm:$0xf]
  %v104 = vld [vmem:[%s1 + $0xe4] sm:$0xf]
  %v105 = vld [vmem:[%s1 + $0xe8] sm:$0xf]
  %v106 = vld [vmem:[%s1 + $0xec] sm:$0xf]
  %v107 = vld [vmem:[%s1 + $0xf0] sm:$0xf]
  %v108 = vld [vmem:[%s1 + $0xf4] sm:$0xf]
  %v109 = vld [vmem:[%s1 + $0xf8] sm:$0xf]
  %v110 = vld [vmem:[%s1 + $0xfc] sm:$0xf]
  %v111 = vld [vmem:[%s2] sm:$0x1]
  %v113 = vlaneseq
  %v114 = vshrl.u32 %v113, 7
  %v115 = vsub.s32 0, %v114
  %v116 = vrot.slane %v111, %v115
  %v150 = vunpack.c.l.b16 %v15
  %v151 = vunpack.c.h.b16 %v15
  %v152 = vunpack.c.l.b16 %v16
  %v153 = vunpack.c.h.b16 %v16
  %v154 = vunpack.c.l.b16 %v17
  %v155 = vunpack.c.h.b16 %v17
  %v156 = vunpack.c.l.b16 %v18
  %v157 = vunpack.c.h.b16 %v18
  %v158 = vunpack.c.l.b16 %v19
  %v159 = vunpack.c.h.b16 %v19
  %v160 = vunpack.c.l.b16 %v20
  %v161 = vunpack.c.h.b16 %v20
  %v162 = vunpack.c.l.b16 %v21
  %v163 = vunpack.c.h.b16 %v21
  %v164 = vunpack.c.l.b16 %v22
  %v165 = vunpack.c.h.b16 %v22
  %v166 = vunpack.c.l.b16 %v23
  %v167 = vunpack.c.h.b16 %v23
  %v168 = vunpack.c.l.b16 %v24
  %v169 = vunpack.c.h.b16 %v24
  %v170 = vunpack.c.l.b16 %v25
  %v171 = vunpack.c.h.b16 %v25
  %v172 = vunpack.c.l.b16 %v26
  %v173 = vunpack.c.h.b16 %v26
  %v174 = vunpack.c.l.b16 %v27
  %v175 = vunpack.c.h.b16 %v27
  %v176 = vunpack.c.l.b16 %v28
  %v177 = vunpack.c.h.b16 %v28
  %v178 = vunpack.c.l.b16 %v29
  %v179 = vunpack.c.h.b16 %v29
  %v180 = vunpack.c.l.b16 %v30
  %v181 = vunpack.c.h.b16 %v30
  %v182 = vunpack.c.l.b16 %v31
  %v183 = vunpack.c.h.b16 %v31
  %v184 = vunpack.c.l.b16 %v32
  %v185 = vunpack.c.h.b16 %v32
  %v186 = vunpack.c.l.b16 %v33
  %v187 = vunpack.c.h.b16 %v33
  %v188 = vunpack.c.l.b16 %v34
  %v189 = vunpack.c.h.b16 %v34
  %v190 = vunpack.c.l.b16 %v35
  %v191 = vunpack.c.h.b16 %v35
  %v192 = vunpack.c.l.b16 %v36
  %v193 = vunpack.c.h.b16 %v36
  %v194 = vunpack.c.l.b16 %v37
  %v195 = vunpack.c.h.b16 %v37
  %v196 = vunpack.c.l.b16 %v38
  %v197 = vunpack.c.h.b16 %v38
  %v198 = vunpack.c.l.b16 %v39
  %v199 = vunpack.c.h.b16 %v39
  %v200 = vunpack.c.l.b16 %v40
  %v201 = vunpack.c.h.b16 %v40
  %v202 = vunpack.c.l.b16 %v41
  %v203 = vunpack.c.h.b16 %v41
  %v204 = vunpack.c.l.b16 %v42
  %v205 = vunpack.c.h.b16 %v42
  %v206 = vunpack.c.l.b16 %v43
  %v207 = vunpack.c.h.b16 %v43
  %v208 = vunpack.c.l.b16 %v44
  %v209 = vunpack.c.h.b16 %v44
  %v210 = vunpack.c.l.b16 %v45
  %v211 = vunpack.c.h.b16 %v45
  %v212 = vunpack.c.l.b16 %v46
  %v213 = vunpack.c.h.b16 %v46
  %v214 = vpack.c.b16 %v154, %v150
  %v215 = vpack.c.b16 %v155, %v151
  %v216 = vpack.c.b16 %v156, %v152
  %v217 = vpack.c.b16 %v157, %v153
  %v218 = vpack.c.b16 %v162, %v158
  %v219 = vpack.c.b16 %v163, %v159
  %v220 = vpack.c.b16 %v164, %v160
  %v221 = vpack.c.b16 %v165, %v161
  %v222 = vpack.c.b16 %v170, %v166
  %v223 = vpack.c.b16 %v171, %v167
  %v224 = vpack.c.b16 %v172, %v168
  %v225 = vpack.c.b16 %v173, %v169
  %v226 = vpack.c.b16 %v178, %v174
  %v227 = vpack.c.b16 %v179, %v175
  %v228 = vpack.c.b16 %v180, %v176
  %v229 = vpack.c.b16 %v181, %v177
  %v230 = vpack.c.b16 %v186, %v182
  %v231 = vpack.c.b16 %v187, %v183
  %v232 = vpack.c.b16 %v188, %v184
  %v233 = vpack.c.b16 %v189, %v185
  %v234 = vpack.c.b16 %v194, %v190
  %v235 = vpack.c.b16 %v195, %v191
  %v236 = vpack.c.b16 %v196, %v192
  %v237 = vpack.c.b16 %v197, %v193
  %v238 = vpack.c.b16 %v202, %v198
  %v239 = vpack.c.b16 %v203, %v199
  %v240 = vpack.c.b16 %v204, %v200
  %v241 = vpack.c.b16 %v205, %v201
  %v242 = vpack.c.b16 %v210, %v206
  %v243 = vpack.c.b16 %v211, %v207
  %v244 = vpack.c.b16 %v212, %v208
  %v245 = vpack.c.b16 %v213, %v209
  %v342 = vunpack.c.l.b16 %v47
  %v343 = vunpack.c.l.b16 %v48
  %v344 = vunpack.c.l.b16 %v49
  %v345 = vunpack.c.l.b16 %v50
  %v346 = vunpack.c.l.b16 %v51
  %v347 = vunpack.c.l.b16 %v52
  %v348 = vunpack.c.l.b16 %v53
  %v349 = vunpack.c.l.b16 %v54
  %v350 = vunpack.c.l.b16 %v55
  %v351 = vunpack.c.l.b16 %v56
  %v352 = vunpack.c.l.b16 %v57
  %v353 = vunpack.c.l.b16 %v58
  %v354 = vunpack.c.l.b16 %v59
  %v355 = vunpack.c.l.b16 %v60
  %v356 = vunpack.c.l.b16 %v61
  %v357 = vunpack.c.l.b16 %v62
  %v358 = vunpack.c.l.b16 %v63
  %v359 = vunpack.c.l.b16 %v64
  %v360 = vunpack.c.l.b16 %v65
  %v361 = vunpack.c.l.b16 %v66
  %v362 = vunpack.c.l.b16 %v67
  %v363 = vunpack.c.l.b16 %v68
  %v364 = vunpack.c.l.b16 %v69
  %v365 = vunpack.c.l.b16 %v70
  %v366 = vunpack.c.l.b16 %v71
  %v367 = vunpack.c.l.b16 %v72
  %v368 = vunpack.c.l.b16 %v73
  %v369 = vunpack.c.l.b16 %v74
  %v370 = vunpack.c.l.b16 %v75
  %v371 = vunpack.c.l.b16 %v76
  %v372 = vunpack.c.l.b16 %v77
  %v373 = vunpack.c.l.b16 %v78
  %v374 = vunpack.c.l.b16 %v79
  %v375 = vunpack.c.l.b16 %v80
  %v376 = vunpack.c.l.b16 %v81
  %v377 = vunpack.c.l.b16 %v82
  %v378 = vunpack.c.l.b16 %v83
  %v379 = vunpack.c.l.b16 %v84
  %v380 = vunpack.c.l.b16 %v85
  %v381 = vunpack.c.l.b16 %v86
  %v382 = vunpack.c.l.b16 %v87
  %v383 = vunpack.c.l.b16 %v88
  %v384 = vunpack.c.l.b16 %v89
  %v385 = vunpack.c.l.b16 %v90
  %v386 = vunpack.c.l.b16 %v91
  %v387 = vunpack.c.l.b16 %v92
  %v388 = vunpack.c.l.b16 %v93
  %v389 = vunpack.c.l.b16 %v94
  %v390 = vunpack.c.l.b16 %v95
  %v391 = vunpack.c.l.b16 %v96
  %v392 = vunpack.c.l.b16 %v97
  %v393 = vunpack.c.l.b16 %v98
  %v394 = vunpack.c.l.b16 %v99
  %v395 = vunpack.c.l.b16 %v100
  %v396 = vunpack.c.l.b16 %v101
  %v397 = vunpack.c.l.b16 %v102
  %v398 = vunpack.c.l.b16 %v103
  %v399 = vunpack.c.l.b16 %v104
  %v400 = vunpack.c.l.b16 %v105
  %v401 = vunpack.c.l.b16 %v106
  %v402 = vunpack.c.l.b16 %v107
  %v403 = vunpack.c.l.b16 %v108
  %v404 = vunpack.c.l.b16 %v109
  %v405 = vunpack.c.l.b16 %v110
  %v406 = vpack.c.b16 %v343, %v342
  %v407 = vpack.c.b16 %v345, %v344
  %v408 = vpack.c.b16 %v347, %v346
  %v409 = vpack.c.b16 %v349, %v348
  %v410 = vpack.c.b16 %v351, %v350
  %v411 = vpack.c.b16 %v353, %v352
  %v412 = vpack.c.b16 %v355, %v354
  %v413 = vpack.c.b16 %v357, %v356
  %v414 = vpack.c.b16 %v359, %v358
  %v415 = vpack.c.b16 %v361, %v360
  %v416 = vpack.c.b16 %v363, %v362
  %v417 = vpack.c.b16 %v365, %v364
  %v418 = vpack.c.b16 %v367, %v366
  %v419 = vpack.c.b16 %v369, %v368
  %v420 = vpack.c.b16 %v371, %v370
  %v421 = vpack.c.b16 %v373, %v372
  %v422 = vpack.c.b16 %v375, %v374
  %v423 = vpack.c.b16 %v377, %v376
  %v424 = vpack.c.b16 %v379, %v378
  %v425 = vpack.c.b16 %v381, %v380
  %v426 = vpack.c.b16 %v383, %v382
  %v427 = vpack.c.b16 %v385, %v384
  %v428 = vpack.c.b16 %v387, %v386
  %v429 = vpack.c.b16 %v389, %v388
  %v430 = vpack.c.b16 %v391, %v390
  %v431 = vpack.c.b16 %v393, %v392
  %v432 = vpack.c.b16 %v395, %v394
  %v433 = vpack.c.b16 %v397, %v396
  %v434 = vpack.c.b16 %v399, %v398
  %v435 = vpack.c.b16 %v401, %v400
  %v436 = vpack.c.b16 %v403, %v402
  %v437 = vpack.c.b16 %v405, %v404
  %470 = vmatprep.subr.bf16.mxu0 0
  %471 = vmatpush1.bf16.msra.mxu0 %v406
  %472 = vmatprep.subr.bf16.mxu0 0
  %473 = vmatpush1.bf16.msra.mxu0 %v407
  %474 = vmatprep.subr.bf16.mxu0 0
  %475 = vmatpush1.bf16.msra.mxu0 %v408
  %476 = vmatprep.subr.bf16.mxu0 0
  %477 = vmatpush1.bf16.msra.mxu0 %v409
  %478 = vmatprep.subr.bf16.mxu0 0
  %479 = vmatpush1.bf16.msra.mxu0 %v410
  %480 = vmatprep.subr.bf16.mxu0 0
  %481 = vmatpush1.bf16.msra.mxu0 %v411
  %482 = vmatprep.subr.bf16.mxu0 0
  %483 = vmatpush1.bf16.msra.mxu0 %v412
  %484 = vmatprep.subr.bf16.mxu0 0
  %485 = vmatpush1.bf16.msra.mxu0 %v413
  %486 = vmatprep.subr.bf16.mxu0 0
  %487 = vmatpush1.bf16.msra.mxu0 %v414
  %488 = vmatprep.subr.bf16.mxu0 0
  %489 = vmatpush1.bf16.msra.mxu0 %v415
  %490 = vmatprep.subr.bf16.mxu0 0
  %491 = vmatpush1.bf16.msra.mxu0 %v416
  %492 = vmatprep.subr.bf16.mxu0 0
  %493 = vmatpush1.bf16.msra.mxu0 %v417
  %494 = vmatprep.subr.bf16.mxu0 0
  %495 = vmatpush1.bf16.msra.mxu0 %v418
  %496 = vmatprep.subr.bf16.mxu0 0
  %497 = vmatpush1.bf16.msra.mxu0 %v419
  %498 = vmatprep.subr.bf16.mxu0 0
  %499 = vmatpush1.bf16.msra.mxu0 %v420
  %500 = vmatprep.subr.bf16.mxu0 0
  %501 = vmatpush1.bf16.msra.mxu0 %v421
  %502 = vmatprep.mubr.bf16.mxu0 %v215
  %503 = vmatmul.mubr.bf16.gmra.mrb[0].mxu0 %v214
  %v504 = vpop.f32.mrb[0].mxu0
  %v505 = vadd.f32 %v116, %v504
  %v506 = vpop.f32.mrb[0].mxu0
  %v507 = vpop.f32.mrb[0].mxu0
  %v508 = vadd.f32 %v116, %v507
  %v509 = vpop.f32.mrb[0].mxu0
  %510 = vmatprep.mubr.bf16.mxu0 %v219
  %511 = vmatmul.mubr.bf16.gmra.mrb[0].mxu0 %v218
  %v512 = vpop.f32.mrb[0].mxu0
  %v513 = vadd.f32 %v116, %v512
  %v514 = vpop.f32.mrb[0].mxu0
  %v515 = vpop.f32.mrb[0].mxu0
  %v516 = vadd.f32 %v116, %v515
  %v517 = vpop.f32.mrb[0].mxu0
  %518 = vmatprep.mubr.bf16.mxu0 %v223
  %519 = vmatmul.mubr.bf16.gmra.mrb[0].mxu0 %v222
  %v520 = vpop.f32.mrb[0].mxu0
  %v521 = vadd.f32 %v116, %v520
  %v522 = vpop.f32.mrb[0].mxu0
  %v523 = vpop.f32.mrb[0].mxu0
  %v524 = vadd.f32 %v116, %v523
  %v525 = vpop.f32.mrb[0].mxu0
  %526 = vmatprep.mubr.bf16.mxu0 %v227
  %527 = vmatmul.mubr.bf16.gmra.mrb[0].mxu0 %v226
  %v528 = vpop.f32.mrb[0].mxu0
  %v529 = vadd.f32 %v116, %v528
  %v530 = vpop.f32.mrb[0].mxu0
  %v531 = vpop.f32.mrb[0].mxu0
  %v532 = vadd.f32 %v116, %v531
  %v533 = vpop.f32.mrb[0].mxu0
  %534 = vmatprep.mubr.bf16.mxu0 %v231
  %535 = vmatmul.mubr.bf16.gmra.mrb[0].mxu0 %v230
  %v536 = vpop.f32.mrb[0].mxu0
  %v537 = vadd.f32 %v116, %v536
  %v538 = vpop.f32.mrb[0].mxu0
  %v539 = vpop.f32.mrb[0].mxu0
  %v540 = vadd.f32 %v116, %v539
  %v541 = vpop.f32.mrb[0].mxu0
  %542 = vmatprep.mubr.bf16.mxu0 %v235
  %543 = vmatmul.mubr.bf16.gmra.mrb[0].mxu0 %v234
  %v544 = vpop.f32.mrb[0].mxu0
  %v545 = vadd.f32 %v116, %v544
  %v546 = vpop.f32.mrb[0].mxu0
  %v547 = vpop.f32.mrb[0].mxu0
  %v548 = vadd.f32 %v116, %v547
  %v549 = vpop.f32.mrb[0].mxu0
  %550 = vmatprep.mubr.bf16.mxu0 %v239
  %551 = vmatmul.mubr.bf16.gmra.mrb[0].mxu0 %v238
  %v552 = vpop.f32.mrb[0].mxu0
  %v553 = vadd.f32 %v116, %v552
  %v554 = vpop.f32.mrb[0].mxu0
  %v555 = vpop.f32.mrb[0].mxu0
  %v556 = vadd.f32 %v116, %v555
  %v557 = vpop.f32.mrb[0].mxu0
  %558 = vmatprep.mubr.bf16.mxu0 %v243
  %559 = vmatmul.mubr.bf16.gmra.mrb[0].mxu0 %v242
  %v560 = vpop.f32.mrb[0].mxu0
  %v561 = vadd.f32 %v116, %v560
  %v562 = vpop.f32.mrb[0].mxu0
  %v563 = vpop.f32.mrb[0].mxu0
  %v564 = vadd.f32 %v116, %v563
  %v565 = vpop.f32.mrb[0].mxu0
  %566 = vdwg.mxu0
  %567 = vmatprep.subr.bf16.mxu0 0
  %568 = vmatpush1.bf16.msra.mxu0 %v422
  %569 = vmatprep.subr.bf16.mxu0 0
  %570 = vmatpush1.bf16.msra.mxu0 %v423
  %571 = vmatprep.subr.bf16.mxu0 0
  %572 = vmatpush1.bf16.msra.mxu0 %v424
  %573 = vmatprep.subr.bf16.mxu0 0
  %574 = vmatpush1.bf16.msra.mxu0 %v425
  %575 = vmatprep.subr.bf16.mxu0 0
  %576 = vmatpush1.bf16.msra.mxu0 %v426
  %577 = vmatprep.subr.bf16.mxu0 0
  %578 = vmatpush1.bf16.msra.mxu0 %v427
  %579 = vmatprep.subr.bf16.mxu0 0
  %580 = vmatpush1.bf16.msra.mxu0 %v428
  %581 = vmatprep.subr.bf16.mxu0 0
  %582 = vmatpush1.bf16.msra.mxu0 %v429
  %583 = vmatprep.subr.bf16.mxu0 0
  %584 = vmatpush1.bf16.msra.mxu0 %v430
  %585 = vmatprep.subr.bf16.mxu0 0
  %586 = vmatpush1.bf16.msra.mxu0 %v431
  %587 = vmatprep.subr.bf16.mxu0 0
  %588 = vmatpush1.bf16.msra.mxu0 %v432
  %589 = vmatprep.subr.bf16.mxu0 0
  %590 = vmatpush1.bf16.msra.mxu0 %v433
  %591 = vmatprep.subr.bf16.mxu0 0
  %592 = vmatpush1.bf16.msra.mxu0 %v434
  %593 = vmatprep.subr.bf16.mxu0 0
  %594 = vmatpush1.bf16.msra.mxu0 %v435
  %595 = vmatprep.subr.bf16.mxu0 0
  %596 = vmatpush1.bf16.msra.mxu0 %v436
  %597 = vmatprep.subr.bf16.mxu0 0
  %598 = vmatpush1.bf16.msra.mxu0 %v437
  %599 = vmatprep.mubr.bf16.mxu0 %v217
  %600 = vmatmul.mubr.bf16.gmra.mrb[0].mxu0 %v216
  %v601 = vpop.f32.mrb[0].mxu0
  %v602 = vadd.f32 %v505, %v601
  %v603 = vpop.f32.mrb[0].mxu0
  %v604 = vpop.f32.mrb[0].mxu0
  %v605 = vadd.f32 %v508, %v604
  %v606 = vpop.f32.mrb[0].mxu0
  %607 = vmatprep.mubr.bf16.mxu0 %v221
  %608 = vmatmul.mubr.bf16.gmra.mrb[0].mxu0 %v220
  %v609 = vpop.f32.mrb[0].mxu0
  %v610 = vadd.f32 %v513, %v609
  %v611 = vpop.f32.mrb[0].mxu0
  %v612 = vpop.f32.mrb[0].mxu0
  %v613 = vadd.f32 %v516, %v612
  %v614 = vpop.f32.mrb[0].mxu0
  %615 = vmatprep.mubr.bf16.mxu0 %v225
  %616 = vmatmul.mubr.bf16.gmra.mrb[0].mxu0 %v224
  %v617 = vpop.f32.mrb[0].mxu0
  %v618 = vadd.f32 %v521, %v617
  %v619 = vpop.f32.mrb[0].mxu0
  %v620 = vpop.f32.mrb[0].mxu0
  %v621 = vadd.f32 %v524, %v620
  %v622 = vpop.f32.mrb[0].mxu0
  %623 = vmatprep.mubr.bf16.mxu0 %v229
  %624 = vmatmul.mubr.bf16.gmra.mrb[0].mxu0 %v228
  %v625 = vpop.f32.mrb[0].mxu0
  %v626 = vadd.f32 %v529, %v625
  %v627 = vpop.f32.mrb[0].mxu0
  %v628 = vpop.f32.mrb[0].mxu0
  %v629 = vadd.f32 %v532, %v628
  %v630 = vpop.f32.mrb[0].mxu0
  %631 = vmatprep.mubr.bf16.mxu0 %v233
  %632 = vmatmul.mubr.bf16.gmra.mrb[0].mxu0 %v232
  %v633 = vpop.f32.mrb[0].mxu0
  %v634 = vadd.f32 %v537, %v633
  %v635 = vpop.f32.mrb[0].mxu0
  %v636 = vpop.f32.mrb[0].mxu0
  %v637 = vadd.f32 %v540, %v636
  %v638 = vpop.f32.mrb[0].mxu0
  %639 = vmatprep.mubr.bf16.mxu0 %v237
  %640 = vmatmul.mubr.bf16.gmra.mrb[0].mxu0 %v236
  %v641 = vpop.f32.mrb[0].mxu0
  %v642 = vadd.f32 %v545, %v641
  %v643 = vpop.f32.mrb[0].mxu0
  %v644 = vpop.f32.mrb[0].mxu0
  %v645 = vadd.f32 %v548, %v644
  %v646 = vpop.f32.mrb[0].mxu0
  %647 = vmatprep.mubr.bf16.mxu0 %v241
  %648 = vmatmul.mubr.bf16.gmra.mrb[0].mxu0 %v240
  %v649 = vpop.f32.mrb[0].mxu0
  %v650 = vadd.f32 %v553, %v649
  %v651 = vpop.f32.mrb[0].mxu0
  %v652 = vpop.f32.mrb[0].mxu0
  %v653 = vadd.f32 %v556, %v652
  %v654 = vpop.f32.mrb[0].mxu0
  %655 = vmatprep.mubr.bf16.mxu0 %v245
  %656 = vmatmul.mubr.bf16.gmra.mrb[0].mxu0 %v244
  %v657 = vpop.f32.mrb[0].mxu0
  %v658 = vadd.f32 %v561, %v657
  %v659 = vpop.f32.mrb[0].mxu0
  %v660 = vpop.f32.mrb[0].mxu0
  %v661 = vadd.f32 %v564, %v660
  %v662 = vpop.f32.mrb[0].mxu0
  %663 = vdwg.mxu0
  %v664 = vpack.c.bf16 %v605, %v602
  %v665 = vpack.c.bf16 %v613, %v610
  %v666 = vpack.c.bf16 %v621, %v618
  %v667 = vpack.c.bf16 %v629, %v626
  %v668 = vpack.c.bf16 %v637, %v634
  %v669 = vpack.c.bf16 %v645, %v642
  %v670 = vpack.c.bf16 %v653, %v650
  %v671 = vpack.c.bf16 %v661, %v658
  %v680 = vunpack.c.l.b16 %v664
  %v681 = vunpack.c.h.b16 %v664
  %v682 = vunpack.c.l.b16 %v665
  %v683 = vunpack.c.h.b16 %v665
  %v684 = vunpack.c.l.b16 %v666
  %v685 = vunpack.c.h.b16 %v666
  %v686 = vunpack.c.l.b16 %v667
  %v687 = vunpack.c.h.b16 %v667
  %v688 = vunpack.c.l.b16 %v668
  %v689 = vunpack.c.h.b16 %v668
  %v690 = vunpack.c.l.b16 %v669
  %v691 = vunpack.c.h.b16 %v669
  %v692 = vunpack.c.l.b16 %v670
  %v693 = vunpack.c.h.b16 %v670
  %v694 = vunpack.c.l.b16 %v671
  %v695 = vunpack.c.h.b16 %v671
  %v696 = vpack.c.b16 %v680, %v680
  %v697 = vpack.c.b16 %v681, %v681
  %v698 = vpack.c.b16 %v682, %v682
  %v699 = vpack.c.b16 %v683, %v683
  %v700 = vpack.c.b16 %v684, %v684
  %v701 = vpack.c.b16 %v685, %v685
  %v702 = vpack.c.b16 %v686, %v686
  %v703 = vpack.c.b16 %v687, %v687
  %v704 = vpack.c.b16 %v688, %v688
  %v705 = vpack.c.b16 %v689, %v689
  %v706 = vpack.c.b16 %v690, %v690
  %v707 = vpack.c.b16 %v691, %v691
  %v708 = vpack.c.b16 %v692, %v692
  %v709 = vpack.c.b16 %v693, %v693
  %v710 = vpack.c.b16 %v694, %v694
  %v711 = vpack.c.b16 %v695, %v695
  %728 = vst [vmem:[%s3] sm:$0xf] %v696
  %729 = vst [vmem:[%s3 + $0x4] sm:$0xf] %v697
  %730 = vst [vmem:[%s3 + $0x8] sm:$0xf] %v698
  %731 = vst [vmem:[%s3 + $0xc] sm:$0xf] %v699
  %732 = vst [vmem:[%s3 + $0x10] sm:$0xf] %v700
  %733 = vst [vmem:[%s3 + $0x14] sm:$0xf] %v701
  %734 = vst [vmem:[%s3 + $0x18] sm:$0xf] %v702
  %735 = vst [vmem:[%s3 + $0x1c] sm:$0xf] %v703
  %736 = vst [vmem:[%s3 + $0x20] sm:$0xf] %v704
  %737 = vst [vmem:[%s3 + $0x24] sm:$0xf] %v705
  %738 = vst [vmem:[%s3 + $0x28] sm:$0xf] %v706
  %739 = vst [vmem:[%s3 + $0x2c] sm:$0xf] %v707
  %740 = vst [vmem:[%s3 + $0x30] sm:$0xf] %v708
  %741 = vst [vmem:[%s3 + $0x34] sm:$0xf] %v709
  %742 = vst [vmem:[%s3 + $0x38] sm:$0xf] %v710
  %743 = vst [vmem:[%s3 + $0x3c] sm:$0xf] %v711
  // Predicated region
  $region14: #{generator_forward.31} parent=0 // pred_check
    _
  $region15: #{generator_forward.31} parent=0 // pred_check_branch
    %745 = sbr.rel (0) target = $region17
  $region16: #{generator_forward.31} parent=0 // pred_region
    _
  $region17: #{generator_forward.31} parent=0 // pred_fallthru
    _
  // Predicated region
  $region18: #{generator_forward.31} parent=0 // pred_check
    _
  $region19: #{generator_forward.31} parent=0 // pred_check_branch
    %747 = sbr.rel (0) target = $region21
  $region20: #{generator_forward.31} parent=0 // pred_region
    _
  $region21: #{generator_forward.31} parent=0 // pred_fallthru
    _

// kernel: generator_forward.32
$region0: #{generator_forward.32}
  #allocation0 [shape = 'u32[]', space=smem, size = 0x4, offset = 0x4, fixed_abs, tag = 'smem constant byte address 0x4 - core index']
  #allocation1 [shape = 'u32[144,128]{1,0:T(1,128)}', space=vmem, size = 0x12000, scoped, tag = 'internal scratch']
  #allocation2 [shape = 'f32[1,128]{1,0:T(1,128)}', space=vmem, size = 0x200, scoped, tag = 'scratch operand']
  #allocation3 [shape = 'f32[1,128]{1,0:T(1,128)}', space=vmem, size = 0x200, scoped, tag = 'scratch operand']
  %s0 = inlined_call_operand.vmem [shape: bf16[2,32,128], index: 0, kind: input, shape index: {}]
  %s1 = inlined_call_operand.vmem [shape: f32[2,1,128], index: 1, kind: output, shape index: {0}]
  %s2 = inlined_call_operand.vmem [shape: f32[2,1,128], index: 2, kind: output, shape index: {1}]
  %3 = xla_tuple %s1, %s2
  %s4 = sld [smem:[#allocation0]]
  $region53: #{generator_forward.32} parent=0
    _
  %s6 = ssub.s32 1, %s4
  %s7 = scalar_select 0, %s6, %s4
  loop: start=0, step=1, limit=4
  $region2: #{generator_forward.32} parent=0 // loop_pre_header
    _
  $region3: #{generator_forward.32} parent=0 // loop_header
    %s9 = sphi 0, %s13
    %p10 = scmp.ge.s32.totalorder %s9, 4
    %s16 = sphi 0, %s28
    %s17 = sphi 0, %s24
    %s18 = sphi 0, %s16
    %s19 = sphi 0, %s17
    %s20 = sphi 0, %s18
    %s21 = sphi 0, %s19
    %s33 = sphi 0, %s35
    %s36 = sphi 0, %s33
    %s37 = sphi 0, %s36
    %s53 = sphi 0, %s37
    %s59 = sphi 0, %s61
    %s62 = sphi 0, %s59
    %s63 = sphi 0, %s62
    %s79 = sphi 0, %s63
    %s85 = sphi 0, %s87
    %s88 = sphi 0, %s85
    %s89 = sphi 0, %s88
    %s105 = sphi 0, %s89
  $region4: #{generator_forward.32} parent=0 // loop_header_branch
    %12 = sbr.rel (%p10) target = $region8
  $region5: #{generator_forward.32} parent=0 // loop_body
    %s14 = ssub.s32 %s9, 1
    %s15 = ssub.s32 %s9, 2
    %s22 = sadd.s32 1, %s17
    %p23 = scmp.ge.s32.totalorder %s22, 1
    %s24 = scalar_select %p23, 0, %s22
    %s25 = sadd.s32 1, %s16
    %s26 = scalar_select %p23, %s25, %s16
    %p27 = scmp.ge.s32.totalorder %s26, 2
    %s28 = scalar_select %p27, 0, %s26
    %s29 = ssub.s32 %s16, %s28
    %s30 = ssub.s32 %s17, %s24
    %s31 = sor.u32 %s29, %s30
    %p32 = scmp.eq.s32.totalorder %s31, 0
    %s34 = sadd.s32 %s33, 1
    %s35 = scalar_select %p32, %s33, %s34
    %p38 = pneg %p32
    %p39 = scmp.eq.s32.totalorder %s9, 1
    %p40 = por %p38, %p39
    %p41 = scmp.ne.s32.totalorder %s33, %s36
    %p42 = scmp.eq.s32.totalorder %s9, 0
    %p43 = por %p41, %p42
    %p44 = scmp.ne.s32.totalorder %s33, %s36
    %p45 = scmp.eq.s32.totalorder %s14, 1
    %p46 = por %p44, %p45
    %p47 = scmp.ne.s32.totalorder %s36, %s37
    %p48 = scmp.eq.s32.totalorder %s14, 0
    %p49 = por %p47, %p48
    %p50 = scmp.ne.s32.totalorder %s36, %s37
    %p51 = scmp.eq.s32.totalorder %s15, 1
    %p52 = por %p50, %p51
    %p54 = scmp.ne.s32.totalorder %s37, %s53
    %p55 = scmp.eq.s32.totalorder %s15, 0
    %p56 = por %p54, %p55
    %s57 = ssub.s32 %s16, %s28
    %p58 = scmp.eq.s32.totalorder %s57, 0
    %s60 = sadd.s32 %s59, 1
    %s61 = scalar_select %p58, %s59, %s60
    %p64 = pneg %p58
    %p65 = scmp.eq.s32.totalorder %s9, 1
    %p66 = por %p64, %p65
    %p67 = scmp.ne.s32.totalorder %s59, %s62
    %p68 = scmp.eq.s32.totalorder %s9, 0
    %p69 = por %p67, %p68
    %p70 = scmp.ne.s32.totalorder %s59, %s62
    %p71 = scmp.eq.s32.totalorder %s14, 1
    %p72 = por %p70, %p71
    %p73 = scmp.ne.s32.totalorder %s62, %s63
    %p74 = scmp.eq.s32.totalorder %s14, 0
    %p75 = por %p73, %p74
    %p76 = scmp.ne.s32.totalorder %s62, %s63
    %p77 = scmp.eq.s32.totalorder %s15, 1
    %p78 = por %p76, %p77
    %p80 = scmp.ne.s32.totalorder %s63, %s79
    %p81 = scmp.eq.s32.totalorder %s15, 0
    %p82 = por %p80, %p81
    %s83 = ssub.s32 %s16, %s28
    %p84 = scmp.eq.s32.totalorder %s83, 0
    %s86 = sadd.s32 %s85, 1
    %s87 = scalar_select %p84, %s85, %s86
    %p90 = pneg %p84
    %p91 = scmp.eq.s32.totalorder %s9, 1
    %p92 = por %p90, %p91
    %p93 = scmp.ne.s32.totalorder %s85, %s88
    %p94 = scmp.eq.s32.totalorder %s9, 0
    %p95 = por %p93, %p94
    %p96 = scmp.ne.s32.totalorder %s85, %s88
    %p97 = scmp.eq.s32.totalorder %s14, 1
    %p98 = por %p96, %p97
    %p99 = scmp.ne.s32.totalorder %s88, %s89
    %p100 = scmp.eq.s32.totalorder %s14, 0
    %p101 = por %p99, %p100
    %p102 = scmp.ne.s32.totalorder %s88, %s89
    %p103 = scmp.eq.s32.totalorder %s15, 1
    %p104 = por %p102, %p103
    %p106 = scmp.ne.s32.totalorder %s89, %s105
    %p107 = scmp.eq.s32.totalorder %s15, 0
    %p108 = por %p106, %p107
    %p109 = scmp.le.s32.totalorder 1, %s9
    %p110 = scmp.lt.s32.totalorder %s9, 3
    %p111 = pnand %p109, %p110
    %p112 = pneg %p111
    // Predicated region
    $region9: #{generator_forward.32} parent=5 // pred_check
      _
    $region10: #{generator_forward.32} parent=5 // pred_check_branch
      %114 = sbr.rel (%p111) target = $region12
    $region11: #{generator_forward.32} parent=5 // pred_region
      %s115 = ssub.s32 %s9, 1
    $region12: #{generator_forward.32} parent=5 // pred_fallthru
      _
    %p116 = scmp.lt.s32.totalorder %s9, 2
    // Predicated region
    $region13: #{generator_forward.32} parent=5 // pred_check
      %p117 = pneg %p116
    $region14: #{generator_forward.32} parent=5 // pred_check_branch
      %119 = sbr.rel (%p117) target = $region16
    $region15: #{generator_forward.32} parent=5 // pred_region
      // Predicated region
      $region17: #{generator_forward.32} parent=15 // pred_check
        %p120 = pneg %p43
      $region18: #{generator_forward.32} parent=15 // pred_check_branch
        %122 = sbr.rel (%p120) target = $region20
      $region19: #{generator_forward.32} parent=15 // pred_region
        %s123 = smul.u32 4, %s17
        %p124 = scmp.lt.s32.totalorder %s16, 1
        %s125 = scalar_select %p124, %s16, 1
        %p126 = scmp.lt.s32.totalorder %s123, 3
        %s127 = scalar_select %p126, %s123, 3
        %s128 = smul.addr %s125, 4
        %s129 = sadd.s32 %s127, %s128
        %s130 = smul.addr %s129, 4
        %s131 = scalar_lea.vmem %s0, %s130
        %s132 = smul.u32 4, %s17
      $region20: #{generator_forward.32} parent=15 // pred_fallthru
        _
    $region16: #{generator_forward.32} parent=5 // pred_fallthru
      _
    %p133 = scmp.le.s32.totalorder 1, %s9
    %p134 = scmp.lt.s32.totalorder %s9, 3
    %p135 = pnand %p133, %p134
    %p136 = pneg %p135
    // Predicated region
    $region21: #{generator_forward.32} parent=5 // pred_check
      _
    $region22: #{generator_forward.32} parent=5 // pred_check_branch
      %138 = sbr.rel (%p135) target = $region24
    $region23: #{generator_forward.32} parent=5 // pred_region
      %s139 = ssub.s32 %s9, 1
      %s140 = smul.u32 4, %s19
      %p141 = scmp.lt.s32.totalorder %s18, 1
      %s142 = scalar_select %p141, %s18, 1
      %p143 = scmp.lt.s32.totalorder %s140, 3
      %s144 = scalar_select %p143, %s140, 3
      %s145 = smul.addr %s142, 4
      %s146 = sadd.s32 %s144, %s145
      %s147 = smul.addr %s146, 4
      %s148 = scalar_lea.vmem %s0, %s147
      %p149 = pneg %p49
      %p150 = pneg %p46
      %p151 = pneg %p75
      %p152 = pneg %p72
      %p153 = scmp.lt.s32.totalorder %s18, 1
      %s154 = scalar_select %p153, %s18, 1
      %s155 = scalar_lea.vmem %s1, %s154
      %p156 = pneg %p101
      %p157 = pneg %p98
      %p158 = scmp.lt.s32.totalorder %s18, 1
      %s159 = scalar_select %p158, %s18, 1
      %s160 = scalar_lea.vmem %s2, %s159
      %s161 = smul.u32 4, %s19
      %p162 = scmp.lt.s32.totalorder %s18, 1
      %s163 = scalar_select %p162, %s18, 1
      %p164 = scmp.lt.s32.totalorder %s161, 3
      %s165 = scalar_select %p164, %s161, 3
      %s166 = smul.addr %s163, 4
      %s167 = sadd.s32 %s165, %s166
      %s168 = smul.addr %s167, 4
      %s169 = scalar_lea.vmem %s0, %s168
      %s170 = smul.u32 4, %s19
      %p171 = scmp.lt.s32.totalorder %s18, 1
      %s172 = scalar_select %p171, %s18, 1
      %s173 = scalar_lea.vmem %s1, %s172
      %p174 = scmp.lt.s32.totalorder %s18, 1
      %s175 = scalar_select %p174, %s18, 1
      %s176 = scalar_lea.vmem %s2, %s175
      %p177 = scmp.eq.s32.totalorder %s19, 0
      // Predicated region
      $region25: #{generator_forward.32} parent=23 // pred_check
        %p178 = pneg %p177
      $region26: #{generator_forward.32} parent=23 // pred_check_branch
        %180 = sbr.rel (%p178) target = $region28
      $region27: #{generator_forward.32} parent=23 // pred_region
        %181 = vst [vmem:[#allocation2] sm:$0x1] 0.0
        %182 = vst [vmem:[#allocation3] sm:$0x1] 0.0
      $region28: #{generator_forward.32} parent=23 // pred_fallthru
        _
      %v183 = vld [vmem:[%s169] sm:$0xf]
      %v184 = vld [vmem:[%s169 + $0x4] sm:$0xf]
      %v185 = vld [vmem:[%s169 + $0x8] sm:$0xf]
      %v186 = vld [vmem:[%s169 + $0xc] sm:$0xf]
      %v187 = vunpack.c.l.bf16 %v183
      %v188 = vunpack.c.l.bf16 %v184
      %v189 = vunpack.c.l.bf16 %v185
      %v190 = vunpack.c.l.bf16 %v186
      %v191 = vld [vmem:[#allocation2] sm:$0x1]
      %v192 = vadd.f32 %v187, %v188
      %v193 = vadd.f32 %v192, %v189
      %v194 = vadd.f32 %v193, %v190
      %v195 = vrot.slane %v194, 4
      %v196 = vadd.f32 %v194, %v195
      %v197 = vrot.slane %v196, 2
      %v198 = vadd.f32 %v196, %v197
      %v199 = vrot.slane %v198, 1
      %v200 = vadd.f32 %v198, %v199
      %v201 = vadd.f32 %v191, %v200
      %202 = vst [vmem:[#allocation2] sm:$0x1] %v201
      %v203 = vld [vmem:[#allocation3] sm:$0x1]
      %v204 = vmul.f32 %v187, %v187
      %v205 = vmul.f32 %v188, %v188
      %v206 = vmul.f32 %v189, %v189
      %v207 = vmul.f32 %v190, %v190
      %v208 = vadd.f32 %v204, %v205
      %v209 = vadd.f32 %v208, %v206
      %v210 = vadd.f32 %v209, %v207
      %v211 = vrot.slane %v210, 4
      %v212 = vadd.f32 %v210, %v211
      %v213 = vrot.slane %v212, 2
      %v214 = vadd.f32 %v212, %v213
      %v215 = vrot.slane %v214, 1
      %v216 = vadd.f32 %v214, %v215
      %v217 = vadd.f32 %v203, %v216
      %218 = vst [vmem:[#allocation3] sm:$0x1] %v217
      // Predicated region
      $region29: #{generator_forward.32} parent=23 // pred_check
        %p219 = pneg %p177
      $region30: #{generator_forward.32} parent=23 // pred_check_branch
        %221 = sbr.rel (%p219) target = $region32
      $region31: #{generator_forward.32} parent=23 // pred_region
        %v222 = vld [vmem:[#allocation2] sm:$0x1]
        %223 = vst [vmem:[%s173] sm:$0x1] %v222
        %v224 = vld [vmem:[#allocation3] sm:$0x1]
        %225 = vst [vmem:[%s176] sm:$0x1] %v224
      $region32: #{generator_forward.32} parent=23 // pred_fallthru
        _
      %p226 = scmp.lt.s32.totalorder %s18, 1
      %s227 = scalar_select %p226, %s18, 1
      %s228 = scalar_lea.vmem %s1, %s227
      %p229 = scmp.lt.s32.totalorder %s18, 1
      %s230 = scalar_select %p229, %s18, 1
      %s231 = scalar_lea.vmem %s2, %s230
      // Predicated region
      $region33: #{generator_forward.32} parent=23 // pred_check
        %p232 = pneg %p72
      $region34: #{generator_forward.32} parent=23 // pred_check_branch
        %234 = sbr.rel (%p232) target = $region36
      $region35: #{generator_forward.32} parent=23 // pred_region
        _
      $region36: #{generator_forward.32} parent=23 // pred_fallthru
        _
      // Predicated region
      $region37: #{generator_forward.32} parent=23 // pred_check
        %p235 = pneg %p98
      $region38: #{generator_forward.32} parent=23 // pred_check_branch
        %237 = sbr.rel (%p235) target = $region40
      $region39: #{generator_forward.32} parent=23 // pred_region
        _
      $region40: #{generator_forward.32} parent=23 // pred_fallthru
        _
    $region24: #{generator_forward.32} parent=5 // pred_fallthru
      _
    %p238 = scmp.le.s32.totalorder 2, %s9
    // Predicated region
    $region41: #{generator_forward.32} parent=5 // pred_check
      %p239 = pneg %p238
    $region42: #{generator_forward.32} parent=5 // pred_check_branch
      %241 = sbr.rel (%p239) target = $region44
    $region43: #{generator_forward.32} parent=5 // pred_region
      %s242 = ssub.s32 %s9, 2
      // Predicated region
      $region45: #{generator_forward.32} parent=43 // pred_check
        %p243 = pneg %p78
      $region46: #{generator_forward.32} parent=43 // pred_check_branch
        %245 = sbr.rel (%p243) target = $region48
      $region47: #{generator_forward.32} parent=43 // pred_region
        %p246 = scmp.lt.s32.totalorder %s20, 1
        %s247 = scalar_select %p246, %s20, 1
        %s248 = scalar_lea.vmem %s1, %s247
      $region48: #{generator_forward.32} parent=43 // pred_fallthru
        _
      // Predicated region
      $region49: #{generator_forward.32} parent=43 // pred_check
        %p249 = pneg %p104
      $region50: #{generator_forward.32} parent=43 // pred_check_branch
        %251 = sbr.rel (%p249) target = $region52
      $region51: #{generator_forward.32} parent=43 // pred_region
        %p252 = scmp.lt.s32.totalorder %s20, 1
        %s253 = scalar_select %p252, %s20, 1
        %s254 = scalar_lea.vmem %s2, %s253
      $region52: #{generator_forward.32} parent=43 // pred_fallthru
        _
    $region44: #{generator_forward.32} parent=5 // pred_fallthru
      _
  $region6: #{generator_forward.32} parent=0 // loop_footer
    %s13 = sadd.s32 1, %s9
  $region7: #{generator_forward.32} parent=0 // loop_footer_branch
    %8 = sbr.rel target = $region3
  $region8: #{generator_forward.32} parent=0 // loop_exit
    _

// kernel: generator_forward.33
$region0: #{generator_forward.33}
  #allocation0 [shape = 'u32[]', space=smem, size = 0x4, offset = 0x4, fixed_abs, tag = 'smem constant byte address 0x4 - core index']
  #allocation1 [shape = 'u32[144,128]{1,0:T(1,128)}', space=vmem, size = 0x12000, scoped, tag = 'internal scratch']
  %s0 = inlined_call_operand.vmem [shape: bf16[2,32,128], index: 0, kind: input, shape index: {}]
  %s1 = inlined_call_operand.vmem [shape: f32[2,1,128], index: 1, kind: input, shape index: {}]
  %s2 = inlined_call_operand.vmem [shape: f32[2,1,128], index: 2, kind: input, shape index: {}]
  %s3 = inlined_call_operand.vmem [shape: bf16[2,32,128], index: 3, kind: output, shape index: {}]
  %s4 = sld [smem:[#allocation0]]
  $region45: #{generator_forward.33} parent=0
    _
  %s6 = ssub.s32 1, %s4
  %s7 = scalar_select 0, %s6, %s4
  loop: start=0, step=1, limit=4
  $region2: #{generator_forward.33} parent=0 // loop_pre_header
    _
  $region3: #{generator_forward.33} parent=0 // loop_header
    %s9 = sphi 0, %s13
    %p10 = scmp.ge.s32.totalorder %s9, 4
    %s16 = sphi 0, %s28
    %s17 = sphi 0, %s24
    %s18 = sphi 0, %s16
    %s19 = sphi 0, %s17
    %s20 = sphi 0, %s18
    %s21 = sphi 0, %s19
    %s33 = sphi 0, %s35
    %s36 = sphi 0, %s33
    %s37 = sphi 0, %s36
    %s53 = sphi 0, %s37
    %s59 = sphi 0, %s61
    %s62 = sphi 0, %s59
    %s63 = sphi 0, %s62
    %s79 = sphi 0, %s63
    %s85 = sphi 0, %s87
    %s88 = sphi 0, %s85
    %s89 = sphi 0, %s88
    %s105 = sphi 0, %s89
    %s113 = sphi 0, %s115
    %s116 = sphi 0, %s113
    %s117 = sphi 0, %s116
    %s133 = sphi 0, %s117
  $region4: #{generator_forward.33} parent=0 // loop_header_branch
    %12 = sbr.rel (%p10) target = $region8
  $region5: #{generator_forward.33} parent=0 // loop_body
    %s14 = ssub.s32 %s9, 1
    %s15 = ssub.s32 %s9, 2
    %s22 = sadd.s32 1, %s17
    %p23 = scmp.ge.s32.totalorder %s22, 1
    %s24 = scalar_select %p23, 0, %s22
    %s25 = sadd.s32 1, %s16
    %s26 = scalar_select %p23, %s25, %s16
    %p27 = scmp.ge.s32.totalorder %s26, 2
    %s28 = scalar_select %p27, 0, %s26
    %s29 = ssub.s32 %s16, %s28
    %s30 = ssub.s32 %s17, %s24
    %s31 = sor.u32 %s29, %s30
    %p32 = scmp.eq.s32.totalorder %s31, 0
    %s34 = sadd.s32 %s33, 1
    %s35 = scalar_select %p32, %s33, %s34
    %p38 = pneg %p32
    %p39 = scmp.eq.s32.totalorder %s9, 1
    %p40 = por %p38, %p39
    %p41 = scmp.ne.s32.totalorder %s33, %s36
    %p42 = scmp.eq.s32.totalorder %s9, 0
    %p43 = por %p41, %p42
    %p44 = scmp.ne.s32.totalorder %s33, %s36
    %p45 = scmp.eq.s32.totalorder %s14, 1
    %p46 = por %p44, %p45
    %p47 = scmp.ne.s32.totalorder %s36, %s37
    %p48 = scmp.eq.s32.totalorder %s14, 0
    %p49 = por %p47, %p48
    %p50 = scmp.ne.s32.totalorder %s36, %s37
    %p51 = scmp.eq.s32.totalorder %s15, 1
    %p52 = por %p50, %p51
    %p54 = scmp.ne.s32.totalorder %s37, %s53
    %p55 = scmp.eq.s32.totalorder %s15, 0
    %p56 = por %p54, %p55
    %s57 = ssub.s32 %s16, %s28
    %p58 = scmp.eq.s32.totalorder %s57, 0
    %s60 = sadd.s32 %s59, 1
    %s61 = scalar_select %p58, %s59, %s60
    %p64 = pneg %p58
    %p65 = scmp.eq.s32.totalorder %s9, 1
    %p66 = por %p64, %p65
    %p67 = scmp.ne.s32.totalorder %s59, %s62
    %p68 = scmp.eq.s32.totalorder %s9, 0
    %p69 = por %p67, %p68
    %p70 = scmp.ne.s32.totalorder %s59, %s62
    %p71 = scmp.eq.s32.totalorder %s14, 1
    %p72 = por %p70, %p71
    %p73 = scmp.ne.s32.totalorder %s62, %s63
    %p74 = scmp.eq.s32.totalorder %s14, 0
    %p75 = por %p73, %p74
    %p76 = scmp.ne.s32.totalorder %s62, %s63
    %p77 = scmp.eq.s32.totalorder %s15, 1
    %p78 = por %p76, %p77
    %p80 = scmp.ne.s32.totalorder %s63, %s79
    %p81 = scmp.eq.s32.totalorder %s15, 0
    %p82 = por %p80, %p81
    %s83 = ssub.s32 %s16, %s28
    %p84 = scmp.eq.s32.totalorder %s83, 0
    %s86 = sadd.s32 %s85, 1
    %s87 = scalar_select %p84, %s85, %s86
    %p90 = pneg %p84
    %p91 = scmp.eq.s32.totalorder %s9, 1
    %p92 = por %p90, %p91
    %p93 = scmp.ne.s32.totalorder %s85, %s88
    %p94 = scmp.eq.s32.totalorder %s9, 0
    %p95 = por %p93, %p94
    %p96 = scmp.ne.s32.totalorder %s85, %s88
    %p97 = scmp.eq.s32.totalorder %s14, 1
    %p98 = por %p96, %p97
    %p99 = scmp.ne.s32.totalorder %s88, %s89
    %p100 = scmp.eq.s32.totalorder %s14, 0
    %p101 = por %p99, %p100
    %p102 = scmp.ne.s32.totalorder %s88, %s89
    %p103 = scmp.eq.s32.totalorder %s15, 1
    %p104 = por %p102, %p103
    %p106 = scmp.ne.s32.totalorder %s89, %s105
    %p107 = scmp.eq.s32.totalorder %s15, 0
    %p108 = por %p106, %p107
    %s109 = ssub.s32 %s16, %s28
    %s110 = ssub.s32 %s17, %s24
    %s111 = sor.u32 %s109, %s110
    %p112 = scmp.eq.s32.totalorder %s111, 0
    %s114 = sadd.s32 %s113, 1
    %s115 = scalar_select %p112, %s113, %s114
    %p118 = pneg %p112
    %p119 = scmp.eq.s32.totalorder %s9, 1
    %p120 = por %p118, %p119
    %p121 = scmp.ne.s32.totalorder %s113, %s116
    %p122 = scmp.eq.s32.totalorder %s9, 0
    %p123 = por %p121, %p122
    %p124 = scmp.ne.s32.totalorder %s113, %s116
    %p125 = scmp.eq.s32.totalorder %s14, 1
    %p126 = por %p124, %p125
    %p127 = scmp.ne.s32.totalorder %s116, %s117
    %p128 = scmp.eq.s32.totalorder %s14, 0
    %p129 = por %p127, %p128
    %p130 = scmp.ne.s32.totalorder %s116, %s117
    %p131 = scmp.eq.s32.totalorder %s15, 1
    %p132 = por %p130, %p131
    %p134 = scmp.ne.s32.totalorder %s117, %s133
    %p135 = scmp.eq.s32.totalorder %s15, 0
    %p136 = por %p134, %p135
    %p137 = scmp.le.s32.totalorder 1, %s9
    %p138 = scmp.lt.s32.totalorder %s9, 3
    %p139 = pnand %p137, %p138
    %p140 = pneg %p139
    // Predicated region
    $region9: #{generator_forward.33} parent=5 // pred_check
      _
    $region10: #{generator_forward.33} parent=5 // pred_check_branch
      %142 = sbr.rel (%p139) target = $region12
    $region11: #{generator_forward.33} parent=5 // pred_region
      %s143 = ssub.s32 %s9, 1
    $region12: #{generator_forward.33} parent=5 // pred_fallthru
      _
    %p144 = scmp.lt.s32.totalorder %s9, 2
    // Predicated region
    $region13: #{generator_forward.33} parent=5 // pred_check
      %p145 = pneg %p144
    $region14: #{generator_forward.33} parent=5 // pred_check_branch
      %147 = sbr.rel (%p145) target = $region16
    $region15: #{generator_forward.33} parent=5 // pred_region
      // Predicated region
      $region17: #{generator_forward.33} parent=15 // pred_check
        %p148 = pneg %p43
      $region18: #{generator_forward.33} parent=15 // pred_check_branch
        %150 = sbr.rel (%p148) target = $region20
      $region19: #{generator_forward.33} parent=15 // pred_region
        %s151 = smul.u32 4, %s17
        %p152 = scmp.lt.s32.totalorder %s16, 1
        %s153 = scalar_select %p152, %s16, 1
        %p154 = scmp.lt.s32.totalorder %s151, 3
        %s155 = scalar_select %p154, %s151, 3
        %s156 = smul.addr %s153, 4
        %s157 = sadd.s32 %s155, %s156
        %s158 = smul.addr %s157, 4
        %s159 = scalar_lea.vmem %s0, %s158
        %s160 = smul.u32 4, %s17
      $region20: #{generator_forward.33} parent=15 // pred_fallthru
        _
      // Predicated region
      $region21: #{generator_forward.33} parent=15 // pred_check
        %p161 = pneg %p69
      $region22: #{generator_forward.33} parent=15 // pred_check_branch
        %163 = sbr.rel (%p161) target = $region24
      $region23: #{generator_forward.33} parent=15 // pred_region
        %p164 = scmp.lt.s32.totalorder %s16, 1
        %s165 = scalar_select %p164, %s16, 1
        %s166 = scalar_lea.vmem %s1, %s165
      $region24: #{generator_forward.33} parent=15 // pred_fallthru
        _
      // Predicated region
      $region25: #{generator_forward.33} parent=15 // pred_check
        %p167 = pneg %p95
      $region26: #{generator_forward.33} parent=15 // pred_check_branch
        %169 = sbr.rel (%p167) target = $region28
      $region27: #{generator_forward.33} parent=15 // pred_region
        %p170 = scmp.lt.s32.totalorder %s16, 1
        %s171 = scalar_select %p170, %s16, 1
        %s172 = scalar_lea.vmem %s2, %s171
      $region28: #{generator_forward.33} parent=15 // pred_fallthru
        _
    $region16: #{generator_forward.33} parent=5 // pred_fallthru
      _
    %p173 = scmp.le.s32.totalorder 1, %s9
    %p174 = scmp.lt.s32.totalorder %s9, 3
    %p175 = pnand %p173, %p174
    %p176 = pneg %p175
    // Predicated region
    $region29: #{generator_forward.33} parent=5 // pred_check
      _
    $region30: #{generator_forward.33} parent=5 // pred_check_branch
      %178 = sbr.rel (%p175) target = $region32
    $region31: #{generator_forward.33} parent=5 // pred_region
      %s179 = ssub.s32 %s9, 1
      %s180 = smul.u32 4, %s19
      %p181 = scmp.lt.s32.totalorder %s18, 1
      %s182 = scalar_select %p181, %s18, 1
      %p183 = scmp.lt.s32.totalorder %s180, 3
      %s184 = scalar_select %p183, %s180, 3
      %s185 = smul.addr %s182, 4
      %s186 = sadd.s32 %s184, %s185
      %s187 = smul.addr %s186, 4
      %s188 = scalar_lea.vmem %s0, %s187
      %p189 = pneg %p49
      %p190 = pneg %p46
      %p191 = scmp.lt.s32.totalorder %s18, 1
      %s192 = scalar_select %p191, %s18, 1
      %s193 = scalar_lea.vmem %s1, %s192
      %p194 = pneg %p75
      %p195 = pneg %p72
      %p196 = scmp.lt.s32.totalorder %s18, 1
      %s197 = scalar_select %p196, %s18, 1
      %s198 = scalar_lea.vmem %s2, %s197
      %p199 = pneg %p101
      %p200 = pneg %p98
      %p201 = pneg %p129
      %p202 = pneg %p126
      %s203 = smul.u32 4, %s19
      %p204 = scmp.lt.s32.totalorder %s18, 1
      %s205 = scalar_select %p204, %s18, 1
      %p206 = scmp.lt.s32.totalorder %s203, 3
      %s207 = scalar_select %p206, %s203, 3
      %s208 = smul.addr %s205, 4
      %s209 = sadd.s32 %s207, %s208
      %s210 = smul.addr %s209, 4
      %s211 = scalar_lea.vmem %s3, %s210
      %s212 = smul.u32 4, %s19
      %p213 = scmp.lt.s32.totalorder %s18, 1
      %s214 = scalar_select %p213, %s18, 1
      %p215 = scmp.lt.s32.totalorder %s212, 3
      %s216 = scalar_select %p215, %s212, 3
      %s217 = smul.addr %s214, 4
      %s218 = sadd.s32 %s216, %s217
      %s219 = smul.addr %s218, 4
      %s220 = scalar_lea.vmem %s0, %s219
      %s221 = smul.u32 4, %s19
      %p222 = scmp.lt.s32.totalorder %s18, 1
      %s223 = scalar_select %p222, %s18, 1
      %s224 = scalar_lea.vmem %s1, %s223
      %p225 = scmp.lt.s32.totalorder %s18, 1
      %s226 = scalar_select %p225, %s18, 1
      %s227 = scalar_lea.vmem %s2, %s226
      %s228 = smul.u32 4, %s19
      %p229 = scmp.lt.s32.totalorder %s18, 1
      %s230 = scalar_select %p229, %s18, 1
      %p231 = scmp.lt.s32.totalorder %s228, 3
      %s232 = scalar_select %p231, %s228, 3
      %s233 = smul.addr %s230, 4
      %s234 = sadd.s32 %s232, %s233
      %s235 = smul.addr %s234, 4
      %s236 = scalar_lea.vmem %s3, %s235
      %s237 = smul.u32 4, %s19
      %v238 = vld [vmem:[%s220] sm:$0xf]
      %v239 = vld [vmem:[%s220 + $0x4] sm:$0xf]
      %v240 = vld [vmem:[%s220 + $0x8] sm:$0xf]
      %v241 = vld [vmem:[%s220 + $0xc] sm:$0xf]
      %v242 = vunpack.c.l.bf16 %v238
      %v243 = vunpack.c.l.bf16 %v239
      %v244 = vunpack.c.l.bf16 %v240
      %v245 = vunpack.c.l.bf16 %v241
      %v246 = vld [vmem:[%s224] sm:$0x1]
      %v248 = vlaneseq
      %v249 = vshrl.u32 %v248, 7
      %v250 = vsub.s32 0, %v249
      %v251 = vrot.slane %v246, %v250
      %v253 = vmul.f32 %v242, %v251
      %v254 = vmul.f32 %v243, %v251
      %v255 = vmul.f32 %v244, %v251
      %v256 = vmul.f32 %v245, %v251
      %v257 = vld [vmem:[%s227] sm:$0x1]
      %v259 = vlaneseq
      %v260 = vshrl.u32 %v259, 7
      %v261 = vsub.s32 0, %v260
      %v262 = vrot.slane %v257, %v261
      %v264 = vadd.f32 %v253, %v262
      %v265 = vadd.f32 %v254, %v262
      %v266 = vadd.f32 %v255, %v262
      %v267 = vadd.f32 %v256, %v262
      %v268 = vmax.f32 %v264, 0.0
      %v269 = vmax.f32 %v265, 0.0
      %v270 = vmax.f32 %v266, 0.0
      %v271 = vmax.f32 %v267, 0.0
      %v272 = vpack.c.bf16 %v269, %v268
      %v273 = vpack.c.bf16 %v271, %v270
      %v276 = vunpack.c.l.b16 %v272
      %v277 = vunpack.c.h.b16 %v272
      %v278 = vunpack.c.l.b16 %v273
      %v279 = vunpack.c.h.b16 %v273
      %v280 = vpack.c.b16 %v276, %v276
      %v281 = vpack.c.b16 %v277, %v277
      %v282 = vpack.c.b16 %v278, %v278
      %v283 = vpack.c.b16 %v279, %v279
      %288 = vst [vmem:[%s236] sm:$0xf] %v280
      %289 = vst [vmem:[%s236 + $0x4] sm:$0xf] %v281
      %290 = vst [vmem:[%s236 + $0x8] sm:$0xf] %v282
      %291 = vst [vmem:[%s236 + $0xc] sm:$0xf] %v283
      %s292 = smul.u32 4, %s19
      %p293 = scmp.lt.s32.totalorder %s18, 1
      %s294 = scalar_select %p293, %s18, 1
      %p295 = scmp.lt.s32.totalorder %s292, 3
      %s296 = scalar_select %p295, %s292, 3
      %s297 = smul.addr %s294, 4
      %s298 = sadd.s32 %s296, %s297
      %s299 = smul.addr %s298, 4
      %s300 = scalar_lea.vmem %s3, %s299
      // Predicated region
      $region33: #{generator_forward.33} parent=31 // pred_check
        %p301 = pneg %p126
      $region34: #{generator_forward.33} parent=31 // pred_check_branch
        %303 = sbr.rel (%p301) target = $region36
      $region35: #{generator_forward.33} parent=31 // pred_region
        %s304 = smul.u32 4, %s19
      $region36: #{generator_forward.33} parent=31 // pred_fallthru
        _
    $region32: #{generator_forward.33} parent=5 // pred_fallthru
      _
    %p305 = scmp.le.s32.totalorder 2, %s9
    // Predicated region
    $region37: #{generator_forward.33} parent=5 // pred_check
      %p306 = pneg %p305
    $region38: #{generator_forward.33} parent=5 // pred_check_branch
      %308 = sbr.rel (%p306) target = $region40
    $region39: #{generator_forward.33} parent=5 // pred_region
      %s309 = ssub.s32 %s9, 2
      // Predicated region
      $region41: #{generator_forward.33} parent=39 // pred_check
        %p310 = pneg %p132
      $region42: #{generator_forward.33} parent=39 // pred_check_branch
        %312 = sbr.rel (%p310) target = $region44
      $region43: #{generator_forward.33} parent=39 // pred_region
        %s313 = smul.u32 4, %s21
        %p314 = scmp.lt.s32.totalorder %s20, 1
        %s315 = scalar_select %p314, %s20, 1
        %p316 = scmp.lt.s32.totalorder %s313, 3
        %s317 = scalar_select %p316, %s313, 3
        %s318 = smul.addr %s315, 4
        %s319 = sadd.s32 %s317, %s318
        %s320 = smul.addr %s319, 4
        %s321 = scalar_lea.vmem %s3, %s320
      $region44: #{generator_forward.33} parent=39 // pred_fallthru
        _
    $region40: #{generator_forward.33} parent=5 // pred_fallthru
      _
  $region6: #{generator_forward.33} parent=0 // loop_footer
    %s13 = sadd.s32 1, %s9
  $region7: #{generator_forward.33} parent=0 // loop_footer_branch
    %8 = sbr.rel target = $region3
  $region8: #{generator_forward.33} parent=0 // loop_exit
    _

// kernel: generator_forward.34
$region0: #{generator_forward.34}
  #allocation0 [shape = 'u32[]', space=smem, size = 0x4, offset = 0x4, fixed_abs, tag = 'smem constant byte address 0x4 - core index']
  #allocation1 [shape = 'u32[144,128]{1,0:T(1,128)}', space=vmem, size = 0x12000, scoped, tag = 'internal scratch']
  %s0 = inlined_call_operand.vmem [shape: bf16[128,1024], index: 0, kind: input, shape index: {}]
  %s1 = inlined_call_operand.vmem [shape: bf16[1024,128], index: 1, kind: input, shape index: {}]
  %s2 = inlined_call_operand.vmem [shape: f32[1,128], index: 2, kind: input, shape index: {}]
  %s3 = inlined_call_operand.vmem [shape: bf16[128,128], index: 3, kind: output, shape index: {}]
  %s4 = sld [smem:[#allocation0]]
  $region22: #{generator_forward.34} parent=0
    _
  %s6 = ssub.s32 1, %s4
  %s7 = scalar_select 0, %s6, %s4
  // Predicated region
  $region2: #{generator_forward.34} parent=0 // pred_check
    _
  $region3: #{generator_forward.34} parent=0 // pred_check_branch
    %9 = sbr.rel (0) target = $region5
  $region4: #{generator_forward.34} parent=0 // pred_region
    _
  $region5: #{generator_forward.34} parent=0 // pred_fallthru
    _
  // Predicated region
  $region6: #{generator_forward.34} parent=0 // pred_check
    _
  $region7: #{generator_forward.34} parent=0 // pred_check_branch
    %11 = sbr.rel (0) target = $region9
  $region8: #{generator_forward.34} parent=0 // pred_region
    _
  $region9: #{generator_forward.34} parent=0 // pred_fallthru
    _
  // Predicated region
  $region10: #{generator_forward.34} parent=0 // pred_check
    _
  $region11: #{generator_forward.34} parent=0 // pred_check_branch
    %13 = sbr.rel (0) target = $region13
  $region12: #{generator_forward.34} parent=0 // pred_region
    _
  $region13: #{generator_forward.34} parent=0 // pred_fallthru
    _
  %v15 = vld [vmem:[%s0] sm:$0xff]
  %v16 = vld [vmem:[%s0 + $0x8] sm:$0xff]
  %v17 = vld [vmem:[%s0 + $0x10] sm:$0xff]
  %v18 = vld [vmem:[%s0 + $0x18] sm:$0xff]
  %v19 = vld [vmem:[%s0 + $0x20] sm:$0xff]
  %v20 = vld [vmem:[%s0 + $0x28] sm:$0xff]
  %v21 = vld [vmem:[%s0 + $0x30] sm:$0xff]
  %v22 = vld [vmem:[%s0 + $0x38] sm:$0xff]
  %v23 = vld [vmem:[%s0 + $0x40] sm:$0xff]
  %v24 = vld [vmem:[%s0 + $0x48] sm:$0xff]
  %v25 = vld [vmem:[%s0 + $0x50] sm:$0xff]
  %v26 = vld [vmem:[%s0 + $0x58] sm:$0xff]
  %v27 = vld [vmem:[%s0 + $0x60] sm:$0xff]
  %v28 = vld [vmem:[%s0 + $0x68] sm:$0xff]
  %v29 = vld [vmem:[%s0 + $0x70] sm:$0xff]
  %v30 = vld [vmem:[%s0 + $0x78] sm:$0xff]
  %v31 = vld [vmem:[%s0 + $0x80] sm:$0xff]
  %v32 = vld [vmem:[%s0 + $0x88] sm:$0xff]
  %v33 = vld [vmem:[%s0 + $0x90] sm:$0xff]
  %v34 = vld [vmem:[%s0 + $0x98] sm:$0xff]
  %v35 = vld [vmem:[%s0 + $0xa0] sm:$0xff]
  %v36 = vld [vmem:[%s0 + $0xa8] sm:$0xff]
  %v37 = vld [vmem:[%s0 + $0xb0] sm:$0xff]
  %v38 = vld [vmem:[%s0 + $0xb8] sm:$0xff]
  %v39 = vld [vmem:[%s0 + $0xc0] sm:$0xff]
  %v40 = vld [vmem:[%s0 + $0xc8] sm:$0xff]
  %v41 = vld [vmem:[%s0 + $0xd0] sm:$0xff]
  %v42 = vld [vmem:[%s0 + $0xd8] sm:$0xff]
  %v43 = vld [vmem:[%s0 + $0xe0] sm:$0xff]
  %v44 = vld [vmem:[%s0 + $0xe8] sm:$0xff]
  %v45 = vld [vmem:[%s0 + $0xf0] sm:$0xff]
  %v46 = vld [vmem:[%s0 + $0xf8] sm:$0xff]
  %v47 = vld [vmem:[%s0 + $0x100] sm:$0xff]
  %v48 = vld [vmem:[%s0 + $0x108] sm:$0xff]
  %v49 = vld [vmem:[%s0 + $0x110] sm:$0xff]
  %v50 = vld [vmem:[%s0 + $0x118] sm:$0xff]
  %v51 = vld [vmem:[%s0 + $0x120] sm:$0xff]
  %v52 = vld [vmem:[%s0 + $0x128] sm:$0xff]
  %v53 = vld [vmem:[%s0 + $0x130] sm:$0xff]
  %v54 = vld [vmem:[%s0 + $0x138] sm:$0xff]
  %v55 = vld [vmem:[%s0 + $0x140] sm:$0xff]
  %v56 = vld [vmem:[%s0 + $0x148] sm:$0xff]
  %v57 = vld [vmem:[%s0 + $0x150] sm:$0xff]
  %v58 = vld [vmem:[%s0 + $0x158] sm:$0xff]
  %v59 = vld [vmem:[%s0 + $0x160] sm:$0xff]
  %v60 = vld [vmem:[%s0 + $0x168] sm:$0xff]
  %v61 = vld [vmem:[%s0 + $0x170] sm:$0xff]
  %v62 = vld [vmem:[%s0 + $0x178] sm:$0xff]
  %v63 = vld [vmem:[%s0 + $0x180] sm:$0xff]
  %v64 = vld [vmem:[%s0 + $0x188] sm:$0xff]
  %v65 = vld [vmem:[%s0 + $0x190] sm:$0xff]
  %v66 = vld [vmem:[%s0 + $0x198] sm:$0xff]
  %v67 = vld [vmem:[%s0 + $0x1a0] sm:$0xff]
  %v68 = vld [vmem:[%s0 + $0x1a8] sm:$0xff]
  %v69 = vld [vmem:[%s0 + $0x1b0] sm:$0xff]
  %v70 = vld [vmem:[%s0 + $0x1b8] sm:$0xff]
  %v71 = vld [vmem:[%s0 + $0x1c0] sm:$0xff]
  %v72 = vld [vmem:[%s0 + $0x1c8] sm:$0xff]
  %v73 = vld [vmem:[%s0 + $0x1d0] sm:$0xff]
  %v74 = vld [vmem:[%s0 + $0x1d8] sm:$0xff]
  %v75 = vld [vmem:[%s0 + $0x1e0] sm:$0xff]
  %v76 = vld [vmem:[%s0 + $0x1e8] sm:$0xff]
  %v77 = vld [vmem:[%s0 + $0x1f0] sm:$0xff]
  %v78 = vld [vmem:[%s0 + $0x1f8] sm:$0xff]
  %v79 = vld [vmem:[%s1] sm:$0xf]
  %v80 = vld [vmem:[%s1 + $0x4] sm:$0xf]
  %v81 = vld [vmem:[%s1 + $0x8] sm:$0xf]
  %v82 = vld [vmem:[%s1 + $0xc] sm:$0xf]
  %v83 = vld [vmem:[%s1 + $0x10] sm:$0xf]
  %v84 = vld [vmem:[%s1 + $0x14] sm:$0xf]
  %v85 = vld [vmem:[%s1 + $0x18] sm:$0xf]
  %v86 = vld [vmem:[%s1 + $0x1c] sm:$0xf]
  %v87 = vld [vmem:[%s1 + $0x20] sm:$0xf]
  %v88 = vld [vmem:[%s1 + $0x24] sm:$0xf]
  %v89 = vld [vmem:[%s1 + $0x28] sm:$0xf]
  %v90 = vld [vmem:[%s1 + $0x2c] sm:$0xf]
  %v91 = vld [vmem:[%s1 + $0x30] sm:$0xf]
  %v92 = vld [vmem:[%s1 + $0x34] sm:$0xf]
  %v93 = vld [vmem:[%s1 + $0x38] sm:$0xf]
  %v94 = vld [vmem:[%s1 + $0x3c] sm:$0xf]
  %v95 = vld [vmem:[%s1 + $0x40] sm:$0xf]
  %v96 = vld [vmem:[%s1 + $0x44] sm:$0xf]
  %v97 = vld [vmem:[%s1 + $0x48] sm:$0xf]
  %v98 = vld [vmem:[%s1 + $0x4c] sm:$0xf]
  %v99 = vld [vmem:[%s1 + $0x50] sm:$0xf]
  %v100 = vld [vmem:[%s1 + $0x54] sm:$0xf]
  %v101 = vld [vmem:[%s1 + $0x58] sm:$0xf]
  %v102 = vld [vmem:[%s1 + $0x5c] sm:$0xf]
  %v103 = vld [vmem:[%s1 + $0x60] sm:$0xf]
  %v104 = vld [vmem:[%s1 + $0x64] sm:$0xf]
  %v105 = vld [vmem:[%s1 + $0x68] sm:$0xf]
  %v106 = vld [vmem:[%s1 + $0x6c] sm:$0xf]
  %v107 = vld [vmem:[%s1 + $0x70] sm:$0xf]
  %v108 = vld [vmem:[%s1 + $0x74] sm:$0xf]
  %v109 = vld [vmem:[%s1 + $0x78] sm:$0xf]
  %v110 = vld [vmem:[%s1 + $0x7c] sm:$0xf]
  %v111 = vld [vmem:[%s1 + $0x80] sm:$0xf]
  %v112 = vld [vmem:[%s1 + $0x84] sm:$0xf]
  %v113 = vld [vmem:[%s1 + $0x88] sm:$0xf]
  %v114 = vld [vmem:[%s1 + $0x8c] sm:$0xf]
  %v115 = vld [vmem:[%s1 + $0x90] sm:$0xf]
  %v116 = vld [vmem:[%s1 + $0x94] sm:$0xf]
  %v117 = vld [vmem:[%s1 + $0x98] sm:$0xf]
  %v118 = vld [vmem:[%s1 + $0x9c] sm:$0xf]
  %v119 = vld [vmem:[%s1 + $0xa0] sm:$0xf]
  %v120 = vld [vmem:[%s1 + $0xa4] sm:$0xf]
  %v121 = vld [vmem:[%s1 + $0xa8] sm:$0xf]
  %v122 = vld [vmem:[%s1 + $0xac] sm:$0xf]
  %v123 = vld [vmem:[%s1 + $0xb0] sm:$0xf]
  %v124 = vld [vmem:[%s1 + $0xb4] sm:$0xf]
  %v125 = vld [vmem:[%s1 + $0xb8] sm:$0xf]
  %v126 = vld [vmem:[%s1 + $0xbc] sm:$0xf]
  %v127 = vld [vmem:[%s1 + $0xc0] sm:$0xf]
  %v128 = vld [vmem:[%s1 + $0xc4] sm:$0xf]
  %v129 = vld [vmem:[%s1 + $0xc8] sm:$0xf]
  %v130 = vld [vmem:[%s1 + $0xcc] sm:$0xf]
  %v131 = vld [vmem:[%s1 + $0xd0] sm:$0xf]
  %v132 = vld [vmem:[%s1 + $0xd4] sm:$0xf]
  %v133 = vld [vmem:[%s1 + $0xd8] sm:$0xf]
  %v134 = vld [vmem:[%s1 + $0xdc] sm:$0xf]
  %v135 = vld [vmem:[%s1 + $0xe0] sm:$0xf]
  %v136 = vld [vmem:[%s1 + $0xe4] sm:$0xf]
  %v137 = vld [vmem:[%s1 + $0xe8] sm:$0xf]
  %v138 = vld [vmem:[%s1 + $0xec] sm:$0xf]
  %v139 = vld [vmem:[%s1 + $0xf0] sm:$0xf]
  %v140 = vld [vmem:[%s1 + $0xf4] sm:$0xf]
  %v141 = vld [vmem:[%s1 + $0xf8] sm:$0xf]
  %v142 = vld [vmem:[%s1 + $0xfc] sm:$0xf]
  %v143 = vld [vmem:[%s1 + $0x100] sm:$0xf]
  %v144 = vld [vmem:[%s1 + $0x104] sm:$0xf]
  %v145 = vld [vmem:[%s1 + $0x108] sm:$0xf]
  %v146 = vld [vmem:[%s1 + $0x10c] sm:$0xf]
  %v147 = vld [vmem:[%s1 + $0x110] sm:$0xf]
  %v148 = vld [vmem:[%s1 + $0x114] sm:$0xf]
  %v149 = vld [vmem:[%s1 + $0x118] sm:$0xf]
  %v150 = vld [vmem:[%s1 + $0x11c] sm:$0xf]
  %v151 = vld [vmem:[%s1 + $0x120] sm:$0xf]
  %v152 = vld [vmem:[%s1 + $0x124] sm:$0xf]
  %v153 = vld [vmem:[%s1 + $0x128] sm:$0xf]
  %v154 = vld [vmem:[%s1 + $0x12c] sm:$0xf]
  %v155 = vld [vmem:[%s1 + $0x130] sm:$0xf]
  %v156 = vld [vmem:[%s1 + $0x134] sm:$0xf]
  %v157 = vld [vmem:[%s1 + $0x138] sm:$0xf]
  %v158 = vld [vmem:[%s1 + $0x13c] sm:$0xf]
  %v159 = vld [vmem:[%s1 + $0x140] sm:$0xf]
  %v160 = vld [vmem:[%s1 + $0x144] sm:$0xf]
  %v161 = vld [vmem:[%s1 + $0x148] sm:$0xf]
  %v162 = vld [vmem:[%s1 + $0x14c] sm:$0xf]
  %v163 = vld [vmem:[%s1 + $0x150] sm:$0xf]
  %v164 = vld [vmem:[%s1 + $0x154] sm:$0xf]
  %v165 = vld [vmem:[%s1 + $0x158] sm:$0xf]
  %v166 = vld [vmem:[%s1 + $0x15c] sm:$0xf]
  %v167 = vld [vmem:[%s1 + $0x160] sm:$0xf]
  %v168 = vld [vmem:[%s1 + $0x164] sm:$0xf]
  %v169 = vld [vmem:[%s1 + $0x168] sm:$0xf]
  %v170 = vld [vmem:[%s1 + $0x16c] sm:$0xf]
  %v171 = vld [vmem:[%s1 + $0x170] sm:$0xf]
  %v172 = vld [vmem:[%s1 + $0x174] sm:$0xf]
  %v173 = vld [vmem:[%s1 + $0x178] sm:$0xf]
  %v174 = vld [vmem:[%s1 + $0x17c] sm:$0xf]
  %v175 = vld [vmem:[%s1 + $0x180] sm:$0xf]
  %v176 = vld [vmem:[%s1 + $0x184] sm:$0xf]
  %v177 = vld [vmem:[%s1 + $0x188] sm:$0xf]
  %v178 = vld [vmem:[%s1 + $0x18c] sm:$0xf]
  %v179 = vld [vmem:[%s1 + $0x190] sm:$0xf]
  %v180 = vld [vmem:[%s1 + $0x194] sm:$0xf]
  %v181 = vld [vmem:[%s1 + $0x198] sm:$0xf]
  %v182 = vld [vmem:[%s1 + $0x19c] sm:$0xf]
  %v183 = vld [vmem:[%s1 + $0x1a0] sm:$0xf]
  %v184 = vld [vmem:[%s1 + $0x1a4] sm:$0xf]
  %v185 = vld [vmem:[%s1 + $0x1a8] sm:$0xf]
  %v186 = vld [vmem:[%s1 + $0x1ac] sm:$0xf]
  %v187 = vld [vmem:[%s1 + $0x1b0] sm:$0xf]
  %v188 = vld [vmem:[%s1 + $0x1b4] sm:$0xf]
  %v189 = vld [vmem:[%s1 + $0x1b8] sm:$0xf]
  %v190 = vld [vmem:[%s1 + $0x1bc] sm:$0xf]
  %v191 = vld [vmem:[%s1 + $0x1c0] sm:$0xf]
  %v192 = vld [vmem:[%s1 + $0x1c4] sm:$0xf]
  %v193 = vld [vmem:[%s1 + $0x1c8] sm:$0xf]
  %v194 = vld [vmem:[%s1 + $0x1cc] sm:$0xf]
  %v195 = vld [vmem:[%s1 + $0x1d0] sm:$0xf]
  %v196 = vld [vmem:[%s1 + $0x1d4] sm:$0xf]
  %v197 = vld [vmem:[%s1 + $0x1d8] sm:$0xf]
  %v198 = vld [vmem:[%s1 + $0x1dc] sm:$0xf]
  %v199 = vld [vmem:[%s1 + $0x1e0] sm:$0xf]
  %v200 = vld [vmem:[%s1 + $0x1e4] sm:$0xf]
  %v201 = vld [vmem:[%s1 + $0x1e8] sm:$0xf]
  %v202 = vld [vmem:[%s1 + $0x1ec] sm:$0xf]
  %v203 = vld [vmem:[%s1 + $0x1f0] sm:$0xf]
  %v204 = vld [vmem:[%s1 + $0x1f4] sm:$0xf]
  %v205 = vld [vmem:[%s1 + $0x1f8] sm:$0xf]
  %v206 = vld [vmem:[%s1 + $0x1fc] sm:$0xf]
  %v207 = vld [vmem:[%s2] sm:$0x1]
  %v209 = vlaneseq
  %v210 = vshrl.u32 %v209, 7
  %v211 = vsub.s32 0, %v210
  %v212 = vrot.slane %v207, %v211
  %v278 = vunpack.c.l.b16 %v15
  %v279 = vunpack.c.h.b16 %v15
  %v280 = vunpack.c.l.b16 %v16
  %v281 = vunpack.c.h.b16 %v16
  %v282 = vunpack.c.l.b16 %v17
  %v283 = vunpack.c.h.b16 %v17
  %v284 = vunpack.c.l.b16 %v18
  %v285 = vunpack.c.h.b16 %v18
  %v286 = vunpack.c.l.b16 %v19
  %v287 = vunpack.c.h.b16 %v19
  %v288 = vunpack.c.l.b16 %v20
  %v289 = vunpack.c.h.b16 %v20
  %v290 = vunpack.c.l.b16 %v21
  %v291 = vunpack.c.h.b16 %v21
  %v292 = vunpack.c.l.b16 %v22
  %v293 = vunpack.c.h.b16 %v22
  %v294 = vunpack.c.l.b16 %v23
  %v295 = vunpack.c.h.b16 %v23
  %v296 = vunpack.c.l.b16 %v24
  %v297 = vunpack.c.h.b16 %v24
  %v298 = vunpack.c.l.b16 %v25
  %v299 = vunpack.c.h.b16 %v25
  %v300 = vunpack.c.l.b16 %v26
  %v301 = vunpack.c.h.b16 %v26
  %v302 = vunpack.c.l.b16 %v27
  %v303 = vunpack.c.h.b16 %v27
  %v304 = vunpack.c.l.b16 %v28
  %v305 = vunpack.c.h.b16 %v28
  %v306 = vunpack.c.l.b16 %v29
  %v307 = vunpack.c.h.b16 %v29
  %v308 = vunpack.c.l.b16 %v30
  %v309 = vunpack.c.h.b16 %v30
  %v310 = vunpack.c.l.b16 %v31
  %v311 = vunpack.c.h.b16 %v31
  %v312 = vunpack.c.l.b16 %v32
  %v313 = vunpack.c.h.b16 %v32
  %v314 = vunpack.c.l.b16 %v33
  %v315 = vunpack.c.h.b16 %v33
  %v316 = vunpack.c.l.b16 %v34
  %v317 = vunpack.c.h.b16 %v34
  %v318 = vunpack.c.l.b16 %v35
  %v319 = vunpack.c.h.b16 %v35
  %v320 = vunpack.c.l.b16 %v36
  %v321 = vunpack.c.h.b16 %v36
  %v322 = vunpack.c.l.b16 %v37
  %v323 = vunpack.c.h.b16 %v37
  %v324 = vunpack.c.l.b16 %v38
  %v325 = vunpack.c.h.b16 %v38
  %v326 = vunpack.c.l.b16 %v39
  %v327 = vunpack.c.h.b16 %v39
  %v328 = vunpack.c.l.b16 %v40
  %v329 = vunpack.c.h.b16 %v40
  %v330 = vunpack.c.l.b16 %v41
  %v331 = vunpack.c.h.b16 %v41
  %v332 = vunpack.c.l.b16 %v42
  %v333 = vunpack.c.h.b16 %v42
  %v334 = vunpack.c.l.b16 %v43
  %v335 = vunpack.c.h.b16 %v43
  %v336 = vunpack.c.l.b16 %v44
  %v337 = vunpack.c.h.b16 %v44
  %v338 = vunpack.c.l.b16 %v45
  %v339 = vunpack.c.h.b16 %v45
  %v340 = vunpack.c.l.b16 %v46
  %v341 = vunpack.c.h.b16 %v46
  %v342 = vunpack.c.l.b16 %v47
  %v343 = vunpack.c.h.b16 %v47
  %v344 = vunpack.c.l.b16 %v48
  %v345 = vunpack.c.h.b16 %v48
  %v346 = vunpack.c.l.b16 %v49
  %v347 = vunpack.c.h.b16 %v49
  %v348 = vunpack.c.l.b16 %v50
  %v349 = vunpack.c.h.b16 %v50
  %v350 = vunpack.c.l.b16 %v51
  %v351 = vunpack.c.h.b16 %v51
  %v352 = vunpack.c.l.b16 %v52
  %v353 = vunpack.c.h.b16 %v52
  %v354 = vunpack.c.l.b16 %v53
  %v355 = vunpack.c.h.b16 %v53
  %v356 = vunpack.c.l.b16 %v54
  %v357 = vunpack.c.h.b16 %v54
  %v358 = vunpack.c.l.b16 %v55
  %v359 = vunpack.c.h.b16 %v55
  %v360 = vunpack.c.l.b16 %v56
  %v361 = vunpack.c.h.b16 %v56
  %v362 = vunpack.c.l.b16 %v57
  %v363 = vunpack.c.h.b16 %v57
  %v364 = vunpack.c.l.b16 %v58
  %v365 = vunpack.c.h.b16 %v58
  %v366 = vunpack.c.l.b16 %v59
  %v367 = vunpack.c.h.b16 %v59
  %v368 = vunpack.c.l.b16 %v60
  %v369 = vunpack.c.h.b16 %v60
  %v370 = vunpack.c.l.b16 %v61
  %v371 = vunpack.c.h.b16 %v61
  %v372 = vunpack.c.l.b16 %v62
  %v373 = vunpack.c.h.b16 %v62
  %v374 = vunpack.c.l.b16 %v63
  %v375 = vunpack.c.h.b16 %v63
  %v376 = vunpack.c.l.b16 %v64
  %v377 = vunpack.c.h.b16 %v64
  %v378 = vunpack.c.l.b16 %v65
  %v379 = vunpack.c.h.b16 %v65
  %v380 = vunpack.c.l.b16 %v66
  %v381 = vunpack.c.h.b16 %v66
  %v382 = vunpack.c.l.b16 %v67
  %v383 = vunpack.c.h.b16 %v67
  %v384 = vunpack.c.l.b16 %v68
  %v385 = vunpack.c.h.b16 %v68
  %v386 = vunpack.c.l.b16 %v69
  %v387 = vunpack.c.h.b16 %v69
  %v388 = vunpack.c.l.b16 %v70
  %v389 = vunpack.c.h.b16 %v70
  %v390 = vunpack.c.l.b16 %v71
  %v391 = vunpack.c.h.b16 %v71
  %v392 = vunpack.c.l.b16 %v72
  %v393 = vunpack.c.h.b16 %v72
  %v394 = vunpack.c.l.b16 %v73
  %v395 = vunpack.c.h.b16 %v73
  %v396 = vunpack.c.l.b16 %v74
  %v397 = vunpack.c.h.b16 %v74
  %v398 = vunpack.c.l.b16 %v75
  %v399 = vunpack.c.h.b16 %v75
  %v400 = vunpack.c.l.b16 %v76
  %v401 = vunpack.c.h.b16 %v76
  %v402 = vunpack.c.l.b16 %v77
  %v403 = vunpack.c.h.b16 %v77
  %v404 = vunpack.c.l.b16 %v78
  %v405 = vunpack.c.h.b16 %v78
  %v406 = vpack.c.b16 %v286, %v278
  %v407 = vpack.c.b16 %v287, %v279
  %v408 = vpack.c.b16 %v288, %v280
  %v409 = vpack.c.b16 %v289, %v281
  %v410 = vpack.c.b16 %v290, %v282
  %v411 = vpack.c.b16 %v291, %v283
  %v412 = vpack.c.b16 %v292, %v284
  %v413 = vpack.c.b16 %v293, %v285
  %v414 = vpack.c.b16 %v302, %v294
  %v415 = vpack.c.b16 %v303, %v295
  %v416 = vpack.c.b16 %v304, %v296
  %v417 = vpack.c.b16 %v305, %v297
  %v418 = vpack.c.b16 %v306, %v298
  %v419 = vpack.c.b16 %v307, %v299
  %v420 = vpack.c.b16 %v308, %v300
  %v421 = vpack.c.b16 %v309, %v301
  %v422 = vpack.c.b16 %v318, %v310
  %v423 = vpack.c.b16 %v319, %v311
  %v424 = vpack.c.b16 %v320, %v312
  %v425 = vpack.c.b16 %v321, %v313
  %v426 = vpack.c.b16 %v322, %v314
  %v427 = vpack.c.b16 %v323, %v315
  %v428 = vpack.c.b16 %v324, %v316
  %v429 = vpack.c.b16 %v325, %v317
  %v430 = vpack.c.b16 %v334, %v326
  %v431 = vpack.c.b16 %v335, %v327
  %v432 = vpack.c.b16 %v336, %v328
  %v433 = vpack.c.b16 %v337, %v329
  %v434 = vpack.c.b16 %v338, %v330
  %v435 = vpack.c.b16 %v339, %v331
  %v436 = vpack.c.b16 %v340, %v332
  %v437 = vpack.c.b16 %v341, %v333
  %v438 = vpack.c.b16 %v350, %v342
  %v439 = vpack.c.b16 %v351, %v343
  %v440 = vpack.c.b16 %v352, %v344
  %v441 = vpack.c.b16 %v353, %v345
  %v442 = vpack.c.b16 %v354, %v346
  %v443 = vpack.c.b16 %v355, %v347
  %v444 = vpack.c.b16 %v356, %v348
  %v445 = vpack.c.b16 %v357, %v349
  %v446 = vpack.c.b16 %v366, %v358
  %v447 = vpack.c.b16 %v367, %v359
  %v448 = vpack.c.b16 %v368, %v360
  %v449 = vpack.c.b16 %v369, %v361
  %v450 = vpack.c.b16 %v370, %v362
  %v451 = vpack.c.b16 %v371, %v363
  %v452 = vpack.c.b16 %v372, %v364
  %v453 = vpack.c.b16 %v373, %v365
  %v454 = vpack.c.b16 %v382, %v374
  %v455 = vpack.c.b16 %v383, %v375
  %v456 = vpack.c.b16 %v384, %v376
  %v457 = vpack.c.b16 %v385, %v377
  %v458 = vpack.c.b16 %v386, %v378
  %v459 = vpack.c.b16 %v387, %v379
  %v460 = vpack.c.b16 %v388, %v380
  %v461 = vpack.c.b16 %v389, %v381
  %v462 = vpack.c.b16 %v398, %v390
  %v463 = vpack.c.b16 %v399, %v391
  %v464 = vpack.c.b16 %v400, %v392
  %v465 = vpack.c.b16 %v401, %v393
  %v466 = vpack.c.b16 %v402, %v394
  %v467 = vpack.c.b16 %v403, %v395
  %v468 = vpack.c.b16 %v404, %v396
  %v469 = vpack.c.b16 %v405, %v397
  %v662 = vunpack.c.l.b16 %v79
  %v663 = vunpack.c.l.b16 %v80
  %v664 = vunpack.c.l.b16 %v81
  %v665 = vunpack.c.l.b16 %v82
  %v666 = vunpack.c.l.b16 %v83
  %v667 = vunpack.c.l.b16 %v84
  %v668 = vunpack.c.l.b16 %v85
  %v669 = vunpack.c.l.b16 %v86
  %v670 = vunpack.c.l.b16 %v87
  %v671 = vunpack.c.l.b16 %v88
  %v672 = vunpack.c.l.b16 %v89
  %v673 = vunpack.c.l.b16 %v90
  %v674 = vunpack.c.l.b16 %v91
  %v675 = vunpack.c.l.b16 %v92
  %v676 = vunpack.c.l.b16 %v93
  %v677 = vunpack.c.l.b16 %v94
  %v678 = vunpack.c.l.b16 %v95
  %v679 = vunpack.c.l.b16 %v96
  %v680 = vunpack.c.l.b16 %v97
  %v681 = vunpack.c.l.b16 %v98
  %v682 = vunpack.c.l.b16 %v99
  %v683 = vunpack.c.l.b16 %v100
  %v684 = vunpack.c.l.b16 %v101
  %v685 = vunpack.c.l.b16 %v102
  %v686 = vunpack.c.l.b16 %v103
  %v687 = vunpack.c.l.b16 %v104
  %v688 = vunpack.c.l.b16 %v105
  %v689 = vunpack.c.l.b16 %v106
  %v690 = vunpack.c.l.b16 %v107
  %v691 = vunpack.c.l.b16 %v108
  %v692 = vunpack.c.l.b16 %v109
  %v693 = vunpack.c.l.b16 %v110
  %v694 = vunpack.c.l.b16 %v111
  %v695 = vunpack.c.l.b16 %v112
  %v696 = vunpack.c.l.b16 %v113
  %v697 = vunpack.c.l.b16 %v114
  %v698 = vunpack.c.l.b16 %v115
  %v699 = vunpack.c.l.b16 %v116
  %v700 = vunpack.c.l.b16 %v117
  %v701 = vunpack.c.l.b16 %v118
  %v702 = vunpack.c.l.b16 %v119
  %v703 = vunpack.c.l.b16 %v120
  %v704 = vunpack.c.l.b16 %v121
  %v705 = vunpack.c.l.b16 %v122
  %v706 = vunpack.c.l.b16 %v123
  %v707 = vunpack.c.l.b16 %v124
  %v708 = vunpack.c.l.b16 %v125
  %v709 = vunpack.c.l.b16 %v126
  %v710 = vunpack.c.l.b16 %v127
  %v711 = vunpack.c.l.b16 %v128
  %v712 = vunpack.c.l.b16 %v129
  %v713 = vunpack.c.l.b16 %v130
  %v714 = vunpack.c.l.b16 %v131
  %v715 = vunpack.c.l.b16 %v132
  %v716 = vunpack.c.l.b16 %v133
  %v717 = vunpack.c.l.b16 %v134
  %v718 = vunpack.c.l.b16 %v135
  %v719 = vunpack.c.l.b16 %v136
  %v720 = vunpack.c.l.b16 %v137
  %v721 = vunpack.c.l.b16 %v138
  %v722 = vunpack.c.l.b16 %v139
  %v723 = vunpack.c.l.b16 %v140
  %v724 = vunpack.c.l.b16 %v141
  %v725 = vunpack.c.l.b16 %v142
  %v726 = vunpack.c.l.b16 %v143
  %v727 = vunpack.c.l.b16 %v144
  %v728 = vunpack.c.l.b16 %v145
  %v729 = vunpack.c.l.b16 %v146
  %v730 = vunpack.c.l.b16 %v147
  %v731 = vunpack.c.l.b16 %v148
  %v732 = vunpack.c.l.b16 %v149
  %v733 = vunpack.c.l.b16 %v150
  %v734 = vunpack.c.l.b16 %v151
  %v735 = vunpack.c.l.b16 %v152
  %v736 = vunpack.c.l.b16 %v153
  %v737 = vunpack.c.l.b16 %v154
  %v738 = vunpack.c.l.b16 %v155
  %v739 = vunpack.c.l.b16 %v156
  %v740 = vunpack.c.l.b16 %v157
  %v741 = vunpack.c.l.b16 %v158
  %v742 = vunpack.c.l.b16 %v159
  %v743 = vunpack.c.l.b16 %v160
  %v744 = vunpack.c.l.b16 %v161
  %v745 = vunpack.c.l.b16 %v162
  %v746 = vunpack.c.l.b16 %v163
  %v747 = vunpack.c.l.b16 %v164
  %v748 = vunpack.c.l.b16 %v165
  %v749 = vunpack.c.l.b16 %v166
  %v750 = vunpack.c.l.b16 %v167
  %v751 = vunpack.c.l.b16 %v168
  %v752 = vunpack.c.l.b16 %v169
  %v753 = vunpack.c.l.b16 %v170
  %v754 = vunpack.c.l.b16 %v171
  %v755 = vunpack.c.l.b16 %v172
  %v756 = vunpack.c.l.b16 %v173
  %v757 = vunpack.c.l.b16 %v174
  %v758 = vunpack.c.l.b16 %v175
  %v759 = vunpack.c.l.b16 %v176
  %v760 = vunpack.c.l.b16 %v177
  %v761 = vunpack.c.l.b16 %v178
  %v762 = vunpack.c.l.b16 %v179
  %v763 = vunpack.c.l.b16 %v180
  %v764 = vunpack.c.l.b16 %v181
  %v765 = vunpack.c.l.b16 %v182
  %v766 = vunpack.c.l.b16 %v183
  %v767 = vunpack.c.l.b16 %v184
  %v768 = vunpack.c.l.b16 %v185
  %v769 = vunpack.c.l.b16 %v186
  %v770 = vunpack.c.l.b16 %v187
  %v771 = vunpack.c.l.b16 %v188
  %v772 = vunpack.c.l.b16 %v189
  %v773 = vunpack.c.l.b16 %v190
  %v774 = vunpack.c.l.b16 %v191
  %v775 = vunpack.c.l.b16 %v192
  %v776 = vunpack.c.l.b16 %v193
  %v777 = vunpack.c.l.b16 %v194
  %v778 = vunpack.c.l.b16 %v195
  %v779 = vunpack.c.l.b16 %v196
  %v780 = vunpack.c.l.b16 %v197
  %v781 = vunpack.c.l.b16 %v198
  %v782 = vunpack.c.l.b16 %v199
  %v783 = vunpack.c.l.b16 %v200
  %v784 = vunpack.c.l.b16 %v201
  %v785 = vunpack.c.l.b16 %v202
  %v786 = vunpack.c.l.b16 %v203
  %v787 = vunpack.c.l.b16 %v204
  %v788 = vunpack.c.l.b16 %v205
  %v789 = vunpack.c.l.b16 %v206
  %v790 = vpack.c.b16 %v663, %v662
  %v791 = vpack.c.b16 %v665, %v664
  %v792 = vpack.c.b16 %v667, %v666
  %v793 = vpack.c.b16 %v669, %v668
  %v794 = vpack.c.b16 %v671, %v670
  %v795 = vpack.c.b16 %v673, %v672
  %v796 = vpack.c.b16 %v675, %v674
  %v797 = vpack.c.b16 %v677, %v676
  %v798 = vpack.c.b16 %v679, %v678
  %v799 = vpack.c.b16 %v681, %v680
  %v800 = vpack.c.b16 %v683, %v682
  %v801 = vpack.c.b16 %v685, %v684
  %v802 = vpack.c.b16 %v687, %v686
  %v803 = vpack.c.b16 %v689, %v688
  %v804 = vpack.c.b16 %v691, %v690
  %v805 = vpack.c.b16 %v693, %v692
  %v806 = vpack.c.b16 %v695, %v694
  %v807 = vpack.c.b16 %v697, %v696
  %v808 = vpack.c.b16 %v699, %v698
  %v809 = vpack.c.b16 %v701, %v700
  %v810 = vpack.c.b16 %v703, %v702
  %v811 = vpack.c.b16 %v705, %v704
  %v812 = vpack.c.b16 %v707, %v706
  %v813 = vpack.c.b16 %v709, %v708
  %v814 = vpack.c.b16 %v711, %v710
  %v815 = vpack.c.b16 %v713, %v712
  %v816 = vpack.c.b16 %v715, %v714
  %v817 = vpack.c.b16 %v717, %v716
  %v818 = vpack.c.b16 %v719, %v718
  %v819 = vpack.c.b16 %v721, %v720
  %v820 = vpack.c.b16 %v723, %v722
  %v821 = vpack.c.b16 %v725, %v724
  %v822 = vpack.c.b16 %v727, %v726
  %v823 = vpack.c.b16 %v729, %v728
  %v824 = vpack.c.b16 %v731, %v730
  %v825 = vpack.c.b16 %v733, %v732
  %v826 = vpack.c.b16 %v735, %v734
  %v827 = vpack.c.b16 %v737, %v736
  %v828 = vpack.c.b16 %v739, %v738
  %v829 = vpack.c.b16 %v741, %v740
  %v830 = vpack.c.b16 %v743, %v742
  %v831 = vpack.c.b16 %v745, %v744
  %v832 = vpack.c.b16 %v747, %v746
  %v833 = vpack.c.b16 %v749, %v748
  %v834 = vpack.c.b16 %v751, %v750
  %v835 = vpack.c.b16 %v753, %v752
  %v836 = vpack.c.b16 %v755, %v754
  %v837 = vpack.c.b16 %v757, %v756
  %v838 = vpack.c.b16 %v759, %v758
  %v839 = vpack.c.b16 %v761, %v760
  %v840 = vpack.c.b16 %v763, %v762
  %v841 = vpack.c.b16 %v765, %v764
  %v842 = vpack.c.b16 %v767, %v766
  %v843 = vpack.c.b16 %v769, %v768
  %v844 = vpack.c.b16 %v771, %v770
  %v845 = vpack.c.b16 %v773, %v772
  %v846 = vpack.c.b16 %v775, %v774
  %v847 = vpack.c.b16 %v777, %v776
  %v848 = vpack.c.b16 %v779, %v778
  %v849 = vpack.c.b16 %v781, %v780
  %v850 = vpack.c.b16 %v783, %v782
  %v851 = vpack.c.b16 %v785, %v784
  %v852 = vpack.c.b16 %v787, %v786
  %v853 = vpack.c.b16 %v789, %v788
  %918 = vmatprep.subr.bf16.mxu0 0
  %919 = vmatpush1.bf16.msra.mxu0 %v790
  %920 = vmatprep.subr.bf16.mxu0 0
  %921 = vmatpush1.bf16.msra.mxu0 %v791
  %922 = vmatprep.subr.bf16.mxu0 0
  %923 = vmatpush1.bf16.msra.mxu0 %v792
  %924 = vmatprep.subr.bf16.mxu0 0
  %925 = vmatpush1.bf16.msra.mxu0 %v793
  %926 = vmatprep.subr.bf16.mxu0 0
  %927 = vmatpush1.bf16.msra.mxu0 %v794
  %928 = vmatprep.subr.bf16.mxu0 0
  %929 = vmatpush1.bf16.msra.mxu0 %v795
  %930 = vmatprep.subr.bf16.mxu0 0
  %931 = vmatpush1.bf16.msra.mxu0 %v796
  %932 = vmatprep.subr.bf16.mxu0 0
  %933 = vmatpush1.bf16.msra.mxu0 %v797
  %934 = vmatprep.subr.bf16.mxu0 0
  %935 = vmatpush1.bf16.msra.mxu0 %v798
  %936 = vmatprep.subr.bf16.mxu0 0
  %937 = vmatpush1.bf16.msra.mxu0 %v799
  %938 = vmatprep.subr.bf16.mxu0 0
  %939 = vmatpush1.bf16.msra.mxu0 %v800
  %940 = vmatprep.subr.bf16.mxu0 0
  %941 = vmatpush1.bf16.msra.mxu0 %v801
  %942 = vmatprep.subr.bf16.mxu0 0
  %943 = vmatpush1.bf16.msra.mxu0 %v802
  %944 = vmatprep.subr.bf16.mxu0 0
  %945 = vmatpush1.bf16.msra.mxu0 %v803
  %946 = vmatprep.subr.bf16.mxu0 0
  %947 = vmatpush1.bf16.msra.mxu0 %v804
  %948 = vmatprep.subr.bf16.mxu0 0
  %949 = vmatpush1.bf16.msra.mxu0 %v805
  %950 = vmatprep.mubr.bf16.mxu0 %v407
  %951 = vmatmul.mubr.bf16.gmra.mrb[0].mxu0 %v406
  %v952 = vpop.f32.mrb[0].mxu0
  %v953 = vadd.f32 %v212, %v952
  %v954 = vpop.f32.mrb[0].mxu0
  %v955 = vpop.f32.mrb[0].mxu0
  %v956 = vadd.f32 %v212, %v955
  %v957 = vpop.f32.mrb[0].mxu0
  %958 = vmatprep.mubr.bf16.mxu0 %v415
  %959 = vmatmul.mubr.bf16.gmra.mrb[0].mxu0 %v414
  %v960 = vpop.f32.mrb[0].mxu0
  %v961 = vadd.f32 %v212, %v960
  %v962 = vpop.f32.mrb[0].mxu0
  %v963 = vpop.f32.mrb[0].mxu0
  %v964 = vadd.f32 %v212, %v963
  %v965 = vpop.f32.mrb[0].mxu0
  %966 = vmatprep.mubr.bf16.mxu0 %v423
  %967 = vmatmul.mubr.bf16.gmra.mrb[0].mxu0 %v422
  %v968 = vpop.f32.mrb[0].mxu0
  %v969 = vadd.f32 %v212, %v968
  %v970 = vpop.f32.mrb[0].mxu0
  %v971 = vpop.f32.mrb[0].mxu0
  %v972 = vadd.f32 %v212, %v971
  %v973 = vpop.f32.mrb[0].mxu0
  %974 = vmatprep.mubr.bf16.mxu0 %v431
  %975 = vmatmul.mubr.bf16.gmra.mrb[0].mxu0 %v430
  %v976 = vpop.f32.mrb[0].mxu0
  %v977 = vadd.f32 %v212, %v976
  %v978 = vpop.f32.mrb[0].mxu0
  %v979 = vpop.f32.mrb[0].mxu0
  %v980 = vadd.f32 %v212, %v979
  %v981 = vpop.f32.mrb[0].mxu0
  %982 = vmatprep.mubr.bf16.mxu0 %v439
  %983 = vmatmul.mubr.bf16.gmra.mrb[0].mxu0 %v438
  %v984 = vpop.f32.mrb[0].mxu0
  %v985 = vadd.f32 %v212, %v984
  %v986 = vpop.f32.mrb[0].mxu0
  %v987 = vpop.f32.mrb[0].mxu0
  %v988 = vadd.f32 %v212, %v987
  %v989 = vpop.f32.mrb[0].mxu0
  %990 = vmatprep.mubr.bf16.mxu0 %v447
  %991 = vmatmul.mubr.bf16.gmra.mrb[0].mxu0 %v446
  %v992 = vpop.f32.mrb[0].mxu0
  %v993 = vadd.f32 %v212, %v992
  %v994 = vpop.f32.mrb[0].mxu0
  %v995 = vpop.f32.mrb[0].mxu0
  %v996 = vadd.f32 %v212, %v995
  %v997 = vpop.f32.mrb[0].mxu0
  %998 = vmatprep.mubr.bf16.mxu0 %v455
  %999 = vmatmul.mubr.bf16.gmra.mrb[0].mxu0 %v454
  %v1000 = vpop.f32.mrb[0].mxu0
  %v1001 = vadd.f32 %v212, %v1000
  %v1002 = vpop.f32.mrb[0].mxu0
  %v1003 = vpop.f32.mrb[0].mxu0
  %v1004 = vadd.f32 %v212, %v1003
  %v1005 = vpop.f32.mrb[0].mxu0
  %1006 = vmatprep.mubr.bf16.mxu0 %v463
  %1007 = vmatmul.mubr.bf16.gmra.mrb[0].mxu0 %v462
  %v1008 = vpop.f32.mrb[0].mxu0
  %v1009 = vadd.f32 %v212, %v1008
  %v1010 = vpop.f32.mrb[0].mxu0
  %v1011 = vpop.f32.mrb[0].mxu0
  %v1012 = vadd.f32 %v212, %v1011
  %v1013 = vpop.f32.mrb[0].mxu0
  %1014 = vdwg.mxu0
  %1015 = vmatprep.subr.bf16.mxu0 0
  %1016 = vmatpush1.bf16.msra.mxu0 %v806
  %1017 = vmatprep.subr.bf16.mxu0 0
  %1018 = vmatpush1.bf16.msra.mxu0 %v807
  %1019 = vmatprep.subr.bf16.mxu0 0
  %1020 = vmatpush1.bf16.msra.mxu0 %v808
  %1021 = vmatprep.subr.bf16.mxu0 0
  %1022 = vmatpush1.bf16.msra.mxu0 %v809
  %1023 = vmatprep.subr.bf16.mxu0 0
  %1024 = vmatpush1.bf16.msra.mxu0 %v810
  %1025 = vmatprep.subr.bf16.mxu0 0
  %1026 = vmatpush1.bf16.msra.mxu0 %v811
  %1027 = vmatprep.subr.bf16.mxu0 0
  %1028 = vmatpush1.bf16.msra.mxu0 %v812
  %1029 = vmatprep.subr.bf16.mxu0 0
  %1030 = vmatpush1.bf16.msra.mxu0 %v813
  %1031 = vmatprep.subr.bf16.mxu0 0
  %1032 = vmatpush1.bf16.msra.mxu0 %v814
  %1033 = vmatprep.subr.bf16.mxu0 0
  %1034 = vmatpush1.bf16.msra.mxu0 %v815
  %1035 = vmatprep.subr.bf16.mxu0 0
  %1036 = vmatpush1.bf16.msra.mxu0 %v816
  %1037 = vmatprep.subr.bf16.mxu0 0
  %1038 = vmatpush1.bf16.msra.mxu0 %v817
  %1039 = vmatprep.subr.bf16.mxu0 0
  %1040 = vmatpush1.bf16.msra.mxu0 %v818
  %1041 = vmatprep.subr.bf16.mxu0 0
  %1042 = vmatpush1.bf16.msra.mxu0 %v819
  %1043 = vmatprep.subr.bf16.mxu0 0
  %1044 = vmatpush1.bf16.msra.mxu0 %v820
  %1045 = vmatprep.subr.bf16.mxu0 0
  %1046 = vmatpush1.bf16.msra.mxu0 %v821
  %1047 = vmatprep.mubr.bf16.mxu0 %v409
  %1048 = vmatmul.mubr.bf16.gmra.mrb[0].mxu0 %v408
  %v1049 = vpop.f32.mrb[0].mxu0
  %v1050 = vadd.f32 %v953, %v1049
  %v1051 = vpop.f32.mrb[0].mxu0
  %v1052 = vpop.f32.mrb[0].mxu0
  %v1053 = vadd.f32 %v956, %v1052
  %v1054 = vpop.f32.mrb[0].mxu0
  %1055 = vmatprep.mubr.bf16.mxu0 %v417
  %1056 = vmatmul.mubr.bf16.gmra.mrb[0].mxu0 %v416
  %v1057 = vpop.f32.mrb[0].mxu0
  %v1058 = vadd.f32 %v961, %v1057
  %v1059 = vpop.f32.mrb[0].mxu0
  %v1060 = vpop.f32.mrb[0].mxu0
  %v1061 = vadd.f32 %v964, %v1060
  %v1062 = vpop.f32.mrb[0].mxu0
  %1063 = vmatprep.mubr.bf16.mxu0 %v425
  %1064 = vmatmul.mubr.bf16.gmra.mrb[0].mxu0 %v424
  %v1065 = vpop.f32.mrb[0].mxu0
  %v1066 = vadd.f32 %v969, %v1065
  %v1067 = vpop.f32.mrb[0].mxu0
  %v1068 = vpop.f32.mrb[0].mxu0
  %v1069 = vadd.f32 %v972, %v1068
  %v1070 = vpop.f32.mrb[0].mxu0
  %1071 = vmatprep.mubr.bf16.mxu0 %v433
  %1072 = vmatmul.mubr.bf16.gmra.mrb[0].mxu0 %v432
  %v1073 = vpop.f32.mrb[0].mxu0
  %v1074 = vadd.f32 %v977, %v1073
  %v1075 = vpop.f32.mrb[0].mxu0
  %v1076 = vpop.f32.mrb[0].mxu0
  %v1077 = vadd.f32 %v980, %v1076
  %v1078 = vpop.f32.mrb[0].mxu0
  %1079 = vmatprep.mubr.bf16.mxu0 %v441
  %1080 = vmatmul.mubr.bf16.gmra.mrb[0].mxu0 %v440
  %v1081 = vpop.f32.mrb[0].mxu0
  %v1082 = vadd.f32 %v985, %v1081
  %v1083 = vpop.f32.mrb[0].mxu0
  %v1084 = vpop.f32.mrb[0].mxu0
  %v1085 = vadd.f32 %v988, %v1084
  %v1086 = vpop.f32.mrb[0].mxu0
  %1087 = vmatprep.mubr.bf16.mxu0 %v449
  %1088 = vmatmul.mubr.bf16.gmra.mrb[0].mxu0 %v448
  %v1089 = vpop.f32.mrb[0].mxu0
  %v1090 = vadd.f32 %v993, %v1089
  %v1091 = vpop.f32.mrb[0].mxu0
  %v1092 = vpop.f32.mrb[0].mxu0
  %v1093 = vadd.f32 %v996, %v1092
  %v1094 = vpop.f32.mrb[0].mxu0
  %1095 = vmatprep.mubr.bf16.mxu0 %v457
  %1096 = vmatmul.mubr.bf16.gmra.mrb[0].mxu0 %v456
  %v1097 = vpop.f32.mrb[0].mxu0
  %v1098 = vadd.f32 %v1001, %v1097
  %v1099 = vpop.f32.mrb[0].mxu0
  %v1100 = vpop.f32.mrb[0].mxu0
  %v1101 = vadd.f32 %v1004, %v1100
  %v1102 = vpop.f32.mrb[0].mxu0
  %1103 = vmatprep.mubr.bf16.mxu0 %v465
  %1104 = vmatmul.mubr.bf16.gmra.mrb[0].mxu0 %v464
  %v1105 = vpop.f32.mrb[0].mxu0
  %v1106 = vadd.f32 %v1009, %v1105
  %v1107 = vpop.f32.mrb[0].mxu0
  %v1108 = vpop.f32.mrb[0].mxu0
  %v1109 = vadd.f32 %v1012, %v1108
  %v1110 = vpop.f32.mrb[0].mxu0
  %1111 = vdwg.mxu0
  %1112 = vmatprep.subr.bf16.mxu0 0
  %1113 = vmatpush1.bf16.msra.mxu0 %v822
  %1114 = vmatprep.subr.bf16.mxu0 0
  %1115 = vmatpush1.bf16.msra.mxu0 %v823
  %1116 = vmatprep.subr.bf16.mxu0 0
  %1117 = vmatpush1.bf16.msra.mxu0 %v824
  %1118 = vmatprep.subr.bf16.mxu0 0
  %1119 = vmatpush1.bf16.msra.mxu0 %v825
  %1120 = vmatprep.subr.bf16.mxu0 0
  %1121 = vmatpush1.bf16.msra.mxu0 %v826
  %1122 = vmatprep.subr.bf16.mxu0 0
  %1123 = vmatpush1.bf16.msra.mxu0 %v827
  %1124 = vmatprep.subr.bf16.mxu0 0
  %1125 = vmatpush1.bf16.msra.mxu0 %v828
  %1126 = vmatprep.subr.bf16.mxu0 0
  %1127 = vmatpush1.bf16.msra.mxu0 %v829
  %1128 = vmatprep.subr.bf16.mxu0 0
  %1129 = vmatpush1.bf16.msra.mxu0 %v830
  %1130 = vmatprep.subr.bf16.mxu0 0
  %1131 = vmatpush1.bf16.msra.mxu0 %v831
  %1132 = vmatprep.subr.bf16.mxu0 0
  %1133 = vmatpush1.bf16.msra.mxu0 %v832
  %1134 = vmatprep.subr.bf16.mxu0 0
  %1135 = vmatpush1.bf16.msra.mxu0 %v833
  %1136 = vmatprep.subr.bf16.mxu0 0
  %1137 = vmatpush1.bf16.msra.mxu0 %v834
  %1138 = vmatprep.subr.bf16.mxu0 0
  %1139 = vmatpush1.bf16.msra.mxu0 %v835
  %1140 = vmatprep.subr.bf16.mxu0 0
  %1141 = vmatpush1.bf16.msra.mxu0 %v836
  %1142 = vmatprep.subr.bf16.mxu0 0
  %1143 = vmatpush1.bf16.msra.mxu0 %v837
  %1144 = vmatprep.mubr.bf16.mxu0 %v411
  %1145 = vmatmul.mubr.bf16.gmra.mrb[0].mxu0 %v410
  %v1146 = vpop.f32.mrb[0].mxu0
  %v1147 = vadd.f32 %v1050, %v1146
  %v1148 = vpop.f32.mrb[0].mxu0
  %v1149 = vpop.f32.mrb[0].mxu0
  %v1150 = vadd.f32 %v1053, %v1149
  %v1151 = vpop.f32.mrb[0].mxu0
  %1152 = vmatprep.mubr.bf16.mxu0 %v419
  %1153 = vmatmul.mubr.bf16.gmra.mrb[0].mxu0 %v418
  %v1154 = vpop.f32.mrb[0].mxu0
  %v1155 = vadd.f32 %v1058, %v1154
  %v1156 = vpop.f32.mrb[0].mxu0
  %v1157 = vpop.f32.mrb[0].mxu0
  %v1158 = vadd.f32 %v1061, %v1157
  %v1159 = vpop.f32.mrb[0].mxu0
  %1160 = vmatprep.mubr.bf16.mxu0 %v427
  %1161 = vmatmul.mubr.bf16.gmra.mrb[0].mxu0 %v426
  %v1162 = vpop.f32.mrb[0].mxu0
  %v1163 = vadd.f32 %v1066, %v1162
  %v1164 = vpop.f32.mrb[0].mxu0
  %v1165 = vpop.f32.mrb[0].mxu0
  %v1166 = vadd.f32 %v1069, %v1165
  %v1167 = vpop.f32.mrb[0].mxu0
  %1168 = vmatprep.mubr.bf16.mxu0 %v435
  %1169 = vmatmul.mubr.bf16.gmra.mrb[0].mxu0 %v434
  %v1170 = vpop.f32.mrb[0].mxu0
  %v1171 = vadd.f32 %v1074, %v1170
  %v1172 = vpop.f32.mrb[0].mxu0
  %v1173 = vpop.f32.mrb[0].mxu0
  %v1174 = vadd.f32 %v1077, %v1173
  %v1175 = vpop.f32.mrb[0].mxu0
  %1176 = vmatprep.mubr.bf16.mxu0 %v443
  %1177 = vmatmul.mubr.bf16.gmra.mrb[0].mxu0 %v442
  %v1178 = vpop.f32.mrb[0].mxu0
  %v1179 = vadd.f32 %v1082, %v1178
  %v1180 = vpop.f32.mrb[0].mxu0
  %v1181 = vpop.f32.mrb[0].mxu0
  %v1182 = vadd.f32 %v1085, %v1181
  %v1183 = vpop.f32.mrb[0].mxu0
  %1184 = vmatprep.mubr.bf16.mxu0 %v451
  %1185 = vmatmul.mubr.bf16.gmra.mrb[0].mxu0 %v450
  %v1186 = vpop.f32.mrb[0].mxu0
  %v1187 = vadd.f32 %v1090, %v1186
  %v1188 = vpop.f32.mrb[0].mxu0
  %v1189 = vpop.f32.mrb[0].mxu0
  %v1190 = vadd.f32 %v1093, %v1189
  %v1191 = vpop.f32.mrb[0].mxu0
  %1192 = vmatprep.mubr.bf16.mxu0 %v459
  %1193 = vmatmul.mubr.bf16.gmra.mrb[0].mxu0 %v458
  %v1194 = vpop.f32.mrb[0].mxu0
  %v1195 = vadd.f32 %v1098, %v1194
  %v1196 = vpop.f32.mrb[0].mxu0
  %v1197 = vpop.f32.mrb[0].mxu0
  %v1198 = vadd.f32 %v1101, %v1197
  %v1199 = vpop.f32.mrb[0].mxu0
  %1200 = vmatprep.mubr.bf16.mxu0 %v467
  %1201 = vmatmul.mubr.bf16.gmra.mrb[0].mxu0 %v466
  %v1202 = vpop.f32.mrb[0].mxu0
  %v1203 = vadd.f32 %v1106, %v1202
  %v1204 = vpop.f32.mrb[0].mxu0
  %v1205 = vpop.f32.mrb[0].mxu0
  %v1206 = vadd.f32 %v1109, %v1205
  %v1207 = vpop.f32.mrb[0].mxu0
  %1208 = vdwg.mxu0
  %1209 = vmatprep.subr.bf16.mxu0 0
  %1210 = vmatpush1.bf16.msra.mxu0 %v838
  %1211 = vmatprep.subr.bf16.mxu0 0
  %1212 = vmatpush1.bf16.msra.mxu0 %v839
  %1213 = vmatprep.subr.bf16.mxu0 0
  %1214 = vmatpush1.bf16.msra.mxu0 %v840
  %1215 = vmatprep.subr.bf16.mxu0 0
  %1216 = vmatpush1.bf16.msra.mxu0 %v841
  %1217 = vmatprep.subr.bf16.mxu0 0
  %1218 = vmatpush1.bf16.msra.mxu0 %v842
  %1219 = vmatprep.subr.bf16.mxu0 0
  %1220 = vmatpush1.bf16.msra.mxu0 %v843
  %1221 = vmatprep.subr.bf16.mxu0 0
  %1222 = vmatpush1.bf16.msra.mxu0 %v844
  %1223 = vmatprep.subr.bf16.mxu0 0
  %1224 = vmatpush1.bf16.msra.mxu0 %v845
  %1225 = vmatprep.subr.bf16.mxu0 0
  %1226 = vmatpush1.bf16.msra.mxu0 %v846
  %1227 = vmatprep.subr.bf16.mxu0 0
  %1228 = vmatpush1.bf16.msra.mxu0 %v847
  %1229 = vmatprep.subr.bf16.mxu0 0
  %1230 = vmatpush1.bf16.msra.mxu0 %v848
  %1231 = vmatprep.subr.bf16.mxu0 0
  %1232 = vmatpush1.bf16.msra.mxu0 %v849
  %1233 = vmatprep.subr.bf16.mxu0 0
  %1234 = vmatpush1.bf16.msra.mxu0 %v850
  %1235 = vmatprep.subr.bf16.mxu0 0
  %1236 = vmatpush1.bf16.msra.mxu0 %v851
  %1237 = vmatprep.subr.bf16.mxu0 0
  %1238 = vmatpush1.bf16.msra.mxu0 %v852
  %1239 = vmatprep.subr.bf16.mxu0 0
  %1240 = vmatpush1.bf16.msra.mxu0 %v853
  %1241 = vmatprep.mubr.bf16.mxu0 %v413
  %1242 = vmatmul.mubr.bf16.gmra.mrb[0].mxu0 %v412
  %v1243 = vpop.f32.mrb[0].mxu0
  %v1244 = vadd.f32 %v1147, %v1243
  %v1245 = vpop.f32.mrb[0].mxu0
  %v1246 = vpop.f32.mrb[0].mxu0
  %v1247 = vadd.f32 %v1150, %v1246
  %v1248 = vpop.f32.mrb[0].mxu0
  %1249 = vmatprep.mubr.bf16.mxu0 %v421
  %1250 = vmatmul.mubr.bf16.gmra.mrb[0].mxu0 %v420
  %v1251 = vpop.f32.mrb[0].mxu0
  %v1252 = vadd.f32 %v1155, %v1251
  %v1253 = vpop.f32.mrb[0].mxu0
  %v1254 = vpop.f32.mrb[0].mxu0
  %v1255 = vadd.f32 %v1158, %v1254
  %v1256 = vpop.f32.mrb[0].mxu0
  %1257 = vmatprep.mubr.bf16.mxu0 %v429
  %1258 = vmatmul.mubr.bf16.gmra.mrb[0].mxu0 %v428
  %v1259 = vpop.f32.mrb[0].mxu0
  %v1260 = vadd.f32 %v1163, %v1259
  %v1261 = vpop.f32.mrb[0].mxu0
  %v1262 = vpop.f32.mrb[0].mxu0
  %v1263 = vadd.f32 %v1166, %v1262
  %v1264 = vpop.f32.mrb[0].mxu0
  %1265 = vmatprep.mubr.bf16.mxu0 %v437
  %1266 = vmatmul.mubr.bf16.gmra.mrb[0].mxu0 %v436
  %v1267 = vpop.f32.mrb[0].mxu0
  %v1268 = vadd.f32 %v1171, %v1267
  %v1269 = vpop.f32.mrb[0].mxu0
  %v1270 = vpop.f32.mrb[0].mxu0
  %v1271 = vadd.f32 %v1174, %v1270
  %v1272 = vpop.f32.mrb[0].mxu0
  %1273 = vmatprep.mubr.bf16.mxu0 %v445
  %1274 = vmatmul.mubr.bf16.gmra.mrb[0].mxu0 %v444
  %v1275 = vpop.f32.mrb[0].mxu0
  %v1276 = vadd.f32 %v1179, %v1275
  %v1277 = vpop.f32.mrb[0].mxu0
  %v1278 = vpop.f32.mrb[0].mxu0
  %v1279 = vadd.f32 %v1182, %v1278
  %v1280 = vpop.f32.mrb[0].mxu0
  %1281 = vmatprep.mubr.bf16.mxu0 %v453
  %1282 = vmatmul.mubr.bf16.gmra.mrb[0].mxu0 %v452
  %v1283 = vpop.f32.mrb[0].mxu0
  %v1284 = vadd.f32 %v1187, %v1283
  %v1285 = vpop.f32.mrb[0].mxu0
  %v1286 = vpop.f32.mrb[0].mxu0
  %v1287 = vadd.f32 %v1190, %v1286
  %v1288 = vpop.f32.mrb[0].mxu0
  %1289 = vmatprep.mubr.bf16.mxu0 %v461
  %1290 = vmatmul.mubr.bf16.gmra.mrb[0].mxu0 %v460
  %v1291 = vpop.f32.mrb[0].mxu0
  %v1292 = vadd.f32 %v1195, %v1291
  %v1293 = vpop.f32.mrb[0].mxu0
  %v1294 = vpop.f32.mrb[0].mxu0
  %v1295 = vadd.f32 %v1198, %v1294
  %v1296 = vpop.f32.mrb[0].mxu0
  %1297 = vmatprep.mubr.bf16.mxu0 %v469
  %1298 = vmatmul.mubr.bf16.gmra.mrb[0].mxu0 %v468
  %v1299 = vpop.f32.mrb[0].mxu0
  %v1300 = vadd.f32 %v1203, %v1299
  %v1301 = vpop.f32.mrb[0].mxu0
  %v1302 = vpop.f32.mrb[0].mxu0
  %v1303 = vadd.f32 %v1206, %v1302
  %v1304 = vpop.f32.mrb[0].mxu0
  %1305 = vdwg.mxu0
  %v1306 = vpack.c.bf16 %v1247, %v1244
  %v1307 = vpack.c.bf16 %v1255, %v1252
  %v1308 = vpack.c.bf16 %v1263, %v1260
  %v1309 = vpack.c.bf16 %v1271, %v1268
  %v1310 = vpack.c.bf16 %v1279, %v1276
  %v1311 = vpack.c.bf16 %v1287, %v1284
  %v1312 = vpack.c.bf16 %v1295, %v1292
  %v1313 = vpack.c.bf16 %v1303, %v1300
  %v1322 = vunpack.c.l.b16 %v1306
  %v1323 = vunpack.c.h.b16 %v1306
  %v1324 = vunpack.c.l.b16 %v1307
  %v1325 = vunpack.c.h.b16 %v1307
  %v1326 = vunpack.c.l.b16 %v1308
  %v1327 = vunpack.c.h.b16 %v1308
  %v1328 = vunpack.c.l.b16 %v1309
  %v1329 = vunpack.c.h.b16 %v1309
  %v1330 = vunpack.c.l.b16 %v1310
  %v1331 = vunpack.c.h.b16 %v1310
  %v1332 = vunpack.c.l.b16 %v1311
  %v1333 = vunpack.c.h.b16 %v1311
  %v1334 = vunpack.c.l.b16 %v1312
  %v1335 = vunpack.c.h.b16 %v1312
  %v1336 = vunpack.c.l.b16 %v1313
  %v1337 = vunpack.c.h.b16 %v1313
  %v1338 = vpack.c.b16 %v1322, %v1322
  %v1339 = vpack.c.b16 %v1323, %v1323
  %v1340 = vpack.c.b16 %v1324, %v1324
  %v1341 = vpack.c.b16 %v1325, %v1325
  %v1342 = vpack.c.b16 %v1326, %v1326
  %v1343 = vpack.c.b16 %v1327, %v1327
  %v1344 = vpack.c.b16 %v1328, %v1328
  %v1345 = vpack.c.b16 %v1329, %v1329
  %v1346 = vpack.c.b16 %v1330, %v1330
  %v1347 = vpack.c.b16 %v1331, %v1331
  %v1348 = vpack.c.b16 %v1332, %v1332
  %v1349 = vpack.c.b16 %v1333, %v1333
  %v1350 = vpack.c.b16 %v1334, %v1334
  %v1351 = vpack.c.b16 %v1335, %v1335
  %v1352 = vpack.c.b16 %v1336, %v1336
  %v1353 = vpack.c.b16 %v1337, %v1337
  %1370 = vst [vmem:[%s3] sm:$0xf] %v1338
  %1371 = vst [vmem:[%s3 + $0x4] sm:$0xf] %v1339
  %1372 = vst [vmem:[%s3 + $0x8] sm:$0xf] %v1340
  %1373 = vst [vmem:[%s3 + $0xc] sm:$0xf] %v1341
  %1374 = vst [vmem:[%s3 + $0x10] sm:$0xf] %v1342
  %1375 = vst [vmem:[%s3 + $0x14] sm:$0xf] %v1343
  %1376 = vst [vmem:[%s3 + $0x18] sm:$0xf] %v1344
  %1377 = vst [vmem:[%s3 + $0x1c] sm:$0xf] %v1345
  %1378 = vst [vmem:[%s3 + $0x20] sm:$0xf] %v1346
  %1379 = vst [vmem:[%s3 + $0x24] sm:$0xf] %v1347
  %1380 = vst [vmem:[%s3 + $0x28] sm:$0xf] %v1348
  %1381 = vst [vmem:[%s3 + $0x2c] sm:$0xf] %v1349
  %1382 = vst [vmem:[%s3 + $0x30] sm:$0xf] %v1350
  %1383 = vst [vmem:[%s3 + $0x34] sm:$0xf] %v1351
  %1384 = vst [vmem:[%s3 + $0x38] sm:$0xf] %v1352
  %1385 = vst [vmem:[%s3 + $0x3c] sm:$0xf] %v1353
  // Predicated region
  $region14: #{generator_forward.34} parent=0 // pred_check
    _
  $region15: #{generator_forward.34} parent=0 // pred_check_branch
    %1387 = sbr.rel (0) target = $region17
  $region16: #{generator_forward.34} parent=0 // pred_region
    _
  $region17: #{generator_forward.34} parent=0 // pred_fallthru
    _
  // Predicated region
  $region18: #{generator_forward.34} parent=0 // pred_check
    _
  $region19: #{generator_forward.34} parent=0 // pred_check_branch
    %1389 = sbr.rel (0) target = $region21
  $region20: #{generator_forward.34} parent=0 // pred_region
    _
  $region21: #{generator_forward.34} parent=0 // pred_fallthru
    _

// kernel: generator_forward.35
$region0: #{generator_forward.35}
  #allocation0 [shape = 'u32[]', space=smem, size = 0x4, offset = 0x4, fixed_abs, tag = 'smem constant byte address 0x4 - core index']
  #allocation1 [shape = 'u32[144,128]{1,0:T(1,128)}', space=vmem, size = 0x12000, scoped, tag = 'internal scratch']
  #allocation2 [shape = 'f32[1,128]{1,0:T(1,128)}', space=vmem, size = 0x200, scoped, tag = 'scratch operand']
  #allocation3 [shape = 'f32[1,128]{1,0:T(1,128)}', space=vmem, size = 0x200, scoped, tag = 'scratch operand']
  %s0 = inlined_call_operand.vmem [shape: bf16[2,16,128], index: 0, kind: input, shape index: {}]
  %s1 = inlined_call_operand.vmem [shape: f32[2,1,128], index: 1, kind: output, shape index: {0}]
  %s2 = inlined_call_operand.vmem [shape: f32[2,1,128], index: 2, kind: output, shape index: {1}]
  %3 = xla_tuple %s1, %s2
  %s4 = sld [smem:[#allocation0]]
  $region53: #{generator_forward.35} parent=0
    _
  %s6 = ssub.s32 1, %s4
  %s7 = scalar_select 0, %s6, %s4
  loop: start=0, step=1, limit=4
  $region2: #{generator_forward.35} parent=0 // loop_pre_header
    _
  $region3: #{generator_forward.35} parent=0 // loop_header
    %s9 = sphi 0, %s13
    %p10 = scmp.ge.s32.totalorder %s9, 4
    %s16 = sphi 0, %s28
    %s17 = sphi 0, %s24
    %s18 = sphi 0, %s16
    %s19 = sphi 0, %s17
    %s20 = sphi 0, %s18
    %s21 = sphi 0, %s19
    %s33 = sphi 0, %s35
    %s36 = sphi 0, %s33
    %s37 = sphi 0, %s36
    %s53 = sphi 0, %s37
    %s59 = sphi 0, %s61
    %s62 = sphi 0, %s59
    %s63 = sphi 0, %s62
    %s79 = sphi 0, %s63
    %s85 = sphi 0, %s87
    %s88 = sphi 0, %s85
    %s89 = sphi 0, %s88
    %s105 = sphi 0, %s89
  $region4: #{generator_forward.35} parent=0 // loop_header_branch
    %12 = sbr.rel (%p10) target = $region8
  $region5: #{generator_forward.35} parent=0 // loop_body
    %s14 = ssub.s32 %s9, 1
    %s15 = ssub.s32 %s9, 2
    %s22 = sadd.s32 1, %s17
    %p23 = scmp.ge.s32.totalorder %s22, 1
    %s24 = scalar_select %p23, 0, %s22
    %s25 = sadd.s32 1, %s16
    %s26 = scalar_select %p23, %s25, %s16
    %p27 = scmp.ge.s32.totalorder %s26, 2
    %s28 = scalar_select %p27, 0, %s26
    %s29 = ssub.s32 %s16, %s28
    %s30 = ssub.s32 %s17, %s24
    %s31 = sor.u32 %s29, %s30
    %p32 = scmp.eq.s32.totalorder %s31, 0
    %s34 = sadd.s32 %s33, 1
    %s35 = scalar_select %p32, %s33, %s34
    %p38 = pneg %p32
    %p39 = scmp.eq.s32.totalorder %s9, 1
    %p40 = por %p38, %p39
    %p41 = scmp.ne.s32.totalorder %s33, %s36
    %p42 = scmp.eq.s32.totalorder %s9, 0
    %p43 = por %p41, %p42
    %p44 = scmp.ne.s32.totalorder %s33, %s36
    %p45 = scmp.eq.s32.totalorder %s14, 1
    %p46 = por %p44, %p45
    %p47 = scmp.ne.s32.totalorder %s36, %s37
    %p48 = scmp.eq.s32.totalorder %s14, 0
    %p49 = por %p47, %p48
    %p50 = scmp.ne.s32.totalorder %s36, %s37
    %p51 = scmp.eq.s32.totalorder %s15, 1
    %p52 = por %p50, %p51
    %p54 = scmp.ne.s32.totalorder %s37, %s53
    %p55 = scmp.eq.s32.totalorder %s15, 0
    %p56 = por %p54, %p55
    %s57 = ssub.s32 %s16, %s28
    %p58 = scmp.eq.s32.totalorder %s57, 0
    %s60 = sadd.s32 %s59, 1
    %s61 = scalar_select %p58, %s59, %s60
    %p64 = pneg %p58
    %p65 = scmp.eq.s32.totalorder %s9, 1
    %p66 = por %p64, %p65
    %p67 = scmp.ne.s32.totalorder %s59, %s62
    %p68 = scmp.eq.s32.totalorder %s9, 0
    %p69 = por %p67, %p68
    %p70 = scmp.ne.s32.totalorder %s59, %s62
    %p71 = scmp.eq.s32.totalorder %s14, 1
    %p72 = por %p70, %p71
    %p73 = scmp.ne.s32.totalorder %s62, %s63
    %p74 = scmp.eq.s32.totalorder %s14, 0
    %p75 = por %p73, %p74
    %p76 = scmp.ne.s32.totalorder %s62, %s63
    %p77 = scmp.eq.s32.totalorder %s15, 1
    %p78 = por %p76, %p77
    %p80 = scmp.ne.s32.totalorder %s63, %s79
    %p81 = scmp.eq.s32.totalorder %s15, 0
    %p82 = por %p80, %p81
    %s83 = ssub.s32 %s16, %s28
    %p84 = scmp.eq.s32.totalorder %s83, 0
    %s86 = sadd.s32 %s85, 1
    %s87 = scalar_select %p84, %s85, %s86
    %p90 = pneg %p84
    %p91 = scmp.eq.s32.totalorder %s9, 1
    %p92 = por %p90, %p91
    %p93 = scmp.ne.s32.totalorder %s85, %s88
    %p94 = scmp.eq.s32.totalorder %s9, 0
    %p95 = por %p93, %p94
    %p96 = scmp.ne.s32.totalorder %s85, %s88
    %p97 = scmp.eq.s32.totalorder %s14, 1
    %p98 = por %p96, %p97
    %p99 = scmp.ne.s32.totalorder %s88, %s89
    %p100 = scmp.eq.s32.totalorder %s14, 0
    %p101 = por %p99, %p100
    %p102 = scmp.ne.s32.totalorder %s88, %s89
    %p103 = scmp.eq.s32.totalorder %s15, 1
    %p104 = por %p102, %p103
    %p106 = scmp.ne.s32.totalorder %s89, %s105
    %p107 = scmp.eq.s32.totalorder %s15, 0
    %p108 = por %p106, %p107
    %p109 = scmp.le.s32.totalorder 1, %s9
    %p110 = scmp.lt.s32.totalorder %s9, 3
    %p111 = pnand %p109, %p110
    %p112 = pneg %p111
    // Predicated region
    $region9: #{generator_forward.35} parent=5 // pred_check
      _
    $region10: #{generator_forward.35} parent=5 // pred_check_branch
      %114 = sbr.rel (%p111) target = $region12
    $region11: #{generator_forward.35} parent=5 // pred_region
      %s115 = ssub.s32 %s9, 1
    $region12: #{generator_forward.35} parent=5 // pred_fallthru
      _
    %p116 = scmp.lt.s32.totalorder %s9, 2
    // Predicated region
    $region13: #{generator_forward.35} parent=5 // pred_check
      %p117 = pneg %p116
    $region14: #{generator_forward.35} parent=5 // pred_check_branch
      %119 = sbr.rel (%p117) target = $region16
    $region15: #{generator_forward.35} parent=5 // pred_region
      // Predicated region
      $region17: #{generator_forward.35} parent=15 // pred_check
        %p120 = pneg %p43
      $region18: #{generator_forward.35} parent=15 // pred_check_branch
        %122 = sbr.rel (%p120) target = $region20
      $region19: #{generator_forward.35} parent=15 // pred_region
        %s123 = smul.u32 2, %s17
        %p124 = scmp.lt.s32.totalorder %s16, 1
        %s125 = scalar_select %p124, %s16, 1
        %p126 = scmp.lt.s32.totalorder %s123, 1
        %s127 = scalar_select %p126, %s123, 1
        %s128 = smul.addr %s125, 2
        %s129 = sadd.s32 %s127, %s128
        %s130 = smul.addr %s129, 4
        %s131 = scalar_lea.vmem %s0, %s130
        %s132 = smul.u32 2, %s17
      $region20: #{generator_forward.35} parent=15 // pred_fallthru
        _
    $region16: #{generator_forward.35} parent=5 // pred_fallthru
      _
    %p133 = scmp.le.s32.totalorder 1, %s9
    %p134 = scmp.lt.s32.totalorder %s9, 3
    %p135 = pnand %p133, %p134
    %p136 = pneg %p135
    // Predicated region
    $region21: #{generator_forward.35} parent=5 // pred_check
      _
    $region22: #{generator_forward.35} parent=5 // pred_check_branch
      %138 = sbr.rel (%p135) target = $region24
    $region23: #{generator_forward.35} parent=5 // pred_region
      %s139 = ssub.s32 %s9, 1
      %s140 = smul.u32 2, %s19
      %p141 = scmp.lt.s32.totalorder %s18, 1
      %s142 = scalar_select %p141, %s18, 1
      %p143 = scmp.lt.s32.totalorder %s140, 1
      %s144 = scalar_select %p143, %s140, 1
      %s145 = smul.addr %s142, 2
      %s146 = sadd.s32 %s144, %s145
      %s147 = smul.addr %s146, 4
      %s148 = scalar_lea.vmem %s0, %s147
      %p149 = pneg %p49
      %p150 = pneg %p46
      %p151 = pneg %p75
      %p152 = pneg %p72
      %p153 = scmp.lt.s32.totalorder %s18, 1
      %s154 = scalar_select %p153, %s18, 1
      %s155 = scalar_lea.vmem %s1, %s154
      %p156 = pneg %p101
      %p157 = pneg %p98
      %p158 = scmp.lt.s32.totalorder %s18, 1
      %s159 = scalar_select %p158, %s18, 1
      %s160 = scalar_lea.vmem %s2, %s159
      %s161 = smul.u32 2, %s19
      %p162 = scmp.lt.s32.totalorder %s18, 1
      %s163 = scalar_select %p162, %s18, 1
      %p164 = scmp.lt.s32.totalorder %s161, 1
      %s165 = scalar_select %p164, %s161, 1
      %s166 = smul.addr %s163, 2
      %s167 = sadd.s32 %s165, %s166
      %s168 = smul.addr %s167, 4
      %s169 = scalar_lea.vmem %s0, %s168
      %s170 = smul.u32 2, %s19
      %p171 = scmp.lt.s32.totalorder %s18, 1
      %s172 = scalar_select %p171, %s18, 1
      %s173 = scalar_lea.vmem %s1, %s172
      %p174 = scmp.lt.s32.totalorder %s18, 1
      %s175 = scalar_select %p174, %s18, 1
      %s176 = scalar_lea.vmem %s2, %s175
      %p177 = scmp.eq.s32.totalorder %s19, 0
      // Predicated region
      $region25: #{generator_forward.35} parent=23 // pred_check
        %p178 = pneg %p177
      $region26: #{generator_forward.35} parent=23 // pred_check_branch
        %180 = sbr.rel (%p178) target = $region28
      $region27: #{generator_forward.35} parent=23 // pred_region
        %181 = vst [vmem:[#allocation2] sm:$0x1] 0.0
        %182 = vst [vmem:[#allocation3] sm:$0x1] 0.0
      $region28: #{generator_forward.35} parent=23 // pred_fallthru
        _
      %v183 = vld [vmem:[%s169] sm:$0xf]
      %v184 = vld [vmem:[%s169 + $0x4] sm:$0xf]
      %v185 = vunpack.c.l.bf16 %v183
      %v186 = vunpack.c.l.bf16 %v184
      %v187 = vld [vmem:[#allocation2] sm:$0x1]
      %v188 = vadd.f32 %v185, %v186
      %v189 = vrot.slane %v188, 4
      %v190 = vadd.f32 %v188, %v189
      %v191 = vrot.slane %v190, 2
      %v192 = vadd.f32 %v190, %v191
      %v193 = vrot.slane %v192, 1
      %v194 = vadd.f32 %v192, %v193
      %v195 = vadd.f32 %v187, %v194
      %196 = vst [vmem:[#allocation2] sm:$0x1] %v195
      %v197 = vld [vmem:[#allocation3] sm:$0x1]
      %v198 = vmul.f32 %v185, %v185
      %v199 = vmul.f32 %v186, %v186
      %v200 = vadd.f32 %v198, %v199
      %v201 = vrot.slane %v200, 4
      %v202 = vadd.f32 %v200, %v201
      %v203 = vrot.slane %v202, 2
      %v204 = vadd.f32 %v202, %v203
      %v205 = vrot.slane %v204, 1
      %v206 = vadd.f32 %v204, %v205
      %v207 = vadd.f32 %v197, %v206
      %208 = vst [vmem:[#allocation3] sm:$0x1] %v207
      // Predicated region
      $region29: #{generator_forward.35} parent=23 // pred_check
        %p209 = pneg %p177
      $region30: #{generator_forward.35} parent=23 // pred_check_branch
        %211 = sbr.rel (%p209) target = $region32
      $region31: #{generator_forward.35} parent=23 // pred_region
        %v212 = vld [vmem:[#allocation2] sm:$0x1]
        %213 = vst [vmem:[%s173] sm:$0x1] %v212
        %v214 = vld [vmem:[#allocation3] sm:$0x1]
        %215 = vst [vmem:[%s176] sm:$0x1] %v214
      $region32: #{generator_forward.35} parent=23 // pred_fallthru
        _
      %p216 = scmp.lt.s32.totalorder %s18, 1
      %s217 = scalar_select %p216, %s18, 1
      %s218 = scalar_lea.vmem %s1, %s217
      %p219 = scmp.lt.s32.totalorder %s18, 1
      %s220 = scalar_select %p219, %s18, 1
      %s221 = scalar_lea.vmem %s2, %s220
      // Predicated region
      $region33: #{generator_forward.35} parent=23 // pred_check
        %p222 = pneg %p72
      $region34: #{generator_forward.35} parent=23 // pred_check_branch
        %224 = sbr.rel (%p222) target = $region36
      $region35: #{generator_forward.35} parent=23 // pred_region
        _
      $region36: #{generator_forward.35} parent=23 // pred_fallthru
        _
      // Predicated region
      $region37: #{generator_forward.35} parent=23 // pred_check
        %p225 = pneg %p98
      $region38: #{generator_forward.35} parent=23 // pred_check_branch
        %227 = sbr.rel (%p225) target = $region40
      $region39: #{generator_forward.35} parent=23 // pred_region
        _
      $region40: #{generator_forward.35} parent=23 // pred_fallthru
        _
    $region24: #{generator_forward.35} parent=5 // pred_fallthru
      _
    %p228 = scmp.le.s32.totalorder 2, %s9
    // Predicated region
    $region41: #{generator_forward.35} parent=5 // pred_check
      %p229 = pneg %p228
    $region42: #{generator_forward.35} parent=5 // pred_check_branch
      %231 = sbr.rel (%p229) target = $region44
    $region43: #{generator_forward.35} parent=5 // pred_region
      %s232 = ssub.s32 %s9, 2
      // Predicated region
      $region45: #{generator_forward.35} parent=43 // pred_check
        %p233 = pneg %p78
      $region46: #{generator_forward.35} parent=43 // pred_check_branch
        %235 = sbr.rel (%p233) target = $region48
      $region47: #{generator_forward.35} parent=43 // pred_region
        %p236 = scmp.lt.s32.totalorder %s20, 1
        %s237 = scalar_select %p236, %s20, 1
        %s238 = scalar_lea.vmem %s1, %s237
      $region48: #{generator_forward.35} parent=43 // pred_fallthru
        _
      // Predicated region
      $region49: #{generator_forward.35} parent=43 // pred_check
        %p239 = pneg %p104
      $region50: #{generator_forward.35} parent=43 // pred_check_branch
        %241 = sbr.rel (%p239) target = $region52
      $region51: #{generator_forward.35} parent=43 // pred_region
        %p242 = scmp.lt.s32.totalorder %s20, 1
        %s243 = scalar_select %p242, %s20, 1
        %s244 = scalar_lea.vmem %s2, %s243
      $region52: #{generator_forward.35} parent=43 // pred_fallthru
        _
    $region44: #{generator_forward.35} parent=5 // pred_fallthru
      _
  $region6: #{generator_forward.35} parent=0 // loop_footer
    %s13 = sadd.s32 1, %s9
  $region7: #{generator_forward.35} parent=0 // loop_footer_branch
    %8 = sbr.rel target = $region3
  $region8: #{generator_forward.35} parent=0 // loop_exit
    _

// kernel: generator_forward.36
$region0: #{generator_forward.36}
  #allocation0 [shape = 'u32[]', space=smem, size = 0x4, offset = 0x4, fixed_abs, tag = 'smem constant byte address 0x4 - core index']
  #allocation1 [shape = 'u32[144,128]{1,0:T(1,128)}', space=vmem, size = 0x12000, scoped, tag = 'internal scratch']
  %s0 = inlined_call_operand.vmem [shape: bf16[2,16,128], index: 0, kind: input, shape index: {}]
  %s1 = inlined_call_operand.vmem [shape: f32[2,1,128], index: 1, kind: input, shape index: {}]
  %s2 = inlined_call_operand.vmem [shape: f32[2,1,128], index: 2, kind: input, shape index: {}]
  %s3 = inlined_call_operand.vmem [shape: bf16[2,16,128], index: 3, kind: output, shape index: {}]
  %s4 = sld [smem:[#allocation0]]
  $region45: #{generator_forward.36} parent=0
    _
  %s6 = ssub.s32 1, %s4
  %s7 = scalar_select 0, %s6, %s4
  loop: start=0, step=1, limit=4
  $region2: #{generator_forward.36} parent=0 // loop_pre_header
    _
  $region3: #{generator_forward.36} parent=0 // loop_header
    %s9 = sphi 0, %s13
    %p10 = scmp.ge.s32.totalorder %s9, 4
    %s16 = sphi 0, %s28
    %s17 = sphi 0, %s24
    %s18 = sphi 0, %s16
    %s19 = sphi 0, %s17
    %s20 = sphi 0, %s18
    %s21 = sphi 0, %s19
    %s33 = sphi 0, %s35
    %s36 = sphi 0, %s33
    %s37 = sphi 0, %s36
    %s53 = sphi 0, %s37
    %s59 = sphi 0, %s61
    %s62 = sphi 0, %s59
    %s63 = sphi 0, %s62
    %s79 = sphi 0, %s63
    %s85 = sphi 0, %s87
    %s88 = sphi 0, %s85
    %s89 = sphi 0, %s88
    %s105 = sphi 0, %s89
    %s113 = sphi 0, %s115
    %s116 = sphi 0, %s113
    %s117 = sphi 0, %s116
    %s133 = sphi 0, %s117
  $region4: #{generator_forward.36} parent=0 // loop_header_branch
    %12 = sbr.rel (%p10) target = $region8
  $region5: #{generator_forward.36} parent=0 // loop_body
    %s14 = ssub.s32 %s9, 1
    %s15 = ssub.s32 %s9, 2
    %s22 = sadd.s32 1, %s17
    %p23 = scmp.ge.s32.totalorder %s22, 1
    %s24 = scalar_select %p23, 0, %s22
    %s25 = sadd.s32 1, %s16
    %s26 = scalar_select %p23, %s25, %s16
    %p27 = scmp.ge.s32.totalorder %s26, 2
    %s28 = scalar_select %p27, 0, %s26
    %s29 = ssub.s32 %s16, %s28
    %s30 = ssub.s32 %s17, %s24
    %s31 = sor.u32 %s29, %s30
    %p32 = scmp.eq.s32.totalorder %s31, 0
    %s34 = sadd.s32 %s33, 1
    %s35 = scalar_select %p32, %s33, %s34
    %p38 = pneg %p32
    %p39 = scmp.eq.s32.totalorder %s9, 1
    %p40 = por %p38, %p39
    %p41 = scmp.ne.s32.totalorder %s33, %s36
    %p42 = scmp.eq.s32.totalorder %s9, 0
    %p43 = por %p41, %p42
    %p44 = scmp.ne.s32.totalorder %s33, %s36
    %p45 = scmp.eq.s32.totalorder %s14, 1
    %p46 = por %p44, %p45
    %p47 = scmp.ne.s32.totalorder %s36, %s37
    %p48 = scmp.eq.s32.totalorder %s14, 0
    %p49 = por %p47, %p48
    %p50 = scmp.ne.s32.totalorder %s36, %s37
    %p51 = scmp.eq.s32.totalorder %s15, 1
    %p52 = por %p50, %p51
    %p54 = scmp.ne.s32.totalorder %s37, %s53
    %p55 = scmp.eq.s32.totalorder %s15, 0
    %p56 = por %p54, %p55
    %s57 = ssub.s32 %s16, %s28
    %p58 = scmp.eq.s32.totalorder %s57, 0
    %s60 = sadd.s32 %s59, 1
    %s61 = scalar_select %p58, %s59, %s60
    %p64 = pneg %p58
    %p65 = scmp.eq.s32.totalorder %s9, 1
    %p66 = por %p64, %p65
    %p67 = scmp.ne.s32.totalorder %s59, %s62
    %p68 = scmp.eq.s32.totalorder %s9, 0
    %p69 = por %p67, %p68
    %p70 = scmp.ne.s32.totalorder %s59, %s62
    %p71 = scmp.eq.s32.totalorder %s14, 1
    %p72 = por %p70, %p71
    %p73 = scmp.ne.s32.totalorder %s62, %s63
    %p74 = scmp.eq.s32.totalorder %s14, 0
    %p75 = por %p73, %p74
    %p76 = scmp.ne.s32.totalorder %s62, %s63
    %p77 = scmp.eq.s32.totalorder %s15, 1
    %p78 = por %p76, %p77
    %p80 = scmp.ne.s32.totalorder %s63, %s79
    %p81 = scmp.eq.s32.totalorder %s15, 0
    %p82 = por %p80, %p81
    %s83 = ssub.s32 %s16, %s28
    %p84 = scmp.eq.s32.totalorder %s83, 0
    %s86 = sadd.s32 %s85, 1
    %s87 = scalar_select %p84, %s85, %s86
    %p90 = pneg %p84
    %p91 = scmp.eq.s32.totalorder %s9, 1
    %p92 = por %p90, %p91
    %p93 = scmp.ne.s32.totalorder %s85, %s88
    %p94 = scmp.eq.s32.totalorder %s9, 0
    %p95 = por %p93, %p94
    %p96 = scmp.ne.s32.totalorder %s85, %s88
    %p97 = scmp.eq.s32.totalorder %s14, 1
    %p98 = por %p96, %p97
    %p99 = scmp.ne.s32.totalorder %s88, %s89
    %p100 = scmp.eq.s32.totalorder %s14, 0
    %p101 = por %p99, %p100
    %p102 = scmp.ne.s32.totalorder %s88, %s89
    %p103 = scmp.eq.s32.totalorder %s15, 1
    %p104 = por %p102, %p103
    %p106 = scmp.ne.s32.totalorder %s89, %s105
    %p107 = scmp.eq.s32.totalorder %s15, 0
    %p108 = por %p106, %p107
    %s109 = ssub.s32 %s16, %s28
    %s110 = ssub.s32 %s17, %s24
    %s111 = sor.u32 %s109, %s110
    %p112 = scmp.eq.s32.totalorder %s111, 0
    %s114 = sadd.s32 %s113, 1
    %s115 = scalar_select %p112, %s113, %s114
    %p118 = pneg %p112
    %p119 = scmp.eq.s32.totalorder %s9, 1
    %p120 = por %p118, %p119
    %p121 = scmp.ne.s32.totalorder %s113, %s116
    %p122 = scmp.eq.s32.totalorder %s9, 0
    %p123 = por %p121, %p122
    %p124 = scmp.ne.s32.totalorder %s113, %s116
    %p125 = scmp.eq.s32.totalorder %s14, 1
    %p126 = por %p124, %p125
    %p127 = scmp.ne.s32.totalorder %s116, %s117
    %p128 = scmp.eq.s32.totalorder %s14, 0
    %p129 = por %p127, %p128
    %p130 = scmp.ne.s32.totalorder %s116, %s117
    %p131 = scmp.eq.s32.totalorder %s15, 1
    %p132 = por %p130, %p131
    %p134 = scmp.ne.s32.totalorder %s117, %s133
    %p135 = scmp.eq.s32.totalorder %s15, 0
    %p136 = por %p134, %p135
    %p137 = scmp.le.s32.totalorder 1, %s9
    %p138 = scmp.lt.s32.totalorder %s9, 3
    %p139 = pnand %p137, %p138
    %p140 = pneg %p139
    // Predicated region
    $region9: #{generator_forward.36} parent=5 // pred_check
      _
    $region10: #{generator_forward.36} parent=5 // pred_check_branch
      %142 = sbr.rel (%p139) target = $region12
    $region11: #{generator_forward.36} parent=5 // pred_region
      %s143 = ssub.s32 %s9, 1
    $region12: #{generator_forward.36} parent=5 // pred_fallthru
      _
    %p144 = scmp.lt.s32.totalorder %s9, 2
    // Predicated region
    $region13: #{generator_forward.36} parent=5 // pred_check
      %p145 = pneg %p144
    $region14: #{generator_forward.36} parent=5 // pred_check_branch
      %147 = sbr.rel (%p145) target = $region16
    $region15: #{generator_forward.36} parent=5 // pred_region
      // Predicated region
      $region17: #{generator_forward.36} parent=15 // pred_check
        %p148 = pneg %p43
      $region18: #{generator_forward.36} parent=15 // pred_check_branch
        %150 = sbr.rel (%p148) target = $region20
      $region19: #{generator_forward.36} parent=15 // pred_region
        %s151 = smul.u32 2, %s17
        %p152 = scmp.lt.s32.totalorder %s16, 1
        %s153 = scalar_select %p152, %s16, 1
        %p154 = scmp.lt.s32.totalorder %s151, 1
        %s155 = scalar_select %p154, %s151, 1
        %s156 = smul.addr %s153, 2
        %s157 = sadd.s32 %s155, %s156
        %s158 = smul.addr %s157, 4
        %s159 = scalar_lea.vmem %s0, %s158
        %s160 = smul.u32 2, %s17
      $region20: #{generator_forward.36} parent=15 // pred_fallthru
        _
      // Predicated region
      $region21: #{generator_forward.36} parent=15 // pred_check
        %p161 = pneg %p69
      $region22: #{generator_forward.36} parent=15 // pred_check_branch
        %163 = sbr.rel (%p161) target = $region24
      $region23: #{generator_forward.36} parent=15 // pred_region
        %p164 = scmp.lt.s32.totalorder %s16, 1
        %s165 = scalar_select %p164, %s16, 1
        %s166 = scalar_lea.vmem %s1, %s165
      $region24: #{generator_forward.36} parent=15 // pred_fallthru
        _
      // Predicated region
      $region25: #{generator_forward.36} parent=15 // pred_check
        %p167 = pneg %p95
      $region26: #{generator_forward.36} parent=15 // pred_check_branch
        %169 = sbr.rel (%p167) target = $region28
      $region27: #{generator_forward.36} parent=15 // pred_region
        %p170 = scmp.lt.s32.totalorder %s16, 1
        %s171 = scalar_select %p170, %s16, 1
        %s172 = scalar_lea.vmem %s2, %s171
      $region28: #{generator_forward.36} parent=15 // pred_fallthru
        _
    $region16: #{generator_forward.36} parent=5 // pred_fallthru
      _
    %p173 = scmp.le.s32.totalorder 1, %s9
    %p174 = scmp.lt.s32.totalorder %s9, 3
    %p175 = pnand %p173, %p174
    %p176 = pneg %p175
    // Predicated region
    $region29: #{generator_forward.36} parent=5 // pred_check
      _
    $region30: #{generator_forward.36} parent=5 // pred_check_branch
      %178 = sbr.rel (%p175) target = $region32
    $region31: #{generator_forward.36} parent=5 // pred_region
      %s179 = ssub.s32 %s9, 1
      %s180 = smul.u32 2, %s19
      %p181 = scmp.lt.s32.totalorder %s18, 1
      %s182 = scalar_select %p181, %s18, 1
      %p183 = scmp.lt.s32.totalorder %s180, 1
      %s184 = scalar_select %p183, %s180, 1
      %s185 = smul.addr %s182, 2
      %s186 = sadd.s32 %s184, %s185
      %s187 = smul.addr %s186, 4
      %s188 = scalar_lea.vmem %s0, %s187
      %p189 = pneg %p49
      %p190 = pneg %p46
      %p191 = scmp.lt.s32.totalorder %s18, 1
      %s192 = scalar_select %p191, %s18, 1
      %s193 = scalar_lea.vmem %s1, %s192
      %p194 = pneg %p75
      %p195 = pneg %p72
      %p196 = scmp.lt.s32.totalorder %s18, 1
      %s197 = scalar_select %p196, %s18, 1
      %s198 = scalar_lea.vmem %s2, %s197
      %p199 = pneg %p101
      %p200 = pneg %p98
      %p201 = pneg %p129
      %p202 = pneg %p126
      %s203 = smul.u32 2, %s19
      %p204 = scmp.lt.s32.totalorder %s18, 1
      %s205 = scalar_select %p204, %s18, 1
      %p206 = scmp.lt.s32.totalorder %s203, 1
      %s207 = scalar_select %p206, %s203, 1
      %s208 = smul.addr %s205, 2
      %s209 = sadd.s32 %s207, %s208
      %s210 = smul.addr %s209, 4
      %s211 = scalar_lea.vmem %s3, %s210
      %s212 = smul.u32 2, %s19
      %p213 = scmp.lt.s32.totalorder %s18, 1
      %s214 = scalar_select %p213, %s18, 1
      %p215 = scmp.lt.s32.totalorder %s212, 1
      %s216 = scalar_select %p215, %s212, 1
      %s217 = smul.addr %s214, 2
      %s218 = sadd.s32 %s216, %s217
      %s219 = smul.addr %s218, 4
      %s220 = scalar_lea.vmem %s0, %s219
      %s221 = smul.u32 2, %s19
      %p222 = scmp.lt.s32.totalorder %s18, 1
      %s223 = scalar_select %p222, %s18, 1
      %s224 = scalar_lea.vmem %s1, %s223
      %p225 = scmp.lt.s32.totalorder %s18, 1
      %s226 = scalar_select %p225, %s18, 1
      %s227 = scalar_lea.vmem %s2, %s226
      %s228 = smul.u32 2, %s19
      %p229 = scmp.lt.s32.totalorder %s18, 1
      %s230 = scalar_select %p229, %s18, 1
      %p231 = scmp.lt.s32.totalorder %s228, 1
      %s232 = scalar_select %p231, %s228, 1
      %s233 = smul.addr %s230, 2
      %s234 = sadd.s32 %s232, %s233
      %s235 = smul.addr %s234, 4
      %s236 = scalar_lea.vmem %s3, %s235
      %s237 = smul.u32 2, %s19
      %v238 = vld [vmem:[%s220] sm:$0xf]
      %v239 = vld [vmem:[%s220 + $0x4] sm:$0xf]
      %v240 = vunpack.c.l.bf16 %v238
      %v241 = vunpack.c.l.bf16 %v239
      %v242 = vld [vmem:[%s224] sm:$0x1]
      %v244 = vlaneseq
      %v245 = vshrl.u32 %v244, 7
      %v246 = vsub.s32 0, %v245
      %v247 = vrot.slane %v242, %v246
      %v249 = vmul.f32 %v240, %v247
      %v250 = vmul.f32 %v241, %v247
      %v251 = vld [vmem:[%s227] sm:$0x1]
      %v253 = vlaneseq
      %v254 = vshrl.u32 %v253, 7
      %v255 = vsub.s32 0, %v254
      %v256 = vrot.slane %v251, %v255
      %v258 = vadd.f32 %v249, %v256
      %v259 = vadd.f32 %v250, %v256
      %v260 = vmax.f32 %v258, 0.0
      %v261 = vmax.f32 %v259, 0.0
      %v262 = vpack.c.bf16 %v261, %v260
      %v264 = vunpack.c.l.b16 %v262
      %v265 = vunpack.c.h.b16 %v262
      %v266 = vpack.c.b16 %v264, %v264
      %v267 = vpack.c.b16 %v265, %v265
      %270 = vst [vmem:[%s236] sm:$0xf] %v266
      %271 = vst [vmem:[%s236 + $0x4] sm:$0xf] %v267
      %s272 = smul.u32 2, %s19
      %p273 = scmp.lt.s32.totalorder %s18, 1
      %s274 = scalar_select %p273, %s18, 1
      %p275 = scmp.lt.s32.totalorder %s272, 1
      %s276 = scalar_select %p275, %s272, 1
      %s277 = smul.addr %s274, 2
      %s278 = sadd.s32 %s276, %s277
      %s279 = smul.addr %s278, 4
      %s280 = scalar_lea.vmem %s3, %s279
      // Predicated region
      $region33: #{generator_forward.36} parent=31 // pred_check
        %p281 = pneg %p126
      $region34: #{generator_forward.36} parent=31 // pred_check_branch
        %283 = sbr.rel (%p281) target = $region36
      $region35: #{generator_forward.36} parent=31 // pred_region
        %s284 = smul.u32 2, %s19
      $region36: #{generator_forward.36} parent=31 // pred_fallthru
        _
    $region32: #{generator_forward.36} parent=5 // pred_fallthru
      _
    %p285 = scmp.le.s32.totalorder 2, %s9
    // Predicated region
    $region37: #{generator_forward.36} parent=5 // pred_check
      %p286 = pneg %p285
    $region38: #{generator_forward.36} parent=5 // pred_check_branch
      %288 = sbr.rel (%p286) target = $region40
    $region39: #{generator_forward.36} parent=5 // pred_region
      %s289 = ssub.s32 %s9, 2
      // Predicated region
      $region41: #{generator_forward.36} parent=39 // pred_check
        %p290 = pneg %p132
      $region42: #{generator_forward.36} parent=39 // pred_check_branch
        %292 = sbr.rel (%p290) target = $region44
      $region43: #{generator_forward.36} parent=39 // pred_region
        %s293 = smul.u32 2, %s21
        %p294 = scmp.lt.s32.totalorder %s20, 1
        %s295 = scalar_select %p294, %s20, 1
        %p296 = scmp.lt.s32.totalorder %s293, 1
        %s297 = scalar_select %p296, %s293, 1
        %s298 = smul.addr %s295, 2
        %s299 = sadd.s32 %s297, %s298
        %s300 = smul.addr %s299, 4
        %s301 = scalar_lea.vmem %s3, %s300
      $region44: #{generator_forward.36} parent=39 // pred_fallthru
        _
    $region40: #{generator_forward.36} parent=5 // pred_fallthru
      _
  $region6: #{generator_forward.36} parent=0 // loop_footer
    %s13 = sadd.s32 1, %s9
  $region7: #{generator_forward.36} parent=0 // loop_footer_branch
    %8 = sbr.rel target = $region3
  $region8: #{generator_forward.36} parent=0 // loop_exit
    _

// kernel: generator_forward.37
$region0: #{generator_forward.37}
  #allocation0 [shape = 'u32[]', space=smem, size = 0x4, offset = 0x4, fixed_abs, tag = 'smem constant byte address 0x4 - core index']
  #allocation1 [shape = 'u32[144,128]{1,0:T(1,128)}', space=vmem, size = 0x12000, scoped, tag = 'internal scratch']
  %s0 = inlined_call_operand.vmem [shape: bf16[128,1152], index: 0, kind: input, shape index: {}]
  %s1 = inlined_call_operand.vmem [shape: bf16[1152,128], index: 1, kind: input, shape index: {}]
  %s2 = inlined_call_operand.vmem [shape: f32[1,128], index: 2, kind: input, shape index: {}]
  %s3 = inlined_call_operand.vmem [shape: bf16[128,128], index: 3, kind: output, shape index: {}]
  %s4 = sld [smem:[#allocation0]]
  $region22: #{generator_forward.37} parent=0
    _
  %s6 = ssub.s32 1, %s4
  %s7 = scalar_select 0, %s6, %s4
  // Predicated region
  $region2: #{generator_forward.37} parent=0 // pred_check
    _
  $region3: #{generator_forward.37} parent=0 // pred_check_branch
    %9 = sbr.rel (0) target = $region5
  $region4: #{generator_forward.37} parent=0 // pred_region
    _
  $region5: #{generator_forward.37} parent=0 // pred_fallthru
    _
  // Predicated region
  $region6: #{generator_forward.37} parent=0 // pred_check
    _
  $region7: #{generator_forward.37} parent=0 // pred_check_branch
    %11 = sbr.rel (0) target = $region9
  $region8: #{generator_forward.37} parent=0 // pred_region
    _
  $region9: #{generator_forward.37} parent=0 // pred_fallthru
    _
  // Predicated region
  $region10: #{generator_forward.37} parent=0 // pred_check
    _
  $region11: #{generator_forward.37} parent=0 // pred_check_branch
    %13 = sbr.rel (0) target = $region13
  $region12: #{generator_forward.37} parent=0 // pred_region
    _
  $region13: #{generator_forward.37} parent=0 // pred_fallthru
    _
  %v15 = vld [vmem:[%s0] sm:$0xff]
  %v16 = vld [vmem:[%s0 + $0x8] sm:$0xff]
  %v17 = vld [vmem:[%s0 + $0x10] sm:$0xff]
  %v18 = vld [vmem:[%s0 + $0x18] sm:$0xff]
  %v19 = vld [vmem:[%s0 + $0x20] sm:$0xf]
  %v20 = vld [vmem:[%s0 + $0x24] sm:$0xff]
  %v21 = vld [vmem:[%s0 + $0x2c] sm:$0xff]
  %v22 = vld [vmem:[%s0 + $0x34] sm:$0xff]
  %v23 = vld [vmem:[%s0 + $0x3c] sm:$0xff]
  %v24 = vld [vmem:[%s0 + $0x44] sm:$0xf]
  %v25 = vld [vmem:[%s0 + $0x48] sm:$0xff]
  %v26 = vld [vmem:[%s0 + $0x50] sm:$0xff]
  %v27 = vld [vmem:[%s0 + $0x58] sm:$0xff]
  %v28 = vld [vmem:[%s0 + $0x60] sm:$0xff]
  %v29 = vld [vmem:[%s0 + $0x68] sm:$0xf]
  %v30 = vld [vmem:[%s0 + $0x6c] sm:$0xff]
  %v31 = vld [vmem:[%s0 + $0x74] sm:$0xff]
  %v32 = vld [vmem:[%s0 + $0x7c] sm:$0xff]
  %v33 = vld [vmem:[%s0 + $0x84] sm:$0xff]
  %v34 = vld [vmem:[%s0 + $0x8c] sm:$0xf]
  %v35 = vld [vmem:[%s0 + $0x90] sm:$0xff]
  %v36 = vld [vmem:[%s0 + $0x98] sm:$0xff]
  %v37 = vld [vmem:[%s0 + $0xa0] sm:$0xff]
  %v38 = vld [vmem:[%s0 + $0xa8] sm:$0xff]
  %v39 = vld [vmem:[%s0 + $0xb0] sm:$0xf]
  %v40 = vld [vmem:[%s0 + $0xb4] sm:$0xff]
  %v41 = vld [vmem:[%s0 + $0xbc] sm:$0xff]
  %v42 = vld [vmem:[%s0 + $0xc4] sm:$0xff]
  %v43 = vld [vmem:[%s0 + $0xcc] sm:$0xff]
  %v44 = vld [vmem:[%s0 + $0xd4] sm:$0xf]
  %v45 = vld [vmem:[%s0 + $0xd8] sm:$0xff]
  %v46 = vld [vmem:[%s0 + $0xe0] sm:$0xff]
  %v47 = vld [vmem:[%s0 + $0xe8] sm:$0xff]
  %v48 = vld [vmem:[%s0 + $0xf0] sm:$0xff]
  %v49 = vld [vmem:[%s0 + $0xf8] sm:$0xf]
  %v50 = vld [vmem:[%s0 + $0xfc] sm:$0xff]
  %v51 = vld [vmem:[%s0 + $0x104] sm:$0xff]
  %v52 = vld [vmem:[%s0 + $0x10c] sm:$0xff]
  %v53 = vld [vmem:[%s0 + $0x114] sm:$0xff]
  %v54 = vld [vmem:[%s0 + $0x11c] sm:$0xf]
  %v55 = vld [vmem:[%s0 + $0x120] sm:$0xff]
  %v56 = vld [vmem:[%s0 + $0x128] sm:$0xff]
  %v57 = vld [vmem:[%s0 + $0x130] sm:$0xff]
  %v58 = vld [vmem:[%s0 + $0x138] sm:$0xff]
  %v59 = vld [vmem:[%s0 + $0x140] sm:$0xf]
  %v60 = vld [vmem:[%s0 + $0x144] sm:$0xff]
  %v61 = vld [vmem:[%s0 + $0x14c] sm:$0xff]
  %v62 = vld [vmem:[%s0 + $0x154] sm:$0xff]
  %v63 = vld [vmem:[%s0 + $0x15c] sm:$0xff]
  %v64 = vld [vmem:[%s0 + $0x164] sm:$0xf]
  %v65 = vld [vmem:[%s0 + $0x168] sm:$0xff]
  %v66 = vld [vmem:[%s0 + $0x170] sm:$0xff]
  %v67 = vld [vmem:[%s0 + $0x178] sm:$0xff]
  %v68 = vld [vmem:[%s0 + $0x180] sm:$0xff]
  %v69 = vld [vmem:[%s0 + $0x188] sm:$0xf]
  %v70 = vld [vmem:[%s0 + $0x18c] sm:$0xff]
  %v71 = vld [vmem:[%s0 + $0x194] sm:$0xff]
  %v72 = vld [vmem:[%s0 + $0x19c] sm:$0xff]
  %v73 = vld [vmem:[%s0 + $0x1a4] sm:$0xff]
  %v74 = vld [vmem:[%s0 + $0x1ac] sm:$0xf]
  %v75 = vld [vmem:[%s0 + $0x1b0] sm:$0xff]
  %v76 = vld [vmem:[%s0 + $0x1b8] sm:$0xff]
  %v77 = vld [vmem:[%s0 + $0x1c0] sm:$0xff]
  %v78 = vld [vmem:[%s0 + $0x1c8] sm:$0xff]
  %v79 = vld [vmem:[%s0 + $0x1d0] sm:$0xf]
  %v80 = vld [vmem:[%s0 + $0x1d4] sm:$0xff]
  %v81 = vld [vmem:[%s0 + $0x1dc] sm:$0xff]
  %v82 = vld [vmem:[%s0 + $0x1e4] sm:$0xff]
  %v83 = vld [vmem:[%s0 + $0x1ec] sm:$0xff]
  %v84 = vld [vmem:[%s0 + $0x1f4] sm:$0xf]
  %v85 = vld [vmem:[%s0 + $0x1f8] sm:$0xff]
  %v86 = vld [vmem:[%s0 + $0x200] sm:$0xff]
  %v87 = vld [vmem:[%s0 + $0x208] sm:$0xff]
  %v88 = vld [vmem:[%s0 + $0x210] sm:$0xff]
  %v89 = vld [vmem:[%s0 + $0x218] sm:$0xf]
  %v90 = vld [vmem:[%s0 + $0x21c] sm:$0xff]
  %v91 = vld [vmem:[%s0 + $0x224] sm:$0xff]
  %v92 = vld [vmem:[%s0 + $0x22c] sm:$0xff]
  %v93 = vld [vmem:[%s0 + $0x234] sm:$0xff]
  %v94 = vld [vmem:[%s0 + $0x23c] sm:$0xf]
  %v95 = vld [vmem:[%s1] sm:$0xf]
  %v96 = vld [vmem:[%s1 + $0x4] sm:$0xf]
  %v97 = vld [vmem:[%s1 + $0x8] sm:$0xf]
  %v98 = vld [vmem:[%s1 + $0xc] sm:$0xf]
  %v99 = vld [vmem:[%s1 + $0x10] sm:$0xf]
  %v100 = vld [vmem:[%s1 + $0x14] sm:$0xf]
  %v101 = vld [vmem:[%s1 + $0x18] sm:$0xf]
  %v102 = vld [vmem:[%s1 + $0x1c] sm:$0xf]
  %v103 = vld [vmem:[%s1 + $0x20] sm:$0xf]
  %v104 = vld [vmem:[%s1 + $0x24] sm:$0xf]
  %v105 = vld [vmem:[%s1 + $0x28] sm:$0xf]
  %v106 = vld [vmem:[%s1 + $0x2c] sm:$0xf]
  %v107 = vld [vmem:[%s1 + $0x30] sm:$0xf]
  %v108 = vld [vmem:[%s1 + $0x34] sm:$0xf]
  %v109 = vld [vmem:[%s1 + $0x38] sm:$0xf]
  %v110 = vld [vmem:[%s1 + $0x3c] sm:$0xf]
  %v111 = vld [vmem:[%s1 + $0x40] sm:$0xf]
  %v112 = vld [vmem:[%s1 + $0x44] sm:$0xf]
  %v113 = vld [vmem:[%s1 + $0x48] sm:$0xf]
  %v114 = vld [vmem:[%s1 + $0x4c] sm:$0xf]
  %v115 = vld [vmem:[%s1 + $0x50] sm:$0xf]
  %v116 = vld [vmem:[%s1 + $0x54] sm:$0xf]
  %v117 = vld [vmem:[%s1 + $0x58] sm:$0xf]
  %v118 = vld [vmem:[%s1 + $0x5c] sm:$0xf]
  %v119 = vld [vmem:[%s1 + $0x60] sm:$0xf]
  %v120 = vld [vmem:[%s1 + $0x64] sm:$0xf]
  %v121 = vld [vmem:[%s1 + $0x68] sm:$0xf]
  %v122 = vld [vmem:[%s1 + $0x6c] sm:$0xf]
  %v123 = vld [vmem:[%s1 + $0x70] sm:$0xf]
  %v124 = vld [vmem:[%s1 + $0x74] sm:$0xf]
  %v125 = vld [vmem:[%s1 + $0x78] sm:$0xf]
  %v126 = vld [vmem:[%s1 + $0x7c] sm:$0xf]
  %v127 = vld [vmem:[%s1 + $0x80] sm:$0xf]
  %v128 = vld [vmem:[%s1 + $0x84] sm:$0xf]
  %v129 = vld [vmem:[%s1 + $0x88] sm:$0xf]
  %v130 = vld [vmem:[%s1 + $0x8c] sm:$0xf]
  %v131 = vld [vmem:[%s1 + $0x90] sm:$0xf]
  %v132 = vld [vmem:[%s1 + $0x94] sm:$0xf]
  %v133 = vld [vmem:[%s1 + $0x98] sm:$0xf]
  %v134 = vld [vmem:[%s1 + $0x9c] sm:$0xf]
  %v135 = vld [vmem:[%s1 + $0xa0] sm:$0xf]
  %v136 = vld [vmem:[%s1 + $0xa4] sm:$0xf]
  %v137 = vld [vmem:[%s1 + $0xa8] sm:$0xf]
  %v138 = vld [vmem:[%s1 + $0xac] sm:$0xf]
  %v139 = vld [vmem:[%s1 + $0xb0] sm:$0xf]
  %v140 = vld [vmem:[%s1 + $0xb4] sm:$0xf]
  %v141 = vld [vmem:[%s1 + $0xb8] sm:$0xf]
  %v142 = vld [vmem:[%s1 + $0xbc] sm:$0xf]
  %v143 = vld [vmem:[%s1 + $0xc0] sm:$0xf]
  %v144 = vld [vmem:[%s1 + $0xc4] sm:$0xf]
  %v145 = vld [vmem:[%s1 + $0xc8] sm:$0xf]
  %v146 = vld [vmem:[%s1 + $0xcc] sm:$0xf]
  %v147 = vld [vmem:[%s1 + $0xd0] sm:$0xf]
  %v148 = vld [vmem:[%s1 + $0xd4] sm:$0xf]
  %v149 = vld [vmem:[%s1 + $0xd8] sm:$0xf]
  %v150 = vld [vmem:[%s1 + $0xdc] sm:$0xf]
  %v151 = vld [vmem:[%s1 + $0xe0] sm:$0xf]
  %v152 = vld [vmem:[%s1 + $0xe4] sm:$0xf]
  %v153 = vld [vmem:[%s1 + $0xe8] sm:$0xf]
  %v154 = vld [vmem:[%s1 + $0xec] sm:$0xf]
  %v155 = vld [vmem:[%s1 + $0xf0] sm:$0xf]
  %v156 = vld [vmem:[%s1 + $0xf4] sm:$0xf]
  %v157 = vld [vmem:[%s1 + $0xf8] sm:$0xf]
  %v158 = vld [vmem:[%s1 + $0xfc] sm:$0xf]
  %v159 = vld [vmem:[%s1 + $0x100] sm:$0xf]
  %v160 = vld [vmem:[%s1 + $0x104] sm:$0xf]
  %v161 = vld [vmem:[%s1 + $0x108] sm:$0xf]
  %v162 = vld [vmem:[%s1 + $0x10c] sm:$0xf]
  %v163 = vld [vmem:[%s1 + $0x110] sm:$0xf]
  %v164 = vld [vmem:[%s1 + $0x114] sm:$0xf]
  %v165 = vld [vmem:[%s1 + $0x118] sm:$0xf]
  %v166 = vld [vmem:[%s1 + $0x11c] sm:$0xf]
  %v167 = vld [vmem:[%s1 + $0x120] sm:$0xf]
  %v168 = vld [vmem:[%s1 + $0x124] sm:$0xf]
  %v169 = vld [vmem:[%s1 + $0x128] sm:$0xf]
  %v170 = vld [vmem:[%s1 + $0x12c] sm:$0xf]
  %v171 = vld [vmem:[%s1 + $0x130] sm:$0xf]
  %v172 = vld [vmem:[%s1 + $0x134] sm:$0xf]
  %v173 = vld [vmem:[%s1 + $0x138] sm:$0xf]
  %v174 = vld [vmem:[%s1 + $0x13c] sm:$0xf]
  %v175 = vld [vmem:[%s1 + $0x140] sm:$0xf]
  %v176 = vld [vmem:[%s1 + $0x144] sm:$0xf]
  %v177 = vld [vmem:[%s1 + $0x148] sm:$0xf]
  %v178 = vld [vmem:[%s1 + $0x14c] sm:$0xf]
  %v179 = vld [vmem:[%s1 + $0x150] sm:$0xf]
  %v180 = vld [vmem:[%s1 + $0x154] sm:$0xf]
  %v181 = vld [vmem:[%s1 + $0x158] sm:$0xf]
  %v182 = vld [vmem:[%s1 + $0x15c] sm:$0xf]
  %v183 = vld [vmem:[%s1 + $0x160] sm:$0xf]
  %v184 = vld [vmem:[%s1 + $0x164] sm:$0xf]
  %v185 = vld [vmem:[%s1 + $0x168] sm:$0xf]
  %v186 = vld [vmem:[%s1 + $0x16c] sm:$0xf]
  %v187 = vld [vmem:[%s1 + $0x170] sm:$0xf]
  %v188 = vld [vmem:[%s1 + $0x174] sm:$0xf]
  %v189 = vld [vmem:[%s1 + $0x178] sm:$0xf]
  %v190 = vld [vmem:[%s1 + $0x17c] sm:$0xf]
  %v191 = vld [vmem:[%s1 + $0x180] sm:$0xf]
  %v192 = vld [vmem:[%s1 + $0x184] sm:$0xf]
  %v193 = vld [vmem:[%s1 + $0x188] sm:$0xf]
  %v194 = vld [vmem:[%s1 + $0x18c] sm:$0xf]
  %v195 = vld [vmem:[%s1 + $0x190] sm:$0xf]
  %v196 = vld [vmem:[%s1 + $0x194] sm:$0xf]
  %v197 = vld [vmem:[%s1 + $0x198] sm:$0xf]
  %v198 = vld [vmem:[%s1 + $0x19c] sm:$0xf]
  %v199 = vld [vmem:[%s1 + $0x1a0] sm:$0xf]
  %v200 = vld [vmem:[%s1 + $0x1a4] sm:$0xf]
  %v201 = vld [vmem:[%s1 + $0x1a8] sm:$0xf]
  %v202 = vld [vmem:[%s1 + $0x1ac] sm:$0xf]
  %v203 = vld [vmem:[%s1 + $0x1b0] sm:$0xf]
  %v204 = vld [vmem:[%s1 + $0x1b4] sm:$0xf]
  %v205 = vld [vmem:[%s1 + $0x1b8] sm:$0xf]
  %v206 = vld [vmem:[%s1 + $0x1bc] sm:$0xf]
  %v207 = vld [vmem:[%s1 + $0x1c0] sm:$0xf]
  %v208 = vld [vmem:[%s1 + $0x1c4] sm:$0xf]
  %v209 = vld [vmem:[%s1 + $0x1c8] sm:$0xf]
  %v210 = vld [vmem:[%s1 + $0x1cc] sm:$0xf]
  %v211 = vld [vmem:[%s1 + $0x1d0] sm:$0xf]
  %v212 = vld [vmem:[%s1 + $0x1d4] sm:$0xf]
  %v213 = vld [vmem:[%s1 + $0x1d8] sm:$0xf]
  %v214 = vld [vmem:[%s1 + $0x1dc] sm:$0xf]
  %v215 = vld [vmem:[%s1 + $0x1e0] sm:$0xf]
  %v216 = vld [vmem:[%s1 + $0x1e4] sm:$0xf]
  %v217 = vld [vmem:[%s1 + $0x1e8] sm:$0xf]
  %v218 = vld [vmem:[%s1 + $0x1ec] sm:$0xf]
  %v219 = vld [vmem:[%s1 + $0x1f0] sm:$0xf]
  %v220 = vld [vmem:[%s1 + $0x1f4] sm:$0xf]
  %v221 = vld [vmem:[%s1 + $0x1f8] sm:$0xf]
  %v222 = vld [vmem:[%s1 + $0x1fc] sm:$0xf]
  %v223 = vld [vmem:[%s1 + $0x200] sm:$0xf]
  %v224 = vld [vmem:[%s1 + $0x204] sm:$0xf]
  %v225 = vld [vmem:[%s1 + $0x208] sm:$0xf]
  %v226 = vld [vmem:[%s1 + $0x20c] sm:$0xf]
  %v227 = vld [vmem:[%s1 + $0x210] sm:$0xf]
  %v228 = vld [vmem:[%s1 + $0x214] sm:$0xf]
  %v229 = vld [vmem:[%s1 + $0x218] sm:$0xf]
  %v230 = vld [vmem:[%s1 + $0x21c] sm:$0xf]
  %v231 = vld [vmem:[%s1 + $0x220] sm:$0xf]
  %v232 = vld [vmem:[%s1 + $0x224] sm:$0xf]
  %v233 = vld [vmem:[%s1 + $0x228] sm:$0xf]
  %v234 = vld [vmem:[%s1 + $0x22c] sm:$0xf]
  %v235 = vld [vmem:[%s1 + $0x230] sm:$0xf]
  %v236 = vld [vmem:[%s1 + $0x234] sm:$0xf]
  %v237 = vld [vmem:[%s1 + $0x238] sm:$0xf]
  %v238 = vld [vmem:[%s1 + $0x23c] sm:$0xf]
  %v239 = vld [vmem:[%s2] sm:$0x1]
  %v241 = vlaneseq
  %v242 = vshrl.u32 %v241, 7
  %v243 = vsub.s32 0, %v242
  %v244 = vrot.slane %v239, %v243
  %v326 = vunpack.c.l.b16 %v15
  %v327 = vunpack.c.h.b16 %v15
  %v328 = vunpack.c.l.b16 %v16
  %v329 = vunpack.c.h.b16 %v16
  %v330 = vunpack.c.l.b16 %v17
  %v331 = vunpack.c.h.b16 %v17
  %v332 = vunpack.c.l.b16 %v18
  %v333 = vunpack.c.h.b16 %v18
  %v334 = vunpack.c.l.b16 %v19
  %v335 = vunpack.c.l.b16 %v20
  %v336 = vunpack.c.h.b16 %v20
  %v337 = vunpack.c.l.b16 %v21
  %v338 = vunpack.c.h.b16 %v21
  %v339 = vunpack.c.l.b16 %v22
  %v340 = vunpack.c.h.b16 %v22
  %v341 = vunpack.c.l.b16 %v23
  %v342 = vunpack.c.h.b16 %v23
  %v343 = vunpack.c.l.b16 %v24
  %v344 = vunpack.c.l.b16 %v25
  %v345 = vunpack.c.h.b16 %v25
  %v346 = vunpack.c.l.b16 %v26
  %v347 = vunpack.c.h.b16 %v26
  %v348 = vunpack.c.l.b16 %v27
  %v349 = vunpack.c.h.b16 %v27
  %v350 = vunpack.c.l.b16 %v28
  %v351 = vunpack.c.h.b16 %v28
  %v352 = vunpack.c.l.b16 %v29
  %v353 = vunpack.c.l.b16 %v30
  %v354 = vunpack.c.h.b16 %v30
  %v355 = vunpack.c.l.b16 %v31
  %v356 = vunpack.c.h.b16 %v31
  %v357 = vunpack.c.l.b16 %v32
  %v358 = vunpack.c.h.b16 %v32
  %v359 = vunpack.c.l.b16 %v33
  %v360 = vunpack.c.h.b16 %v33
  %v361 = vunpack.c.l.b16 %v34
  %v362 = vunpack.c.l.b16 %v35
  %v363 = vunpack.c.h.b16 %v35
  %v364 = vunpack.c.l.b16 %v36
  %v365 = vunpack.c.h.b16 %v36
  %v366 = vunpack.c.l.b16 %v37
  %v367 = vunpack.c.h.b16 %v37
  %v368 = vunpack.c.l.b16 %v38
  %v369 = vunpack.c.h.b16 %v38
  %v370 = vunpack.c.l.b16 %v39
  %v371 = vunpack.c.l.b16 %v40
  %v372 = vunpack.c.h.b16 %v40
  %v373 = vunpack.c.l.b16 %v41
  %v374 = vunpack.c.h.b16 %v41
  %v375 = vunpack.c.l.b16 %v42
  %v376 = vunpack.c.h.b16 %v42
  %v377 = vunpack.c.l.b16 %v43
  %v378 = vunpack.c.h.b16 %v43
  %v379 = vunpack.c.l.b16 %v44
  %v380 = vunpack.c.l.b16 %v45
  %v381 = vunpack.c.h.b16 %v45
  %v382 = vunpack.c.l.b16 %v46
  %v383 = vunpack.c.h.b16 %v46
  %v384 = vunpack.c.l.b16 %v47
  %v385 = vunpack.c.h.b16 %v47
  %v386 = vunpack.c.l.b16 %v48
  %v387 = vunpack.c.h.b16 %v48
  %v388 = vunpack.c.l.b16 %v49
  %v389 = vunpack.c.l.b16 %v50
  %v390 = vunpack.c.h.b16 %v50
  %v391 = vunpack.c.l.b16 %v51
  %v392 = vunpack.c.h.b16 %v51
  %v393 = vunpack.c.l.b16 %v52
  %v394 = vunpack.c.h.b16 %v52
  %v395 = vunpack.c.l.b16 %v53
  %v396 = vunpack.c.h.b16 %v53
  %v397 = vunpack.c.l.b16 %v54
  %v398 = vunpack.c.l.b16 %v55
  %v399 = vunpack.c.h.b16 %v55
  %v400 = vunpack.c.l.b16 %v56
  %v401 = vunpack.c.h.b16 %v56
  %v402 = vunpack.c.l.b16 %v57
  %v403 = vunpack.c.h.b16 %v57
  %v404 = vunpack.c.l.b16 %v58
  %v405 = vunpack.c.h.b16 %v58
  %v406 = vunpack.c.l.b16 %v59
  %v407 = vunpack.c.l.b16 %v60
  %v408 = vunpack.c.h.b16 %v60
  %v409 = vunpack.c.l.b16 %v61
  %v410 = vunpack.c.h.b16 %v61
  %v411 = vunpack.c.l.b16 %v62
  %v412 = vunpack.c.h.b16 %v62
  %v413 = vunpack.c.l.b16 %v63
  %v414 = vunpack.c.h.b16 %v63
  %v415 = vunpack.c.l.b16 %v64
  %v416 = vunpack.c.l.b16 %v65
  %v417 = vunpack.c.h.b16 %v65
  %v418 = vunpack.c.l.b16 %v66
  %v419 = vunpack.c.h.b16 %v66
  %v420 = vunpack.c.l.b16 %v67
  %v421 = vunpack.c.h.b16 %v67
  %v422 = vunpack.c.l.b16 %v68
  %v423 = vunpack.c.h.b16 %v68
  %v424 = vunpack.c.l.b16 %v69
  %v425 = vunpack.c.l.b16 %v70
  %v426 = vunpack.c.h.b16 %v70
  %v427 = vunpack.c.l.b16 %v71
  %v428 = vunpack.c.h.b16 %v71
  %v429 = vunpack.c.l.b16 %v72
  %v430 = vunpack.c.h.b16 %v72
  %v431 = vunpack.c.l.b16 %v73
  %v432 = vunpack.c.h.b16 %v73
  %v433 = vunpack.c.l.b16 %v74
  %v434 = vunpack.c.l.b16 %v75
  %v435 = vunpack.c.h.b16 %v75
  %v436 = vunpack.c.l.b16 %v76
  %v437 = vunpack.c.h.b16 %v76
  %v438 = vunpack.c.l.b16 %v77
  %v439 = vunpack.c.h.b16 %v77
  %v440 = vunpack.c.l.b16 %v78
  %v441 = vunpack.c.h.b16 %v78
  %v442 = vunpack.c.l.b16 %v79
  %v443 = vunpack.c.l.b16 %v80
  %v444 = vunpack.c.h.b16 %v80
  %v445 = vunpack.c.l.b16 %v81
  %v446 = vunpack.c.h.b16 %v81
  %v447 = vunpack.c.l.b16 %v82
  %v448 = vunpack.c.h.b16 %v82
  %v449 = vunpack.c.l.b16 %v83
  %v450 = vunpack.c.h.b16 %v83
  %v451 = vunpack.c.l.b16 %v84
  %v452 = vunpack.c.l.b16 %v85
  %v453 = vunpack.c.h.b16 %v85
  %v454 = vunpack.c.l.b16 %v86
  %v455 = vunpack.c.h.b16 %v86
  %v456 = vunpack.c.l.b16 %v87
  %v457 = vunpack.c.h.b16 %v87
  %v458 = vunpack.c.l.b16 %v88
  %v459 = vunpack.c.h.b16 %v88
  %v460 = vunpack.c.l.b16 %v89
  %v461 = vunpack.c.l.b16 %v90
  %v462 = vunpack.c.h.b16 %v90
  %v463 = vunpack.c.l.b16 %v91
  %v464 = vunpack.c.h.b16 %v91
  %v465 = vunpack.c.l.b16 %v92
  %v466 = vunpack.c.h.b16 %v92
  %v467 = vunpack.c.l.b16 %v93
  %v468 = vunpack.c.h.b16 %v93
  %v469 = vunpack.c.l.b16 %v94
  %v470 = vpack.c.b16 %v335, %v326
  %v471 = vpack.c.b16 %v336, %v327
  %v472 = vpack.c.b16 %v337, %v328
  %v473 = vpack.c.b16 %v338, %v329
  %v474 = vpack.c.b16 %v339, %v330
  %v475 = vpack.c.b16 %v340, %v331
  %v476 = vpack.c.b16 %v341, %v332
  %v477 = vpack.c.b16 %v342, %v333
  %v478 = vpack.c.b16 %v343, %v334
  %v479 = vpack.c.b16 %v353, %v344
  %v480 = vpack.c.b16 %v354, %v345
  %v481 = vpack.c.b16 %v355, %v346
  %v482 = vpack.c.b16 %v356, %v347
  %v483 = vpack.c.b16 %v357, %v348
  %v484 = vpack.c.b16 %v358, %v349
  %v485 = vpack.c.b16 %v359, %v350
  %v486 = vpack.c.b16 %v360, %v351
  %v487 = vpack.c.b16 %v361, %v352
  %v488 = vpack.c.b16 %v371, %v362
  %v489 = vpack.c.b16 %v372, %v363
  %v490 = vpack.c.b16 %v373, %v364
  %v491 = vpack.c.b16 %v374, %v365
  %v492 = vpack.c.b16 %v375, %v366
  %v493 = vpack.c.b16 %v376, %v367
  %v494 = vpack.c.b16 %v377, %v368
  %v495 = vpack.c.b16 %v378, %v369
  %v496 = vpack.c.b16 %v379, %v370
  %v497 = vpack.c.b16 %v389, %v380
  %v498 = vpack.c.b16 %v390, %v381
  %v499 = vpack.c.b16 %v391, %v382
  %v500 = vpack.c.b16 %v392, %v383
  %v501 = vpack.c.b16 %v393, %v384
  %v502 = vpack.c.b16 %v394, %v385
  %v503 = vpack.c.b16 %v395, %v386
  %v504 = vpack.c.b16 %v396, %v387
  %v505 = vpack.c.b16 %v397, %v388
  %v506 = vpack.c.b16 %v407, %v398
  %v507 = vpack.c.b16 %v408, %v399
  %v508 = vpack.c.b16 %v409, %v400
  %v509 = vpack.c.b16 %v410, %v401
  %v510 = vpack.c.b16 %v411, %v402
  %v511 = vpack.c.b16 %v412, %v403
  %v512 = vpack.c.b16 %v413, %v404
  %v513 = vpack.c.b16 %v414, %v405
  %v514 = vpack.c.b16 %v415, %v406
  %v515 = vpack.c.b16 %v425, %v416
  %v516 = vpack.c.b16 %v426, %v417
  %v517 = vpack.c.b16 %v427, %v418
  %v518 = vpack.c.b16 %v428, %v419
  %v519 = vpack.c.b16 %v429, %v420
  %v520 = vpack.c.b16 %v430, %v421
  %v521 = vpack.c.b16 %v431, %v422
  %v522 = vpack.c.b16 %v432, %v423
  %v523 = vpack.c.b16 %v433, %v424
  %v524 = vpack.c.b16 %v443, %v434
  %v525 = vpack.c.b16 %v444, %v435
  %v526 = vpack.c.b16 %v445, %v436
  %v527 = vpack.c.b16 %v446, %v437
  %v528 = vpack.c.b16 %v447, %v438
  %v529 = vpack.c.b16 %v448, %v439
  %v530 = vpack.c.b16 %v449, %v440
  %v531 = vpack.c.b16 %v450, %v441
  %v532 = vpack.c.b16 %v451, %v442
  %v533 = vpack.c.b16 %v461, %v452
  %v534 = vpack.c.b16 %v462, %v453
  %v535 = vpack.c.b16 %v463, %v454
  %v536 = vpack.c.b16 %v464, %v455
  %v537 = vpack.c.b16 %v465, %v456
  %v538 = vpack.c.b16 %v466, %v457
  %v539 = vpack.c.b16 %v467, %v458
  %v540 = vpack.c.b16 %v468, %v459
  %v541 = vpack.c.b16 %v469, %v460
  %v758 = vunpack.c.l.b16 %v95
  %v759 = vunpack.c.l.b16 %v96
  %v760 = vunpack.c.l.b16 %v97
  %v761 = vunpack.c.l.b16 %v98
  %v762 = vunpack.c.l.b16 %v99
  %v763 = vunpack.c.l.b16 %v100
  %v764 = vunpack.c.l.b16 %v101
  %v765 = vunpack.c.l.b16 %v102
  %v766 = vunpack.c.l.b16 %v103
  %v767 = vunpack.c.l.b16 %v104
  %v768 = vunpack.c.l.b16 %v105
  %v769 = vunpack.c.l.b16 %v106
  %v770 = vunpack.c.l.b16 %v107
  %v771 = vunpack.c.l.b16 %v108
  %v772 = vunpack.c.l.b16 %v109
  %v773 = vunpack.c.l.b16 %v110
  %v774 = vunpack.c.l.b16 %v111
  %v775 = vunpack.c.l.b16 %v112
  %v776 = vunpack.c.l.b16 %v113
  %v777 = vunpack.c.l.b16 %v114
  %v778 = vunpack.c.l.b16 %v115
  %v779 = vunpack.c.l.b16 %v116
  %v780 = vunpack.c.l.b16 %v117
  %v781 = vunpack.c.l.b16 %v118
  %v782 = vunpack.c.l.b16 %v119
  %v783 = vunpack.c.l.b16 %v120
  %v784 = vunpack.c.l.b16 %v121
  %v785 = vunpack.c.l.b16 %v122
  %v786 = vunpack.c.l.b16 %v123
  %v787 = vunpack.c.l.b16 %v124
  %v788 = vunpack.c.l.b16 %v125
  %v789 = vunpack.c.l.b16 %v126
  %v790 = vunpack.c.l.b16 %v127
  %v791 = vunpack.c.l.b16 %v128
  %v792 = vunpack.c.l.b16 %v129
  %v793 = vunpack.c.l.b16 %v130
  %v794 = vunpack.c.l.b16 %v131
  %v795 = vunpack.c.l.b16 %v132
  %v796 = vunpack.c.l.b16 %v133
  %v797 = vunpack.c.l.b16 %v134
  %v798 = vunpack.c.l.b16 %v135
  %v799 = vunpack.c.l.b16 %v136
  %v800 = vunpack.c.l.b16 %v137
  %v801 = vunpack.c.l.b16 %v138
  %v802 = vunpack.c.l.b16 %v139
  %v803 = vunpack.c.l.b16 %v140
  %v804 = vunpack.c.l.b16 %v141
  %v805 = vunpack.c.l.b16 %v142
  %v806 = vunpack.c.l.b16 %v143
  %v807 = vunpack.c.l.b16 %v144
  %v808 = vunpack.c.l.b16 %v145
  %v809 = vunpack.c.l.b16 %v146
  %v810 = vunpack.c.l.b16 %v147
  %v811 = vunpack.c.l.b16 %v148
  %v812 = vunpack.c.l.b16 %v149
  %v813 = vunpack.c.l.b16 %v150
  %v814 = vunpack.c.l.b16 %v151
  %v815 = vunpack.c.l.b16 %v152
  %v816 = vunpack.c.l.b16 %v153
  %v817 = vunpack.c.l.b16 %v154
  %v818 = vunpack.c.l.b16 %v155
  %v819 = vunpack.c.l.b16 %v156
  %v820 = vunpack.c.l.b16 %v157
  %v821 = vunpack.c.l.b16 %v158
  %v822 = vunpack.c.l.b16 %v159
  %v823 = vunpack.c.l.b16 %v160
  %v824 = vunpack.c.l.b16 %v161
  %v825 = vunpack.c.l.b16 %v162
  %v826 = vunpack.c.l.b16 %v163
  %v827 = vunpack.c.l.b16 %v164
  %v828 = vunpack.c.l.b16 %v165
  %v829 = vunpack.c.l.b16 %v166
  %v830 = vunpack.c.l.b16 %v167
  %v831 = vunpack.c.l.b16 %v168
  %v832 = vunpack.c.l.b16 %v169
  %v833 = vunpack.c.l.b16 %v170
  %v834 = vunpack.c.l.b16 %v171
  %v835 = vunpack.c.l.b16 %v172
  %v836 = vunpack.c.l.b16 %v173
  %v837 = vunpack.c.l.b16 %v174
  %v838 = vunpack.c.l.b16 %v175
  %v839 = vunpack.c.l.b16 %v176
  %v840 = vunpack.c.l.b16 %v177
  %v841 = vunpack.c.l.b16 %v178
  %v842 = vunpack.c.l.b16 %v179
  %v843 = vunpack.c.l.b16 %v180
  %v844 = vunpack.c.l.b16 %v181
  %v845 = vunpack.c.l.b16 %v182
  %v846 = vunpack.c.l.b16 %v183
  %v847 = vunpack.c.l.b16 %v184
  %v848 = vunpack.c.l.b16 %v185
  %v849 = vunpack.c.l.b16 %v186
  %v850 = vunpack.c.l.b16 %v187
  %v851 = vunpack.c.l.b16 %v188
  %v852 = vunpack.c.l.b16 %v189
  %v853 = vunpack.c.l.b16 %v190
  %v854 = vunpack.c.l.b16 %v191
  %v855 = vunpack.c.l.b16 %v192
  %v856 = vunpack.c.l.b16 %v193
  %v857 = vunpack.c.l.b16 %v194
  %v858 = vunpack.c.l.b16 %v195
  %v859 = vunpack.c.l.b16 %v196
  %v860 = vunpack.c.l.b16 %v197
  %v861 = vunpack.c.l.b16 %v198
  %v862 = vunpack.c.l.b16 %v199
  %v863 = vunpack.c.l.b16 %v200
  %v864 = vunpack.c.l.b16 %v201
  %v865 = vunpack.c.l.b16 %v202
  %v866 = vunpack.c.l.b16 %v203
  %v867 = vunpack.c.l.b16 %v204
  %v868 = vunpack.c.l.b16 %v205
  %v869 = vunpack.c.l.b16 %v206
  %v870 = vunpack.c.l.b16 %v207
  %v871 = vunpack.c.l.b16 %v208
  %v872 = vunpack.c.l.b16 %v209
  %v873 = vunpack.c.l.b16 %v210
  %v874 = vunpack.c.l.b16 %v211
  %v875 = vunpack.c.l.b16 %v212
  %v876 = vunpack.c.l.b16 %v213
  %v877 = vunpack.c.l.b16 %v214
  %v878 = vunpack.c.l.b16 %v215
  %v879 = vunpack.c.l.b16 %v216
  %v880 = vunpack.c.l.b16 %v217
  %v881 = vunpack.c.l.b16 %v218
  %v882 = vunpack.c.l.b16 %v219
  %v883 = vunpack.c.l.b16 %v220
  %v884 = vunpack.c.l.b16 %v221
  %v885 = vunpack.c.l.b16 %v222
  %v886 = vunpack.c.l.b16 %v223
  %v887 = vunpack.c.l.b16 %v224
  %v888 = vunpack.c.l.b16 %v225
  %v889 = vunpack.c.l.b16 %v226
  %v890 = vunpack.c.l.b16 %v227
  %v891 = vunpack.c.l.b16 %v228
  %v892 = vunpack.c.l.b16 %v229
  %v893 = vunpack.c.l.b16 %v230
  %v894 = vunpack.c.l.b16 %v231
  %v895 = vunpack.c.l.b16 %v232
  %v896 = vunpack.c.l.b16 %v233
  %v897 = vunpack.c.l.b16 %v234
  %v898 = vunpack.c.l.b16 %v235
  %v899 = vunpack.c.l.b16 %v236
  %v900 = vunpack.c.l.b16 %v237
  %v901 = vunpack.c.l.b16 %v238
  %v902 = vpack.c.b16 %v759, %v758
  %v903 = vpack.c.b16 %v761, %v760
  %v904 = vpack.c.b16 %v763, %v762
  %v905 = vpack.c.b16 %v765, %v764
  %v906 = vpack.c.b16 %v767, %v766
  %v907 = vpack.c.b16 %v769, %v768
  %v908 = vpack.c.b16 %v771, %v770
  %v909 = vpack.c.b16 %v773, %v772
  %v910 = vpack.c.b16 %v775, %v774
  %v911 = vpack.c.b16 %v777, %v776
  %v912 = vpack.c.b16 %v779, %v778
  %v913 = vpack.c.b16 %v781, %v780
  %v914 = vpack.c.b16 %v783, %v782
  %v915 = vpack.c.b16 %v785, %v784
  %v916 = vpack.c.b16 %v787, %v786
  %v917 = vpack.c.b16 %v789, %v788
  %v918 = vpack.c.b16 %v791, %v790
  %v919 = vpack.c.b16 %v793, %v792
  %v920 = vpack.c.b16 %v795, %v794
  %v921 = vpack.c.b16 %v797, %v796
  %v922 = vpack.c.b16 %v799, %v798
  %v923 = vpack.c.b16 %v801, %v800
  %v924 = vpack.c.b16 %v803, %v802
  %v925 = vpack.c.b16 %v805, %v804
  %v926 = vpack.c.b16 %v807, %v806
  %v927 = vpack.c.b16 %v809, %v808
  %v928 = vpack.c.b16 %v811, %v810
  %v929 = vpack.c.b16 %v813, %v812
  %v930 = vpack.c.b16 %v815, %v814
  %v931 = vpack.c.b16 %v817, %v816
  %v932 = vpack.c.b16 %v819, %v818
  %v933 = vpack.c.b16 %v821, %v820
  %v934 = vpack.c.b16 %v823, %v822
  %v935 = vpack.c.b16 %v825, %v824
  %v936 = vpack.c.b16 %v827, %v826
  %v937 = vpack.c.b16 %v829, %v828
  %v938 = vpack.c.b16 %v831, %v830
  %v939 = vpack.c.b16 %v833, %v832
  %v940 = vpack.c.b16 %v835, %v834
  %v941 = vpack.c.b16 %v837, %v836
  %v942 = vpack.c.b16 %v839, %v838
  %v943 = vpack.c.b16 %v841, %v840
  %v944 = vpack.c.b16 %v843, %v842
  %v945 = vpack.c.b16 %v845, %v844
  %v946 = vpack.c.b16 %v847, %v846
  %v947 = vpack.c.b16 %v849, %v848
  %v948 = vpack.c.b16 %v851, %v850
  %v949 = vpack.c.b16 %v853, %v852
  %v950 = vpack.c.b16 %v855, %v854
  %v951 = vpack.c.b16 %v857, %v856
  %v952 = vpack.c.b16 %v859, %v858
  %v953 = vpack.c.b16 %v861, %v860
  %v954 = vpack.c.b16 %v863, %v862
  %v955 = vpack.c.b16 %v865, %v864
  %v956 = vpack.c.b16 %v867, %v866
  %v957 = vpack.c.b16 %v869, %v868
  %v958 = vpack.c.b16 %v871, %v870
  %v959 = vpack.c.b16 %v873, %v872
  %v960 = vpack.c.b16 %v875, %v874
  %v961 = vpack.c.b16 %v877, %v876
  %v962 = vpack.c.b16 %v879, %v878
  %v963 = vpack.c.b16 %v881, %v880
  %v964 = vpack.c.b16 %v883, %v882
  %v965 = vpack.c.b16 %v885, %v884
  %v966 = vpack.c.b16 %v887, %v886
  %v967 = vpack.c.b16 %v889, %v888
  %v968 = vpack.c.b16 %v891, %v890
  %v969 = vpack.c.b16 %v893, %v892
  %v970 = vpack.c.b16 %v895, %v894
  %v971 = vpack.c.b16 %v897, %v896
  %v972 = vpack.c.b16 %v899, %v898
  %v973 = vpack.c.b16 %v901, %v900
  %1046 = vmatprep.subr.bf16.mxu0 0
  %1047 = vmatpush1.bf16.msra.mxu0 %v902
  %1048 = vmatprep.subr.bf16.mxu0 0
  %1049 = vmatpush1.bf16.msra.mxu0 %v903
  %1050 = vmatprep.subr.bf16.mxu0 0
  %1051 = vmatpush1.bf16.msra.mxu0 %v904
  %1052 = vmatprep.subr.bf16.mxu0 0
  %1053 = vmatpush1.bf16.msra.mxu0 %v905
  %1054 = vmatprep.subr.bf16.mxu0 0
  %1055 = vmatpush1.bf16.msra.mxu0 %v906
  %1056 = vmatprep.subr.bf16.mxu0 0
  %1057 = vmatpush1.bf16.msra.mxu0 %v907
  %1058 = vmatprep.subr.bf16.mxu0 0
  %1059 = vmatpush1.bf16.msra.mxu0 %v908
  %1060 = vmatprep.subr.bf16.mxu0 0
  %1061 = vmatpush1.bf16.msra.mxu0 %v909
  %1062 = vmatprep.subr.bf16.mxu0 0
  %1063 = vmatpush1.bf16.msra.mxu0 %v910
  %1064 = vmatprep.subr.bf16.mxu0 0
  %1065 = vmatpush1.bf16.msra.mxu0 %v911
  %1066 = vmatprep.subr.bf16.mxu0 0
  %1067 = vmatpush1.bf16.msra.mxu0 %v912
  %1068 = vmatprep.subr.bf16.mxu0 0
  %1069 = vmatpush1.bf16.msra.mxu0 %v913
  %1070 = vmatprep.subr.bf16.mxu0 0
  %1071 = vmatpush1.bf16.msra.mxu0 %v914
  %1072 = vmatprep.subr.bf16.mxu0 0
  %1073 = vmatpush1.bf16.msra.mxu0 %v915
  %1074 = vmatprep.subr.bf16.mxu0 0
  %1075 = vmatpush1.bf16.msra.mxu0 %v916
  %1076 = vmatprep.subr.bf16.mxu0 0
  %1077 = vmatpush1.bf16.msra.mxu0 %v917
  %1078 = vmatprep.mubr.bf16.mxu0 %v471
  %1079 = vmatmul.mubr.bf16.gmra.mrb[0].mxu0 %v470
  %v1080 = vpop.f32.mrb[0].mxu0
  %v1081 = vadd.f32 %v244, %v1080
  %v1082 = vpop.f32.mrb[0].mxu0
  %v1083 = vpop.f32.mrb[0].mxu0
  %v1084 = vadd.f32 %v244, %v1083
  %v1085 = vpop.f32.mrb[0].mxu0
  %1086 = vmatprep.mubr.bf16.mxu0 %v480
  %1087 = vmatmul.mubr.bf16.gmra.mrb[0].mxu0 %v479
  %v1088 = vpop.f32.mrb[0].mxu0
  %v1089 = vadd.f32 %v244, %v1088
  %v1090 = vpop.f32.mrb[0].mxu0
  %v1091 = vpop.f32.mrb[0].mxu0
  %v1092 = vadd.f32 %v244, %v1091
  %v1093 = vpop.f32.mrb[0].mxu0
  %1094 = vmatprep.mubr.bf16.mxu0 %v489
  %1095 = vmatmul.mubr.bf16.gmra.mrb[0].mxu0 %v488
  %v1096 = vpop.f32.mrb[0].mxu0
  %v1097 = vadd.f32 %v244, %v1096
  %v1098 = vpop.f32.mrb[0].mxu0
  %v1099 = vpop.f32.mrb[0].mxu0
  %v1100 = vadd.f32 %v244, %v1099
  %v1101 = vpop.f32.mrb[0].mxu0
  %1102 = vmatprep.mubr.bf16.mxu0 %v498
  %1103 = vmatmul.mubr.bf16.gmra.mrb[0].mxu0 %v497
  %v1104 = vpop.f32.mrb[0].mxu0
  %v1105 = vadd.f32 %v244, %v1104
  %v1106 = vpop.f32.mrb[0].mxu0
  %v1107 = vpop.f32.mrb[0].mxu0
  %v1108 = vadd.f32 %v244, %v1107
  %v1109 = vpop.f32.mrb[0].mxu0
  %1110 = vmatprep.mubr.bf16.mxu0 %v507
  %1111 = vmatmul.mubr.bf16.gmra.mrb[0].mxu0 %v506
  %v1112 = vpop.f32.mrb[0].mxu0
  %v1113 = vadd.f32 %v244, %v1112
  %v1114 = vpop.f32.mrb[0].mxu0
  %v1115 = vpop.f32.mrb[0].mxu0
  %v1116 = vadd.f32 %v244, %v1115
  %v1117 = vpop.f32.mrb[0].mxu0
  %1118 = vmatprep.mubr.bf16.mxu0 %v516
  %1119 = vmatmul.mubr.bf16.gmra.mrb[0].mxu0 %v515
  %v1120 = vpop.f32.mrb[0].mxu0
  %v1121 = vadd.f32 %v244, %v1120
  %v1122 = vpop.f32.mrb[0].mxu0
  %v1123 = vpop.f32.mrb[0].mxu0
  %v1124 = vadd.f32 %v244, %v1123
  %v1125 = vpop.f32.mrb[0].mxu0
  %1126 = vmatprep.mubr.bf16.mxu0 %v525
  %1127 = vmatmul.mubr.bf16.gmra.mrb[0].mxu0 %v524
  %v1128 = vpop.f32.mrb[0].mxu0
  %v1129 = vadd.f32 %v244, %v1128
  %v1130 = vpop.f32.mrb[0].mxu0
  %v1131 = vpop.f32.mrb[0].mxu0
  %v1132 = vadd.f32 %v244, %v1131
  %v1133 = vpop.f32.mrb[0].mxu0
  %1134 = vmatprep.mubr.bf16.mxu0 %v534
  %1135 = vmatmul.mubr.bf16.gmra.mrb[0].mxu0 %v533
  %v1136 = vpop.f32.mrb[0].mxu0
  %v1137 = vadd.f32 %v244, %v1136
  %v1138 = vpop.f32.mrb[0].mxu0
  %v1139 = vpop.f32.mrb[0].mxu0
  %v1140 = vadd.f32 %v244, %v1139
  %v1141 = vpop.f32.mrb[0].mxu0
  %1142 = vdwg.mxu0
  %1143 = vmatprep.subr.bf16.mxu0 0
  %1144 = vmatpush1.bf16.msra.mxu0 %v918
  %1145 = vmatprep.subr.bf16.mxu0 0
  %1146 = vmatpush1.bf16.msra.mxu0 %v919
  %1147 = vmatprep.subr.bf16.mxu0 0
  %1148 = vmatpush1.bf16.msra.mxu0 %v920
  %1149 = vmatprep.subr.bf16.mxu0 0
  %1150 = vmatpush1.bf16.msra.mxu0 %v921
  %1151 = vmatprep.subr.bf16.mxu0 0
  %1152 = vmatpush1.bf16.msra.mxu0 %v922
  %1153 = vmatprep.subr.bf16.mxu0 0
  %1154 = vmatpush1.bf16.msra.mxu0 %v923
  %1155 = vmatprep.subr.bf16.mxu0 0
  %1156 = vmatpush1.bf16.msra.mxu0 %v924
  %1157 = vmatprep.subr.bf16.mxu0 0
  %1158 = vmatpush1.bf16.msra.mxu0 %v925
  %1159 = vmatprep.subr.bf16.mxu0 0
  %1160 = vmatpush1.bf16.msra.mxu0 %v926
  %1161 = vmatprep.subr.bf16.mxu0 0
  %1162 = vmatpush1.bf16.msra.mxu0 %v927
  %1163 = vmatprep.subr.bf16.mxu0 0
  %1164 = vmatpush1.bf16.msra.mxu0 %v928
  %1165 = vmatprep.subr.bf16.mxu0 0
  %1166 = vmatpush1.bf16.msra.mxu0 %v929
  %1167 = vmatprep.subr.bf16.mxu0 0
  %1168 = vmatpush1.bf16.msra.mxu0 %v930
  %1169 = vmatprep.subr.bf16.mxu0 0
  %1170 = vmatpush1.bf16.msra.mxu0 %v931
  %1171 = vmatprep.subr.bf16.mxu0 0
  %1172 = vmatpush1.bf16.msra.mxu0 %v932
  %1173 = vmatprep.subr.bf16.mxu0 0
  %1174 = vmatpush1.bf16.msra.mxu0 %v933
  %1175 = vmatprep.mubr.bf16.mxu0 %v473
  %1176 = vmatmul.mubr.bf16.gmra.mrb[0].mxu0 %v472
  %v1177 = vpop.f32.mrb[0].mxu0
  %v1178 = vadd.f32 %v1081, %v1177
  %v1179 = vpop.f32.mrb[0].mxu0
  %v1180 = vpop.f32.mrb[0].mxu0
  %v1181 = vadd.f32 %v1084, %v1180
  %v1182 = vpop.f32.mrb[0].mxu0
  %1183 = vmatprep.mubr.bf16.mxu0 %v482
  %1184 = vmatmul.mubr.bf16.gmra.mrb[0].mxu0 %v481
  %v1185 = vpop.f32.mrb[0].mxu0
  %v1186 = vadd.f32 %v1089, %v1185
  %v1187 = vpop.f32.mrb[0].mxu0
  %v1188 = vpop.f32.mrb[0].mxu0
  %v1189 = vadd.f32 %v1092, %v1188
  %v1190 = vpop.f32.mrb[0].mxu0
  %1191 = vmatprep.mubr.bf16.mxu0 %v491
  %1192 = vmatmul.mubr.bf16.gmra.mrb[0].mxu0 %v490
  %v1193 = vpop.f32.mrb[0].mxu0
  %v1194 = vadd.f32 %v1097, %v1193
  %v1195 = vpop.f32.mrb[0].mxu0
  %v1196 = vpop.f32.mrb[0].mxu0
  %v1197 = vadd.f32 %v1100, %v1196
  %v1198 = vpop.f32.mrb[0].mxu0
  %1199 = vmatprep.mubr.bf16.mxu0 %v500
  %1200 = vmatmul.mubr.bf16.gmra.mrb[0].mxu0 %v499
  %v1201 = vpop.f32.mrb[0].mxu0
  %v1202 = vadd.f32 %v1105, %v1201
  %v1203 = vpop.f32.mrb[0].mxu0
  %v1204 = vpop.f32.mrb[0].mxu0
  %v1205 = vadd.f32 %v1108, %v1204
  %v1206 = vpop.f32.mrb[0].mxu0
  %1207 = vmatprep.mubr.bf16.mxu0 %v509
  %1208 = vmatmul.mubr.bf16.gmra.mrb[0].mxu0 %v508
  %v1209 = vpop.f32.mrb[0].mxu0
  %v1210 = vadd.f32 %v1113, %v1209
  %v1211 = vpop.f32.mrb[0].mxu0
  %v1212 = vpop.f32.mrb[0].mxu0
  %v1213 = vadd.f32 %v1116, %v1212
  %v1214 = vpop.f32.mrb[0].mxu0
  %1215 = vmatprep.mubr.bf16.mxu0 %v518
  %1216 = vmatmul.mubr.bf16.gmra.mrb[0].mxu0 %v517
  %v1217 = vpop.f32.mrb[0].mxu0
  %v1218 = vadd.f32 %v1121, %v1217
  %v1219 = vpop.f32.mrb[0].mxu0
  %v1220 = vpop.f32.mrb[0].mxu0
  %v1221 = vadd.f32 %v1124, %v1220
  %v1222 = vpop.f32.mrb[0].mxu0
  %1223 = vmatprep.mubr.bf16.mxu0 %v527
  %1224 = vmatmul.mubr.bf16.gmra.mrb[0].mxu0 %v526
  %v1225 = vpop.f32.mrb[0].mxu0
  %v1226 = vadd.f32 %v1129, %v1225
  %v1227 = vpop.f32.mrb[0].mxu0
  %v1228 = vpop.f32.mrb[0].mxu0
  %v1229 = vadd.f32 %v1132, %v1228
  %v1230 = vpop.f32.mrb[0].mxu0
  %1231 = vmatprep.mubr.bf16.mxu0 %v536
  %1232 = vmatmul.mubr.bf16.gmra.mrb[0].mxu0 %v535
  %v1233 = vpop.f32.mrb[0].mxu0
  %v1234 = vadd.f32 %v1137, %v1233
  %v1235 = vpop.f32.mrb[0].mxu0
  %v1236 = vpop.f32.mrb[0].mxu0
  %v1237 = vadd.f32 %v1140, %v1236
  %v1238 = vpop.f32.mrb[0].mxu0
  %1239 = vdwg.mxu0
  %1240 = vmatprep.subr.bf16.mxu0 0
  %1241 = vmatpush1.bf16.msra.mxu0 %v934
  %1242 = vmatprep.subr.bf16.mxu0 0
  %1243 = vmatpush1.bf16.msra.mxu0 %v935
  %1244 = vmatprep.subr.bf16.mxu0 0
  %1245 = vmatpush1.bf16.msra.mxu0 %v936
  %1246 = vmatprep.subr.bf16.mxu0 0
  %1247 = vmatpush1.bf16.msra.mxu0 %v937
  %1248 = vmatprep.subr.bf16.mxu0 0
  %1249 = vmatpush1.bf16.msra.mxu0 %v938
  %1250 = vmatprep.subr.bf16.mxu0 0
  %1251 = vmatpush1.bf16.msra.mxu0 %v939
  %1252 = vmatprep.subr.bf16.mxu0 0
  %1253 = vmatpush1.bf16.msra.mxu0 %v940
  %1254 = vmatprep.subr.bf16.mxu0 0
  %1255 = vmatpush1.bf16.msra.mxu0 %v941
  %1256 = vmatprep.subr.bf16.mxu0 0
  %1257 = vmatpush1.bf16.msra.mxu0 %v942
  %1258 = vmatprep.subr.bf16.mxu0 0
  %1259 = vmatpush1.bf16.msra.mxu0 %v943
  %1260 = vmatprep.subr.bf16.mxu0 0
  %1261 = vmatpush1.bf16.msra.mxu0 %v944
  %1262 = vmatprep.subr.bf16.mxu0 0
  %1263 = vmatpush1.bf16.msra.mxu0 %v945
  %1264 = vmatprep.subr.bf16.mxu0 0
  %1265 = vmatpush1.bf16.msra.mxu0 %v946
  %1266 = vmatprep.subr.bf16.mxu0 0
  %1267 = vmatpush1.bf16.msra.mxu0 %v947
  %1268 = vmatprep.subr.bf16.mxu0 0
  %1269 = vmatpush1.bf16.msra.mxu0 %v948
  %1270 = vmatprep.subr.bf16.mxu0 0
  %1271 = vmatpush1.bf16.msra.mxu0 %v949
  %1272 = vmatprep.mubr.bf16.mxu0 %v475
  %1273 = vmatmul.mubr.bf16.gmra.mrb[0].mxu0 %v474
  %v1274 = vpop.f32.mrb[0].mxu0
  %v1275 = vadd.f32 %v1178, %v1274
  %v1276 = vpop.f32.mrb[0].mxu0
  %v1277 = vpop.f32.mrb[0].mxu0
  %v1278 = vadd.f32 %v1181, %v1277
  %v1279 = vpop.f32.mrb[0].mxu0
  %1280 = vmatprep.mubr.bf16.mxu0 %v484
  %1281 = vmatmul.mubr.bf16.gmra.mrb[0].mxu0 %v483
  %v1282 = vpop.f32.mrb[0].mxu0
  %v1283 = vadd.f32 %v1186, %v1282
  %v1284 = vpop.f32.mrb[0].mxu0
  %v1285 = vpop.f32.mrb[0].mxu0
  %v1286 = vadd.f32 %v1189, %v1285
  %v1287 = vpop.f32.mrb[0].mxu0
  %1288 = vmatprep.mubr.bf16.mxu0 %v493
  %1289 = vmatmul.mubr.bf16.gmra.mrb[0].mxu0 %v492
  %v1290 = vpop.f32.mrb[0].mxu0
  %v1291 = vadd.f32 %v1194, %v1290
  %v1292 = vpop.f32.mrb[0].mxu0
  %v1293 = vpop.f32.mrb[0].mxu0
  %v1294 = vadd.f32 %v1197, %v1293
  %v1295 = vpop.f32.mrb[0].mxu0
  %1296 = vmatprep.mubr.bf16.mxu0 %v502
  %1297 = vmatmul.mubr.bf16.gmra.mrb[0].mxu0 %v501
  %v1298 = vpop.f32.mrb[0].mxu0
  %v1299 = vadd.f32 %v1202, %v1298
  %v1300 = vpop.f32.mrb[0].mxu0
  %v1301 = vpop.f32.mrb[0].mxu0
  %v1302 = vadd.f32 %v1205, %v1301
  %v1303 = vpop.f32.mrb[0].mxu0
  %1304 = vmatprep.mubr.bf16.mxu0 %v511
  %1305 = vmatmul.mubr.bf16.gmra.mrb[0].mxu0 %v510
  %v1306 = vpop.f32.mrb[0].mxu0
  %v1307 = vadd.f32 %v1210, %v1306
  %v1308 = vpop.f32.mrb[0].mxu0
  %v1309 = vpop.f32.mrb[0].mxu0
  %v1310 = vadd.f32 %v1213, %v1309
  %v1311 = vpop.f32.mrb[0].mxu0
  %1312 = vmatprep.mubr.bf16.mxu0 %v520
  %1313 = vmatmul.mubr.bf16.gmra.mrb[0].mxu0 %v519
  %v1314 = vpop.f32.mrb[0].mxu0
  %v1315 = vadd.f32 %v1218, %v1314
  %v1316 = vpop.f32.mrb[0].mxu0
  %v1317 = vpop.f32.mrb[0].mxu0
  %v1318 = vadd.f32 %v1221, %v1317
  %v1319 = vpop.f32.mrb[0].mxu0
  %1320 = vmatprep.mubr.bf16.mxu0 %v529
  %1321 = vmatmul.mubr.bf16.gmra.mrb[0].mxu0 %v528
  %v1322 = vpop.f32.mrb[0].mxu0
  %v1323 = vadd.f32 %v1226, %v1322
  %v1324 = vpop.f32.mrb[0].mxu0
  %v1325 = vpop.f32.mrb[0].mxu0
  %v1326 = vadd.f32 %v1229, %v1325
  %v1327 = vpop.f32.mrb[0].mxu0
  %1328 = vmatprep.mubr.bf16.mxu0 %v538
  %1329 = vmatmul.mubr.bf16.gmra.mrb[0].mxu0 %v537
  %v1330 = vpop.f32.mrb[0].mxu0
  %v1331 = vadd.f32 %v1234, %v1330
  %v1332 = vpop.f32.mrb[0].mxu0
  %v1333 = vpop.f32.mrb[0].mxu0
  %v1334 = vadd.f32 %v1237, %v1333
  %v1335 = vpop.f32.mrb[0].mxu0
  %1336 = vdwg.mxu0
  %1337 = vmatprep.subr.bf16.mxu0 0
  %1338 = vmatpush1.bf16.msra.mxu0 %v950
  %1339 = vmatprep.subr.bf16.mxu0 0
  %1340 = vmatpush1.bf16.msra.mxu0 %v951
  %1341 = vmatprep.subr.bf16.mxu0 0
  %1342 = vmatpush1.bf16.msra.mxu0 %v952
  %1343 = vmatprep.subr.bf16.mxu0 0
  %1344 = vmatpush1.bf16.msra.mxu0 %v953
  %1345 = vmatprep.subr.bf16.mxu0 0
  %1346 = vmatpush1.bf16.msra.mxu0 %v954
  %1347 = vmatprep.subr.bf16.mxu0 0
  %1348 = vmatpush1.bf16.msra.mxu0 %v955
  %1349 = vmatprep.subr.bf16.mxu0 0
  %1350 = vmatpush1.bf16.msra.mxu0 %v956
  %1351 = vmatprep.subr.bf16.mxu0 0
  %1352 = vmatpush1.bf16.msra.mxu0 %v957
  %1353 = vmatprep.subr.bf16.mxu0 0
  %1354 = vmatpush1.bf16.msra.mxu0 %v958
  %1355 = vmatprep.subr.bf16.mxu0 0
  %1356 = vmatpush1.bf16.msra.mxu0 %v959
  %1357 = vmatprep.subr.bf16.mxu0 0
  %1358 = vmatpush1.bf16.msra.mxu0 %v960
  %1359 = vmatprep.subr.bf16.mxu0 0
  %1360 = vmatpush1.bf16.msra.mxu0 %v961
  %1361 = vmatprep.subr.bf16.mxu0 0
  %1362 = vmatpush1.bf16.msra.mxu0 %v962
  %1363 = vmatprep.subr.bf16.mxu0 0
  %1364 = vmatpush1.bf16.msra.mxu0 %v963
  %1365 = vmatprep.subr.bf16.mxu0 0
  %1366 = vmatpush1.bf16.msra.mxu0 %v964
  %1367 = vmatprep.subr.bf16.mxu0 0
  %1368 = vmatpush1.bf16.msra.mxu0 %v965
  %1369 = vmatprep.mubr.bf16.mxu0 %v477
  %1370 = vmatmul.mubr.bf16.gmra.mrb[0].mxu0 %v476
  %v1371 = vpop.f32.mrb[0].mxu0
  %v1372 = vadd.f32 %v1275, %v1371
  %v1373 = vpop.f32.mrb[0].mxu0
  %v1374 = vpop.f32.mrb[0].mxu0
  %v1375 = vadd.f32 %v1278, %v1374
  %v1376 = vpop.f32.mrb[0].mxu0
  %1377 = vmatprep.mubr.bf16.mxu0 %v486
  %1378 = vmatmul.mubr.bf16.gmra.mrb[0].mxu0 %v485
  %v1379 = vpop.f32.mrb[0].mxu0
  %v1380 = vadd.f32 %v1283, %v1379
  %v1381 = vpop.f32.mrb[0].mxu0
  %v1382 = vpop.f32.mrb[0].mxu0
  %v1383 = vadd.f32 %v1286, %v1382
  %v1384 = vpop.f32.mrb[0].mxu0
  %1385 = vmatprep.mubr.bf16.mxu0 %v495
  %1386 = vmatmul.mubr.bf16.gmra.mrb[0].mxu0 %v494
  %v1387 = vpop.f32.mrb[0].mxu0
  %v1388 = vadd.f32 %v1291, %v1387
  %v1389 = vpop.f32.mrb[0].mxu0
  %v1390 = vpop.f32.mrb[0].mxu0
  %v1391 = vadd.f32 %v1294, %v1390
  %v1392 = vpop.f32.mrb[0].mxu0
  %1393 = vmatprep.mubr.bf16.mxu0 %v504
  %1394 = vmatmul.mubr.bf16.gmra.mrb[0].mxu0 %v503
  %v1395 = vpop.f32.mrb[0].mxu0
  %v1396 = vadd.f32 %v1299, %v1395
  %v1397 = vpop.f32.mrb[0].mxu0
  %v1398 = vpop.f32.mrb[0].mxu0
  %v1399 = vadd.f32 %v1302, %v1398
  %v1400 = vpop.f32.mrb[0].mxu0
  %1401 = vmatprep.mubr.bf16.mxu0 %v513
  %1402 = vmatmul.mubr.bf16.gmra.mrb[0].mxu0 %v512
  %v1403 = vpop.f32.mrb[0].mxu0
  %v1404 = vadd.f32 %v1307, %v1403
  %v1405 = vpop.f32.mrb[0].mxu0
  %v1406 = vpop.f32.mrb[0].mxu0
  %v1407 = vadd.f32 %v1310, %v1406
  %v1408 = vpop.f32.mrb[0].mxu0
  %1409 = vmatprep.mubr.bf16.mxu0 %v522
  %1410 = vmatmul.mubr.bf16.gmra.mrb[0].mxu0 %v521
  %v1411 = vpop.f32.mrb[0].mxu0
  %v1412 = vadd.f32 %v1315, %v1411
  %v1413 = vpop.f32.mrb[0].mxu0
  %v1414 = vpop.f32.mrb[0].mxu0
  %v1415 = vadd.f32 %v1318, %v1414
  %v1416 = vpop.f32.mrb[0].mxu0
  %1417 = vmatprep.mubr.bf16.mxu0 %v531
  %1418 = vmatmul.mubr.bf16.gmra.mrb[0].mxu0 %v530
  %v1419 = vpop.f32.mrb[0].mxu0
  %v1420 = vadd.f32 %v1323, %v1419
  %v1421 = vpop.f32.mrb[0].mxu0
  %v1422 = vpop.f32.mrb[0].mxu0
  %v1423 = vadd.f32 %v1326, %v1422
  %v1424 = vpop.f32.mrb[0].mxu0
  %1425 = vmatprep.mubr.bf16.mxu0 %v540
  %1426 = vmatmul.mubr.bf16.gmra.mrb[0].mxu0 %v539
  %v1427 = vpop.f32.mrb[0].mxu0
  %v1428 = vadd.f32 %v1331, %v1427
  %v1429 = vpop.f32.mrb[0].mxu0
  %v1430 = vpop.f32.mrb[0].mxu0
  %v1431 = vadd.f32 %v1334, %v1430
  %v1432 = vpop.f32.mrb[0].mxu0
  %1433 = vdwg.mxu0
  %1434 = vmatprep.subr.bf16.mxu0 0
  %1435 = vmatpush1.bf16.msra.mxu0 %v966
  %1436 = vmatprep.subr.bf16.mxu0 0
  %1437 = vmatpush1.bf16.msra.mxu0 %v967
  %1438 = vmatprep.subr.bf16.mxu0 0
  %1439 = vmatpush1.bf16.msra.mxu0 %v968
  %1440 = vmatprep.subr.bf16.mxu0 0
  %1441 = vmatpush1.bf16.msra.mxu0 %v969
  %1442 = vmatprep.subr.bf16.mxu0 0
  %1443 = vmatpush1.bf16.msra.mxu0 %v970
  %1444 = vmatprep.subr.bf16.mxu0 0
  %1445 = vmatpush1.bf16.msra.mxu0 %v971
  %1446 = vmatprep.subr.bf16.mxu0 0
  %1447 = vmatpush1.bf16.msra.mxu0 %v972
  %1448 = vmatprep.subr.bf16.mxu0 0
  %1449 = vmatpush1.bf16.msra.mxu0 %v973
  %1450 = vmatprep.subr.bf16.mxu0 0
  %1451 = vmatpush1.bf16.msra.mxu0 0
  %1452 = vmatprep.subr.bf16.mxu0 0
  %1453 = vmatpush1.bf16.msra.mxu0 0
  %1454 = vmatprep.subr.bf16.mxu0 0
  %1455 = vmatpush1.bf16.msra.mxu0 0
  %1456 = vmatprep.subr.bf16.mxu0 0
  %1457 = vmatpush1.bf16.msra.mxu0 0
  %1458 = vmatprep.subr.bf16.mxu0 0
  %1459 = vmatpush1.bf16.msra.mxu0 0
  %1460 = vmatprep.subr.bf16.mxu0 0
  %1461 = vmatpush1.bf16.msra.mxu0 0
  %1462 = vmatprep.subr.bf16.mxu0 0
  %1463 = vmatpush1.bf16.msra.mxu0 0
  %1464 = vmatprep.subr.bf16.mxu0 0
  %1465 = vmatpush1.bf16.msra.mxu0 0
  %1466 = vmatprep.mubr.bf16.mxu0 0
  %1467 = vmatmul.mubr.bf16.gmra.mrb[0].mxu0 %v478
  %v1468 = vpop.f32.mrb[0].mxu0
  %v1469 = vadd.f32 %v1372, %v1468
  %v1470 = vpop.f32.mrb[0].mxu0
  %v1471 = vpop.f32.mrb[0].mxu0
  %v1472 = vadd.f32 %v1375, %v1471
  %v1473 = vpop.f32.mrb[0].mxu0
  %1474 = vmatprep.mubr.bf16.mxu0 0
  %1475 = vmatmul.mubr.bf16.gmra.mrb[0].mxu0 %v487
  %v1476 = vpop.f32.mrb[0].mxu0
  %v1477 = vadd.f32 %v1380, %v1476
  %v1478 = vpop.f32.mrb[0].mxu0
  %v1479 = vpop.f32.mrb[0].mxu0
  %v1480 = vadd.f32 %v1383, %v1479
  %v1481 = vpop.f32.mrb[0].mxu0
  %1482 = vmatprep.mubr.bf16.mxu0 0
  %1483 = vmatmul.mubr.bf16.gmra.mrb[0].mxu0 %v496
  %v1484 = vpop.f32.mrb[0].mxu0
  %v1485 = vadd.f32 %v1388, %v1484
  %v1486 = vpop.f32.mrb[0].mxu0
  %v1487 = vpop.f32.mrb[0].mxu0
  %v1488 = vadd.f32 %v1391, %v1487
  %v1489 = vpop.f32.mrb[0].mxu0
  %1490 = vmatprep.mubr.bf16.mxu0 0
  %1491 = vmatmul.mubr.bf16.gmra.mrb[0].mxu0 %v505
  %v1492 = vpop.f32.mrb[0].mxu0
  %v1493 = vadd.f32 %v1396, %v1492
  %v1494 = vpop.f32.mrb[0].mxu0
  %v1495 = vpop.f32.mrb[0].mxu0
  %v1496 = vadd.f32 %v1399, %v1495
  %v1497 = vpop.f32.mrb[0].mxu0
  %1498 = vmatprep.mubr.bf16.mxu0 0
  %1499 = vmatmul.mubr.bf16.gmra.mrb[0].mxu0 %v514
  %v1500 = vpop.f32.mrb[0].mxu0
  %v1501 = vadd.f32 %v1404, %v1500
  %v1502 = vpop.f32.mrb[0].mxu0
  %v1503 = vpop.f32.mrb[0].mxu0
  %v1504 = vadd.f32 %v1407, %v1503
  %v1505 = vpop.f32.mrb[0].mxu0
  %1506 = vmatprep.mubr.bf16.mxu0 0
  %1507 = vmatmul.mubr.bf16.gmra.mrb[0].mxu0 %v523
  %v1508 = vpop.f32.mrb[0].mxu0
  %v1509 = vadd.f32 %v1412, %v1508
  %v1510 = vpop.f32.mrb[0].mxu0
  %v1511 = vpop.f32.mrb[0].mxu0
  %v1512 = vadd.f32 %v1415, %v1511
  %v1513 = vpop.f32.mrb[0].mxu0
  %1514 = vmatprep.mubr.bf16.mxu0 0
  %1515 = vmatmul.mubr.bf16.gmra.mrb[0].mxu0 %v532
  %v1516 = vpop.f32.mrb[0].mxu0
  %v1517 = vadd.f32 %v1420, %v1516
  %v1518 = vpop.f32.mrb[0].mxu0
  %v1519 = vpop.f32.mrb[0].mxu0
  %v1520 = vadd.f32 %v1423, %v1519
  %v1521 = vpop.f32.mrb[0].mxu0
  %1522 = vmatprep.mubr.bf16.mxu0 0
  %1523 = vmatmul.mubr.bf16.gmra.mrb[0].mxu0 %v541
  %v1524 = vpop.f32.mrb[0].mxu0
  %v1525 = vadd.f32 %v1428, %v1524
  %v1526 = vpop.f32.mrb[0].mxu0
  %v1527 = vpop.f32.mrb[0].mxu0
  %v1528 = vadd.f32 %v1431, %v1527
  %v1529 = vpop.f32.mrb[0].mxu0
  %1530 = vdwg.mxu0
  %v1531 = vpack.c.bf16 %v1472, %v1469
  %v1532 = vpack.c.bf16 %v1480, %v1477
  %v1533 = vpack.c.bf16 %v1488, %v1485
  %v1534 = vpack.c.bf16 %v1496, %v1493
  %v1535 = vpack.c.bf16 %v1504, %v1501
  %v1536 = vpack.c.bf16 %v1512, %v1509
  %v1537 = vpack.c.bf16 %v1520, %v1517
  %v1538 = vpack.c.bf16 %v1528, %v1525
  %v1547 = vunpack.c.l.b16 %v1531
  %v1548 = vunpack.c.h.b16 %v1531
  %v1549 = vunpack.c.l.b16 %v1532
  %v1550 = vunpack.c.h.b16 %v1532
  %v1551 = vunpack.c.l.b16 %v1533
  %v1552 = vunpack.c.h.b16 %v1533
  %v1553 = vunpack.c.l.b16 %v1534
  %v1554 = vunpack.c.h.b16 %v1534
  %v1555 = vunpack.c.l.b16 %v1535
  %v1556 = vunpack.c.h.b16 %v1535
  %v1557 = vunpack.c.l.b16 %v1536
  %v1558 = vunpack.c.h.b16 %v1536
  %v1559 = vunpack.c.l.b16 %v1537
  %v1560 = vunpack.c.h.b16 %v1537
  %v1561 = vunpack.c.l.b16 %v1538
  %v1562 = vunpack.c.h.b16 %v1538
  %v1563 = vpack.c.b16 %v1547, %v1547
  %v1564 = vpack.c.b16 %v1548, %v1548
  %v1565 = vpack.c.b16 %v1549, %v1549
  %v1566 = vpack.c.b16 %v1550, %v1550
  %v1567 = vpack.c.b16 %v1551, %v1551
  %v1568 = vpack.c.b16 %v1552, %v1552
  %v1569 = vpack.c.b16 %v1553, %v1553
  %v1570 = vpack.c.b16 %v1554, %v1554
  %v1571 = vpack.c.b16 %v1555, %v1555
  %v1572 = vpack.c.b16 %v1556, %v1556
  %v1573 = vpack.c.b16 %v1557, %v1557
  %v1574 = vpack.c.b16 %v1558, %v1558
  %v1575 = vpack.c.b16 %v1559, %v1559
  %v1576 = vpack.c.b16 %v1560, %v1560
  %v1577 = vpack.c.b16 %v1561, %v1561
  %v1578 = vpack.c.b16 %v1562, %v1562
  %1595 = vst [vmem:[%s3] sm:$0xf] %v1563
  %1596 = vst [vmem:[%s3 + $0x4] sm:$0xf] %v1564
  %1597 = vst [vmem:[%s3 + $0x8] sm:$0xf] %v1565
  %1598 = vst [vmem:[%s3 + $0xc] sm:$0xf] %v1566
  %1599 = vst [vmem:[%s3 + $0x10] sm:$0xf] %v1567
  %1600 = vst [vmem:[%s3 + $0x14] sm:$0xf] %v1568
  %1601 = vst [vmem:[%s3 + $0x18] sm:$0xf] %v1569
  %1602 = vst [vmem:[%s3 + $0x1c] sm:$0xf] %v1570
  %1603 = vst [vmem:[%s3 + $0x20] sm:$0xf] %v1571
  %1604 = vst [vmem:[%s3 + $0x24] sm:$0xf] %v1572
  %1605 = vst [vmem:[%s3 + $0x28] sm:$0xf] %v1573
  %1606 = vst [vmem:[%s3 + $0x2c] sm:$0xf] %v1574
  %1607 = vst [vmem:[%s3 + $0x30] sm:$0xf] %v1575
  %1608 = vst [vmem:[%s3 + $0x34] sm:$0xf] %v1576
  %1609 = vst [vmem:[%s3 + $0x38] sm:$0xf] %v1577
  %1610 = vst [vmem:[%s3 + $0x3c] sm:$0xf] %v1578
  // Predicated region
  $region14: #{generator_forward.37} parent=0 // pred_check
    _
  $region15: #{generator_forward.37} parent=0 // pred_check_branch
    %1612 = sbr.rel (0) target = $region17
  $region16: #{generator_forward.37} parent=0 // pred_region
    _
  $region17: #{generator_forward.37} parent=0 // pred_fallthru
    _
  // Predicated region
  $region18: #{generator_forward.37} parent=0 // pred_check
    _
  $region19: #{generator_forward.37} parent=0 // pred_check_branch
    %1614 = sbr.rel (0) target = $region21
  $region20: #{generator_forward.37} parent=0 // pred_region
    _
  $region21: #{generator_forward.37} parent=0 // pred_fallthru
    _

// kernel: generator_forward.42
$region0: #{generator_forward.42}
  #allocation0 [shape = 'u32[]', space=smem, size = 0x4, offset = 0x4, fixed_abs, tag = 'smem constant byte address 0x4 - core index']
  #allocation1 [shape = 'u32[144,128]{1,0:T(1,128)}', space=vmem, size = 0x12000, scoped, tag = 'internal scratch']
  %s0 = inlined_call_operand.vmem [shape: bf16[2,16,128], index: 0, kind: input, shape index: {}]
  %s1 = inlined_call_operand.vmem [shape: f32[2,1,128], index: 1, kind: input, shape index: {}]
  %s2 = inlined_call_operand.vmem [shape: f32[2,1,128], index: 2, kind: input, shape index: {}]
  %s3 = inlined_call_operand.vmem [shape: bf16[2,16,128], index: 3, kind: input, shape index: {}]
  %s4 = inlined_call_operand.vmem [shape: bf16[2,16,128], index: 4, kind: output, shape index: {}]
  %s5 = sld [smem:[#allocation0]]
  $region49: #{generator_forward.42} parent=0
    _
  %s7 = ssub.s32 1, %s5
  %s8 = scalar_select 0, %s7, %s5
  loop: start=0, step=1, limit=4
  $region2: #{generator_forward.42} parent=0 // loop_pre_header
    _
  $region3: #{generator_forward.42} parent=0 // loop_header
    %s10 = sphi 0, %s14
    %p11 = scmp.ge.s32.totalorder %s10, 4
    %s17 = sphi 0, %s29
    %s18 = sphi 0, %s25
    %s19 = sphi 0, %s17
    %s20 = sphi 0, %s18
    %s21 = sphi 0, %s19
    %s22 = sphi 0, %s20
    %s34 = sphi 0, %s36
    %s37 = sphi 0, %s34
    %s38 = sphi 0, %s37
    %s54 = sphi 0, %s38
    %s60 = sphi 0, %s62
    %s63 = sphi 0, %s60
    %s64 = sphi 0, %s63
    %s80 = sphi 0, %s64
    %s86 = sphi 0, %s88
    %s89 = sphi 0, %s86
    %s90 = sphi 0, %s89
    %s106 = sphi 0, %s90
    %s114 = sphi 0, %s116
    %s117 = sphi 0, %s114
    %s118 = sphi 0, %s117
    %s134 = sphi 0, %s118
    %s142 = sphi 0, %s144
    %s145 = sphi 0, %s142
    %s146 = sphi 0, %s145
    %s162 = sphi 0, %s146
  $region4: #{generator_forward.42} parent=0 // loop_header_branch
    %13 = sbr.rel (%p11) target = $region8
  $region5: #{generator_forward.42} parent=0 // loop_body
    %s15 = ssub.s32 %s10, 1
    %s16 = ssub.s32 %s10, 2
    %s23 = sadd.s32 1, %s18
    %p24 = scmp.ge.s32.totalorder %s23, 1
    %s25 = scalar_select %p24, 0, %s23
    %s26 = sadd.s32 1, %s17
    %s27 = scalar_select %p24, %s26, %s17
    %p28 = scmp.ge.s32.totalorder %s27, 2
    %s29 = scalar_select %p28, 0, %s27
    %s30 = ssub.s32 %s17, %s29
    %s31 = ssub.s32 %s18, %s25
    %s32 = sor.u32 %s30, %s31
    %p33 = scmp.eq.s32.totalorder %s32, 0
    %s35 = sadd.s32 %s34, 1
    %s36 = scalar_select %p33, %s34, %s35
    %p39 = pneg %p33
    %p40 = scmp.eq.s32.totalorder %s10, 1
    %p41 = por %p39, %p40
    %p42 = scmp.ne.s32.totalorder %s34, %s37
    %p43 = scmp.eq.s32.totalorder %s10, 0
    %p44 = por %p42, %p43
    %p45 = scmp.ne.s32.totalorder %s34, %s37
    %p46 = scmp.eq.s32.totalorder %s15, 1
    %p47 = por %p45, %p46
    %p48 = scmp.ne.s32.totalorder %s37, %s38
    %p49 = scmp.eq.s32.totalorder %s15, 0
    %p50 = por %p48, %p49
    %p51 = scmp.ne.s32.totalorder %s37, %s38
    %p52 = scmp.eq.s32.totalorder %s16, 1
    %p53 = por %p51, %p52
    %p55 = scmp.ne.s32.totalorder %s38, %s54
    %p56 = scmp.eq.s32.totalorder %s16, 0
    %p57 = por %p55, %p56
    %s58 = ssub.s32 %s17, %s29
    %p59 = scmp.eq.s32.totalorder %s58, 0
    %s61 = sadd.s32 %s60, 1
    %s62 = scalar_select %p59, %s60, %s61
    %p65 = pneg %p59
    %p66 = scmp.eq.s32.totalorder %s10, 1
    %p67 = por %p65, %p66
    %p68 = scmp.ne.s32.totalorder %s60, %s63
    %p69 = scmp.eq.s32.totalorder %s10, 0
    %p70 = por %p68, %p69
    %p71 = scmp.ne.s32.totalorder %s60, %s63
    %p72 = scmp.eq.s32.totalorder %s15, 1
    %p73 = por %p71, %p72
    %p74 = scmp.ne.s32.totalorder %s63, %s64
    %p75 = scmp.eq.s32.totalorder %s15, 0
    %p76 = por %p74, %p75
    %p77 = scmp.ne.s32.totalorder %s63, %s64
    %p78 = scmp.eq.s32.totalorder %s16, 1
    %p79 = por %p77, %p78
    %p81 = scmp.ne.s32.totalorder %s64, %s80
    %p82 = scmp.eq.s32.totalorder %s16, 0
    %p83 = por %p81, %p82
    %s84 = ssub.s32 %s17, %s29
    %p85 = scmp.eq.s32.totalorder %s84, 0
    %s87 = sadd.s32 %s86, 1
    %s88 = scalar_select %p85, %s86, %s87
    %p91 = pneg %p85
    %p92 = scmp.eq.s32.totalorder %s10, 1
    %p93 = por %p91, %p92
    %p94 = scmp.ne.s32.totalorder %s86, %s89
    %p95 = scmp.eq.s32.totalorder %s10, 0
    %p96 = por %p94, %p95
    %p97 = scmp.ne.s32.totalorder %s86, %s89
    %p98 = scmp.eq.s32.totalorder %s15, 1
    %p99 = por %p97, %p98
    %p100 = scmp.ne.s32.totalorder %s89, %s90
    %p101 = scmp.eq.s32.totalorder %s15, 0
    %p102 = por %p100, %p101
    %p103 = scmp.ne.s32.totalorder %s89, %s90
    %p104 = scmp.eq.s32.totalorder %s16, 1
    %p105 = por %p103, %p104
    %p107 = scmp.ne.s32.totalorder %s90, %s106
    %p108 = scmp.eq.s32.totalorder %s16, 0
    %p109 = por %p107, %p108
    %s110 = ssub.s32 %s17, %s29
    %s111 = ssub.s32 %s18, %s25
    %s112 = sor.u32 %s110, %s111
    %p113 = scmp.eq.s32.totalorder %s112, 0
    %s115 = sadd.s32 %s114, 1
    %s116 = scalar_select %p113, %s114, %s115
    %p119 = pneg %p113
    %p120 = scmp.eq.s32.totalorder %s10, 1
    %p121 = por %p119, %p120
    %p122 = scmp.ne.s32.totalorder %s114, %s117
    %p123 = scmp.eq.s32.totalorder %s10, 0
    %p124 = por %p122, %p123
    %p125 = scmp.ne.s32.totalorder %s114, %s117
    %p126 = scmp.eq.s32.totalorder %s15, 1
    %p127 = por %p125, %p126
    %p128 = scmp.ne.s32.totalorder %s117, %s118
    %p129 = scmp.eq.s32.totalorder %s15, 0
    %p130 = por %p128, %p129
    %p131 = scmp.ne.s32.totalorder %s117, %s118
    %p132 = scmp.eq.s32.totalorder %s16, 1
    %p133 = por %p131, %p132
    %p135 = scmp.ne.s32.totalorder %s118, %s134
    %p136 = scmp.eq.s32.totalorder %s16, 0
    %p137 = por %p135, %p136
    %s138 = ssub.s32 %s17, %s29
    %s139 = ssub.s32 %s18, %s25
    %s140 = sor.u32 %s138, %s139
    %p141 = scmp.eq.s32.totalorder %s140, 0
    %s143 = sadd.s32 %s142, 1
    %s144 = scalar_select %p141, %s142, %s143
    %p147 = pneg %p141
    %p148 = scmp.eq.s32.totalorder %s10, 1
    %p149 = por %p147, %p148
    %p150 = scmp.ne.s32.totalorder %s142, %s145
    %p151 = scmp.eq.s32.totalorder %s10, 0
    %p152 = por %p150, %p151
    %p153 = scmp.ne.s32.totalorder %s142, %s145
    %p154 = scmp.eq.s32.totalorder %s15, 1
    %p155 = por %p153, %p154
    %p156 = scmp.ne.s32.totalorder %s145, %s146
    %p157 = scmp.eq.s32.totalorder %s15, 0
    %p158 = por %p156, %p157
    %p159 = scmp.ne.s32.totalorder %s145, %s146
    %p160 = scmp.eq.s32.totalorder %s16, 1
    %p161 = por %p159, %p160
    %p163 = scmp.ne.s32.totalorder %s146, %s162
    %p164 = scmp.eq.s32.totalorder %s16, 0
    %p165 = por %p163, %p164
    %p166 = scmp.le.s32.totalorder 1, %s10
    %p167 = scmp.lt.s32.totalorder %s10, 3
    %p168 = pnand %p166, %p167
    %p169 = pneg %p168
    // Predicated region
    $region9: #{generator_forward.42} parent=5 // pred_check
      _
    $region10: #{generator_forward.42} parent=5 // pred_check_branch
      %171 = sbr.rel (%p168) target = $region12
    $region11: #{generator_forward.42} parent=5 // pred_region
      %s172 = ssub.s32 %s10, 1
    $region12: #{generator_forward.42} parent=5 // pred_fallthru
      _
    %p173 = scmp.lt.s32.totalorder %s10, 2
    // Predicated region
    $region13: #{generator_forward.42} parent=5 // pred_check
      %p174 = pneg %p173
    $region14: #{generator_forward.42} parent=5 // pred_check_branch
      %176 = sbr.rel (%p174) target = $region16
    $region15: #{generator_forward.42} parent=5 // pred_region
      // Predicated region
      $region17: #{generator_forward.42} parent=15 // pred_check
        %p177 = pneg %p44
      $region18: #{generator_forward.42} parent=15 // pred_check_branch
        %179 = sbr.rel (%p177) target = $region20
      $region19: #{generator_forward.42} parent=15 // pred_region
        %s180 = smul.u32 2, %s18
        %p181 = scmp.lt.s32.totalorder %s17, 1
        %s182 = scalar_select %p181, %s17, 1
        %p183 = scmp.lt.s32.totalorder %s180, 1
        %s184 = scalar_select %p183, %s180, 1
        %s185 = smul.addr %s182, 2
        %s186 = sadd.s32 %s184, %s185
        %s187 = smul.addr %s186, 4
        %s188 = scalar_lea.vmem %s0, %s187
        %s189 = smul.u32 2, %s18
      $region20: #{generator_forward.42} parent=15 // pred_fallthru
        _
      // Predicated region
      $region21: #{generator_forward.42} parent=15 // pred_check
        %p190 = pneg %p70
      $region22: #{generator_forward.42} parent=15 // pred_check_branch
        %192 = sbr.rel (%p190) target = $region24
      $region23: #{generator_forward.42} parent=15 // pred_region
        %p193 = scmp.lt.s32.totalorder %s17, 1
        %s194 = scalar_select %p193, %s17, 1
        %s195 = scalar_lea.vmem %s1, %s194
      $region24: #{generator_forward.42} parent=15 // pred_fallthru
        _
      // Predicated region
      $region25: #{generator_forward.42} parent=15 // pred_check
        %p196 = pneg %p96
      $region26: #{generator_forward.42} parent=15 // pred_check_branch
        %198 = sbr.rel (%p196) target = $region28
      $region27: #{generator_forward.42} parent=15 // pred_region
        %p199 = scmp.lt.s32.totalorder %s17, 1
        %s200 = scalar_select %p199, %s17, 1
        %s201 = scalar_lea.vmem %s2, %s200
      $region28: #{generator_forward.42} parent=15 // pred_fallthru
        _
      // Predicated region
      $region29: #{generator_forward.42} parent=15 // pred_check
        %p202 = pneg %p124
      $region30: #{generator_forward.42} parent=15 // pred_check_branch
        %204 = sbr.rel (%p202) target = $region32
      $region31: #{generator_forward.42} parent=15 // pred_region
        %s205 = smul.u32 2, %s18
        %p206 = scmp.lt.s32.totalorder %s17, 1
        %s207 = scalar_select %p206, %s17, 1
        %p208 = scmp.lt.s32.totalorder %s205, 1
        %s209 = scalar_select %p208, %s205, 1
        %s210 = smul.addr %s207, 2
        %s211 = sadd.s32 %s209, %s210
        %s212 = smul.addr %s211, 4
        %s213 = scalar_lea.vmem %s3, %s212
        %s214 = smul.u32 2, %s18
      $region32: #{generator_forward.42} parent=15 // pred_fallthru
        _
    $region16: #{generator_forward.42} parent=5 // pred_fallthru
      _
    %p215 = scmp.le.s32.totalorder 1, %s10
    %p216 = scmp.lt.s32.totalorder %s10, 3
    %p217 = pnand %p215, %p216
    %p218 = pneg %p217
    // Predicated region
    $region33: #{generator_forward.42} parent=5 // pred_check
      _
    $region34: #{generator_forward.42} parent=5 // pred_check_branch
      %220 = sbr.rel (%p217) target = $region36
    $region35: #{generator_forward.42} parent=5 // pred_region
      %s221 = ssub.s32 %s10, 1
      %s222 = smul.u32 2, %s20
      %p223 = scmp.lt.s32.totalorder %s19, 1
      %s224 = scalar_select %p223, %s19, 1
      %p225 = scmp.lt.s32.totalorder %s222, 1
      %s226 = scalar_select %p225, %s222, 1
      %s227 = smul.addr %s224, 2
      %s228 = sadd.s32 %s226, %s227
      %s229 = smul.addr %s228, 4
      %s230 = scalar_lea.vmem %s0, %s229
      %p231 = pneg %p50
      %p232 = pneg %p47
      %p233 = scmp.lt.s32.totalorder %s19, 1
      %s234 = scalar_select %p233, %s19, 1
      %s235 = scalar_lea.vmem %s1, %s234
      %p236 = pneg %p76
      %p237 = pneg %p73
      %p238 = scmp.lt.s32.totalorder %s19, 1
      %s239 = scalar_select %p238, %s19, 1
      %s240 = scalar_lea.vmem %s2, %s239
      %p241 = pneg %p102
      %p242 = pneg %p99
      %s243 = smul.u32 2, %s20
      %p244 = scmp.lt.s32.totalorder %s19, 1
      %s245 = scalar_select %p244, %s19, 1
      %p246 = scmp.lt.s32.totalorder %s243, 1
      %s247 = scalar_select %p246, %s243, 1
      %s248 = smul.addr %s245, 2
      %s249 = sadd.s32 %s247, %s248
      %s250 = smul.addr %s249, 4
      %s251 = scalar_lea.vmem %s3, %s250
      %p252 = pneg %p130
      %p253 = pneg %p127
      %p254 = pneg %p158
      %p255 = pneg %p155
      %s256 = smul.u32 2, %s20
      %p257 = scmp.lt.s32.totalorder %s19, 1
      %s258 = scalar_select %p257, %s19, 1
      %p259 = scmp.lt.s32.totalorder %s256, 1
      %s260 = scalar_select %p259, %s256, 1
      %s261 = smul.addr %s258, 2
      %s262 = sadd.s32 %s260, %s261
      %s263 = smul.addr %s262, 4
      %s264 = scalar_lea.vmem %s4, %s263
      %s265 = smul.u32 2, %s20
      %p266 = scmp.lt.s32.totalorder %s19, 1
      %s267 = scalar_select %p266, %s19, 1
      %p268 = scmp.lt.s32.totalorder %s265, 1
      %s269 = scalar_select %p268, %s265, 1
      %s270 = smul.addr %s267, 2
      %s271 = sadd.s32 %s269, %s270
      %s272 = smul.addr %s271, 4
      %s273 = scalar_lea.vmem %s0, %s272
      %s274 = smul.u32 2, %s20
      %p275 = scmp.lt.s32.totalorder %s19, 1
      %s276 = scalar_select %p275, %s19, 1
      %s277 = scalar_lea.vmem %s1, %s276
      %p278 = scmp.lt.s32.totalorder %s19, 1
      %s279 = scalar_select %p278, %s19, 1
      %s280 = scalar_lea.vmem %s2, %s279
      %s281 = smul.u32 2, %s20
      %p282 = scmp.lt.s32.totalorder %s19, 1
      %s283 = scalar_select %p282, %s19, 1
      %p284 = scmp.lt.s32.totalorder %s281, 1
      %s285 = scalar_select %p284, %s281, 1
      %s286 = smul.addr %s283, 2
      %s287 = sadd.s32 %s285, %s286
      %s288 = smul.addr %s287, 4
      %s289 = scalar_lea.vmem %s3, %s288
      %s290 = smul.u32 2, %s20
      %s291 = smul.u32 2, %s20
      %p292 = scmp.lt.s32.totalorder %s19, 1
      %s293 = scalar_select %p292, %s19, 1
      %p294 = scmp.lt.s32.totalorder %s291, 1
      %s295 = scalar_select %p294, %s291, 1
      %s296 = smul.addr %s293, 2
      %s297 = sadd.s32 %s295, %s296
      %s298 = smul.addr %s297, 4
      %s299 = scalar_lea.vmem %s4, %s298
      %s300 = smul.u32 2, %s20
      %v301 = vld [vmem:[%s273] sm:$0xf]
      %v302 = vld [vmem:[%s273 + $0x4] sm:$0xf]
      %v303 = vunpack.c.l.bf16 %v301
      %v304 = vunpack.c.l.bf16 %v302
      %v305 = vld [vmem:[%s277] sm:$0x1]
      %v307 = vlaneseq
      %v308 = vshrl.u32 %v307, 7
      %v309 = vsub.s32 0, %v308
      %v310 = vrot.slane %v305, %v309
      %v312 = vmul.f32 %v303, %v310
      %v313 = vmul.f32 %v304, %v310
      %v314 = vld [vmem:[%s280] sm:$0x1]
      %v316 = vlaneseq
      %v317 = vshrl.u32 %v316, 7
      %v318 = vsub.s32 0, %v317
      %v319 = vrot.slane %v314, %v318
      %v321 = vadd.f32 %v312, %v319
      %v322 = vadd.f32 %v313, %v319
      %v323 = vld [vmem:[%s289] sm:$0xf]
      %v324 = vld [vmem:[%s289 + $0x4] sm:$0xf]
      %v325 = vunpack.c.l.bf16 %v323
      %v326 = vunpack.c.l.bf16 %v324
      %v327 = vadd.f32 %v321, %v325
      %v328 = vadd.f32 %v322, %v326
      %v329 = vpack.c.bf16 %v328, %v327
      %v331 = vunpack.c.l.b16 %v329
      %v332 = vunpack.c.h.b16 %v329
      %v333 = vpack.c.b16 %v331, %v331
      %v334 = vpack.c.b16 %v332, %v332
      %337 = vst [vmem:[%s299] sm:$0xf] %v333
      %338 = vst [vmem:[%s299 + $0x4] sm:$0xf] %v334
      %s339 = smul.u32 2, %s20
      %p340 = scmp.lt.s32.totalorder %s19, 1
      %s341 = scalar_select %p340, %s19, 1
      %p342 = scmp.lt.s32.totalorder %s339, 1
      %s343 = scalar_select %p342, %s339, 1
      %s344 = smul.addr %s341, 2
      %s345 = sadd.s32 %s343, %s344
      %s346 = smul.addr %s345, 4
      %s347 = scalar_lea.vmem %s4, %s346
      // Predicated region
      $region37: #{generator_forward.42} parent=35 // pred_check
        %p348 = pneg %p155
      $region38: #{generator_forward.42} parent=35 // pred_check_branch
        %350 = sbr.rel (%p348) target = $region40
      $region39: #{generator_forward.42} parent=35 // pred_region
        %s351 = smul.u32 2, %s20
      $region40: #{generator_forward.42} parent=35 // pred_fallthru
        _
    $region36: #{generator_forward.42} parent=5 // pred_fallthru
      _
    %p352 = scmp.le.s32.totalorder 2, %s10
    // Predicated region
    $region41: #{generator_forward.42} parent=5 // pred_check
      %p353 = pneg %p352
    $region42: #{generator_forward.42} parent=5 // pred_check_branch
      %355 = sbr.rel (%p353) target = $region44
    $region43: #{generator_forward.42} parent=5 // pred_region
      %s356 = ssub.s32 %s10, 2
      // Predicated region
      $region45: #{generator_forward.42} parent=43 // pred_check
        %p357 = pneg %p161
      $region46: #{generator_forward.42} parent=43 // pred_check_branch
        %359 = sbr.rel (%p357) target = $region48
      $region47: #{generator_forward.42} parent=43 // pred_region
        %s360 = smul.u32 2, %s22
        %p361 = scmp.lt.s32.totalorder %s21, 1
        %s362 = scalar_select %p361, %s21, 1
        %p363 = scmp.lt.s32.totalorder %s360, 1
        %s364 = scalar_select %p363, %s360, 1
        %s365 = smul.addr %s362, 2
        %s366 = sadd.s32 %s364, %s365
        %s367 = smul.addr %s366, 4
        %s368 = scalar_lea.vmem %s4, %s367
      $region48: #{generator_forward.42} parent=43 // pred_fallthru
        _
    $region44: #{generator_forward.42} parent=5 // pred_fallthru
      _
  $region6: #{generator_forward.42} parent=0 // loop_footer
    %s14 = sadd.s32 1, %s10
  $region7: #{generator_forward.42} parent=0 // loop_footer_branch
    %9 = sbr.rel target = $region3
  $region8: #{generator_forward.42} parent=0 // loop_exit
    _

// kernel: generator_forward.49
$region0: #{generator_forward.49}
  #allocation0 [shape = 'u32[]', space=smem, size = 0x4, offset = 0x4, fixed_abs, tag = 'smem constant byte address 0x4 - core index']
  #allocation1 [shape = 'u32[144,128]{1,0:T(1,128)}', space=vmem, size = 0x12000, scoped, tag = 'internal scratch']
  %s0 = inlined_call_operand.vmem [shape: bf16[128,1152], index: 0, kind: input, shape index: {}]
  %s1 = inlined_call_operand.vmem [shape: bf16[1152,256], index: 1, kind: input, shape index: {}]
  %s2 = inlined_call_operand.vmem [shape: f32[1,256], index: 2, kind: input, shape index: {}]
  %s3 = inlined_call_operand.vmem [shape: bf16[128,256], index: 3, kind: output, shape index: {}]
  %s4 = sld [smem:[#allocation0]]
  $region22: #{generator_forward.49} parent=0
    _
  %s6 = ssub.s32 1, %s4
  %s7 = scalar_select 0, %s6, %s4
  // Predicated region
  $region2: #{generator_forward.49} parent=0 // pred_check
    _
  $region3: #{generator_forward.49} parent=0 // pred_check_branch
    %9 = sbr.rel (0) target = $region5
  $region4: #{generator_forward.49} parent=0 // pred_region
    _
  $region5: #{generator_forward.49} parent=0 // pred_fallthru
    _
  // Predicated region
  $region6: #{generator_forward.49} parent=0 // pred_check
    _
  $region7: #{generator_forward.49} parent=0 // pred_check_branch
    %11 = sbr.rel (0) target = $region9
  $region8: #{generator_forward.49} parent=0 // pred_region
    _
  $region9: #{generator_forward.49} parent=0 // pred_fallthru
    _
  // Predicated region
  $region10: #{generator_forward.49} parent=0 // pred_check
    _
  $region11: #{generator_forward.49} parent=0 // pred_check_branch
    %13 = sbr.rel (0) target = $region13
  $region12: #{generator_forward.49} parent=0 // pred_region
    _
  $region13: #{generator_forward.49} parent=0 // pred_fallthru
    _
  %v15 = vld [vmem:[%s0] sm:$0xff]
  %v16 = vld [vmem:[%s0 + $0x8] sm:$0xff]
  %v17 = vld [vmem:[%s0 + $0x10] sm:$0xff]
  %v18 = vld [vmem:[%s0 + $0x18] sm:$0xff]
  %v19 = vld [vmem:[%s0 + $0x20] sm:$0xf]
  %v20 = vld [vmem:[%s0 + $0x24] sm:$0xff]
  %v21 = vld [vmem:[%s0 + $0x2c] sm:$0xff]
  %v22 = vld [vmem:[%s0 + $0x34] sm:$0xff]
  %v23 = vld [vmem:[%s0 + $0x3c] sm:$0xff]
  %v24 = vld [vmem:[%s0 + $0x44] sm:$0xf]
  %v25 = vld [vmem:[%s0 + $0x48] sm:$0xff]
  %v26 = vld [vmem:[%s0 + $0x50] sm:$0xff]
  %v27 = vld [vmem:[%s0 + $0x58] sm:$0xff]
  %v28 = vld [vmem:[%s0 + $0x60] sm:$0xff]
  %v29 = vld [vmem:[%s0 + $0x68] sm:$0xf]
  %v30 = vld [vmem:[%s0 + $0x6c] sm:$0xff]
  %v31 = vld [vmem:[%s0 + $0x74] sm:$0xff]
  %v32 = vld [vmem:[%s0 + $0x7c] sm:$0xff]
  %v33 = vld [vmem:[%s0 + $0x84] sm:$0xff]
  %v34 = vld [vmem:[%s0 + $0x8c] sm:$0xf]
  %v35 = vld [vmem:[%s0 + $0x90] sm:$0xff]
  %v36 = vld [vmem:[%s0 + $0x98] sm:$0xff]
  %v37 = vld [vmem:[%s0 + $0xa0] sm:$0xff]
  %v38 = vld [vmem:[%s0 + $0xa8] sm:$0xff]
  %v39 = vld [vmem:[%s0 + $0xb0] sm:$0xf]
  %v40 = vld [vmem:[%s0 + $0xb4] sm:$0xff]
  %v41 = vld [vmem:[%s0 + $0xbc] sm:$0xff]
  %v42 = vld [vmem:[%s0 + $0xc4] sm:$0xff]
  %v43 = vld [vmem:[%s0 + $0xcc] sm:$0xff]
  %v44 = vld [vmem:[%s0 + $0xd4] sm:$0xf]
  %v45 = vld [vmem:[%s0 + $0xd8] sm:$0xff]
  %v46 = vld [vmem:[%s0 + $0xe0] sm:$0xff]
  %v47 = vld [vmem:[%s0 + $0xe8] sm:$0xff]
  %v48 = vld [vmem:[%s0 + $0xf0] sm:$0xff]
  %v49 = vld [vmem:[%s0 + $0xf8] sm:$0xf]
  %v50 = vld [vmem:[%s0 + $0xfc] sm:$0xff]
  %v51 = vld [vmem:[%s0 + $0x104] sm:$0xff]
  %v52 = vld [vmem:[%s0 + $0x10c] sm:$0xff]
  %v53 = vld [vmem:[%s0 + $0x114] sm:$0xff]
  %v54 = vld [vmem:[%s0 + $0x11c] sm:$0xf]
  %v55 = vld [vmem:[%s0 + $0x120] sm:$0xff]
  %v56 = vld [vmem:[%s0 + $0x128] sm:$0xff]
  %v57 = vld [vmem:[%s0 + $0x130] sm:$0xff]
  %v58 = vld [vmem:[%s0 + $0x138] sm:$0xff]
  %v59 = vld [vmem:[%s0 + $0x140] sm:$0xf]
  %v60 = vld [vmem:[%s0 + $0x144] sm:$0xff]
  %v61 = vld [vmem:[%s0 + $0x14c] sm:$0xff]
  %v62 = vld [vmem:[%s0 + $0x154] sm:$0xff]
  %v63 = vld [vmem:[%s0 + $0x15c] sm:$0xff]
  %v64 = vld [vmem:[%s0 + $0x164] sm:$0xf]
  %v65 = vld [vmem:[%s0 + $0x168] sm:$0xff]
  %v66 = vld [vmem:[%s0 + $0x170] sm:$0xff]
  %v67 = vld [vmem:[%s0 + $0x178] sm:$0xff]
  %v68 = vld [vmem:[%s0 + $0x180] sm:$0xff]
  %v69 = vld [vmem:[%s0 + $0x188] sm:$0xf]
  %v70 = vld [vmem:[%s0 + $0x18c] sm:$0xff]
  %v71 = vld [vmem:[%s0 + $0x194] sm:$0xff]
  %v72 = vld [vmem:[%s0 + $0x19c] sm:$0xff]
  %v73 = vld [vmem:[%s0 + $0x1a4] sm:$0xff]
  %v74 = vld [vmem:[%s0 + $0x1ac] sm:$0xf]
  %v75 = vld [vmem:[%s0 + $0x1b0] sm:$0xff]
  %v76 = vld [vmem:[%s0 + $0x1b8] sm:$0xff]
  %v77 = vld [vmem:[%s0 + $0x1c0] sm:$0xff]
  %v78 = vld [vmem:[%s0 + $0x1c8] sm:$0xff]
  %v79 = vld [vmem:[%s0 + $0x1d0] sm:$0xf]
  %v80 = vld [vmem:[%s0 + $0x1d4] sm:$0xff]
  %v81 = vld [vmem:[%s0 + $0x1dc] sm:$0xff]
  %v82 = vld [vmem:[%s0 + $0x1e4] sm:$0xff]
  %v83 = vld [vmem:[%s0 + $0x1ec] sm:$0xff]
  %v84 = vld [vmem:[%s0 + $0x1f4] sm:$0xf]
  %v85 = vld [vmem:[%s0 + $0x1f8] sm:$0xff]
  %v86 = vld [vmem:[%s0 + $0x200] sm:$0xff]
  %v87 = vld [vmem:[%s0 + $0x208] sm:$0xff]
  %v88 = vld [vmem:[%s0 + $0x210] sm:$0xff]
  %v89 = vld [vmem:[%s0 + $0x218] sm:$0xf]
  %v90 = vld [vmem:[%s0 + $0x21c] sm:$0xff]
  %v91 = vld [vmem:[%s0 + $0x224] sm:$0xff]
  %v92 = vld [vmem:[%s0 + $0x22c] sm:$0xff]
  %v93 = vld [vmem:[%s0 + $0x234] sm:$0xff]
  %v94 = vld [vmem:[%s0 + $0x23c] sm:$0xf]
  %v95 = vld [vmem:[%s1] sm:$0xff]
  %v96 = vld [vmem:[%s1 + $0x8] sm:$0xff]
  %v97 = vld [vmem:[%s1 + $0x10] sm:$0xff]
  %v98 = vld [vmem:[%s1 + $0x18] sm:$0xff]
  %v99 = vld [vmem:[%s1 + $0x20] sm:$0xff]
  %v100 = vld [vmem:[%s1 + $0x28] sm:$0xff]
  %v101 = vld [vmem:[%s1 + $0x30] sm:$0xff]
  %v102 = vld [vmem:[%s1 + $0x38] sm:$0xff]
  %v103 = vld [vmem:[%s1 + $0x40] sm:$0xff]
  %v104 = vld [vmem:[%s1 + $0x48] sm:$0xff]
  %v105 = vld [vmem:[%s1 + $0x50] sm:$0xff]
  %v106 = vld [vmem:[%s1 + $0x58] sm:$0xff]
  %v107 = vld [vmem:[%s1 + $0x60] sm:$0xff]
  %v108 = vld [vmem:[%s1 + $0x68] sm:$0xff]
  %v109 = vld [vmem:[%s1 + $0x70] sm:$0xff]
  %v110 = vld [vmem:[%s1 + $0x78] sm:$0xff]
  %v111 = vld [vmem:[%s1 + $0x80] sm:$0xff]
  %v112 = vld [vmem:[%s1 + $0x88] sm:$0xff]
  %v113 = vld [vmem:[%s1 + $0x90] sm:$0xff]
  %v114 = vld [vmem:[%s1 + $0x98] sm:$0xff]
  %v115 = vld [vmem:[%s1 + $0xa0] sm:$0xff]
  %v116 = vld [vmem:[%s1 + $0xa8] sm:$0xff]
  %v117 = vld [vmem:[%s1 + $0xb0] sm:$0xff]
  %v118 = vld [vmem:[%s1 + $0xb8] sm:$0xff]
  %v119 = vld [vmem:[%s1 + $0xc0] sm:$0xff]
  %v120 = vld [vmem:[%s1 + $0xc8] sm:$0xff]
  %v121 = vld [vmem:[%s1 + $0xd0] sm:$0xff]
  %v122 = vld [vmem:[%s1 + $0xd8] sm:$0xff]
  %v123 = vld [vmem:[%s1 + $0xe0] sm:$0xff]
  %v124 = vld [vmem:[%s1 + $0xe8] sm:$0xff]
  %v125 = vld [vmem:[%s1 + $0xf0] sm:$0xff]
  %v126 = vld [vmem:[%s1 + $0xf8] sm:$0xff]
  %v127 = vld [vmem:[%s1 + $0x100] sm:$0xff]
  %v128 = vld [vmem:[%s1 + $0x108] sm:$0xff]
  %v129 = vld [vmem:[%s1 + $0x110] sm:$0xff]
  %v130 = vld [vmem:[%s1 + $0x118] sm:$0xff]
  %v131 = vld [vmem:[%s1 + $0x120] sm:$0xff]
  %v132 = vld [vmem:[%s1 + $0x128] sm:$0xff]
  %v133 = vld [vmem:[%s1 + $0x130] sm:$0xff]
  %v134 = vld [vmem:[%s1 + $0x138] sm:$0xff]
  %v135 = vld [vmem:[%s1 + $0x140] sm:$0xff]
  %v136 = vld [vmem:[%s1 + $0x148] sm:$0xff]
  %v137 = vld [vmem:[%s1 + $0x150] sm:$0xff]
  %v138 = vld [vmem:[%s1 + $0x158] sm:$0xff]
  %v139 = vld [vmem:[%s1 + $0x160] sm:$0xff]
  %v140 = vld [vmem:[%s1 + $0x168] sm:$0xff]
  %v141 = vld [vmem:[%s1 + $0x170] sm:$0xff]
  %v142 = vld [vmem:[%s1 + $0x178] sm:$0xff]
  %v143 = vld [vmem:[%s1 + $0x180] sm:$0xff]
  %v144 = vld [vmem:[%s1 + $0x188] sm:$0xff]
  %v145 = vld [vmem:[%s1 + $0x190] sm:$0xff]
  %v146 = vld [vmem:[%s1 + $0x198] sm:$0xff]
  %v147 = vld [vmem:[%s1 + $0x1a0] sm:$0xff]
  %v148 = vld [vmem:[%s1 + $0x1a8] sm:$0xff]
  %v149 = vld [vmem:[%s1 + $0x1b0] sm:$0xff]
  %v150 = vld [vmem:[%s1 + $0x1b8] sm:$0xff]
  %v151 = vld [vmem:[%s1 + $0x1c0] sm:$0xff]
  %v152 = vld [vmem:[%s1 + $0x1c8] sm:$0xff]
  %v153 = vld [vmem:[%s1 + $0x1d0] sm:$0xff]
  %v154 = vld [vmem:[%s1 + $0x1d8] sm:$0xff]
  %v155 = vld [vmem:[%s1 + $0x1e0] sm:$0xff]
  %v156 = vld [vmem:[%s1 + $0x1e8] sm:$0xff]
  %v157 = vld [vmem:[%s1 + $0x1f0] sm:$0xff]
  %v158 = vld [vmem:[%s1 + $0x1f8] sm:$0xff]
  %v159 = vld [vmem:[%s1 + $0x200] sm:$0xff]
  %v160 = vld [vmem:[%s1 + $0x208] sm:$0xff]
  %v161 = vld [vmem:[%s1 + $0x210] sm:$0xff]
  %v162 = vld [vmem:[%s1 + $0x218] sm:$0xff]
  %v163 = vld [vmem:[%s1 + $0x220] sm:$0xff]
  %v164 = vld [vmem:[%s1 + $0x228] sm:$0xff]
  %v165 = vld [vmem:[%s1 + $0x230] sm:$0xff]
  %v166 = vld [vmem:[%s1 + $0x238] sm:$0xff]
  %v167 = vld [vmem:[%s1 + $0x240] sm:$0xff]
  %v168 = vld [vmem:[%s1 + $0x248] sm:$0xff]
  %v169 = vld [vmem:[%s1 + $0x250] sm:$0xff]
  %v170 = vld [vmem:[%s1 + $0x258] sm:$0xff]
  %v171 = vld [vmem:[%s1 + $0x260] sm:$0xff]
  %v172 = vld [vmem:[%s1 + $0x268] sm:$0xff]
  %v173 = vld [vmem:[%s1 + $0x270] sm:$0xff]
  %v174 = vld [vmem:[%s1 + $0x278] sm:$0xff]
  %v175 = vld [vmem:[%s1 + $0x280] sm:$0xff]
  %v176 = vld [vmem:[%s1 + $0x288] sm:$0xff]
  %v177 = vld [vmem:[%s1 + $0x290] sm:$0xff]
  %v178 = vld [vmem:[%s1 + $0x298] sm:$0xff]
  %v179 = vld [vmem:[%s1 + $0x2a0] sm:$0xff]
  %v180 = vld [vmem:[%s1 + $0x2a8] sm:$0xff]
  %v181 = vld [vmem:[%s1 + $0x2b0] sm:$0xff]
  %v182 = vld [vmem:[%s1 + $0x2b8] sm:$0xff]
  %v183 = vld [vmem:[%s1 + $0x2c0] sm:$0xff]
  %v184 = vld [vmem:[%s1 + $0x2c8] sm:$0xff]
  %v185 = vld [vmem:[%s1 + $0x2d0] sm:$0xff]
  %v186 = vld [vmem:[%s1 + $0x2d8] sm:$0xff]
  %v187 = vld [vmem:[%s1 + $0x2e0] sm:$0xff]
  %v188 = vld [vmem:[%s1 + $0x2e8] sm:$0xff]
  %v189 = vld [vmem:[%s1 + $0x2f0] sm:$0xff]
  %v190 = vld [vmem:[%s1 + $0x2f8] sm:$0xff]
  %v191 = vld [vmem:[%s1 + $0x300] sm:$0xff]
  %v192 = vld [vmem:[%s1 + $0x308] sm:$0xff]
  %v193 = vld [vmem:[%s1 + $0x310] sm:$0xff]
  %v194 = vld [vmem:[%s1 + $0x318] sm:$0xff]
  %v195 = vld [vmem:[%s1 + $0x320] sm:$0xff]
  %v196 = vld [vmem:[%s1 + $0x328] sm:$0xff]
  %v197 = vld [vmem:[%s1 + $0x330] sm:$0xff]
  %v198 = vld [vmem:[%s1 + $0x338] sm:$0xff]
  %v199 = vld [vmem:[%s1 + $0x340] sm:$0xff]
  %v200 = vld [vmem:[%s1 + $0x348] sm:$0xff]
  %v201 = vld [vmem:[%s1 + $0x350] sm:$0xff]
  %v202 = vld [vmem:[%s1 + $0x358] sm:$0xff]
  %v203 = vld [vmem:[%s1 + $0x360] sm:$0xff]
  %v204 = vld [vmem:[%s1 + $0x368] sm:$0xff]
  %v205 = vld [vmem:[%s1 + $0x370] sm:$0xff]
  %v206 = vld [vmem:[%s1 + $0x378] sm:$0xff]
  %v207 = vld [vmem:[%s1 + $0x380] sm:$0xff]
  %v208 = vld [vmem:[%s1 + $0x388] sm:$0xff]
  %v209 = vld [vmem:[%s1 + $0x390] sm:$0xff]
  %v210 = vld [vmem:[%s1 + $0x398] sm:$0xff]
  %v211 = vld [vmem:[%s1 + $0x3a0] sm:$0xff]
  %v212 = vld [vmem:[%s1 + $0x3a8] sm:$0xff]
  %v213 = vld [vmem:[%s1 + $0x3b0] sm:$0xff]
  %v214 = vld [vmem:[%s1 + $0x3b8] sm:$0xff]
  %v215 = vld [vmem:[%s1 + $0x3c0] sm:$0xff]
  %v216 = vld [vmem:[%s1 + $0x3c8] sm:$0xff]
  %v217 = vld [vmem:[%s1 + $0x3d0] sm:$0xff]
  %v218 = vld [vmem:[%s1 + $0x3d8] sm:$0xff]
  %v219 = vld [vmem:[%s1 + $0x3e0] sm:$0xff]
  %v220 = vld [vmem:[%s1 + $0x3e8] sm:$0xff]
  %v221 = vld [vmem:[%s1 + $0x3f0] sm:$0xff]
  %v222 = vld [vmem:[%s1 + $0x3f8] sm:$0xff]
  %v223 = vld [vmem:[%s1 + $0x400] sm:$0xff]
  %v224 = vld [vmem:[%s1 + $0x408] sm:$0xff]
  %v225 = vld [vmem:[%s1 + $0x410] sm:$0xff]
  %v226 = vld [vmem:[%s1 + $0x418] sm:$0xff]
  %v227 = vld [vmem:[%s1 + $0x420] sm:$0xff]
  %v228 = vld [vmem:[%s1 + $0x428] sm:$0xff]
  %v229 = vld [vmem:[%s1 + $0x430] sm:$0xff]
  %v230 = vld [vmem:[%s1 + $0x438] sm:$0xff]
  %v231 = vld [vmem:[%s1 + $0x440] sm:$0xff]
  %v232 = vld [vmem:[%s1 + $0x448] sm:$0xff]
  %v233 = vld [vmem:[%s1 + $0x450] sm:$0xff]
  %v234 = vld [vmem:[%s1 + $0x458] sm:$0xff]
  %v235 = vld [vmem:[%s1 + $0x460] sm:$0xff]
  %v236 = vld [vmem:[%s1 + $0x468] sm:$0xff]
  %v237 = vld [vmem:[%s1 + $0x470] sm:$0xff]
  %v238 = vld [vmem:[%s1 + $0x478] sm:$0xff]
  %v239 = vld [vmem:[%s2] sm:$0x3]
  %v241 = vlaneseq
  %v242 = vshrl.u32 %v241, 7
  %v243 = vsub.s32 0, %v242
  %v244 = vrot.slane %v239, %v243
  %v245 = vlaneseq
  %v246 = vshrl.u32 %v245, 7
  %v247 = vsub.s32 1, %v246
  %v248 = vrot.slane %v239, %v247
  %v331 = vunpack.c.l.b16 %v15
  %v332 = vunpack.c.h.b16 %v15
  %v333 = vunpack.c.l.b16 %v16
  %v334 = vunpack.c.h.b16 %v16
  %v335 = vunpack.c.l.b16 %v17
  %v336 = vunpack.c.h.b16 %v17
  %v337 = vunpack.c.l.b16 %v18
  %v338 = vunpack.c.h.b16 %v18
  %v339 = vunpack.c.l.b16 %v19
  %v340 = vunpack.c.l.b16 %v20
  %v341 = vunpack.c.h.b16 %v20
  %v342 = vunpack.c.l.b16 %v21
  %v343 = vunpack.c.h.b16 %v21
  %v344 = vunpack.c.l.b16 %v22
  %v345 = vunpack.c.h.b16 %v22
  %v346 = vunpack.c.l.b16 %v23
  %v347 = vunpack.c.h.b16 %v23
  %v348 = vunpack.c.l.b16 %v24
  %v349 = vunpack.c.l.b16 %v25
  %v350 = vunpack.c.h.b16 %v25
  %v351 = vunpack.c.l.b16 %v26
  %v352 = vunpack.c.h.b16 %v26
  %v353 = vunpack.c.l.b16 %v27
  %v354 = vunpack.c.h.b16 %v27
  %v355 = vunpack.c.l.b16 %v28
  %v356 = vunpack.c.h.b16 %v28
  %v357 = vunpack.c.l.b16 %v29
  %v358 = vunpack.c.l.b16 %v30
  %v359 = vunpack.c.h.b16 %v30
  %v360 = vunpack.c.l.b16 %v31
  %v361 = vunpack.c.h.b16 %v31
  %v362 = vunpack.c.l.b16 %v32
  %v363 = vunpack.c.h.b16 %v32
  %v364 = vunpack.c.l.b16 %v33
  %v365 = vunpack.c.h.b16 %v33
  %v366 = vunpack.c.l.b16 %v34
  %v367 = vunpack.c.l.b16 %v35
  %v368 = vunpack.c.h.b16 %v35
  %v369 = vunpack.c.l.b16 %v36
  %v370 = vunpack.c.h.b16 %v36
  %v371 = vunpack.c.l.b16 %v37
  %v372 = vunpack.c.h.b16 %v37
  %v373 = vunpack.c.l.b16 %v38
  %v374 = vunpack.c.h.b16 %v38
  %v375 = vunpack.c.l.b16 %v39
  %v376 = vunpack.c.l.b16 %v40
  %v377 = vunpack.c.h.b16 %v40
  %v378 = vunpack.c.l.b16 %v41
  %v379 = vunpack.c.h.b16 %v41
  %v380 = vunpack.c.l.b16 %v42
  %v381 = vunpack.c.h.b16 %v42
  %v382 = vunpack.c.l.b16 %v43
  %v383 = vunpack.c.h.b16 %v43
  %v384 = vunpack.c.l.b16 %v44
  %v385 = vunpack.c.l.b16 %v45
  %v386 = vunpack.c.h.b16 %v45
  %v387 = vunpack.c.l.b16 %v46
  %v388 = vunpack.c.h.b16 %v46
  %v389 = vunpack.c.l.b16 %v47
  %v390 = vunpack.c.h.b16 %v47
  %v391 = vunpack.c.l.b16 %v48
  %v392 = vunpack.c.h.b16 %v48
  %v393 = vunpack.c.l.b16 %v49
  %v394 = vunpack.c.l.b16 %v50
  %v395 = vunpack.c.h.b16 %v50
  %v396 = vunpack.c.l.b16 %v51
  %v397 = vunpack.c.h.b16 %v51
  %v398 = vunpack.c.l.b16 %v52
  %v399 = vunpack.c.h.b16 %v52
  %v400 = vunpack.c.l.b16 %v53
  %v401 = vunpack.c.h.b16 %v53
  %v402 = vunpack.c.l.b16 %v54
  %v403 = vunpack.c.l.b16 %v55
  %v404 = vunpack.c.h.b16 %v55
  %v405 = vunpack.c.l.b16 %v56
  %v406 = vunpack.c.h.b16 %v56
  %v407 = vunpack.c.l.b16 %v57
  %v408 = vunpack.c.h.b16 %v57
  %v409 = vunpack.c.l.b16 %v58
  %v410 = vunpack.c.h.b16 %v58
  %v411 = vunpack.c.l.b16 %v59
  %v412 = vunpack.c.l.b16 %v60
  %v413 = vunpack.c.h.b16 %v60
  %v414 = vunpack.c.l.b16 %v61
  %v415 = vunpack.c.h.b16 %v61
  %v416 = vunpack.c.l.b16 %v62
  %v417 = vunpack.c.h.b16 %v62
  %v418 = vunpack.c.l.b16 %v63
  %v419 = vunpack.c.h.b16 %v63
  %v420 = vunpack.c.l.b16 %v64
  %v421 = vunpack.c.l.b16 %v65
  %v422 = vunpack.c.h.b16 %v65
  %v423 = vunpack.c.l.b16 %v66
  %v424 = vunpack.c.h.b16 %v66
  %v425 = vunpack.c.l.b16 %v67
  %v426 = vunpack.c.h.b16 %v67
  %v427 = vunpack.c.l.b16 %v68
  %v428 = vunpack.c.h.b16 %v68
  %v429 = vunpack.c.l.b16 %v69
  %v430 = vunpack.c.l.b16 %v70
  %v431 = vunpack.c.h.b16 %v70
  %v432 = vunpack.c.l.b16 %v71
  %v433 = vunpack.c.h.b16 %v71
  %v434 = vunpack.c.l.b16 %v72
  %v435 = vunpack.c.h.b16 %v72
  %v436 = vunpack.c.l.b16 %v73
  %v437 = vunpack.c.h.b16 %v73
  %v438 = vunpack.c.l.b16 %v74
  %v439 = vunpack.c.l.b16 %v75
  %v440 = vunpack.c.h.b16 %v75
  %v441 = vunpack.c.l.b16 %v76
  %v442 = vunpack.c.h.b16 %v76
  %v443 = vunpack.c.l.b16 %v77
  %v444 = vunpack.c.h.b16 %v77
  %v445 = vunpack.c.l.b16 %v78
  %v446 = vunpack.c.h.b16 %v78
  %v447 = vunpack.c.l.b16 %v79
  %v448 = vunpack.c.l.b16 %v80
  %v449 = vunpack.c.h.b16 %v80
  %v450 = vunpack.c.l.b16 %v81
  %v451 = vunpack.c.h.b16 %v81
  %v452 = vunpack.c.l.b16 %v82
  %v453 = vunpack.c.h.b16 %v82
  %v454 = vunpack.c.l.b16 %v83
  %v455 = vunpack.c.h.b16 %v83
  %v456 = vunpack.c.l.b16 %v84
  %v457 = vunpack.c.l.b16 %v85
  %v458 = vunpack.c.h.b16 %v85
  %v459 = vunpack.c.l.b16 %v86
  %v460 = vunpack.c.h.b16 %v86
  %v461 = vunpack.c.l.b16 %v87
  %v462 = vunpack.c.h.b16 %v87
  %v463 = vunpack.c.l.b16 %v88
  %v464 = vunpack.c.h.b16 %v88
  %v465 = vunpack.c.l.b16 %v89
  %v466 = vunpack.c.l.b16 %v90
  %v467 = vunpack.c.h.b16 %v90
  %v468 = vunpack.c.l.b16 %v91
  %v469 = vunpack.c.h.b16 %v91
  %v470 = vunpack.c.l.b16 %v92
  %v471 = vunpack.c.h.b16 %v92
  %v472 = vunpack.c.l.b16 %v93
  %v473 = vunpack.c.h.b16 %v93
  %v474 = vunpack.c.l.b16 %v94
  %v475 = vpack.c.b16 %v340, %v331
  %v476 = vpack.c.b16 %v341, %v332
  %v477 = vpack.c.b16 %v342, %v333
  %v478 = vpack.c.b16 %v343, %v334
  %v479 = vpack.c.b16 %v344, %v335
  %v480 = vpack.c.b16 %v345, %v336
  %v481 = vpack.c.b16 %v346, %v337
  %v482 = vpack.c.b16 %v347, %v338
  %v483 = vpack.c.b16 %v348, %v339
  %v484 = vpack.c.b16 %v358, %v349
  %v485 = vpack.c.b16 %v359, %v350
  %v486 = vpack.c.b16 %v360, %v351
  %v487 = vpack.c.b16 %v361, %v352
  %v488 = vpack.c.b16 %v362, %v353
  %v489 = vpack.c.b16 %v363, %v354
  %v490 = vpack.c.b16 %v364, %v355
  %v491 = vpack.c.b16 %v365, %v356
  %v492 = vpack.c.b16 %v366, %v357
  %v493 = vpack.c.b16 %v376, %v367
  %v494 = vpack.c.b16 %v377, %v368
  %v495 = vpack.c.b16 %v378, %v369
  %v496 = vpack.c.b16 %v379, %v370
  %v497 = vpack.c.b16 %v380, %v371
  %v498 = vpack.c.b16 %v381, %v372
  %v499 = vpack.c.b16 %v382, %v373
  %v500 = vpack.c.b16 %v383, %v374
  %v501 = vpack.c.b16 %v384, %v375
  %v502 = vpack.c.b16 %v394, %v385
  %v503 = vpack.c.b16 %v395, %v386
  %v504 = vpack.c.b16 %v396, %v387
  %v505 = vpack.c.b16 %v397, %v388
  %v506 = vpack.c.b16 %v398, %v389
  %v507 = vpack.c.b16 %v399, %v390
  %v508 = vpack.c.b16 %v400, %v391
  %v509 = vpack.c.b16 %v401, %v392
  %v510 = vpack.c.b16 %v402, %v393
  %v511 = vpack.c.b16 %v412, %v403
  %v512 = vpack.c.b16 %v413, %v404
  %v513 = vpack.c.b16 %v414, %v405
  %v514 = vpack.c.b16 %v415, %v406
  %v515 = vpack.c.b16 %v416, %v407
  %v516 = vpack.c.b16 %v417, %v408
  %v517 = vpack.c.b16 %v418, %v409
  %v518 = vpack.c.b16 %v419, %v410
  %v519 = vpack.c.b16 %v420, %v411
  %v520 = vpack.c.b16 %v430, %v421
  %v521 = vpack.c.b16 %v431, %v422
  %v522 = vpack.c.b16 %v432, %v423
  %v523 = vpack.c.b16 %v433, %v424
  %v524 = vpack.c.b16 %v434, %v425
  %v525 = vpack.c.b16 %v435, %v426
  %v526 = vpack.c.b16 %v436, %v427
  %v527 = vpack.c.b16 %v437, %v428
  %v528 = vpack.c.b16 %v438, %v429
  %v529 = vpack.c.b16 %v448, %v439
  %v530 = vpack.c.b16 %v449, %v440
  %v531 = vpack.c.b16 %v450, %v441
  %v532 = vpack.c.b16 %v451, %v442
  %v533 = vpack.c.b16 %v452, %v443
  %v534 = vpack.c.b16 %v453, %v444
  %v535 = vpack.c.b16 %v454, %v445
  %v536 = vpack.c.b16 %v455, %v446
  %v537 = vpack.c.b16 %v456, %v447
  %v538 = vpack.c.b16 %v466, %v457
  %v539 = vpack.c.b16 %v467, %v458
  %v540 = vpack.c.b16 %v468, %v459
  %v541 = vpack.c.b16 %v469, %v460
  %v542 = vpack.c.b16 %v470, %v461
  %v543 = vpack.c.b16 %v471, %v462
  %v544 = vpack.c.b16 %v472, %v463
  %v545 = vpack.c.b16 %v473, %v464
  %v546 = vpack.c.b16 %v474, %v465
  %v763 = vunpack.c.l.b16 %v95
  %v764 = vunpack.c.h.b16 %v95
  %v765 = vunpack.c.l.b16 %v96
  %v766 = vunpack.c.h.b16 %v96
  %v767 = vunpack.c.l.b16 %v97
  %v768 = vunpack.c.h.b16 %v97
  %v769 = vunpack.c.l.b16 %v98
  %v770 = vunpack.c.h.b16 %v98
  %v771 = vunpack.c.l.b16 %v99
  %v772 = vunpack.c.h.b16 %v99
  %v773 = vunpack.c.l.b16 %v100
  %v774 = vunpack.c.h.b16 %v100
  %v775 = vunpack.c.l.b16 %v101
  %v776 = vunpack.c.h.b16 %v101
  %v777 = vunpack.c.l.b16 %v102
  %v778 = vunpack.c.h.b16 %v102
  %v779 = vunpack.c.l.b16 %v103
  %v780 = vunpack.c.h.b16 %v103
  %v781 = vunpack.c.l.b16 %v104
  %v782 = vunpack.c.h.b16 %v104
  %v783 = vunpack.c.l.b16 %v105
  %v784 = vunpack.c.h.b16 %v105
  %v785 = vunpack.c.l.b16 %v106
  %v786 = vunpack.c.h.b16 %v106
  %v787 = vunpack.c.l.b16 %v107
  %v788 = vunpack.c.h.b16 %v107
  %v789 = vunpack.c.l.b16 %v108
  %v790 = vunpack.c.h.b16 %v108
  %v791 = vunpack.c.l.b16 %v109
  %v792 = vunpack.c.h.b16 %v109
  %v793 = vunpack.c.l.b16 %v110
  %v794 = vunpack.c.h.b16 %v110
  %v795 = vunpack.c.l.b16 %v111
  %v796 = vunpack.c.h.b16 %v111
  %v797 = vunpack.c.l.b16 %v112
  %v798 = vunpack.c.h.b16 %v112
  %v799 = vunpack.c.l.b16 %v113
  %v800 = vunpack.c.h.b16 %v113
  %v801 = vunpack.c.l.b16 %v114
  %v802 = vunpack.c.h.b16 %v114
  %v803 = vunpack.c.l.b16 %v115
  %v804 = vunpack.c.h.b16 %v115
  %v805 = vunpack.c.l.b16 %v116
  %v806 = vunpack.c.h.b16 %v116
  %v807 = vunpack.c.l.b16 %v117
  %v808 = vunpack.c.h.b16 %v117
  %v809 = vunpack.c.l.b16 %v118
  %v810 = vunpack.c.h.b16 %v118
  %v811 = vunpack.c.l.b16 %v119
  %v812 = vunpack.c.h.b16 %v119
  %v813 = vunpack.c.l.b16 %v120
  %v814 = vunpack.c.h.b16 %v120
  %v815 = vunpack.c.l.b16 %v121
  %v816 = vunpack.c.h.b16 %v121
  %v817 = vunpack.c.l.b16 %v122
  %v818 = vunpack.c.h.b16 %v122
  %v819 = vunpack.c.l.b16 %v123
  %v820 = vunpack.c.h.b16 %v123
  %v821 = vunpack.c.l.b16 %v124
  %v822 = vunpack.c.h.b16 %v124
  %v823 = vunpack.c.l.b16 %v125
  %v824 = vunpack.c.h.b16 %v125
  %v825 = vunpack.c.l.b16 %v126
  %v826 = vunpack.c.h.b16 %v126
  %v827 = vunpack.c.l.b16 %v127
  %v828 = vunpack.c.h.b16 %v127
  %v829 = vunpack.c.l.b16 %v128
  %v830 = vunpack.c.h.b16 %v128
  %v831 = vunpack.c.l.b16 %v129
  %v832 = vunpack.c.h.b16 %v129
  %v833 = vunpack.c.l.b16 %v130
  %v834 = vunpack.c.h.b16 %v130
  %v835 = vunpack.c.l.b16 %v131
  %v836 = vunpack.c.h.b16 %v131
  %v837 = vunpack.c.l.b16 %v132
  %v838 = vunpack.c.h.b16 %v132
  %v839 = vunpack.c.l.b16 %v133
  %v840 = vunpack.c.h.b16 %v133
  %v841 = vunpack.c.l.b16 %v134
  %v842 = vunpack.c.h.b16 %v134
  %v843 = vunpack.c.l.b16 %v135
  %v844 = vunpack.c.h.b16 %v135
  %v845 = vunpack.c.l.b16 %v136
  %v846 = vunpack.c.h.b16 %v136
  %v847 = vunpack.c.l.b16 %v137
  %v848 = vunpack.c.h.b16 %v137
  %v849 = vunpack.c.l.b16 %v138
  %v850 = vunpack.c.h.b16 %v138
  %v851 = vunpack.c.l.b16 %v139
  %v852 = vunpack.c.h.b16 %v139
  %v853 = vunpack.c.l.b16 %v140
  %v854 = vunpack.c.h.b16 %v140
  %v855 = vunpack.c.l.b16 %v141
  %v856 = vunpack.c.h.b16 %v141
  %v857 = vunpack.c.l.b16 %v142
  %v858 = vunpack.c.h.b16 %v142
  %v859 = vunpack.c.l.b16 %v143
  %v860 = vunpack.c.h.b16 %v143
  %v861 = vunpack.c.l.b16 %v144
  %v862 = vunpack.c.h.b16 %v144
  %v863 = vunpack.c.l.b16 %v145
  %v864 = vunpack.c.h.b16 %v145
  %v865 = vunpack.c.l.b16 %v146
  %v866 = vunpack.c.h.b16 %v146
  %v867 = vunpack.c.l.b16 %v147
  %v868 = vunpack.c.h.b16 %v147
  %v869 = vunpack.c.l.b16 %v148
  %v870 = vunpack.c.h.b16 %v148
  %v871 = vunpack.c.l.b16 %v149
  %v872 = vunpack.c.h.b16 %v149
  %v873 = vunpack.c.l.b16 %v150
  %v874 = vunpack.c.h.b16 %v150
  %v875 = vunpack.c.l.b16 %v151
  %v876 = vunpack.c.h.b16 %v151
  %v877 = vunpack.c.l.b16 %v152
  %v878 = vunpack.c.h.b16 %v152
  %v879 = vunpack.c.l.b16 %v153
  %v880 = vunpack.c.h.b16 %v153
  %v881 = vunpack.c.l.b16 %v154
  %v882 = vunpack.c.h.b16 %v154
  %v883 = vunpack.c.l.b16 %v155
  %v884 = vunpack.c.h.b16 %v155
  %v885 = vunpack.c.l.b16 %v156
  %v886 = vunpack.c.h.b16 %v156
  %v887 = vunpack.c.l.b16 %v157
  %v888 = vunpack.c.h.b16 %v157
  %v889 = vunpack.c.l.b16 %v158
  %v890 = vunpack.c.h.b16 %v158
  %v891 = vunpack.c.l.b16 %v159
  %v892 = vunpack.c.h.b16 %v159
  %v893 = vunpack.c.l.b16 %v160
  %v894 = vunpack.c.h.b16 %v160
  %v895 = vunpack.c.l.b16 %v161
  %v896 = vunpack.c.h.b16 %v161
  %v897 = vunpack.c.l.b16 %v162
  %v898 = vunpack.c.h.b16 %v162
  %v899 = vunpack.c.l.b16 %v163
  %v900 = vunpack.c.h.b16 %v163
  %v901 = vunpack.c.l.b16 %v164
  %v902 = vunpack.c.h.b16 %v164
  %v903 = vunpack.c.l.b16 %v165
  %v904 = vunpack.c.h.b16 %v165
  %v905 = vunpack.c.l.b16 %v166
  %v906 = vunpack.c.h.b16 %v166
  %v907 = vunpack.c.l.b16 %v167
  %v908 = vunpack.c.h.b16 %v167
  %v909 = vunpack.c.l.b16 %v168
  %v910 = vunpack.c.h.b16 %v168
  %v911 = vunpack.c.l.b16 %v169
  %v912 = vunpack.c.h.b16 %v169
  %v913 = vunpack.c.l.b16 %v170
  %v914 = vunpack.c.h.b16 %v170
  %v915 = vunpack.c.l.b16 %v171
  %v916 = vunpack.c.h.b16 %v171
  %v917 = vunpack.c.l.b16 %v172
  %v918 = vunpack.c.h.b16 %v172
  %v919 = vunpack.c.l.b16 %v173
  %v920 = vunpack.c.h.b16 %v173
  %v921 = vunpack.c.l.b16 %v174
  %v922 = vunpack.c.h.b16 %v174
  %v923 = vunpack.c.l.b16 %v175
  %v924 = vunpack.c.h.b16 %v175
  %v925 = vunpack.c.l.b16 %v176
  %v926 = vunpack.c.h.b16 %v176
  %v927 = vunpack.c.l.b16 %v177
  %v928 = vunpack.c.h.b16 %v177
  %v929 = vunpack.c.l.b16 %v178
  %v930 = vunpack.c.h.b16 %v178
  %v931 = vunpack.c.l.b16 %v179
  %v932 = vunpack.c.h.b16 %v179
  %v933 = vunpack.c.l.b16 %v180
  %v934 = vunpack.c.h.b16 %v180
  %v935 = vunpack.c.l.b16 %v181
  %v936 = vunpack.c.h.b16 %v181
  %v937 = vunpack.c.l.b16 %v182
  %v938 = vunpack.c.h.b16 %v182
  %v939 = vunpack.c.l.b16 %v183
  %v940 = vunpack.c.h.b16 %v183
  %v941 = vunpack.c.l.b16 %v184
  %v942 = vunpack.c.h.b16 %v184
  %v943 = vunpack.c.l.b16 %v185
  %v944 = vunpack.c.h.b16 %v185
  %v945 = vunpack.c.l.b16 %v186
  %v946 = vunpack.c.h.b16 %v186
  %v947 = vunpack.c.l.b16 %v187
  %v948 = vunpack.c.h.b16 %v187
  %v949 = vunpack.c.l.b16 %v188
  %v950 = vunpack.c.h.b16 %v188
  %v951 = vunpack.c.l.b16 %v189
  %v952 = vunpack.c.h.b16 %v189
  %v953 = vunpack.c.l.b16 %v190
  %v954 = vunpack.c.h.b16 %v190
  %v955 = vunpack.c.l.b16 %v191
  %v956 = vunpack.c.h.b16 %v191
  %v957 = vunpack.c.l.b16 %v192
  %v958 = vunpack.c.h.b16 %v192
  %v959 = vunpack.c.l.b16 %v193
  %v960 = vunpack.c.h.b16 %v193
  %v961 = vunpack.c.l.b16 %v194
  %v962 = vunpack.c.h.b16 %v194
  %v963 = vunpack.c.l.b16 %v195
  %v964 = vunpack.c.h.b16 %v195
  %v965 = vunpack.c.l.b16 %v196
  %v966 = vunpack.c.h.b16 %v196
  %v967 = vunpack.c.l.b16 %v197
  %v968 = vunpack.c.h.b16 %v197
  %v969 = vunpack.c.l.b16 %v198
  %v970 = vunpack.c.h.b16 %v198
  %v971 = vunpack.c.l.b16 %v199
  %v972 = vunpack.c.h.b16 %v199
  %v973 = vunpack.c.l.b16 %v200
  %v974 = vunpack.c.h.b16 %v200
  %v975 = vunpack.c.l.b16 %v201
  %v976 = vunpack.c.h.b16 %v201
  %v977 = vunpack.c.l.b16 %v202
  %v978 = vunpack.c.h.b16 %v202
  %v979 = vunpack.c.l.b16 %v203
  %v980 = vunpack.c.h.b16 %v203
  %v981 = vunpack.c.l.b16 %v204
  %v982 = vunpack.c.h.b16 %v204
  %v983 = vunpack.c.l.b16 %v205
  %v984 = vunpack.c.h.b16 %v205
  %v985 = vunpack.c.l.b16 %v206
  %v986 = vunpack.c.h.b16 %v206
  %v987 = vunpack.c.l.b16 %v207
  %v988 = vunpack.c.h.b16 %v207
  %v989 = vunpack.c.l.b16 %v208
  %v990 = vunpack.c.h.b16 %v208
  %v991 = vunpack.c.l.b16 %v209
  %v992 = vunpack.c.h.b16 %v209
  %v993 = vunpack.c.l.b16 %v210
  %v994 = vunpack.c.h.b16 %v210
  %v995 = vunpack.c.l.b16 %v211
  %v996 = vunpack.c.h.b16 %v211
  %v997 = vunpack.c.l.b16 %v212
  %v998 = vunpack.c.h.b16 %v212
  %v999 = vunpack.c.l.b16 %v213
  %v1000 = vunpack.c.h.b16 %v213
  %v1001 = vunpack.c.l.b16 %v214
  %v1002 = vunpack.c.h.b16 %v214
  %v1003 = vunpack.c.l.b16 %v215
  %v1004 = vunpack.c.h.b16 %v215
  %v1005 = vunpack.c.l.b16 %v216
  %v1006 = vunpack.c.h.b16 %v216
  %v1007 = vunpack.c.l.b16 %v217
  %v1008 = vunpack.c.h.b16 %v217
  %v1009 = vunpack.c.l.b16 %v218
  %v1010 = vunpack.c.h.b16 %v218
  %v1011 = vunpack.c.l.b16 %v219
  %v1012 = vunpack.c.h.b16 %v219
  %v1013 = vunpack.c.l.b16 %v220
  %v1014 = vunpack.c.h.b16 %v220
  %v1015 = vunpack.c.l.b16 %v221
  %v1016 = vunpack.c.h.b16 %v221
  %v1017 = vunpack.c.l.b16 %v222
  %v1018 = vunpack.c.h.b16 %v222
  %v1019 = vunpack.c.l.b16 %v223
  %v1020 = vunpack.c.h.b16 %v223
  %v1021 = vunpack.c.l.b16 %v224
  %v1022 = vunpack.c.h.b16 %v224
  %v1023 = vunpack.c.l.b16 %v225
  %v1024 = vunpack.c.h.b16 %v225
  %v1025 = vunpack.c.l.b16 %v226
  %v1026 = vunpack.c.h.b16 %v226
  %v1027 = vunpack.c.l.b16 %v227
  %v1028 = vunpack.c.h.b16 %v227
  %v1029 = vunpack.c.l.b16 %v228
  %v1030 = vunpack.c.h.b16 %v228
  %v1031 = vunpack.c.l.b16 %v229
  %v1032 = vunpack.c.h.b16 %v229
  %v1033 = vunpack.c.l.b16 %v230
  %v1034 = vunpack.c.h.b16 %v230
  %v1035 = vunpack.c.l.b16 %v231
  %v1036 = vunpack.c.h.b16 %v231
  %v1037 = vunpack.c.l.b16 %v232
  %v1038 = vunpack.c.h.b16 %v232
  %v1039 = vunpack.c.l.b16 %v233
  %v1040 = vunpack.c.h.b16 %v233
  %v1041 = vunpack.c.l.b16 %v234
  %v1042 = vunpack.c.h.b16 %v234
  %v1043 = vunpack.c.l.b16 %v235
  %v1044 = vunpack.c.h.b16 %v235
  %v1045 = vunpack.c.l.b16 %v236
  %v1046 = vunpack.c.h.b16 %v236
  %v1047 = vunpack.c.l.b16 %v237
  %v1048 = vunpack.c.h.b16 %v237
  %v1049 = vunpack.c.l.b16 %v238
  %v1050 = vunpack.c.h.b16 %v238
  %v1051 = vpack.c.b16 %v765, %v763
  %v1052 = vpack.c.b16 %v766, %v764
  %v1053 = vpack.c.b16 %v769, %v767
  %v1054 = vpack.c.b16 %v770, %v768
  %v1055 = vpack.c.b16 %v773, %v771
  %v1056 = vpack.c.b16 %v774, %v772
  %v1057 = vpack.c.b16 %v777, %v775
  %v1058 = vpack.c.b16 %v778, %v776
  %v1059 = vpack.c.b16 %v781, %v779
  %v1060 = vpack.c.b16 %v782, %v780
  %v1061 = vpack.c.b16 %v785, %v783
  %v1062 = vpack.c.b16 %v786, %v784
  %v1063 = vpack.c.b16 %v789, %v787
  %v1064 = vpack.c.b16 %v790, %v788
  %v1065 = vpack.c.b16 %v793, %v791
  %v1066 = vpack.c.b16 %v794, %v792
  %v1067 = vpack.c.b16 %v797, %v795
  %v1068 = vpack.c.b16 %v798, %v796
  %v1069 = vpack.c.b16 %v801, %v799
  %v1070 = vpack.c.b16 %v802, %v800
  %v1071 = vpack.c.b16 %v805, %v803
  %v1072 = vpack.c.b16 %v806, %v804
  %v1073 = vpack.c.b16 %v809, %v807
  %v1074 = vpack.c.b16 %v810, %v808
  %v1075 = vpack.c.b16 %v813, %v811
  %v1076 = vpack.c.b16 %v814, %v812
  %v1077 = vpack.c.b16 %v817, %v815
  %v1078 = vpack.c.b16 %v818, %v816
  %v1079 = vpack.c.b16 %v821, %v819
  %v1080 = vpack.c.b16 %v822, %v820
  %v1081 = vpack.c.b16 %v825, %v823
  %v1082 = vpack.c.b16 %v826, %v824
  %v1083 = vpack.c.b16 %v829, %v827
  %v1084 = vpack.c.b16 %v830, %v828
  %v1085 = vpack.c.b16 %v833, %v831
  %v1086 = vpack.c.b16 %v834, %v832
  %v1087 = vpack.c.b16 %v837, %v835
  %v1088 = vpack.c.b16 %v838, %v836
  %v1089 = vpack.c.b16 %v841, %v839
  %v1090 = vpack.c.b16 %v842, %v840
  %v1091 = vpack.c.b16 %v845, %v843
  %v1092 = vpack.c.b16 %v846, %v844
  %v1093 = vpack.c.b16 %v849, %v847
  %v1094 = vpack.c.b16 %v850, %v848
  %v1095 = vpack.c.b16 %v853, %v851
  %v1096 = vpack.c.b16 %v854, %v852
  %v1097 = vpack.c.b16 %v857, %v855
  %v1098 = vpack.c.b16 %v858, %v856
  %v1099 = vpack.c.b16 %v861, %v859
  %v1100 = vpack.c.b16 %v862, %v860
  %v1101 = vpack.c.b16 %v865, %v863
  %v1102 = vpack.c.b16 %v866, %v864
  %v1103 = vpack.c.b16 %v869, %v867
  %v1104 = vpack.c.b16 %v870, %v868
  %v1105 = vpack.c.b16 %v873, %v871
  %v1106 = vpack.c.b16 %v874, %v872
  %v1107 = vpack.c.b16 %v877, %v875
  %v1108 = vpack.c.b16 %v878, %v876
  %v1109 = vpack.c.b16 %v881, %v879
  %v1110 = vpack.c.b16 %v882, %v880
  %v1111 = vpack.c.b16 %v885, %v883
  %v1112 = vpack.c.b16 %v886, %v884
  %v1113 = vpack.c.b16 %v889, %v887
  %v1114 = vpack.c.b16 %v890, %v888
  %v1115 = vpack.c.b16 %v893, %v891
  %v1116 = vpack.c.b16 %v894, %v892
  %v1117 = vpack.c.b16 %v897, %v895
  %v1118 = vpack.c.b16 %v898, %v896
  %v1119 = vpack.c.b16 %v901, %v899
  %v1120 = vpack.c.b16 %v902, %v900
  %v1121 = vpack.c.b16 %v905, %v903
  %v1122 = vpack.c.b16 %v906, %v904
  %v1123 = vpack.c.b16 %v909, %v907
  %v1124 = vpack.c.b16 %v910, %v908
  %v1125 = vpack.c.b16 %v913, %v911
  %v1126 = vpack.c.b16 %v914, %v912
  %v1127 = vpack.c.b16 %v917, %v915
  %v1128 = vpack.c.b16 %v918, %v916
  %v1129 = vpack.c.b16 %v921, %v919
  %v1130 = vpack.c.b16 %v922, %v920
  %v1131 = vpack.c.b16 %v925, %v923
  %v1132 = vpack.c.b16 %v926, %v924
  %v1133 = vpack.c.b16 %v929, %v927
  %v1134 = vpack.c.b16 %v930, %v928
  %v1135 = vpack.c.b16 %v933, %v931
  %v1136 = vpack.c.b16 %v934, %v932
  %v1137 = vpack.c.b16 %v937, %v935
  %v1138 = vpack.c.b16 %v938, %v936
  %v1139 = vpack.c.b16 %v941, %v939
  %v1140 = vpack.c.b16 %v942, %v940
  %v1141 = vpack.c.b16 %v945, %v943
  %v1142 = vpack.c.b16 %v946, %v944
  %v1143 = vpack.c.b16 %v949, %v947
  %v1144 = vpack.c.b16 %v950, %v948
  %v1145 = vpack.c.b16 %v953, %v951
  %v1146 = vpack.c.b16 %v954, %v952
  %v1147 = vpack.c.b16 %v957, %v955
  %v1148 = vpack.c.b16 %v958, %v956
  %v1149 = vpack.c.b16 %v961, %v959
  %v1150 = vpack.c.b16 %v962, %v960
  %v1151 = vpack.c.b16 %v965, %v963
  %v1152 = vpack.c.b16 %v966, %v964
  %v1153 = vpack.c.b16 %v969, %v967
  %v1154 = vpack.c.b16 %v970, %v968
  %v1155 = vpack.c.b16 %v973, %v971
  %v1156 = vpack.c.b16 %v974, %v972
  %v1157 = vpack.c.b16 %v977, %v975
  %v1158 = vpack.c.b16 %v978, %v976
  %v1159 = vpack.c.b16 %v981, %v979
  %v1160 = vpack.c.b16 %v982, %v980
  %v1161 = vpack.c.b16 %v985, %v983
  %v1162 = vpack.c.b16 %v986, %v984
  %v1163 = vpack.c.b16 %v989, %v987
  %v1164 = vpack.c.b16 %v990, %v988
  %v1165 = vpack.c.b16 %v993, %v991
  %v1166 = vpack.c.b16 %v994, %v992
  %v1167 = vpack.c.b16 %v997, %v995
  %v1168 = vpack.c.b16 %v998, %v996
  %v1169 = vpack.c.b16 %v1001, %v999
  %v1170 = vpack.c.b16 %v1002, %v1000
  %v1171 = vpack.c.b16 %v1005, %v1003
  %v1172 = vpack.c.b16 %v1006, %v1004
  %v1173 = vpack.c.b16 %v1009, %v1007
  %v1174 = vpack.c.b16 %v1010, %v1008
  %v1175 = vpack.c.b16 %v1013, %v1011
  %v1176 = vpack.c.b16 %v1014, %v1012
  %v1177 = vpack.c.b16 %v1017, %v1015
  %v1178 = vpack.c.b16 %v1018, %v1016
  %v1179 = vpack.c.b16 %v1021, %v1019
  %v1180 = vpack.c.b16 %v1022, %v1020
  %v1181 = vpack.c.b16 %v1025, %v1023
  %v1182 = vpack.c.b16 %v1026, %v1024
  %v1183 = vpack.c.b16 %v1029, %v1027
  %v1184 = vpack.c.b16 %v1030, %v1028
  %v1185 = vpack.c.b16 %v1033, %v1031
  %v1186 = vpack.c.b16 %v1034, %v1032
  %v1187 = vpack.c.b16 %v1037, %v1035
  %v1188 = vpack.c.b16 %v1038, %v1036
  %v1189 = vpack.c.b16 %v1041, %v1039
  %v1190 = vpack.c.b16 %v1042, %v1040
  %v1191 = vpack.c.b16 %v1045, %v1043
  %v1192 = vpack.c.b16 %v1046, %v1044
  %v1193 = vpack.c.b16 %v1049, %v1047
  %v1194 = vpack.c.b16 %v1050, %v1048
  %1339 = vmatprep.subr.bf16.mxu0 %v1052
  %1340 = vmatpush1.bf16.msra.mxu0 %v1051
  %1341 = vmatprep.subr.bf16.mxu0 %v1054
  %1342 = vmatpush1.bf16.msra.mxu0 %v1053
  %1343 = vmatprep.subr.bf16.mxu0 %v1056
  %1344 = vmatpush1.bf16.msra.mxu0 %v1055
  %1345 = vmatprep.subr.bf16.mxu0 %v1058
  %1346 = vmatpush1.bf16.msra.mxu0 %v1057
  %1347 = vmatprep.subr.bf16.mxu0 %v1060
  %1348 = vmatpush1.bf16.msra.mxu0 %v1059
  %1349 = vmatprep.subr.bf16.mxu0 %v1062
  %1350 = vmatpush1.bf16.msra.mxu0 %v1061
  %1351 = vmatprep.subr.bf16.mxu0 %v1064
  %1352 = vmatpush1.bf16.msra.mxu0 %v1063
  %1353 = vmatprep.subr.bf16.mxu0 %v1066
  %1354 = vmatpush1.bf16.msra.mxu0 %v1065
  %1355 = vmatprep.subr.bf16.mxu0 %v1068
  %1356 = vmatpush1.bf16.msra.mxu0 %v1067
  %1357 = vmatprep.subr.bf16.mxu0 %v1070
  %1358 = vmatpush1.bf16.msra.mxu0 %v1069
  %1359 = vmatprep.subr.bf16.mxu0 %v1072
  %1360 = vmatpush1.bf16.msra.mxu0 %v1071
  %1361 = vmatprep.subr.bf16.mxu0 %v1074
  %1362 = vmatpush1.bf16.msra.mxu0 %v1073
  %1363 = vmatprep.subr.bf16.mxu0 %v1076
  %1364 = vmatpush1.bf16.msra.mxu0 %v1075
  %1365 = vmatprep.subr.bf16.mxu0 %v1078
  %1366 = vmatpush1.bf16.msra.mxu0 %v1077
  %1367 = vmatprep.subr.bf16.mxu0 %v1080
  %1368 = vmatpush1.bf16.msra.mxu0 %v1079
  %1369 = vmatprep.subr.bf16.mxu0 %v1082
  %1370 = vmatpush1.bf16.msra.mxu0 %v1081
  %1371 = vmatprep.mubr.bf16.mxu0 %v476
  %1372 = vmatmul.mubr.bf16.gmra.mrb[0].mxu0 %v475
  %v1373 = vpop.f32.mrb[0].mxu0
  %v1374 = vadd.f32 %v244, %v1373
  %v1375 = vpop.f32.mrb[0].mxu0
  %v1376 = vadd.f32 %v248, %v1375
  %v1377 = vpop.f32.mrb[0].mxu0
  %v1378 = vadd.f32 %v244, %v1377
  %v1379 = vpop.f32.mrb[0].mxu0
  %v1380 = vadd.f32 %v248, %v1379
  %1381 = vmatprep.mubr.bf16.mxu0 %v485
  %1382 = vmatmul.mubr.bf16.gmra.mrb[0].mxu0 %v484
  %v1383 = vpop.f32.mrb[0].mxu0
  %v1384 = vadd.f32 %v244, %v1383
  %v1385 = vpop.f32.mrb[0].mxu0
  %v1386 = vadd.f32 %v248, %v1385
  %v1387 = vpop.f32.mrb[0].mxu0
  %v1388 = vadd.f32 %v244, %v1387
  %v1389 = vpop.f32.mrb[0].mxu0
  %v1390 = vadd.f32 %v248, %v1389
  %1391 = vmatprep.mubr.bf16.mxu0 %v494
  %1392 = vmatmul.mubr.bf16.gmra.mrb[0].mxu0 %v493
  %v1393 = vpop.f32.mrb[0].mxu0
  %v1394 = vadd.f32 %v244, %v1393
  %v1395 = vpop.f32.mrb[0].mxu0
  %v1396 = vadd.f32 %v248, %v1395
  %v1397 = vpop.f32.mrb[0].mxu0
  %v1398 = vadd.f32 %v244, %v1397
  %v1399 = vpop.f32.mrb[0].mxu0
  %v1400 = vadd.f32 %v248, %v1399
  %1401 = vmatprep.mubr.bf16.mxu0 %v503
  %1402 = vmatmul.mubr.bf16.gmra.mrb[0].mxu0 %v502
  %v1403 = vpop.f32.mrb[0].mxu0
  %v1404 = vadd.f32 %v244, %v1403
  %v1405 = vpop.f32.mrb[0].mxu0
  %v1406 = vadd.f32 %v248, %v1405
  %v1407 = vpop.f32.mrb[0].mxu0
  %v1408 = vadd.f32 %v244, %v1407
  %v1409 = vpop.f32.mrb[0].mxu0
  %v1410 = vadd.f32 %v248, %v1409
  %1411 = vmatprep.mubr.bf16.mxu0 %v512
  %1412 = vmatmul.mubr.bf16.gmra.mrb[0].mxu0 %v511
  %v1413 = vpop.f32.mrb[0].mxu0
  %v1414 = vadd.f32 %v244, %v1413
  %v1415 = vpop.f32.mrb[0].mxu0
  %v1416 = vadd.f32 %v248, %v1415
  %v1417 = vpop.f32.mrb[0].mxu0
  %v1418 = vadd.f32 %v244, %v1417
  %v1419 = vpop.f32.mrb[0].mxu0
  %v1420 = vadd.f32 %v248, %v1419
  %1421 = vmatprep.mubr.bf16.mxu0 %v521
  %1422 = vmatmul.mubr.bf16.gmra.mrb[0].mxu0 %v520
  %v1423 = vpop.f32.mrb[0].mxu0
  %v1424 = vadd.f32 %v244, %v1423
  %v1425 = vpop.f32.mrb[0].mxu0
  %v1426 = vadd.f32 %v248, %v1425
  %v1427 = vpop.f32.mrb[0].mxu0
  %v1428 = vadd.f32 %v244, %v1427
  %v1429 = vpop.f32.mrb[0].mxu0
  %v1430 = vadd.f32 %v248, %v1429
  %1431 = vmatprep.mubr.bf16.mxu0 %v530
  %1432 = vmatmul.mubr.bf16.gmra.mrb[0].mxu0 %v529
  %v1433 = vpop.f32.mrb[0].mxu0
  %v1434 = vadd.f32 %v244, %v1433
  %v1435 = vpop.f32.mrb[0].mxu0
  %v1436 = vadd.f32 %v248, %v1435
  %v1437 = vpop.f32.mrb[0].mxu0
  %v1438 = vadd.f32 %v244, %v1437
  %v1439 = vpop.f32.mrb[0].mxu0
  %v1440 = vadd.f32 %v248, %v1439
  %1441 = vmatprep.mubr.bf16.mxu0 %v539
  %1442 = vmatmul.mubr.bf16.gmra.mrb[0].mxu0 %v538
  %v1443 = vpop.f32.mrb[0].mxu0
  %v1444 = vadd.f32 %v244, %v1443
  %v1445 = vpop.f32.mrb[0].mxu0
  %v1446 = vadd.f32 %v248, %v1445
  %v1447 = vpop.f32.mrb[0].mxu0
  %v1448 = vadd.f32 %v244, %v1447
  %v1449 = vpop.f32.mrb[0].mxu0
  %v1450 = vadd.f32 %v248, %v1449
  %1451 = vdwg.mxu0
  %1452 = vmatprep.subr.bf16.mxu0 %v1084
  %1453 = vmatpush1.bf16.msra.mxu0 %v1083
  %1454 = vmatprep.subr.bf16.mxu0 %v1086
  %1455 = vmatpush1.bf16.msra.mxu0 %v1085
  %1456 = vmatprep.subr.bf16.mxu0 %v1088
  %1457 = vmatpush1.bf16.msra.mxu0 %v1087
  %1458 = vmatprep.subr.bf16.mxu0 %v1090
  %1459 = vmatpush1.bf16.msra.mxu0 %v1089
  %1460 = vmatprep.subr.bf16.mxu0 %v1092
  %1461 = vmatpush1.bf16.msra.mxu0 %v1091
  %1462 = vmatprep.subr.bf16.mxu0 %v1094
  %1463 = vmatpush1.bf16.msra.mxu0 %v1093
  %1464 = vmatprep.subr.bf16.mxu0 %v1096
  %1465 = vmatpush1.bf16.msra.mxu0 %v1095
  %1466 = vmatprep.subr.bf16.mxu0 %v1098
  %1467 = vmatpush1.bf16.msra.mxu0 %v1097
  %1468 = vmatprep.subr.bf16.mxu0 %v1100
  %1469 = vmatpush1.bf16.msra.mxu0 %v1099
  %1470 = vmatprep.subr.bf16.mxu0 %v1102
  %1471 = vmatpush1.bf16.msra.mxu0 %v1101
  %1472 = vmatprep.subr.bf16.mxu0 %v1104
  %1473 = vmatpush1.bf16.msra.mxu0 %v1103
  %1474 = vmatprep.subr.bf16.mxu0 %v1106
  %1475 = vmatpush1.bf16.msra.mxu0 %v1105
  %1476 = vmatprep.subr.bf16.mxu0 %v1108
  %1477 = vmatpush1.bf16.msra.mxu0 %v1107
  %1478 = vmatprep.subr.bf16.mxu0 %v1110
  %1479 = vmatpush1.bf16.msra.mxu0 %v1109
  %1480 = vmatprep.subr.bf16.mxu0 %v1112
  %1481 = vmatpush1.bf16.msra.mxu0 %v1111
  %1482 = vmatprep.subr.bf16.mxu0 %v1114
  %1483 = vmatpush1.bf16.msra.mxu0 %v1113
  %1484 = vmatprep.mubr.bf16.mxu0 %v478
  %1485 = vmatmul.mubr.bf16.gmra.mrb[0].mxu0 %v477
  %v1486 = vpop.f32.mrb[0].mxu0
  %v1487 = vadd.f32 %v1374, %v1486
  %v1488 = vpop.f32.mrb[0].mxu0
  %v1489 = vadd.f32 %v1376, %v1488
  %v1490 = vpop.f32.mrb[0].mxu0
  %v1491 = vadd.f32 %v1378, %v1490
  %v1492 = vpop.f32.mrb[0].mxu0
  %v1493 = vadd.f32 %v1380, %v1492
  %1494 = vmatprep.mubr.bf16.mxu0 %v487
  %1495 = vmatmul.mubr.bf16.gmra.mrb[0].mxu0 %v486
  %v1496 = vpop.f32.mrb[0].mxu0
  %v1497 = vadd.f32 %v1384, %v1496
  %v1498 = vpop.f32.mrb[0].mxu0
  %v1499 = vadd.f32 %v1386, %v1498
  %v1500 = vpop.f32.mrb[0].mxu0
  %v1501 = vadd.f32 %v1388, %v1500
  %v1502 = vpop.f32.mrb[0].mxu0
  %v1503 = vadd.f32 %v1390, %v1502
  %1504 = vmatprep.mubr.bf16.mxu0 %v496
  %1505 = vmatmul.mubr.bf16.gmra.mrb[0].mxu0 %v495
  %v1506 = vpop.f32.mrb[0].mxu0
  %v1507 = vadd.f32 %v1394, %v1506
  %v1508 = vpop.f32.mrb[0].mxu0
  %v1509 = vadd.f32 %v1396, %v1508
  %v1510 = vpop.f32.mrb[0].mxu0
  %v1511 = vadd.f32 %v1398, %v1510
  %v1512 = vpop.f32.mrb[0].mxu0
  %v1513 = vadd.f32 %v1400, %v1512
  %1514 = vmatprep.mubr.bf16.mxu0 %v505
  %1515 = vmatmul.mubr.bf16.gmra.mrb[0].mxu0 %v504
  %v1516 = vpop.f32.mrb[0].mxu0
  %v1517 = vadd.f32 %v1404, %v1516
  %v1518 = vpop.f32.mrb[0].mxu0
  %v1519 = vadd.f32 %v1406, %v1518
  %v1520 = vpop.f32.mrb[0].mxu0
  %v1521 = vadd.f32 %v1408, %v1520
  %v1522 = vpop.f32.mrb[0].mxu0
  %v1523 = vadd.f32 %v1410, %v1522
  %1524 = vmatprep.mubr.bf16.mxu0 %v514
  %1525 = vmatmul.mubr.bf16.gmra.mrb[0].mxu0 %v513
  %v1526 = vpop.f32.mrb[0].mxu0
  %v1527 = vadd.f32 %v1414, %v1526
  %v1528 = vpop.f32.mrb[0].mxu0
  %v1529 = vadd.f32 %v1416, %v1528
  %v1530 = vpop.f32.mrb[0].mxu0
  %v1531 = vadd.f32 %v1418, %v1530
  %v1532 = vpop.f32.mrb[0].mxu0
  %v1533 = vadd.f32 %v1420, %v1532
  %1534 = vmatprep.mubr.bf16.mxu0 %v523
  %1535 = vmatmul.mubr.bf16.gmra.mrb[0].mxu0 %v522
  %v1536 = vpop.f32.mrb[0].mxu0
  %v1537 = vadd.f32 %v1424, %v1536
  %v1538 = vpop.f32.mrb[0].mxu0
  %v1539 = vadd.f32 %v1426, %v1538
  %v1540 = vpop.f32.mrb[0].mxu0
  %v1541 = vadd.f32 %v1428, %v1540
  %v1542 = vpop.f32.mrb[0].mxu0
  %v1543 = vadd.f32 %v1430, %v1542
  %1544 = vmatprep.mubr.bf16.mxu0 %v532
  %1545 = vmatmul.mubr.bf16.gmra.mrb[0].mxu0 %v531
  %v1546 = vpop.f32.mrb[0].mxu0
  %v1547 = vadd.f32 %v1434, %v1546
  %v1548 = vpop.f32.mrb[0].mxu0
  %v1549 = vadd.f32 %v1436, %v1548
  %v1550 = vpop.f32.mrb[0].mxu0
  %v1551 = vadd.f32 %v1438, %v1550
  %v1552 = vpop.f32.mrb[0].mxu0
  %v1553 = vadd.f32 %v1440, %v1552
  %1554 = vmatprep.mubr.bf16.mxu0 %v541
  %1555 = vmatmul.mubr.bf16.gmra.mrb[0].mxu0 %v540
  %v1556 = vpop.f32.mrb[0].mxu0
  %v1557 = vadd.f32 %v1444, %v1556
  %v1558 = vpop.f32.mrb[0].mxu0
  %v1559 = vadd.f32 %v1446, %v1558
  %v1560 = vpop.f32.mrb[0].mxu0
  %v1561 = vadd.f32 %v1448, %v1560
  %v1562 = vpop.f32.mrb[0].mxu0
  %v1563 = vadd.f32 %v1450, %v1562
  %1564 = vdwg.mxu0
  %1565 = vmatprep.subr.bf16.mxu0 %v1116
  %1566 = vmatpush1.bf16.msra.mxu0 %v1115
  %1567 = vmatprep.subr.bf16.mxu0 %v1118
  %1568 = vmatpush1.bf16.msra.mxu0 %v1117
  %1569 = vmatprep.subr.bf16.mxu0 %v1120
  %1570 = vmatpush1.bf16.msra.mxu0 %v1119
  %1571 = vmatprep.subr.bf16.mxu0 %v1122
  %1572 = vmatpush1.bf16.msra.mxu0 %v1121
  %1573 = vmatprep.subr.bf16.mxu0 %v1124
  %1574 = vmatpush1.bf16.msra.mxu0 %v1123
  %1575 = vmatprep.subr.bf16.mxu0 %v1126
  %1576 = vmatpush1.bf16.msra.mxu0 %v1125
  %1577 = vmatprep.subr.bf16.mxu0 %v1128
  %1578 = vmatpush1.bf16.msra.mxu0 %v1127
  %1579 = vmatprep.subr.bf16.mxu0 %v1130
  %1580 = vmatpush1.bf16.msra.mxu0 %v1129
  %1581 = vmatprep.subr.bf16.mxu0 %v1132
  %1582 = vmatpush1.bf16.msra.mxu0 %v1131
  %1583 = vmatprep.subr.bf16.mxu0 %v1134
  %1584 = vmatpush1.bf16.msra.mxu0 %v1133
  %1585 = vmatprep.subr.bf16.mxu0 %v1136
  %1586 = vmatpush1.bf16.msra.mxu0 %v1135
  %1587 = vmatprep.subr.bf16.mxu0 %v1138
  %1588 = vmatpush1.bf16.msra.mxu0 %v1137
  %1589 = vmatprep.subr.bf16.mxu0 %v1140
  %1590 = vmatpush1.bf16.msra.mxu0 %v1139
  %1591 = vmatprep.subr.bf16.mxu0 %v1142
  %1592 = vmatpush1.bf16.msra.mxu0 %v1141
  %1593 = vmatprep.subr.bf16.mxu0 %v1144
  %1594 = vmatpush1.bf16.msra.mxu0 %v1143
  %1595 = vmatprep.subr.bf16.mxu0 %v1146
  %1596 = vmatpush1.bf16.msra.mxu0 %v1145
  %1597 = vmatprep.mubr.bf16.mxu0 %v480
  %1598 = vmatmul.mubr.bf16.gmra.mrb[0].mxu0 %v479
  %v1599 = vpop.f32.mrb[0].mxu0
  %v1600 = vadd.f32 %v1487, %v1599
  %v1601 = vpop.f32.mrb[0].mxu0
  %v1602 = vadd.f32 %v1489, %v1601
  %v1603 = vpop.f32.mrb[0].mxu0
  %v1604 = vadd.f32 %v1491, %v1603
  %v1605 = vpop.f32.mrb[0].mxu0
  %v1606 = vadd.f32 %v1493, %v1605
  %1607 = vmatprep.mubr.bf16.mxu0 %v489
  %1608 = vmatmul.mubr.bf16.gmra.mrb[0].mxu0 %v488
  %v1609 = vpop.f32.mrb[0].mxu0
  %v1610 = vadd.f32 %v1497, %v1609
  %v1611 = vpop.f32.mrb[0].mxu0
  %v1612 = vadd.f32 %v1499, %v1611
  %v1613 = vpop.f32.mrb[0].mxu0
  %v1614 = vadd.f32 %v1501, %v1613
  %v1615 = vpop.f32.mrb[0].mxu0
  %v1616 = vadd.f32 %v1503, %v1615
  %1617 = vmatprep.mubr.bf16.mxu0 %v498
  %1618 = vmatmul.mubr.bf16.gmra.mrb[0].mxu0 %v497
  %v1619 = vpop.f32.mrb[0].mxu0
  %v1620 = vadd.f32 %v1507, %v1619
  %v1621 = vpop.f32.mrb[0].mxu0
  %v1622 = vadd.f32 %v1509, %v1621
  %v1623 = vpop.f32.mrb[0].mxu0
  %v1624 = vadd.f32 %v1511, %v1623
  %v1625 = vpop.f32.mrb[0].mxu0
  %v1626 = vadd.f32 %v1513, %v1625
  %1627 = vmatprep.mubr.bf16.mxu0 %v507
  %1628 = vmatmul.mubr.bf16.gmra.mrb[0].mxu0 %v506
  %v1629 = vpop.f32.mrb[0].mxu0
  %v1630 = vadd.f32 %v1517, %v1629
  %v1631 = vpop.f32.mrb[0].mxu0
  %v1632 = vadd.f32 %v1519, %v1631
  %v1633 = vpop.f32.mrb[0].mxu0
  %v1634 = vadd.f32 %v1521, %v1633
  %v1635 = vpop.f32.mrb[0].mxu0
  %v1636 = vadd.f32 %v1523, %v1635
  %1637 = vmatprep.mubr.bf16.mxu0 %v516
  %1638 = vmatmul.mubr.bf16.gmra.mrb[0].mxu0 %v515
  %v1639 = vpop.f32.mrb[0].mxu0
  %v1640 = vadd.f32 %v1527, %v1639
  %v1641 = vpop.f32.mrb[0].mxu0
  %v1642 = vadd.f32 %v1529, %v1641
  %v1643 = vpop.f32.mrb[0].mxu0
  %v1644 = vadd.f32 %v1531, %v1643
  %v1645 = vpop.f32.mrb[0].mxu0
  %v1646 = vadd.f32 %v1533, %v1645
  %1647 = vmatprep.mubr.bf16.mxu0 %v525
  %1648 = vmatmul.mubr.bf16.gmra.mrb[0].mxu0 %v524
  %v1649 = vpop.f32.mrb[0].mxu0
  %v1650 = vadd.f32 %v1537, %v1649
  %v1651 = vpop.f32.mrb[0].mxu0
  %v1652 = vadd.f32 %v1539, %v1651
  %v1653 = vpop.f32.mrb[0].mxu0
  %v1654 = vadd.f32 %v1541, %v1653
  %v1655 = vpop.f32.mrb[0].mxu0
  %v1656 = vadd.f32 %v1543, %v1655
  %1657 = vmatprep.mubr.bf16.mxu0 %v534
  %1658 = vmatmul.mubr.bf16.gmra.mrb[0].mxu0 %v533
  %v1659 = vpop.f32.mrb[0].mxu0
  %v1660 = vadd.f32 %v1547, %v1659
  %v1661 = vpop.f32.mrb[0].mxu0
  %v1662 = vadd.f32 %v1549, %v1661
  %v1663 = vpop.f32.mrb[0].mxu0
  %v1664 = vadd.f32 %v1551, %v1663
  %v1665 = vpop.f32.mrb[0].mxu0
  %v1666 = vadd.f32 %v1553, %v1665
  %1667 = vmatprep.mubr.bf16.mxu0 %v543
  %1668 = vmatmul.mubr.bf16.gmra.mrb[0].mxu0 %v542
  %v1669 = vpop.f32.mrb[0].mxu0
  %v1670 = vadd.f32 %v1557, %v1669
  %v1671 = vpop.f32.mrb[0].mxu0
  %v1672 = vadd.f32 %v1559, %v1671
  %v1673 = vpop.f32.mrb[0].mxu0
  %v1674 = vadd.f32 %v1561, %v1673
  %v1675 = vpop.f32.mrb[0].mxu0
  %v1676 = vadd.f32 %v1563, %v1675
  %1677 = vdwg.mxu0
  %1678 = vmatprep.subr.bf16.mxu0 %v1148
  %1679 = vmatpush1.bf16.msra.mxu0 %v1147
  %1680 = vmatprep.subr.bf16.mxu0 %v1150
  %1681 = vmatpush1.bf16.msra.mxu0 %v1149
  %1682 = vmatprep.subr.bf16.mxu0 %v1152
  %1683 = vmatpush1.bf16.msra.mxu0 %v1151
  %1684 = vmatprep.subr.bf16.mxu0 %v1154
  %1685 = vmatpush1.bf16.msra.mxu0 %v1153
  %1686 = vmatprep.subr.bf16.mxu0 %v1156
  %1687 = vmatpush1.bf16.msra.mxu0 %v1155
  %1688 = vmatprep.subr.bf16.mxu0 %v1158
  %1689 = vmatpush1.bf16.msra.mxu0 %v1157
  %1690 = vmatprep.subr.bf16.mxu0 %v1160
  %1691 = vmatpush1.bf16.msra.mxu0 %v1159
  %1692 = vmatprep.subr.bf16.mxu0 %v1162
  %1693 = vmatpush1.bf16.msra.mxu0 %v1161
  %1694 = vmatprep.subr.bf16.mxu0 %v1164
  %1695 = vmatpush1.bf16.msra.mxu0 %v1163
  %1696 = vmatprep.subr.bf16.mxu0 %v1166
  %1697 = vmatpush1.bf16.msra.mxu0 %v1165
  %1698 = vmatprep.subr.bf16.mxu0 %v1168
  %1699 = vmatpush1.bf16.msra.mxu0 %v1167
  %1700 = vmatprep.subr.bf16.mxu0 %v1170
  %1701 = vmatpush1.bf16.msra.mxu0 %v1169
  %1702 = vmatprep.subr.bf16.mxu0 %v1172
  %1703 = vmatpush1.bf16.msra.mxu0 %v1171
  %1704 = vmatprep.subr.bf16.mxu0 %v1174
  %1705 = vmatpush1.bf16.msra.mxu0 %v1173
  %1706 = vmatprep.subr.bf16.mxu0 %v1176
  %1707 = vmatpush1.bf16.msra.mxu0 %v1175
  %1708 = vmatprep.subr.bf16.mxu0 %v1178
  %1709 = vmatpush1.bf16.msra.mxu0 %v1177
  %1710 = vmatprep.mubr.bf16.mxu0 %v482
  %1711 = vmatmul.mubr.bf16.gmra.mrb[0].mxu0 %v481
  %v1712 = vpop.f32.mrb[0].mxu0
  %v1713 = vadd.f32 %v1600, %v1712
  %v1714 = vpop.f32.mrb[0].mxu0
  %v1715 = vadd.f32 %v1602, %v1714
  %v1716 = vpop.f32.mrb[0].mxu0
  %v1717 = vadd.f32 %v1604, %v1716
  %v1718 = vpop.f32.mrb[0].mxu0
  %v1719 = vadd.f32 %v1606, %v1718
  %1720 = vmatprep.mubr.bf16.mxu0 %v491
  %1721 = vmatmul.mubr.bf16.gmra.mrb[0].mxu0 %v490
  %v1722 = vpop.f32.mrb[0].mxu0
  %v1723 = vadd.f32 %v1610, %v1722
  %v1724 = vpop.f32.mrb[0].mxu0
  %v1725 = vadd.f32 %v1612, %v1724
  %v1726 = vpop.f32.mrb[0].mxu0
  %v1727 = vadd.f32 %v1614, %v1726
  %v1728 = vpop.f32.mrb[0].mxu0
  %v1729 = vadd.f32 %v1616, %v1728
  %1730 = vmatprep.mubr.bf16.mxu0 %v500
  %1731 = vmatmul.mubr.bf16.gmra.mrb[0].mxu0 %v499
  %v1732 = vpop.f32.mrb[0].mxu0
  %v1733 = vadd.f32 %v1620, %v1732
  %v1734 = vpop.f32.mrb[0].mxu0
  %v1735 = vadd.f32 %v1622, %v1734
  %v1736 = vpop.f32.mrb[0].mxu0
  %v1737 = vadd.f32 %v1624, %v1736
  %v1738 = vpop.f32.mrb[0].mxu0
  %v1739 = vadd.f32 %v1626, %v1738
  %1740 = vmatprep.mubr.bf16.mxu0 %v509
  %1741 = vmatmul.mubr.bf16.gmra.mrb[0].mxu0 %v508
  %v1742 = vpop.f32.mrb[0].mxu0
  %v1743 = vadd.f32 %v1630, %v1742
  %v1744 = vpop.f32.mrb[0].mxu0
  %v1745 = vadd.f32 %v1632, %v1744
  %v1746 = vpop.f32.mrb[0].mxu0
  %v1747 = vadd.f32 %v1634, %v1746
  %v1748 = vpop.f32.mrb[0].mxu0
  %v1749 = vadd.f32 %v1636, %v1748
  %1750 = vmatprep.mubr.bf16.mxu0 %v518
  %1751 = vmatmul.mubr.bf16.gmra.mrb[0].mxu0 %v517
  %v1752 = vpop.f32.mrb[0].mxu0
  %v1753 = vadd.f32 %v1640, %v1752
  %v1754 = vpop.f32.mrb[0].mxu0
  %v1755 = vadd.f32 %v1642, %v1754
  %v1756 = vpop.f32.mrb[0].mxu0
  %v1757 = vadd.f32 %v1644, %v1756
  %v1758 = vpop.f32.mrb[0].mxu0
  %v1759 = vadd.f32 %v1646, %v1758
  %1760 = vmatprep.mubr.bf16.mxu0 %v527
  %1761 = vmatmul.mubr.bf16.gmra.mrb[0].mxu0 %v526
  %v1762 = vpop.f32.mrb[0].mxu0
  %v1763 = vadd.f32 %v1650, %v1762
  %v1764 = vpop.f32.mrb[0].mxu0
  %v1765 = vadd.f32 %v1652, %v1764
  %v1766 = vpop.f32.mrb[0].mxu0
  %v1767 = vadd.f32 %v1654, %v1766
  %v1768 = vpop.f32.mrb[0].mxu0
  %v1769 = vadd.f32 %v1656, %v1768
  %1770 = vmatprep.mubr.bf16.mxu0 %v536
  %1771 = vmatmul.mubr.bf16.gmra.mrb[0].mxu0 %v535
  %v1772 = vpop.f32.mrb[0].mxu0
  %v1773 = vadd.f32 %v1660, %v1772
  %v1774 = vpop.f32.mrb[0].mxu0
  %v1775 = vadd.f32 %v1662, %v1774
  %v1776 = vpop.f32.mrb[0].mxu0
  %v1777 = vadd.f32 %v1664, %v1776
  %v1778 = vpop.f32.mrb[0].mxu0
  %v1779 = vadd.f32 %v1666, %v1778
  %1780 = vmatprep.mubr.bf16.mxu0 %v545
  %1781 = vmatmul.mubr.bf16.gmra.mrb[0].mxu0 %v544
  %v1782 = vpop.f32.mrb[0].mxu0
  %v1783 = vadd.f32 %v1670, %v1782
  %v1784 = vpop.f32.mrb[0].mxu0
  %v1785 = vadd.f32 %v1672, %v1784
  %v1786 = vpop.f32.mrb[0].mxu0
  %v1787 = vadd.f32 %v1674, %v1786
  %v1788 = vpop.f32.mrb[0].mxu0
  %v1789 = vadd.f32 %v1676, %v1788
  %1790 = vdwg.mxu0
  %1791 = vmatprep.subr.bf16.mxu0 %v1180
  %1792 = vmatpush1.bf16.msra.mxu0 %v1179
  %1793 = vmatprep.subr.bf16.mxu0 %v1182
  %1794 = vmatpush1.bf16.msra.mxu0 %v1181
  %1795 = vmatprep.subr.bf16.mxu0 %v1184
  %1796 = vmatpush1.bf16.msra.mxu0 %v1183
  %1797 = vmatprep.subr.bf16.mxu0 %v1186
  %1798 = vmatpush1.bf16.msra.mxu0 %v1185
  %1799 = vmatprep.subr.bf16.mxu0 %v1188
  %1800 = vmatpush1.bf16.msra.mxu0 %v1187
  %1801 = vmatprep.subr.bf16.mxu0 %v1190
  %1802 = vmatpush1.bf16.msra.mxu0 %v1189
  %1803 = vmatprep.subr.bf16.mxu0 %v1192
  %1804 = vmatpush1.bf16.msra.mxu0 %v1191
  %1805 = vmatprep.subr.bf16.mxu0 %v1194
  %1806 = vmatpush1.bf16.msra.mxu0 %v1193
  %1807 = vmatprep.subr.bf16.mxu0 0
  %1808 = vmatpush1.bf16.msra.mxu0 0
  %1809 = vmatprep.subr.bf16.mxu0 0
  %1810 = vmatpush1.bf16.msra.mxu0 0
  %1811 = vmatprep.subr.bf16.mxu0 0
  %1812 = vmatpush1.bf16.msra.mxu0 0
  %1813 = vmatprep.subr.bf16.mxu0 0
  %1814 = vmatpush1.bf16.msra.mxu0 0
  %1815 = vmatprep.subr.bf16.mxu0 0
  %1816 = vmatpush1.bf16.msra.mxu0 0
  %1817 = vmatprep.subr.bf16.mxu0 0
  %1818 = vmatpush1.bf16.msra.mxu0 0
  %1819 = vmatprep.subr.bf16.mxu0 0
  %1820 = vmatpush1.bf16.msra.mxu0 0
  %1821 = vmatprep.subr.bf16.mxu0 0
  %1822 = vmatpush1.bf16.msra.mxu0 0
  %1823 = vmatprep.mubr.bf16.mxu0 0
  %1824 = vmatmul.mubr.bf16.gmra.mrb[0].mxu0 %v483
  %v1825 = vpop.f32.mrb[0].mxu0
  %v1826 = vadd.f32 %v1713, %v1825
  %v1827 = vpop.f32.mrb[0].mxu0
  %v1828 = vadd.f32 %v1715, %v1827
  %v1829 = vpop.f32.mrb[0].mxu0
  %v1830 = vadd.f32 %v1717, %v1829
  %v1831 = vpop.f32.mrb[0].mxu0
  %v1832 = vadd.f32 %v1719, %v1831
  %1833 = vmatprep.mubr.bf16.mxu0 0
  %1834 = vmatmul.mubr.bf16.gmra.mrb[0].mxu0 %v492
  %v1835 = vpop.f32.mrb[0].mxu0
  %v1836 = vadd.f32 %v1723, %v1835
  %v1837 = vpop.f32.mrb[0].mxu0
  %v1838 = vadd.f32 %v1725, %v1837
  %v1839 = vpop.f32.mrb[0].mxu0
  %v1840 = vadd.f32 %v1727, %v1839
  %v1841 = vpop.f32.mrb[0].mxu0
  %v1842 = vadd.f32 %v1729, %v1841
  %1843 = vmatprep.mubr.bf16.mxu0 0
  %1844 = vmatmul.mubr.bf16.gmra.mrb[0].mxu0 %v501
  %v1845 = vpop.f32.mrb[0].mxu0
  %v1846 = vadd.f32 %v1733, %v1845
  %v1847 = vpop.f32.mrb[0].mxu0
  %v1848 = vadd.f32 %v1735, %v1847
  %v1849 = vpop.f32.mrb[0].mxu0
  %v1850 = vadd.f32 %v1737, %v1849
  %v1851 = vpop.f32.mrb[0].mxu0
  %v1852 = vadd.f32 %v1739, %v1851
  %1853 = vmatprep.mubr.bf16.mxu0 0
  %1854 = vmatmul.mubr.bf16.gmra.mrb[0].mxu0 %v510
  %v1855 = vpop.f32.mrb[0].mxu0
  %v1856 = vadd.f32 %v1743, %v1855
  %v1857 = vpop.f32.mrb[0].mxu0
  %v1858 = vadd.f32 %v1745, %v1857
  %v1859 = vpop.f32.mrb[0].mxu0
  %v1860 = vadd.f32 %v1747, %v1859
  %v1861 = vpop.f32.mrb[0].mxu0
  %v1862 = vadd.f32 %v1749, %v1861
  %1863 = vmatprep.mubr.bf16.mxu0 0
  %1864 = vmatmul.mubr.bf16.gmra.mrb[0].mxu0 %v519
  %v1865 = vpop.f32.mrb[0].mxu0
  %v1866 = vadd.f32 %v1753, %v1865
  %v1867 = vpop.f32.mrb[0].mxu0
  %v1868 = vadd.f32 %v1755, %v1867
  %v1869 = vpop.f32.mrb[0].mxu0
  %v1870 = vadd.f32 %v1757, %v1869
  %v1871 = vpop.f32.mrb[0].mxu0
  %v1872 = vadd.f32 %v1759, %v1871
  %1873 = vmatprep.mubr.bf16.mxu0 0
  %1874 = vmatmul.mubr.bf16.gmra.mrb[0].mxu0 %v528
  %v1875 = vpop.f32.mrb[0].mxu0
  %v1876 = vadd.f32 %v1763, %v1875
  %v1877 = vpop.f32.mrb[0].mxu0
  %v1878 = vadd.f32 %v1765, %v1877
  %v1879 = vpop.f32.mrb[0].mxu0
  %v1880 = vadd.f32 %v1767, %v1879
  %v1881 = vpop.f32.mrb[0].mxu0
  %v1882 = vadd.f32 %v1769, %v1881
  %1883 = vmatprep.mubr.bf16.mxu0 0
  %1884 = vmatmul.mubr.bf16.gmra.mrb[0].mxu0 %v537
  %v1885 = vpop.f32.mrb[0].mxu0
  %v1886 = vadd.f32 %v1773, %v1885
  %v1887 = vpop.f32.mrb[0].mxu0
  %v1888 = vadd.f32 %v1775, %v1887
  %v1889 = vpop.f32.mrb[0].mxu0
  %v1890 = vadd.f32 %v1777, %v1889
  %v1891 = vpop.f32.mrb[0].mxu0
  %v1892 = vadd.f32 %v1779, %v1891
  %1893 = vmatprep.mubr.bf16.mxu0 0
  %1894 = vmatmul.mubr.bf16.gmra.mrb[0].mxu0 %v546
  %v1895 = vpop.f32.mrb[0].mxu0
  %v1896 = vadd.f32 %v1783, %v1895
  %v1897 = vpop.f32.mrb[0].mxu0
  %v1898 = vadd.f32 %v1785, %v1897
  %v1899 = vpop.f32.mrb[0].mxu0
  %v1900 = vadd.f32 %v1787, %v1899
  %v1901 = vpop.f32.mrb[0].mxu0
  %v1902 = vadd.f32 %v1789, %v1901
  %1903 = vdwg.mxu0
  %v1904 = vpack.c.bf16 %v1830, %v1826
  %v1905 = vpack.c.bf16 %v1832, %v1828
  %v1906 = vpack.c.bf16 %v1840, %v1836
  %v1907 = vpack.c.bf16 %v1842, %v1838
  %v1908 = vpack.c.bf16 %v1850, %v1846
  %v1909 = vpack.c.bf16 %v1852, %v1848
  %v1910 = vpack.c.bf16 %v1860, %v1856
  %v1911 = vpack.c.bf16 %v1862, %v1858
  %v1912 = vpack.c.bf16 %v1870, %v1866
  %v1913 = vpack.c.bf16 %v1872, %v1868
  %v1914 = vpack.c.bf16 %v1880, %v1876
  %v1915 = vpack.c.bf16 %v1882, %v1878
  %v1916 = vpack.c.bf16 %v1890, %v1886
  %v1917 = vpack.c.bf16 %v1892, %v1888
  %v1918 = vpack.c.bf16 %v1900, %v1896
  %v1919 = vpack.c.bf16 %v1902, %v1898
  %v1936 = vunpack.c.l.b16 %v1904
  %v1937 = vunpack.c.l.b16 %v1905
  %v1938 = vunpack.c.h.b16 %v1904
  %v1939 = vunpack.c.h.b16 %v1905
  %v1940 = vunpack.c.l.b16 %v1906
  %v1941 = vunpack.c.l.b16 %v1907
  %v1942 = vunpack.c.h.b16 %v1906
  %v1943 = vunpack.c.h.b16 %v1907
  %v1944 = vunpack.c.l.b16 %v1908
  %v1945 = vunpack.c.l.b16 %v1909
  %v1946 = vunpack.c.h.b16 %v1908
  %v1947 = vunpack.c.h.b16 %v1909
  %v1948 = vunpack.c.l.b16 %v1910
  %v1949 = vunpack.c.l.b16 %v1911
  %v1950 = vunpack.c.h.b16 %v1910
  %v1951 = vunpack.c.h.b16 %v1911
  %v1952 = vunpack.c.l.b16 %v1912
  %v1953 = vunpack.c.l.b16 %v1913
  %v1954 = vunpack.c.h.b16 %v1912
  %v1955 = vunpack.c.h.b16 %v1913
  %v1956 = vunpack.c.l.b16 %v1914
  %v1957 = vunpack.c.l.b16 %v1915
  %v1958 = vunpack.c.h.b16 %v1914
  %v1959 = vunpack.c.h.b16 %v1915
  %v1960 = vunpack.c.l.b16 %v1916
  %v1961 = vunpack.c.l.b16 %v1917
  %v1962 = vunpack.c.h.b16 %v1916
  %v1963 = vunpack.c.h.b16 %v1917
  %v1964 = vunpack.c.l.b16 %v1918
  %v1965 = vunpack.c.l.b16 %v1919
  %v1966 = vunpack.c.h.b16 %v1918
  %v1967 = vunpack.c.h.b16 %v1919
  %v1968 = vpack.c.b16 %v1937, %v1936
  %v1969 = vpack.c.b16 %v1939, %v1938
  %v1970 = vpack.c.b16 %v1941, %v1940
  %v1971 = vpack.c.b16 %v1943, %v1942
  %v1972 = vpack.c.b16 %v1945, %v1944
  %v1973 = vpack.c.b16 %v1947, %v1946
  %v1974 = vpack.c.b16 %v1949, %v1948
  %v1975 = vpack.c.b16 %v1951, %v1950
  %v1976 = vpack.c.b16 %v1953, %v1952
  %v1977 = vpack.c.b16 %v1955, %v1954
  %v1978 = vpack.c.b16 %v1957, %v1956
  %v1979 = vpack.c.b16 %v1959, %v1958
  %v1980 = vpack.c.b16 %v1961, %v1960
  %v1981 = vpack.c.b16 %v1963, %v1962
  %v1982 = vpack.c.b16 %v1965, %v1964
  %v1983 = vpack.c.b16 %v1967, %v1966
  %2000 = vst [vmem:[%s3] sm:$0xff] %v1968
  %2001 = vst [vmem:[%s3 + $0x8] sm:$0xff] %v1969
  %2002 = vst [vmem:[%s3 + $0x10] sm:$0xff] %v1970
  %2003 = vst [vmem:[%s3 + $0x18] sm:$0xff] %v1971
  %2004 = vst [vmem:[%s3 + $0x20] sm:$0xff] %v1972
  %2005 = vst [vmem:[%s3 + $0x28] sm:$0xff] %v1973
  %2006 = vst [vmem:[%s3 + $0x30] sm:$0xff] %v1974
  %2007 = vst [vmem:[%s3 + $0x38] sm:$0xff] %v1975
  %2008 = vst [vmem:[%s3 + $0x40] sm:$0xff] %v1976
  %2009 = vst [vmem:[%s3 + $0x48] sm:$0xff] %v1977
  %2010 = vst [vmem:[%s3 + $0x50] sm:$0xff] %v1978
  %2011 = vst [vmem:[%s3 + $0x58] sm:$0xff] %v1979
  %2012 = vst [vmem:[%s3 + $0x60] sm:$0xff] %v1980
  %2013 = vst [vmem:[%s3 + $0x68] sm:$0xff] %v1981
  %2014 = vst [vmem:[%s3 + $0x70] sm:$0xff] %v1982
  %2015 = vst [vmem:[%s3 + $0x78] sm:$0xff] %v1983
  // Predicated region
  $region14: #{generator_forward.49} parent=0 // pred_check
    _
  $region15: #{generator_forward.49} parent=0 // pred_check_branch
    %2017 = sbr.rel (0) target = $region17
  $region16: #{generator_forward.49} parent=0 // pred_region
    _
  $region17: #{generator_forward.49} parent=0 // pred_fallthru
    _
  // Predicated region
  $region18: #{generator_forward.49} parent=0 // pred_check
    _
  $region19: #{generator_forward.49} parent=0 // pred_check_branch
    %2019 = sbr.rel (0) target = $region21
  $region20: #{generator_forward.49} parent=0 // pred_region
    _
  $region21: #{generator_forward.49} parent=0 // pred_fallthru
    _

// kernel: generator_forward.52
$region0: #{generator_forward.52}
  #allocation0 [shape = 'u32[]', space=smem, size = 0x4, offset = 0x4, fixed_abs, tag = 'smem constant byte address 0x4 - core index']
  #allocation1 [shape = 'u32[144,128]{1,0:T(1,128)}', space=vmem, size = 0x12000, scoped, tag = 'internal scratch']
  %s0 = inlined_call_operand.vmem [shape: bf16[128,576], index: 0, kind: input, shape index: {}]
  %s1 = inlined_call_operand.vmem [shape: bf16[576,128], index: 1, kind: input, shape index: {}]
  %s2 = inlined_call_operand.vmem [shape: f32[1,128], index: 2, kind: input, shape index: {}]
  %s3 = inlined_call_operand.vmem [shape: bf16[128,128], index: 3, kind: output, shape index: {}]
  %s4 = sld [smem:[#allocation0]]
  $region22: #{generator_forward.52} parent=0
    _
  %s6 = ssub.s32 1, %s4
  %s7 = scalar_select 0, %s6, %s4
  // Predicated region
  $region2: #{generator_forward.52} parent=0 // pred_check
    _
  $region3: #{generator_forward.52} parent=0 // pred_check_branch
    %9 = sbr.rel (0) target = $region5
  $region4: #{generator_forward.52} parent=0 // pred_region
    _
  $region5: #{generator_forward.52} parent=0 // pred_fallthru
    _
  // Predicated region
  $region6: #{generator_forward.52} parent=0 // pred_check
    _
  $region7: #{generator_forward.52} parent=0 // pred_check_branch
    %11 = sbr.rel (0) target = $region9
  $region8: #{generator_forward.52} parent=0 // pred_region
    _
  $region9: #{generator_forward.52} parent=0 // pred_fallthru
    _
  // Predicated region
  $region10: #{generator_forward.52} parent=0 // pred_check
    _
  $region11: #{generator_forward.52} parent=0 // pred_check_branch
    %13 = sbr.rel (0) target = $region13
  $region12: #{generator_forward.52} parent=0 // pred_region
    _
  $region13: #{generator_forward.52} parent=0 // pred_fallthru
    _
  %v15 = vld [vmem:[%s0] sm:$0xff]
  %v16 = vld [vmem:[%s0 + $0x8] sm:$0xff]
  %v17 = vld [vmem:[%s0 + $0x10] sm:$0xf]
  %v18 = vld [vmem:[%s0 + $0x14] sm:$0xff]
  %v19 = vld [vmem:[%s0 + $0x1c] sm:$0xff]
  %v20 = vld [vmem:[%s0 + $0x24] sm:$0xf]
  %v21 = vld [vmem:[%s0 + $0x28] sm:$0xff]
  %v22 = vld [vmem:[%s0 + $0x30] sm:$0xff]
  %v23 = vld [vmem:[%s0 + $0x38] sm:$0xf]
  %v24 = vld [vmem:[%s0 + $0x3c] sm:$0xff]
  %v25 = vld [vmem:[%s0 + $0x44] sm:$0xff]
  %v26 = vld [vmem:[%s0 + $0x4c] sm:$0xf]
  %v27 = vld [vmem:[%s0 + $0x50] sm:$0xff]
  %v28 = vld [vmem:[%s0 + $0x58] sm:$0xff]
  %v29 = vld [vmem:[%s0 + $0x60] sm:$0xf]
  %v30 = vld [vmem:[%s0 + $0x64] sm:$0xff]
  %v31 = vld [vmem:[%s0 + $0x6c] sm:$0xff]
  %v32 = vld [vmem:[%s0 + $0x74] sm:$0xf]
  %v33 = vld [vmem:[%s0 + $0x78] sm:$0xff]
  %v34 = vld [vmem:[%s0 + $0x80] sm:$0xff]
  %v35 = vld [vmem:[%s0 + $0x88] sm:$0xf]
  %v36 = vld [vmem:[%s0 + $0x8c] sm:$0xff]
  %v37 = vld [vmem:[%s0 + $0x94] sm:$0xff]
  %v38 = vld [vmem:[%s0 + $0x9c] sm:$0xf]
  %v39 = vld [vmem:[%s0 + $0xa0] sm:$0xff]
  %v40 = vld [vmem:[%s0 + $0xa8] sm:$0xff]
  %v41 = vld [vmem:[%s0 + $0xb0] sm:$0xf]
  %v42 = vld [vmem:[%s0 + $0xb4] sm:$0xff]
  %v43 = vld [vmem:[%s0 + $0xbc] sm:$0xff]
  %v44 = vld [vmem:[%s0 + $0xc4] sm:$0xf]
  %v45 = vld [vmem:[%s0 + $0xc8] sm:$0xff]
  %v46 = vld [vmem:[%s0 + $0xd0] sm:$0xff]
  %v47 = vld [vmem:[%s0 + $0xd8] sm:$0xf]
  %v48 = vld [vmem:[%s0 + $0xdc] sm:$0xff]
  %v49 = vld [vmem:[%s0 + $0xe4] sm:$0xff]
  %v50 = vld [vmem:[%s0 + $0xec] sm:$0xf]
  %v51 = vld [vmem:[%s0 + $0xf0] sm:$0xff]
  %v52 = vld [vmem:[%s0 + $0xf8] sm:$0xff]
  %v53 = vld [vmem:[%s0 + $0x100] sm:$0xf]
  %v54 = vld [vmem:[%s0 + $0x104] sm:$0xff]
  %v55 = vld [vmem:[%s0 + $0x10c] sm:$0xff]
  %v56 = vld [vmem:[%s0 + $0x114] sm:$0xf]
  %v57 = vld [vmem:[%s0 + $0x118] sm:$0xff]
  %v58 = vld [vmem:[%s0 + $0x120] sm:$0xff]
  %v59 = vld [vmem:[%s0 + $0x128] sm:$0xf]
  %v60 = vld [vmem:[%s0 + $0x12c] sm:$0xff]
  %v61 = vld [vmem:[%s0 + $0x134] sm:$0xff]
  %v62 = vld [vmem:[%s0 + $0x13c] sm:$0xf]
  %v63 = vld [vmem:[%s1] sm:$0xf]
  %v64 = vld [vmem:[%s1 + $0x4] sm:$0xf]
  %v65 = vld [vmem:[%s1 + $0x8] sm:$0xf]
  %v66 = vld [vmem:[%s1 + $0xc] sm:$0xf]
  %v67 = vld [vmem:[%s1 + $0x10] sm:$0xf]
  %v68 = vld [vmem:[%s1 + $0x14] sm:$0xf]
  %v69 = vld [vmem:[%s1 + $0x18] sm:$0xf]
  %v70 = vld [vmem:[%s1 + $0x1c] sm:$0xf]
  %v71 = vld [vmem:[%s1 + $0x20] sm:$0xf]
  %v72 = vld [vmem:[%s1 + $0x24] sm:$0xf]
  %v73 = vld [vmem:[%s1 + $0x28] sm:$0xf]
  %v74 = vld [vmem:[%s1 + $0x2c] sm:$0xf]
  %v75 = vld [vmem:[%s1 + $0x30] sm:$0xf]
  %v76 = vld [vmem:[%s1 + $0x34] sm:$0xf]
  %v77 = vld [vmem:[%s1 + $0x38] sm:$0xf]
  %v78 = vld [vmem:[%s1 + $0x3c] sm:$0xf]
  %v79 = vld [vmem:[%s1 + $0x40] sm:$0xf]
  %v80 = vld [vmem:[%s1 + $0x44] sm:$0xf]
  %v81 = vld [vmem:[%s1 + $0x48] sm:$0xf]
  %v82 = vld [vmem:[%s1 + $0x4c] sm:$0xf]
  %v83 = vld [vmem:[%s1 + $0x50] sm:$0xf]
  %v84 = vld [vmem:[%s1 + $0x54] sm:$0xf]
  %v85 = vld [vmem:[%s1 + $0x58] sm:$0xf]
  %v86 = vld [vmem:[%s1 + $0x5c] sm:$0xf]
  %v87 = vld [vmem:[%s1 + $0x60] sm:$0xf]
  %v88 = vld [vmem:[%s1 + $0x64] sm:$0xf]
  %v89 = vld [vmem:[%s1 + $0x68] sm:$0xf]
  %v90 = vld [vmem:[%s1 + $0x6c] sm:$0xf]
  %v91 = vld [vmem:[%s1 + $0x70] sm:$0xf]
  %v92 = vld [vmem:[%s1 + $0x74] sm:$0xf]
  %v93 = vld [vmem:[%s1 + $0x78] sm:$0xf]
  %v94 = vld [vmem:[%s1 + $0x7c] sm:$0xf]
  %v95 = vld [vmem:[%s1 + $0x80] sm:$0xf]
  %v96 = vld [vmem:[%s1 + $0x84] sm:$0xf]
  %v97 = vld [vmem:[%s1 + $0x88] sm:$0xf]
  %v98 = vld [vmem:[%s1 + $0x8c] sm:$0xf]
  %v99 = vld [vmem:[%s1 + $0x90] sm:$0xf]
  %v100 = vld [vmem:[%s1 + $0x94] sm:$0xf]
  %v101 = vld [vmem:[%s1 + $0x98] sm:$0xf]
  %v102 = vld [vmem:[%s1 + $0x9c] sm:$0xf]
  %v103 = vld [vmem:[%s1 + $0xa0] sm:$0xf]
  %v104 = vld [vmem:[%s1 + $0xa4] sm:$0xf]
  %v105 = vld [vmem:[%s1 + $0xa8] sm:$0xf]
  %v106 = vld [vmem:[%s1 + $0xac] sm:$0xf]
  %v107 = vld [vmem:[%s1 + $0xb0] sm:$0xf]
  %v108 = vld [vmem:[%s1 + $0xb4] sm:$0xf]
  %v109 = vld [vmem:[%s1 + $0xb8] sm:$0xf]
  %v110 = vld [vmem:[%s1 + $0xbc] sm:$0xf]
  %v111 = vld [vmem:[%s1 + $0xc0] sm:$0xf]
  %v112 = vld [vmem:[%s1 + $0xc4] sm:$0xf]
  %v113 = vld [vmem:[%s1 + $0xc8] sm:$0xf]
  %v114 = vld [vmem:[%s1 + $0xcc] sm:$0xf]
  %v115 = vld [vmem:[%s1 + $0xd0] sm:$0xf]
  %v116 = vld [vmem:[%s1 + $0xd4] sm:$0xf]
  %v117 = vld [vmem:[%s1 + $0xd8] sm:$0xf]
  %v118 = vld [vmem:[%s1 + $0xdc] sm:$0xf]
  %v119 = vld [vmem:[%s1 + $0xe0] sm:$0xf]
  %v120 = vld [vmem:[%s1 + $0xe4] sm:$0xf]
  %v121 = vld [vmem:[%s1 + $0xe8] sm:$0xf]
  %v122 = vld [vmem:[%s1 + $0xec] sm:$0xf]
  %v123 = vld [vmem:[%s1 + $0xf0] sm:$0xf]
  %v124 = vld [vmem:[%s1 + $0xf4] sm:$0xf]
  %v125 = vld [vmem:[%s1 + $0xf8] sm:$0xf]
  %v126 = vld [vmem:[%s1 + $0xfc] sm:$0xf]
  %v127 = vld [vmem:[%s1 + $0x100] sm:$0xf]
  %v128 = vld [vmem:[%s1 + $0x104] sm:$0xf]
  %v129 = vld [vmem:[%s1 + $0x108] sm:$0xf]
  %v130 = vld [vmem:[%s1 + $0x10c] sm:$0xf]
  %v131 = vld [vmem:[%s1 + $0x110] sm:$0xf]
  %v132 = vld [vmem:[%s1 + $0x114] sm:$0xf]
  %v133 = vld [vmem:[%s1 + $0x118] sm:$0xf]
  %v134 = vld [vmem:[%s1 + $0x11c] sm:$0xf]
  %v135 = vld [vmem:[%s2] sm:$0x1]
  %v137 = vlaneseq
  %v138 = vshrl.u32 %v137, 7
  %v139 = vsub.s32 0, %v138
  %v140 = vrot.slane %v135, %v139
  %v190 = vunpack.c.l.b16 %v15
  %v191 = vunpack.c.h.b16 %v15
  %v192 = vunpack.c.l.b16 %v16
  %v193 = vunpack.c.h.b16 %v16
  %v194 = vunpack.c.l.b16 %v17
  %v195 = vunpack.c.l.b16 %v18
  %v196 = vunpack.c.h.b16 %v18
  %v197 = vunpack.c.l.b16 %v19
  %v198 = vunpack.c.h.b16 %v19
  %v199 = vunpack.c.l.b16 %v20
  %v200 = vunpack.c.l.b16 %v21
  %v201 = vunpack.c.h.b16 %v21
  %v202 = vunpack.c.l.b16 %v22
  %v203 = vunpack.c.h.b16 %v22
  %v204 = vunpack.c.l.b16 %v23
  %v205 = vunpack.c.l.b16 %v24
  %v206 = vunpack.c.h.b16 %v24
  %v207 = vunpack.c.l.b16 %v25
  %v208 = vunpack.c.h.b16 %v25
  %v209 = vunpack.c.l.b16 %v26
  %v210 = vunpack.c.l.b16 %v27
  %v211 = vunpack.c.h.b16 %v27
  %v212 = vunpack.c.l.b16 %v28
  %v213 = vunpack.c.h.b16 %v28
  %v214 = vunpack.c.l.b16 %v29
  %v215 = vunpack.c.l.b16 %v30
  %v216 = vunpack.c.h.b16 %v30
  %v217 = vunpack.c.l.b16 %v31
  %v218 = vunpack.c.h.b16 %v31
  %v219 = vunpack.c.l.b16 %v32
  %v220 = vunpack.c.l.b16 %v33
  %v221 = vunpack.c.h.b16 %v33
  %v222 = vunpack.c.l.b16 %v34
  %v223 = vunpack.c.h.b16 %v34
  %v224 = vunpack.c.l.b16 %v35
  %v225 = vunpack.c.l.b16 %v36
  %v226 = vunpack.c.h.b16 %v36
  %v227 = vunpack.c.l.b16 %v37
  %v228 = vunpack.c.h.b16 %v37
  %v229 = vunpack.c.l.b16 %v38
  %v230 = vunpack.c.l.b16 %v39
  %v231 = vunpack.c.h.b16 %v39
  %v232 = vunpack.c.l.b16 %v40
  %v233 = vunpack.c.h.b16 %v40
  %v234 = vunpack.c.l.b16 %v41
  %v235 = vunpack.c.l.b16 %v42
  %v236 = vunpack.c.h.b16 %v42
  %v237 = vunpack.c.l.b16 %v43
  %v238 = vunpack.c.h.b16 %v43
  %v239 = vunpack.c.l.b16 %v44
  %v240 = vunpack.c.l.b16 %v45
  %v241 = vunpack.c.h.b16 %v45
  %v242 = vunpack.c.l.b16 %v46
  %v243 = vunpack.c.h.b16 %v46
  %v244 = vunpack.c.l.b16 %v47
  %v245 = vunpack.c.l.b16 %v48
  %v246 = vunpack.c.h.b16 %v48
  %v247 = vunpack.c.l.b16 %v49
  %v248 = vunpack.c.h.b16 %v49
  %v249 = vunpack.c.l.b16 %v50
  %v250 = vunpack.c.l.b16 %v51
  %v251 = vunpack.c.h.b16 %v51
  %v252 = vunpack.c.l.b16 %v52
  %v253 = vunpack.c.h.b16 %v52
  %v254 = vunpack.c.l.b16 %v53
  %v255 = vunpack.c.l.b16 %v54
  %v256 = vunpack.c.h.b16 %v54
  %v257 = vunpack.c.l.b16 %v55
  %v258 = vunpack.c.h.b16 %v55
  %v259 = vunpack.c.l.b16 %v56
  %v260 = vunpack.c.l.b16 %v57
  %v261 = vunpack.c.h.b16 %v57
  %v262 = vunpack.c.l.b16 %v58
  %v263 = vunpack.c.h.b16 %v58
  %v264 = vunpack.c.l.b16 %v59
  %v265 = vunpack.c.l.b16 %v60
  %v266 = vunpack.c.h.b16 %v60
  %v267 = vunpack.c.l.b16 %v61
  %v268 = vunpack.c.h.b16 %v61
  %v269 = vunpack.c.l.b16 %v62
  %v270 = vpack.c.b16 %v195, %v190
  %v271 = vpack.c.b16 %v196, %v191
  %v272 = vpack.c.b16 %v197, %v192
  %v273 = vpack.c.b16 %v198, %v193
  %v274 = vpack.c.b16 %v199, %v194
  %v275 = vpack.c.b16 %v205, %v200
  %v276 = vpack.c.b16 %v206, %v201
  %v277 = vpack.c.b16 %v207, %v202
  %v278 = vpack.c.b16 %v208, %v203
  %v279 = vpack.c.b16 %v209, %v204
  %v280 = vpack.c.b16 %v215, %v210
  %v281 = vpack.c.b16 %v216, %v211
  %v282 = vpack.c.b16 %v217, %v212
  %v283 = vpack.c.b16 %v218, %v213
  %v284 = vpack.c.b16 %v219, %v214
  %v285 = vpack.c.b16 %v225, %v220
  %v286 = vpack.c.b16 %v226, %v221
  %v287 = vpack.c.b16 %v227, %v222
  %v288 = vpack.c.b16 %v228, %v223
  %v289 = vpack.c.b16 %v229, %v224
  %v290 = vpack.c.b16 %v235, %v230
  %v291 = vpack.c.b16 %v236, %v231
  %v292 = vpack.c.b16 %v237, %v232
  %v293 = vpack.c.b16 %v238, %v233
  %v294 = vpack.c.b16 %v239, %v234
  %v295 = vpack.c.b16 %v245, %v240
  %v296 = vpack.c.b16 %v246, %v241
  %v297 = vpack.c.b16 %v247, %v242
  %v298 = vpack.c.b16 %v248, %v243
  %v299 = vpack.c.b16 %v249, %v244
  %v300 = vpack.c.b16 %v255, %v250
  %v301 = vpack.c.b16 %v256, %v251
  %v302 = vpack.c.b16 %v257, %v252
  %v303 = vpack.c.b16 %v258, %v253
  %v304 = vpack.c.b16 %v259, %v254
  %v305 = vpack.c.b16 %v265, %v260
  %v306 = vpack.c.b16 %v266, %v261
  %v307 = vpack.c.b16 %v267, %v262
  %v308 = vpack.c.b16 %v268, %v263
  %v309 = vpack.c.b16 %v269, %v264
  %v414 = vunpack.c.l.b16 %v63
  %v415 = vunpack.c.l.b16 %v64
  %v416 = vunpack.c.l.b16 %v65
  %v417 = vunpack.c.l.b16 %v66
  %v418 = vunpack.c.l.b16 %v67
  %v419 = vunpack.c.l.b16 %v68
  %v420 = vunpack.c.l.b16 %v69
  %v421 = vunpack.c.l.b16 %v70
  %v422 = vunpack.c.l.b16 %v71
  %v423 = vunpack.c.l.b16 %v72
  %v424 = vunpack.c.l.b16 %v73
  %v425 = vunpack.c.l.b16 %v74
  %v426 = vunpack.c.l.b16 %v75
  %v427 = vunpack.c.l.b16 %v76
  %v428 = vunpack.c.l.b16 %v77
  %v429 = vunpack.c.l.b16 %v78
  %v430 = vunpack.c.l.b16 %v79
  %v431 = vunpack.c.l.b16 %v80
  %v432 = vunpack.c.l.b16 %v81
  %v433 = vunpack.c.l.b16 %v82
  %v434 = vunpack.c.l.b16 %v83
  %v435 = vunpack.c.l.b16 %v84
  %v436 = vunpack.c.l.b16 %v85
  %v437 = vunpack.c.l.b16 %v86
  %v438 = vunpack.c.l.b16 %v87
  %v439 = vunpack.c.l.b16 %v88
  %v440 = vunpack.c.l.b16 %v89
  %v441 = vunpack.c.l.b16 %v90
  %v442 = vunpack.c.l.b16 %v91
  %v443 = vunpack.c.l.b16 %v92
  %v444 = vunpack.c.l.b16 %v93
  %v445 = vunpack.c.l.b16 %v94
  %v446 = vunpack.c.l.b16 %v95
  %v447 = vunpack.c.l.b16 %v96
  %v448 = vunpack.c.l.b16 %v97
  %v449 = vunpack.c.l.b16 %v98
  %v450 = vunpack.c.l.b16 %v99
  %v451 = vunpack.c.l.b16 %v100
  %v452 = vunpack.c.l.b16 %v101
  %v453 = vunpack.c.l.b16 %v102
  %v454 = vunpack.c.l.b16 %v103
  %v455 = vunpack.c.l.b16 %v104
  %v456 = vunpack.c.l.b16 %v105
  %v457 = vunpack.c.l.b16 %v106
  %v458 = vunpack.c.l.b16 %v107
  %v459 = vunpack.c.l.b16 %v108
  %v460 = vunpack.c.l.b16 %v109
  %v461 = vunpack.c.l.b16 %v110
  %v462 = vunpack.c.l.b16 %v111
  %v463 = vunpack.c.l.b16 %v112
  %v464 = vunpack.c.l.b16 %v113
  %v465 = vunpack.c.l.b16 %v114
  %v466 = vunpack.c.l.b16 %v115
  %v467 = vunpack.c.l.b16 %v116
  %v468 = vunpack.c.l.b16 %v117
  %v469 = vunpack.c.l.b16 %v118
  %v470 = vunpack.c.l.b16 %v119
  %v471 = vunpack.c.l.b16 %v120
  %v472 = vunpack.c.l.b16 %v121
  %v473 = vunpack.c.l.b16 %v122
  %v474 = vunpack.c.l.b16 %v123
  %v475 = vunpack.c.l.b16 %v124
  %v476 = vunpack.c.l.b16 %v125
  %v477 = vunpack.c.l.b16 %v126
  %v478 = vunpack.c.l.b16 %v127
  %v479 = vunpack.c.l.b16 %v128
  %v480 = vunpack.c.l.b16 %v129
  %v481 = vunpack.c.l.b16 %v130
  %v482 = vunpack.c.l.b16 %v131
  %v483 = vunpack.c.l.b16 %v132
  %v484 = vunpack.c.l.b16 %v133
  %v485 = vunpack.c.l.b16 %v134
  %v486 = vpack.c.b16 %v415, %v414
  %v487 = vpack.c.b16 %v417, %v416
  %v488 = vpack.c.b16 %v419, %v418
  %v489 = vpack.c.b16 %v421, %v420
  %v490 = vpack.c.b16 %v423, %v422
  %v491 = vpack.c.b16 %v425, %v424
  %v492 = vpack.c.b16 %v427, %v426
  %v493 = vpack.c.b16 %v429, %v428
  %v494 = vpack.c.b16 %v431, %v430
  %v495 = vpack.c.b16 %v433, %v432
  %v496 = vpack.c.b16 %v435, %v434
  %v497 = vpack.c.b16 %v437, %v436
  %v498 = vpack.c.b16 %v439, %v438
  %v499 = vpack.c.b16 %v441, %v440
  %v500 = vpack.c.b16 %v443, %v442
  %v501 = vpack.c.b16 %v445, %v444
  %v502 = vpack.c.b16 %v447, %v446
  %v503 = vpack.c.b16 %v449, %v448
  %v504 = vpack.c.b16 %v451, %v450
  %v505 = vpack.c.b16 %v453, %v452
  %v506 = vpack.c.b16 %v455, %v454
  %v507 = vpack.c.b16 %v457, %v456
  %v508 = vpack.c.b16 %v459, %v458
  %v509 = vpack.c.b16 %v461, %v460
  %v510 = vpack.c.b16 %v463, %v462
  %v511 = vpack.c.b16 %v465, %v464
  %v512 = vpack.c.b16 %v467, %v466
  %v513 = vpack.c.b16 %v469, %v468
  %v514 = vpack.c.b16 %v471, %v470
  %v515 = vpack.c.b16 %v473, %v472
  %v516 = vpack.c.b16 %v475, %v474
  %v517 = vpack.c.b16 %v477, %v476
  %v518 = vpack.c.b16 %v479, %v478
  %v519 = vpack.c.b16 %v481, %v480
  %v520 = vpack.c.b16 %v483, %v482
  %v521 = vpack.c.b16 %v485, %v484
  %vm558 = vcmask 523264
  %v560 = vsel %vm558, %v274, 0
  %v563 = vsel %vm558, %v279, 0
  %v566 = vsel %vm558, %v284, 0
  %v569 = vsel %vm558, %v289, 0
  %v572 = vsel %vm558, %v294, 0
  %v575 = vsel %vm558, %v299, 0
  %v578 = vsel %vm558, %v304, 0
  %v581 = vsel %vm558, %v309, 0
  %583 = vmatprep.subr.bf16.mxu0 0
  %584 = vmatpush1.bf16.msra.mxu0 %v486
  %585 = vmatprep.subr.bf16.mxu0 0
  %586 = vmatpush1.bf16.msra.mxu0 %v487
  %587 = vmatprep.subr.bf16.mxu0 0
  %588 = vmatpush1.bf16.msra.mxu0 %v488
  %589 = vmatprep.subr.bf16.mxu0 0
  %590 = vmatpush1.bf16.msra.mxu0 %v489
  %591 = vmatprep.subr.bf16.mxu0 0
  %592 = vmatpush1.bf16.msra.mxu0 %v490
  %593 = vmatprep.subr.bf16.mxu0 0
  %594 = vmatpush1.bf16.msra.mxu0 %v491
  %595 = vmatprep.subr.bf16.mxu0 0
  %596 = vmatpush1.bf16.msra.mxu0 %v492
  %597 = vmatprep.subr.bf16.mxu0 0
  %598 = vmatpush1.bf16.msra.mxu0 %v493
  %599 = vmatprep.subr.bf16.mxu0 0
  %600 = vmatpush1.bf16.msra.mxu0 %v494
  %601 = vmatprep.subr.bf16.mxu0 0
  %602 = vmatpush1.bf16.msra.mxu0 %v495
  %603 = vmatprep.subr.bf16.mxu0 0
  %604 = vmatpush1.bf16.msra.mxu0 %v496
  %605 = vmatprep.subr.bf16.mxu0 0
  %606 = vmatpush1.bf16.msra.mxu0 %v497
  %607 = vmatprep.subr.bf16.mxu0 0
  %608 = vmatpush1.bf16.msra.mxu0 %v498
  %609 = vmatprep.subr.bf16.mxu0 0
  %610 = vmatpush1.bf16.msra.mxu0 %v499
  %611 = vmatprep.subr.bf16.mxu0 0
  %612 = vmatpush1.bf16.msra.mxu0 %v500
  %613 = vmatprep.subr.bf16.mxu0 0
  %614 = vmatpush1.bf16.msra.mxu0 %v501
  %615 = vmatprep.mubr.bf16.mxu0 %v271
  %616 = vmatmul.mubr.bf16.gmra.mrb[0].mxu0 %v270
  %v617 = vpop.f32.mrb[0].mxu0
  %v618 = vadd.f32 %v140, %v617
  %v619 = vpop.f32.mrb[0].mxu0
  %v620 = vpop.f32.mrb[0].mxu0
  %v621 = vadd.f32 %v140, %v620
  %v622 = vpop.f32.mrb[0].mxu0
  %623 = vmatprep.mubr.bf16.mxu0 %v276
  %624 = vmatmul.mubr.bf16.gmra.mrb[0].mxu0 %v275
  %v625 = vpop.f32.mrb[0].mxu0
  %v626 = vadd.f32 %v140, %v625
  %v627 = vpop.f32.mrb[0].mxu0
  %v628 = vpop.f32.mrb[0].mxu0
  %v629 = vadd.f32 %v140, %v628
  %v630 = vpop.f32.mrb[0].mxu0
  %631 = vmatprep.mubr.bf16.mxu0 %v281
  %632 = vmatmul.mubr.bf16.gmra.mrb[0].mxu0 %v280
  %v633 = vpop.f32.mrb[0].mxu0
  %v634 = vadd.f32 %v140, %v633
  %v635 = vpop.f32.mrb[0].mxu0
  %v636 = vpop.f32.mrb[0].mxu0
  %v637 = vadd.f32 %v140, %v636
  %v638 = vpop.f32.mrb[0].mxu0
  %639 = vmatprep.mubr.bf16.mxu0 %v286
  %640 = vmatmul.mubr.bf16.gmra.mrb[0].mxu0 %v285
  %v641 = vpop.f32.mrb[0].mxu0
  %v642 = vadd.f32 %v140, %v641
  %v643 = vpop.f32.mrb[0].mxu0
  %v644 = vpop.f32.mrb[0].mxu0
  %v645 = vadd.f32 %v140, %v644
  %v646 = vpop.f32.mrb[0].mxu0
  %647 = vmatprep.mubr.bf16.mxu0 %v291
  %648 = vmatmul.mubr.bf16.gmra.mrb[0].mxu0 %v290
  %v649 = vpop.f32.mrb[0].mxu0
  %v650 = vadd.f32 %v140, %v649
  %v651 = vpop.f32.mrb[0].mxu0
  %v652 = vpop.f32.mrb[0].mxu0
  %v653 = vadd.f32 %v140, %v652
  %v654 = vpop.f32.mrb[0].mxu0
  %655 = vmatprep.mubr.bf16.mxu0 %v296
  %656 = vmatmul.mubr.bf16.gmra.mrb[0].mxu0 %v295
  %v657 = vpop.f32.mrb[0].mxu0
  %v658 = vadd.f32 %v140, %v657
  %v659 = vpop.f32.mrb[0].mxu0
  %v660 = vpop.f32.mrb[0].mxu0
  %v661 = vadd.f32 %v140, %v660
  %v662 = vpop.f32.mrb[0].mxu0
  %663 = vmatprep.mubr.bf16.mxu0 %v301
  %664 = vmatmul.mubr.bf16.gmra.mrb[0].mxu0 %v300
  %v665 = vpop.f32.mrb[0].mxu0
  %v666 = vadd.f32 %v140, %v665
  %v667 = vpop.f32.mrb[0].mxu0
  %v668 = vpop.f32.mrb[0].mxu0
  %v669 = vadd.f32 %v140, %v668
  %v670 = vpop.f32.mrb[0].mxu0
  %671 = vmatprep.mubr.bf16.mxu0 %v306
  %672 = vmatmul.mubr.bf16.gmra.mrb[0].mxu0 %v305
  %v673 = vpop.f32.mrb[0].mxu0
  %v674 = vadd.f32 %v140, %v673
  %v675 = vpop.f32.mrb[0].mxu0
  %v676 = vpop.f32.mrb[0].mxu0
  %v677 = vadd.f32 %v140, %v676
  %v678 = vpop.f32.mrb[0].mxu0
  %679 = vdwg.mxu0
  %680 = vmatprep.subr.bf16.mxu0 0
  %681 = vmatpush1.bf16.msra.mxu0 %v502
  %682 = vmatprep.subr.bf16.mxu0 0
  %683 = vmatpush1.bf16.msra.mxu0 %v503
  %684 = vmatprep.subr.bf16.mxu0 0
  %685 = vmatpush1.bf16.msra.mxu0 %v504
  %686 = vmatprep.subr.bf16.mxu0 0
  %687 = vmatpush1.bf16.msra.mxu0 %v505
  %688 = vmatprep.subr.bf16.mxu0 0
  %689 = vmatpush1.bf16.msra.mxu0 %v506
  %690 = vmatprep.subr.bf16.mxu0 0
  %691 = vmatpush1.bf16.msra.mxu0 %v507
  %692 = vmatprep.subr.bf16.mxu0 0
  %693 = vmatpush1.bf16.msra.mxu0 %v508
  %694 = vmatprep.subr.bf16.mxu0 0
  %695 = vmatpush1.bf16.msra.mxu0 %v509
  %696 = vmatprep.subr.bf16.mxu0 0
  %697 = vmatpush1.bf16.msra.mxu0 %v510
  %698 = vmatprep.subr.bf16.mxu0 0
  %699 = vmatpush1.bf16.msra.mxu0 %v511
  %700 = vmatprep.subr.bf16.mxu0 0
  %701 = vmatpush1.bf16.msra.mxu0 %v512
  %702 = vmatprep.subr.bf16.mxu0 0
  %703 = vmatpush1.bf16.msra.mxu0 %v513
  %704 = vmatprep.subr.bf16.mxu0 0
  %705 = vmatpush1.bf16.msra.mxu0 %v514
  %706 = vmatprep.subr.bf16.mxu0 0
  %707 = vmatpush1.bf16.msra.mxu0 %v515
  %708 = vmatprep.subr.bf16.mxu0 0
  %709 = vmatpush1.bf16.msra.mxu0 %v516
  %710 = vmatprep.subr.bf16.mxu0 0
  %711 = vmatpush1.bf16.msra.mxu0 %v517
  %712 = vmatprep.mubr.bf16.mxu0 %v273
  %713 = vmatmul.mubr.bf16.gmra.mrb[0].mxu0 %v272
  %v714 = vpop.f32.mrb[0].mxu0
  %v715 = vadd.f32 %v618, %v714
  %v716 = vpop.f32.mrb[0].mxu0
  %v717 = vpop.f32.mrb[0].mxu0
  %v718 = vadd.f32 %v621, %v717
  %v719 = vpop.f32.mrb[0].mxu0
  %720 = vmatprep.mubr.bf16.mxu0 %v278
  %721 = vmatmul.mubr.bf16.gmra.mrb[0].mxu0 %v277
  %v722 = vpop.f32.mrb[0].mxu0
  %v723 = vadd.f32 %v626, %v722
  %v724 = vpop.f32.mrb[0].mxu0
  %v725 = vpop.f32.mrb[0].mxu0
  %v726 = vadd.f32 %v629, %v725
  %v727 = vpop.f32.mrb[0].mxu0
  %728 = vmatprep.mubr.bf16.mxu0 %v283
  %729 = vmatmul.mubr.bf16.gmra.mrb[0].mxu0 %v282
  %v730 = vpop.f32.mrb[0].mxu0
  %v731 = vadd.f32 %v634, %v730
  %v732 = vpop.f32.mrb[0].mxu0
  %v733 = vpop.f32.mrb[0].mxu0
  %v734 = vadd.f32 %v637, %v733
  %v735 = vpop.f32.mrb[0].mxu0
  %736 = vmatprep.mubr.bf16.mxu0 %v288
  %737 = vmatmul.mubr.bf16.gmra.mrb[0].mxu0 %v287
  %v738 = vpop.f32.mrb[0].mxu0
  %v739 = vadd.f32 %v642, %v738
  %v740 = vpop.f32.mrb[0].mxu0
  %v741 = vpop.f32.mrb[0].mxu0
  %v742 = vadd.f32 %v645, %v741
  %v743 = vpop.f32.mrb[0].mxu0
  %744 = vmatprep.mubr.bf16.mxu0 %v293
  %745 = vmatmul.mubr.bf16.gmra.mrb[0].mxu0 %v292
  %v746 = vpop.f32.mrb[0].mxu0
  %v747 = vadd.f32 %v650, %v746
  %v748 = vpop.f32.mrb[0].mxu0
  %v749 = vpop.f32.mrb[0].mxu0
  %v750 = vadd.f32 %v653, %v749
  %v751 = vpop.f32.mrb[0].mxu0
  %752 = vmatprep.mubr.bf16.mxu0 %v298
  %753 = vmatmul.mubr.bf16.gmra.mrb[0].mxu0 %v297
  %v754 = vpop.f32.mrb[0].mxu0
  %v755 = vadd.f32 %v658, %v754
  %v756 = vpop.f32.mrb[0].mxu0
  %v757 = vpop.f32.mrb[0].mxu0
  %v758 = vadd.f32 %v661, %v757
  %v759 = vpop.f32.mrb[0].mxu0
  %760 = vmatprep.mubr.bf16.mxu0 %v303
  %761 = vmatmul.mubr.bf16.gmra.mrb[0].mxu0 %v302
  %v762 = vpop.f32.mrb[0].mxu0
  %v763 = vadd.f32 %v666, %v762
  %v764 = vpop.f32.mrb[0].mxu0
  %v765 = vpop.f32.mrb[0].mxu0
  %v766 = vadd.f32 %v669, %v765
  %v767 = vpop.f32.mrb[0].mxu0
  %768 = vmatprep.mubr.bf16.mxu0 %v308
  %769 = vmatmul.mubr.bf16.gmra.mrb[0].mxu0 %v307
  %v770 = vpop.f32.mrb[0].mxu0
  %v771 = vadd.f32 %v674, %v770
  %v772 = vpop.f32.mrb[0].mxu0
  %v773 = vpop.f32.mrb[0].mxu0
  %v774 = vadd.f32 %v677, %v773
  %v775 = vpop.f32.mrb[0].mxu0
  %776 = vdwg.mxu0
  %777 = vmatprep.subr.bf16.mxu0 0
  %778 = vmatpush1.bf16.msra.mxu0 %v518
  %779 = vmatprep.subr.bf16.mxu0 0
  %780 = vmatpush1.bf16.msra.mxu0 %v519
  %781 = vmatprep.subr.bf16.mxu0 0
  %782 = vmatpush1.bf16.msra.mxu0 %v520
  %783 = vmatprep.subr.bf16.mxu0 0
  %784 = vmatpush1.bf16.msra.mxu0 %v521
  %785 = vmatprep.subr.bf16.mxu0 0
  %786 = vmatpush1.bf16.msra.mxu0 0
  %787 = vmatprep.subr.bf16.mxu0 0
  %788 = vmatpush1.bf16.msra.mxu0 0
  %789 = vmatprep.subr.bf16.mxu0 0
  %790 = vmatpush1.bf16.msra.mxu0 0
  %791 = vmatprep.subr.bf16.mxu0 0
  %792 = vmatpush1.bf16.msra.mxu0 0
  %793 = vmatprep.subr.bf16.mxu0 0
  %794 = vmatpush1.bf16.msra.mxu0 0
  %795 = vmatprep.subr.bf16.mxu0 0
  %796 = vmatpush1.bf16.msra.mxu0 0
  %797 = vmatprep.subr.bf16.mxu0 0
  %798 = vmatpush1.bf16.msra.mxu0 0
  %799 = vmatprep.subr.bf16.mxu0 0
  %800 = vmatpush1.bf16.msra.mxu0 0
  %801 = vmatprep.subr.bf16.mxu0 0
  %802 = vmatpush1.bf16.msra.mxu0 0
  %803 = vmatprep.subr.bf16.mxu0 0
  %804 = vmatpush1.bf16.msra.mxu0 0
  %805 = vmatprep.subr.bf16.mxu0 0
  %806 = vmatpush1.bf16.msra.mxu0 0
  %807 = vmatprep.subr.bf16.mxu0 0
  %808 = vmatpush1.bf16.msra.mxu0 0
  %809 = vmatprep.mubr.bf16.mxu0 0
  %810 = vmatmul.mubr.bf16.gmra.mrb[0].mxu0 %v560
  %v811 = vpop.f32.mrb[0].mxu0
  %v812 = vadd.f32 %v715, %v811
  %v813 = vpop.f32.mrb[0].mxu0
  %v814 = vpop.f32.mrb[0].mxu0
  %v815 = vadd.f32 %v718, %v814
  %v816 = vpop.f32.mrb[0].mxu0
  %817 = vmatprep.mubr.bf16.mxu0 0
  %818 = vmatmul.mubr.bf16.gmra.mrb[0].mxu0 %v563
  %v819 = vpop.f32.mrb[0].mxu0
  %v820 = vadd.f32 %v723, %v819
  %v821 = vpop.f32.mrb[0].mxu0
  %v822 = vpop.f32.mrb[0].mxu0
  %v823 = vadd.f32 %v726, %v822
  %v824 = vpop.f32.mrb[0].mxu0
  %825 = vmatprep.mubr.bf16.mxu0 0
  %826 = vmatmul.mubr.bf16.gmra.mrb[0].mxu0 %v566
  %v827 = vpop.f32.mrb[0].mxu0
  %v828 = vadd.f32 %v731, %v827
  %v829 = vpop.f32.mrb[0].mxu0
  %v830 = vpop.f32.mrb[0].mxu0
  %v831 = vadd.f32 %v734, %v830
  %v832 = vpop.f32.mrb[0].mxu0
  %833 = vmatprep.mubr.bf16.mxu0 0
  %834 = vmatmul.mubr.bf16.gmra.mrb[0].mxu0 %v569
  %v835 = vpop.f32.mrb[0].mxu0
  %v836 = vadd.f32 %v739, %v835
  %v837 = vpop.f32.mrb[0].mxu0
  %v838 = vpop.f32.mrb[0].mxu0
  %v839 = vadd.f32 %v742, %v838
  %v840 = vpop.f32.mrb[0].mxu0
  %841 = vmatprep.mubr.bf16.mxu0 0
  %842 = vmatmul.mubr.bf16.gmra.mrb[0].mxu0 %v572
  %v843 = vpop.f32.mrb[0].mxu0
  %v844 = vadd.f32 %v747, %v843
  %v845 = vpop.f32.mrb[0].mxu0
  %v846 = vpop.f32.mrb[0].mxu0
  %v847 = vadd.f32 %v750, %v846
  %v848 = vpop.f32.mrb[0].mxu0
  %849 = vmatprep.mubr.bf16.mxu0 0
  %850 = vmatmul.mubr.bf16.gmra.mrb[0].mxu0 %v575
  %v851 = vpop.f32.mrb[0].mxu0
  %v852 = vadd.f32 %v755, %v851
  %v853 = vpop.f32.mrb[0].mxu0
  %v854 = vpop.f32.mrb[0].mxu0
  %v855 = vadd.f32 %v758, %v854
  %v856 = vpop.f32.mrb[0].mxu0
  %857 = vmatprep.mubr.bf16.mxu0 0
  %858 = vmatmul.mubr.bf16.gmra.mrb[0].mxu0 %v578
  %v859 = vpop.f32.mrb[0].mxu0
  %v860 = vadd.f32 %v763, %v859
  %v861 = vpop.f32.mrb[0].mxu0
  %v862 = vpop.f32.mrb[0].mxu0
  %v863 = vadd.f32 %v766, %v862
  %v864 = vpop.f32.mrb[0].mxu0
  %865 = vmatprep.mubr.bf16.mxu0 0
  %866 = vmatmul.mubr.bf16.gmra.mrb[0].mxu0 %v581
  %v867 = vpop.f32.mrb[0].mxu0
  %v868 = vadd.f32 %v771, %v867
  %v869 = vpop.f32.mrb[0].mxu0
  %v870 = vpop.f32.mrb[0].mxu0
  %v871 = vadd.f32 %v774, %v870
  %v872 = vpop.f32.mrb[0].mxu0
  %873 = vdwg.mxu0
  %v874 = vpack.c.bf16 %v815, %v812
  %v875 = vpack.c.bf16 %v823, %v820
  %v876 = vpack.c.bf16 %v831, %v828
  %v877 = vpack.c.bf16 %v839, %v836
  %v878 = vpack.c.bf16 %v847, %v844
  %v879 = vpack.c.bf16 %v855, %v852
  %v880 = vpack.c.bf16 %v863, %v860
  %v881 = vpack.c.bf16 %v871, %v868
  %v890 = vunpack.c.l.b16 %v874
  %v891 = vunpack.c.h.b16 %v874
  %v892 = vunpack.c.l.b16 %v875
  %v893 = vunpack.c.h.b16 %v875
  %v894 = vunpack.c.l.b16 %v876
  %v895 = vunpack.c.h.b16 %v876
  %v896 = vunpack.c.l.b16 %v877
  %v897 = vunpack.c.h.b16 %v877
  %v898 = vunpack.c.l.b16 %v878
  %v899 = vunpack.c.h.b16 %v878
  %v900 = vunpack.c.l.b16 %v879
  %v901 = vunpack.c.h.b16 %v879
  %v902 = vunpack.c.l.b16 %v880
  %v903 = vunpack.c.h.b16 %v880
  %v904 = vunpack.c.l.b16 %v881
  %v905 = vunpack.c.h.b16 %v881
  %v906 = vpack.c.b16 %v890, %v890
  %v907 = vpack.c.b16 %v891, %v891
  %v908 = vpack.c.b16 %v892, %v892
  %v909 = vpack.c.b16 %v893, %v893
  %v910 = vpack.c.b16 %v894, %v894
  %v911 = vpack.c.b16 %v895, %v895
  %v912 = vpack.c.b16 %v896, %v896
  %v913 = vpack.c.b16 %v897, %v897
  %v914 = vpack.c.b16 %v898, %v898
  %v915 = vpack.c.b16 %v899, %v899
  %v916 = vpack.c.b16 %v900, %v900
  %v917 = vpack.c.b16 %v901, %v901
  %v918 = vpack.c.b16 %v902, %v902
  %v919 = vpack.c.b16 %v903, %v903
  %v920 = vpack.c.b16 %v904, %v904
  %v921 = vpack.c.b16 %v905, %v905
  %938 = vst [vmem:[%s3] sm:$0xf] %v906
  %939 = vst [vmem:[%s3 + $0x4] sm:$0xf] %v907
  %940 = vst [vmem:[%s3 + $0x8] sm:$0xf] %v908
  %941 = vst [vmem:[%s3 + $0xc] sm:$0xf] %v909
  %942 = vst [vmem:[%s3 + $0x10] sm:$0xf] %v910
  %943 = vst [vmem:[%s3 + $0x14] sm:$0xf] %v911
  %944 = vst [vmem:[%s3 + $0x18] sm:$0xf] %v912
  %945 = vst [vmem:[%s3 + $0x1c] sm:$0xf] %v913
  %946 = vst [vmem:[%s3 + $0x20] sm:$0xf] %v914
  %947 = vst [vmem:[%s3 + $0x24] sm:$0xf] %v915
  %948 = vst [vmem:[%s3 + $0x28] sm:$0xf] %v916
  %949 = vst [vmem:[%s3 + $0x2c] sm:$0xf] %v917
  %950 = vst [vmem:[%s3 + $0x30] sm:$0xf] %v918
  %951 = vst [vmem:[%s3 + $0x34] sm:$0xf] %v919
  %952 = vst [vmem:[%s3 + $0x38] sm:$0xf] %v920
  %953 = vst [vmem:[%s3 + $0x3c] sm:$0xf] %v921
  // Predicated region
  $region14: #{generator_forward.52} parent=0 // pred_check
    _
  $region15: #{generator_forward.52} parent=0 // pred_check_branch
    %955 = sbr.rel (0) target = $region17
  $region16: #{generator_forward.52} parent=0 // pred_region
    _
  $region17: #{generator_forward.52} parent=0 // pred_fallthru
    _
  // Predicated region
  $region18: #{generator_forward.52} parent=0 // pred_check
    _
  $region19: #{generator_forward.52} parent=0 // pred_check_branch
    %957 = sbr.rel (0) target = $region21
  $region20: #{generator_forward.52} parent=0 // pred_region
    _
  $region21: #{generator_forward.52} parent=0 // pred_fallthru
    _

// kernel: generator_forward.55
$region0: #{generator_forward.55}
  #allocation0 [shape = 'u32[]', space=smem, size = 0x4, offset = 0x4, fixed_abs, tag = 'smem constant byte address 0x4 - core index']
  #allocation1 [shape = 'u32[144,128]{1,0:T(1,128)}', space=vmem, size = 0x12000, scoped, tag = 'internal scratch']
  %s0 = inlined_call_operand.vmem [shape: bf16[512,1568], index: 0, kind: input, shape index: {}]
  %s1 = inlined_call_operand.vmem [shape: bf16[128,1568], index: 1, kind: input, shape index: {}]
  %s2 = inlined_call_operand.vmem [shape: f32[8,1], index: 2, kind: input, shape index: {}]
  %s3 = inlined_call_operand.vmem [shape: f32[8,512], index: 3, kind: output, shape index: {}]
  %s4 = sld [smem:[#allocation0]]
  $region45: #{generator_forward.55} parent=0
    _
  %s6 = ssub.s32 1, %s4
  %s7 = scalar_select 0, %s6, %s4
  loop: start=0, step=1, limit=4
  $region2: #{generator_forward.55} parent=0 // loop_pre_header
    _
  $region3: #{generator_forward.55} parent=0 // loop_header
    %s9 = sphi 0, %s13
    %p10 = scmp.ge.s32.totalorder %s9, 4
    %s19 = sphi 0, %s21
    %s22 = sphi 0, %s19
    %s23 = sphi 0, %s22
    %s39 = sphi 0, %s23
    %s43 = sphi 0, %s43
    %s45 = sphi 0, %s43
    %s46 = sphi 0, %s45
    %s60 = sphi 0, %s46
    %s64 = sphi 0, %s64
    %s66 = sphi 0, %s64
    %s67 = sphi 0, %s66
    %s81 = sphi 0, %s67
    %s87 = sphi 0, %s89
    %s90 = sphi 0, %s87
    %s91 = sphi 0, %s90
    %s107 = sphi 0, %s91
  $region4: #{generator_forward.55} parent=0 // loop_header_branch
    %12 = sbr.rel (%p10) target = $region8
  $region5: #{generator_forward.55} parent=0 // loop_body
    %s14 = ssub.s32 %s9, 1
    %s15 = ssub.s32 %s9, 2
    %s16 = sadd.s32 %s9, 1
    %s17 = ssub.s32 %s9, %s16
    %p18 = scmp.eq.s32.totalorder %s17, 0
    %s20 = sadd.s32 %s19, 1
    %s21 = scalar_select %p18, %s19, %s20
    %p24 = pneg %p18
    %p25 = scmp.eq.s32.totalorder %s9, 1
    %p26 = por %p24, %p25
    %p27 = scmp.ne.s32.totalorder %s19, %s22
    %p28 = scmp.eq.s32.totalorder %s9, 0
    %p29 = por %p27, %p28
    %p30 = scmp.ne.s32.totalorder %s19, %s22
    %p31 = scmp.eq.s32.totalorder %s14, 1
    %p32 = por %p30, %p31
    %p33 = scmp.ne.s32.totalorder %s22, %s23
    %p34 = scmp.eq.s32.totalorder %s14, 0
    %p35 = por %p33, %p34
    %p36 = scmp.ne.s32.totalorder %s22, %s23
    %p37 = scmp.eq.s32.totalorder %s15, 1
    %p38 = por %p36, %p37
    %p40 = scmp.ne.s32.totalorder %s23, %s39
    %p41 = scmp.eq.s32.totalorder %s15, 0
    %p42 = por %p40, %p41
    %s44 = sadd.s32 %s43, 1
    %p47 = scmp.eq.s32.totalorder %s9, 1
    %p48 = scmp.ne.s32.totalorder %s43, %s45
    %p49 = scmp.eq.s32.totalorder %s9, 0
    %p50 = por %p48, %p49
    %p51 = scmp.ne.s32.totalorder %s43, %s45
    %p52 = scmp.eq.s32.totalorder %s14, 1
    %p53 = por %p51, %p52
    %p54 = scmp.ne.s32.totalorder %s45, %s46
    %p55 = scmp.eq.s32.totalorder %s14, 0
    %p56 = por %p54, %p55
    %p57 = scmp.ne.s32.totalorder %s45, %s46
    %p58 = scmp.eq.s32.totalorder %s15, 1
    %p59 = por %p57, %p58
    %p61 = scmp.ne.s32.totalorder %s46, %s60
    %p62 = scmp.eq.s32.totalorder %s15, 0
    %p63 = por %p61, %p62
    %s65 = sadd.s32 %s64, 1
    %p68 = scmp.eq.s32.totalorder %s9, 1
    %p69 = scmp.ne.s32.totalorder %s64, %s66
    %p70 = scmp.eq.s32.totalorder %s9, 0
    %p71 = por %p69, %p70
    %p72 = scmp.ne.s32.totalorder %s64, %s66
    %p73 = scmp.eq.s32.totalorder %s14, 1
    %p74 = por %p72, %p73
    %p75 = scmp.ne.s32.totalorder %s66, %s67
    %p76 = scmp.eq.s32.totalorder %s14, 0
    %p77 = por %p75, %p76
    %p78 = scmp.ne.s32.totalorder %s66, %s67
    %p79 = scmp.eq.s32.totalorder %s15, 1
    %p80 = por %p78, %p79
    %p82 = scmp.ne.s32.totalorder %s67, %s81
    %p83 = scmp.eq.s32.totalorder %s15, 0
    %p84 = por %p82, %p83
    %s85 = ssub.s32 %s9, %s16
    %p86 = scmp.eq.s32.totalorder %s85, 0
    %s88 = sadd.s32 %s87, 1
    %s89 = scalar_select %p86, %s87, %s88
    %p92 = pneg %p86
    %p93 = scmp.eq.s32.totalorder %s9, 1
    %p94 = por %p92, %p93
    %p95 = scmp.ne.s32.totalorder %s87, %s90
    %p96 = scmp.eq.s32.totalorder %s9, 0
    %p97 = por %p95, %p96
    %p98 = scmp.ne.s32.totalorder %s87, %s90
    %p99 = scmp.eq.s32.totalorder %s14, 1
    %p100 = por %p98, %p99
    %p101 = scmp.ne.s32.totalorder %s90, %s91
    %p102 = scmp.eq.s32.totalorder %s14, 0
    %p103 = por %p101, %p102
    %p104 = scmp.ne.s32.totalorder %s90, %s91
    %p105 = scmp.eq.s32.totalorder %s15, 1
    %p106 = por %p104, %p105
    %p108 = scmp.ne.s32.totalorder %s91, %s107
    %p109 = scmp.eq.s32.totalorder %s15, 0
    %p110 = por %p108, %p109
    %p111 = scmp.le.s32.totalorder 1, %s9
    %p112 = scmp.lt.s32.totalorder %s9, 3
    %p113 = pnand %p111, %p112
    %p114 = pneg %p113
    // Predicated region
    $region9: #{generator_forward.55} parent=5 // pred_check
      _
    $region10: #{generator_forward.55} parent=5 // pred_check_branch
      %116 = sbr.rel (%p113) target = $region12
    $region11: #{generator_forward.55} parent=5 // pred_region
      %s117 = ssub.s32 %s9, 1
      // Predicated region
      $region13: #{generator_forward.55} parent=11 // pred_check
        %p118 = pneg %p56
      $region14: #{generator_forward.55} parent=11 // pred_check_branch
        %120 = sbr.rel (%p118) target = $region16
      $region15: #{generator_forward.55} parent=11 // pred_region
        _
      $region16: #{generator_forward.55} parent=11 // pred_fallthru
        _
      // Predicated region
      $region17: #{generator_forward.55} parent=11 // pred_check
        %p121 = pneg %p77
      $region18: #{generator_forward.55} parent=11 // pred_check_branch
        %123 = sbr.rel (%p121) target = $region20
      $region19: #{generator_forward.55} parent=11 // pred_region
        _
      $region20: #{generator_forward.55} parent=11 // pred_fallthru
        _
    $region12: #{generator_forward.55} parent=5 // pred_fallthru
      _
    %p124 = scmp.lt.s32.totalorder %s9, 2
    // Predicated region
    $region21: #{generator_forward.55} parent=5 // pred_check
      %p125 = pneg %p124
    $region22: #{generator_forward.55} parent=5 // pred_check_branch
      %127 = sbr.rel (%p125) target = $region24
    $region23: #{generator_forward.55} parent=5 // pred_region
      // Predicated region
      $region25: #{generator_forward.55} parent=23 // pred_check
        %p128 = pneg %p29
      $region26: #{generator_forward.55} parent=23 // pred_check_branch
        %130 = sbr.rel (%p128) target = $region28
      $region27: #{generator_forward.55} parent=23 // pred_region
        %s131 = smul.u32 32, %s9
        %p132 = scmp.lt.s32.totalorder %s131, 63
        %s133 = scalar_select %p132, %s131, 63
        %s134 = smul.addr %s133, 13
        %s135 = smul.addr %s134, 4
        %s136 = scalar_lea.vmem %s0, %s135
        %s137 = smul.u32 32, %s9
      $region28: #{generator_forward.55} parent=23 // pred_fallthru
        _
    $region24: #{generator_forward.55} parent=5 // pred_fallthru
      _
    %p138 = scmp.le.s32.totalorder 1, %s9
    %p139 = scmp.lt.s32.totalorder %s9, 3
    %p140 = pnand %p138, %p139
    %p141 = pneg %p140
    // Predicated region
    $region29: #{generator_forward.55} parent=5 // pred_check
      _
    $region30: #{generator_forward.55} parent=5 // pred_check_branch
      %143 = sbr.rel (%p140) target = $region32
    $region31: #{generator_forward.55} parent=5 // pred_region
      %s144 = ssub.s32 %s9, 1
      %s145 = smul.u32 32, %s14
      %p146 = scmp.lt.s32.totalorder %s145, 63
      %s147 = scalar_select %p146, %s145, 63
      %s148 = smul.addr %s147, 13
      %s149 = smul.addr %s148, 4
      %s150 = scalar_lea.vmem %s0, %s149
      %p151 = pneg %p35
      %p152 = pneg %p32
      %p153 = pneg %p56
      %p154 = pneg %p53
      %p155 = pneg %p77
      %p156 = pneg %p74
      %p157 = pneg %p103
      %p158 = pneg %p100
      %s159 = smul.u32 2, %s14
      %p160 = scmp.lt.s32.totalorder %s159, 3
      %s161 = scalar_select %p160, %s159, 3
      %s162 = smul.addr %s161, 8
      %s163 = scalar_lea.vmem %s3, %s162
      %s164 = smul.u32 32, %s14
      %p165 = scmp.lt.s32.totalorder %s164, 63
      %s166 = scalar_select %p165, %s164, 63
      %s167 = smul.addr %s166, 13
      %s168 = smul.addr %s167, 4
      %s169 = scalar_lea.vmem %s0, %s168
      %s170 = smul.u32 32, %s14
      %s171 = smul.u32 2, %s14
      %p172 = scmp.lt.s32.totalorder %s171, 3
      %s173 = scalar_select %p172, %s171, 3
      %s174 = smul.addr %s173, 8
      %s175 = scalar_lea.vmem %s3, %s174
      %s176 = smul.u32 2, %s14
      %v178 = vld [vmem:[%s1] sm:$0xff]
      %v179 = vld [vmem:[%s1 + $0x8] sm:$0xff]
      %v180 = vld [vmem:[%s1 + $0x10] sm:$0xff]
      %v181 = vld [vmem:[%s1 + $0x18] sm:$0xff]
      %v182 = vld [vmem:[%s1 + $0x20] sm:$0xff]
      %v183 = vld [vmem:[%s1 + $0x28] sm:$0xff]
      %v184 = vld [vmem:[%s1 + $0x30] sm:$0xf]
      %v185 = vld [vmem:[%s1 + $0x34] sm:$0xff]
      %v186 = vld [vmem:[%s1 + $0x3c] sm:$0xff]
      %v187 = vld [vmem:[%s1 + $0x44] sm:$0xff]
      %v188 = vld [vmem:[%s1 + $0x4c] sm:$0xff]
      %v189 = vld [vmem:[%s1 + $0x54] sm:$0xff]
      %v190 = vld [vmem:[%s1 + $0x5c] sm:$0xff]
      %v191 = vld [vmem:[%s1 + $0x64] sm:$0xf]
      %v192 = vld [vmem:[%s1 + $0x68] sm:$0xff]
      %v193 = vld [vmem:[%s1 + $0x70] sm:$0xff]
      %v194 = vld [vmem:[%s1 + $0x78] sm:$0xff]
      %v195 = vld [vmem:[%s1 + $0x80] sm:$0xff]
      %v196 = vld [vmem:[%s1 + $0x88] sm:$0xff]
      %v197 = vld [vmem:[%s1 + $0x90] sm:$0xff]
      %v198 = vld [vmem:[%s1 + $0x98] sm:$0xf]
      %v199 = vld [vmem:[%s1 + $0x9c] sm:$0xff]
      %v200 = vld [vmem:[%s1 + $0xa4] sm:$0xff]
      %v201 = vld [vmem:[%s1 + $0xac] sm:$0xff]
      %v202 = vld [vmem:[%s1 + $0xb4] sm:$0xff]
      %v203 = vld [vmem:[%s1 + $0xbc] sm:$0xff]
      %v204 = vld [vmem:[%s1 + $0xc4] sm:$0xff]
      %v205 = vld [vmem:[%s1 + $0xcc] sm:$0xf]
      %v206 = vld [vmem:[%s1 + $0xd0] sm:$0xff]
      %v207 = vld [vmem:[%s1 + $0xd8] sm:$0xff]
      %v208 = vld [vmem:[%s1 + $0xe0] sm:$0xff]
      %v209 = vld [vmem:[%s1 + $0xe8] sm:$0xff]
      %v210 = vld [vmem:[%s1 + $0xf0] sm:$0xff]
      %v211 = vld [vmem:[%s1 + $0xf8] sm:$0xff]
      %v212 = vld [vmem:[%s1 + $0x100] sm:$0xf]
      %v213 = vld [vmem:[%s1 + $0x104] sm:$0xff]
      %v214 = vld [vmem:[%s1 + $0x10c] sm:$0xff]
      %v215 = vld [vmem:[%s1 + $0x114] sm:$0xff]
      %v216 = vld [vmem:[%s1 + $0x11c] sm:$0xff]
      %v217 = vld [vmem:[%s1 + $0x124] sm:$0xff]
      %v218 = vld [vmem:[%s1 + $0x12c] sm:$0xff]
      %v219 = vld [vmem:[%s1 + $0x134] sm:$0xf]
      %v220 = vld [vmem:[%s1 + $0x138] sm:$0xff]
      %v221 = vld [vmem:[%s1 + $0x140] sm:$0xff]
      %v222 = vld [vmem:[%s1 + $0x148] sm:$0xff]
      %v223 = vld [vmem:[%s1 + $0x150] sm:$0xff]
      %v224 = vld [vmem:[%s1 + $0x158] sm:$0xff]
      %v225 = vld [vmem:[%s1 + $0x160] sm:$0xff]
      %v226 = vld [vmem:[%s1 + $0x168] sm:$0xf]
      %v227 = vld [vmem:[%s1 + $0x16c] sm:$0xff]
      %v228 = vld [vmem:[%s1 + $0x174] sm:$0xff]
      %v229 = vld [vmem:[%s1 + $0x17c] sm:$0xff]
      %v230 = vld [vmem:[%s1 + $0x184] sm:$0xff]
      %v231 = vld [vmem:[%s1 + $0x18c] sm:$0xff]
      %v232 = vld [vmem:[%s1 + $0x194] sm:$0xff]
      %v233 = vld [vmem:[%s1 + $0x19c] sm:$0xf]
      %v234 = vld [vmem:[%s1 + $0x1a0] sm:$0xff]
      %v235 = vld [vmem:[%s1 + $0x1a8] sm:$0xff]
      %v236 = vld [vmem:[%s1 + $0x1b0] sm:$0xff]
      %v237 = vld [vmem:[%s1 + $0x1b8] sm:$0xff]
      %v238 = vld [vmem:[%s1 + $0x1c0] sm:$0xff]
      %v239 = vld [vmem:[%s1 + $0x1c8] sm:$0xff]
      %v240 = vld [vmem:[%s1 + $0x1d0] sm:$0xf]
      %v241 = vld [vmem:[%s1 + $0x1d4] sm:$0xff]
      %v242 = vld [vmem:[%s1 + $0x1dc] sm:$0xff]
      %v243 = vld [vmem:[%s1 + $0x1e4] sm:$0xff]
      %v244 = vld [vmem:[%s1 + $0x1ec] sm:$0xff]
      %v245 = vld [vmem:[%s1 + $0x1f4] sm:$0xff]
      %v246 = vld [vmem:[%s1 + $0x1fc] sm:$0xff]
      %v247 = vld [vmem:[%s1 + $0x204] sm:$0xf]
      %v248 = vld [vmem:[%s1 + $0x208] sm:$0xff]
      %v249 = vld [vmem:[%s1 + $0x210] sm:$0xff]
      %v250 = vld [vmem:[%s1 + $0x218] sm:$0xff]
      %v251 = vld [vmem:[%s1 + $0x220] sm:$0xff]
      %v252 = vld [vmem:[%s1 + $0x228] sm:$0xff]
      %v253 = vld [vmem:[%s1 + $0x230] sm:$0xff]
      %v254 = vld [vmem:[%s1 + $0x238] sm:$0xf]
      %v255 = vld [vmem:[%s1 + $0x23c] sm:$0xff]
      %v256 = vld [vmem:[%s1 + $0x244] sm:$0xff]
      %v257 = vld [vmem:[%s1 + $0x24c] sm:$0xff]
      %v258 = vld [vmem:[%s1 + $0x254] sm:$0xff]
      %v259 = vld [vmem:[%s1 + $0x25c] sm:$0xff]
      %v260 = vld [vmem:[%s1 + $0x264] sm:$0xff]
      %v261 = vld [vmem:[%s1 + $0x26c] sm:$0xf]
      %v262 = vld [vmem:[%s1 + $0x270] sm:$0xff]
      %v263 = vld [vmem:[%s1 + $0x278] sm:$0xff]
      %v264 = vld [vmem:[%s1 + $0x280] sm:$0xff]
      %v265 = vld [vmem:[%s1 + $0x288] sm:$0xff]
      %v266 = vld [vmem:[%s1 + $0x290] sm:$0xff]
      %v267 = vld [vmem:[%s1 + $0x298] sm:$0xff]
      %v268 = vld [vmem:[%s1 + $0x2a0] sm:$0xf]
      %v269 = vld [vmem:[%s1 + $0x2a4] sm:$0xff]
      %v270 = vld [vmem:[%s1 + $0x2ac] sm:$0xff]
      %v271 = vld [vmem:[%s1 + $0x2b4] sm:$0xff]
      %v272 = vld [vmem:[%s1 + $0x2bc] sm:$0xff]
      %v273 = vld [vmem:[%s1 + $0x2c4] sm:$0xff]
      %v274 = vld [vmem:[%s1 + $0x2cc] sm:$0xff]
      %v275 = vld [vmem:[%s1 + $0x2d4] sm:$0xf]
      %v276 = vld [vmem:[%s1 + $0x2d8] sm:$0xff]
      %v277 = vld [vmem:[%s1 + $0x2e0] sm:$0xff]
      %v278 = vld [vmem:[%s1 + $0x2e8] sm:$0xff]
      %v279 = vld [vmem:[%s1 + $0x2f0] sm:$0xff]
      %v280 = vld [vmem:[%s1 + $0x2f8] sm:$0xff]
      %v281 = vld [vmem:[%s1 + $0x300] sm:$0xff]
      %v282 = vld [vmem:[%s1 + $0x308] sm:$0xf]
      %v283 = vld [vmem:[%s1 + $0x30c] sm:$0xff]
      %v284 = vld [vmem:[%s1 + $0x314] sm:$0xff]
      %v285 = vld [vmem:[%s1 + $0x31c] sm:$0xff]
      %v286 = vld [vmem:[%s1 + $0x324] sm:$0xff]
      %v287 = vld [vmem:[%s1 + $0x32c] sm:$0xff]
      %v288 = vld [vmem:[%s1 + $0x334] sm:$0xff]
      %v289 = vld [vmem:[%s1 + $0x33c] sm:$0xf]
      %v290 = vld [vmem:[%s169] sm:$0xff]
      %v291 = vld [vmem:[%s169 + $0x8] sm:$0xff]
      %v292 = vld [vmem:[%s169 + $0x10] sm:$0xff]
      %v293 = vld [vmem:[%s169 + $0x18] sm:$0xff]
      %v294 = vld [vmem:[%s169 + $0x20] sm:$0xff]
      %v295 = vld [vmem:[%s169 + $0x28] sm:$0xff]
      %v296 = vld [vmem:[%s169 + $0x30] sm:$0xf]
      %v297 = vld [vmem:[%s169 + $0x34] sm:$0xff]
      %v298 = vld [vmem:[%s169 + $0x3c] sm:$0xff]
      %v299 = vld [vmem:[%s169 + $0x44] sm:$0xff]
      %v300 = vld [vmem:[%s169 + $0x4c] sm:$0xff]
      %v301 = vld [vmem:[%s169 + $0x54] sm:$0xff]
      %v302 = vld [vmem:[%s169 + $0x5c] sm:$0xff]
      %v303 = vld [vmem:[%s169 + $0x64] sm:$0xf]
      %v304 = vld [vmem:[%s169 + $0x68] sm:$0xff]
      %v305 = vld [vmem:[%s169 + $0x70] sm:$0xff]
      %v306 = vld [vmem:[%s169 + $0x78] sm:$0xff]
      %v307 = vld [vmem:[%s169 + $0x80] sm:$0xff]
      %v308 = vld [vmem:[%s169 + $0x88] sm:$0xff]
      %v309 = vld [vmem:[%s169 + $0x90] sm:$0xff]
      %v310 = vld [vmem:[%s169 + $0x98] sm:$0xf]
      %v311 = vld [vmem:[%s169 + $0x9c] sm:$0xff]
      %v312 = vld [vmem:[%s169 + $0xa4] sm:$0xff]
      %v313 = vld [vmem:[%s169 + $0xac] sm:$0xff]
      %v314 = vld [vmem:[%s169 + $0xb4] sm:$0xff]
      %v315 = vld [vmem:[%s169 + $0xbc] sm:$0xff]
      %v316 = vld [vmem:[%s169 + $0xc4] sm:$0xff]
      %v317 = vld [vmem:[%s169 + $0xcc] sm:$0xf]
      %v318 = vld [vmem:[%s169 + $0xd0] sm:$0xff]
      %v319 = vld [vmem:[%s169 + $0xd8] sm:$0xff]
      %v320 = vld [vmem:[%s169 + $0xe0] sm:$0xff]
      %v321 = vld [vmem:[%s169 + $0xe8] sm:$0xff]
      %v322 = vld [vmem:[%s169 + $0xf0] sm:$0xff]
      %v323 = vld [vmem:[%s169 + $0xf8] sm:$0xff]
      %v324 = vld [vmem:[%s169 + $0x100] sm:$0xf]
      %v325 = vld [vmem:[%s169 + $0x104] sm:$0xff]
      %v326 = vld [vmem:[%s169 + $0x10c] sm:$0xff]
      %v327 = vld [vmem:[%s169 + $0x114] sm:$0xff]
      %v328 = vld [vmem:[%s169 + $0x11c] sm:$0xff]
      %v329 = vld [vmem:[%s169 + $0x124] sm:$0xff]
      %v330 = vld [vmem:[%s169 + $0x12c] sm:$0xff]
      %v331 = vld [vmem:[%s169 + $0x134] sm:$0xf]
      %v332 = vld [vmem:[%s169 + $0x138] sm:$0xff]
      %v333 = vld [vmem:[%s169 + $0x140] sm:$0xff]
      %v334 = vld [vmem:[%s169 + $0x148] sm:$0xff]
      %v335 = vld [vmem:[%s169 + $0x150] sm:$0xff]
      %v336 = vld [vmem:[%s169 + $0x158] sm:$0xff]
      %v337 = vld [vmem:[%s169 + $0x160] sm:$0xff]
      %v338 = vld [vmem:[%s169 + $0x168] sm:$0xf]
      %v339 = vld [vmem:[%s169 + $0x16c] sm:$0xff]
      %v340 = vld [vmem:[%s169 + $0x174] sm:$0xff]
      %v341 = vld [vmem:[%s169 + $0x17c] sm:$0xff]
      %v342 = vld [vmem:[%s169 + $0x184] sm:$0xff]
      %v343 = vld [vmem:[%s169 + $0x18c] sm:$0xff]
      %v344 = vld [vmem:[%s169 + $0x194] sm:$0xff]
      %v345 = vld [vmem:[%s169 + $0x19c] sm:$0xf]
      %v346 = vld [vmem:[%s169 + $0x1a0] sm:$0xff]
      %v347 = vld [vmem:[%s169 + $0x1a8] sm:$0xff]
      %v348 = vld [vmem:[%s169 + $0x1b0] sm:$0xff]
      %v349 = vld [vmem:[%s169 + $0x1b8] sm:$0xff]
      %v350 = vld [vmem:[%s169 + $0x1c0] sm:$0xff]
      %v351 = vld [vmem:[%s169 + $0x1c8] sm:$0xff]
      %v352 = vld [vmem:[%s169 + $0x1d0] sm:$0xf]
      %v353 = vld [vmem:[%s169 + $0x1d4] sm:$0xff]
      %v354 = vld [vmem:[%s169 + $0x1dc] sm:$0xff]
      %v355 = vld [vmem:[%s169 + $0x1e4] sm:$0xff]
      %v356 = vld [vmem:[%s169 + $0x1ec] sm:$0xff]
      %v357 = vld [vmem:[%s169 + $0x1f4] sm:$0xff]
      %v358 = vld [vmem:[%s169 + $0x1fc] sm:$0xff]
      %v359 = vld [vmem:[%s169 + $0x204] sm:$0xf]
      %v360 = vld [vmem:[%s169 + $0x208] sm:$0xff]
      %v361 = vld [vmem:[%s169 + $0x210] sm:$0xff]
      %v362 = vld [vmem:[%s169 + $0x218] sm:$0xff]
      %v363 = vld [vmem:[%s169 + $0x220] sm:$0xff]
      %v364 = vld [vmem:[%s169 + $0x228] sm:$0xff]
      %v365 = vld [vmem:[%s169 + $0x230] sm:$0xff]
      %v366 = vld [vmem:[%s169 + $0x238] sm:$0xf]
      %v367 = vld [vmem:[%s169 + $0x23c] sm:$0xff]
      %v368 = vld [vmem:[%s169 + $0x244] sm:$0xff]
      %v369 = vld [vmem:[%s169 + $0x24c] sm:$0xff]
      %v370 = vld [vmem:[%s169 + $0x254] sm:$0xff]
      %v371 = vld [vmem:[%s169 + $0x25c] sm:$0xff]
      %v372 = vld [vmem:[%s169 + $0x264] sm:$0xff]
      %v373 = vld [vmem:[%s169 + $0x26c] sm:$0xf]
      %v374 = vld [vmem:[%s169 + $0x270] sm:$0xff]
      %v375 = vld [vmem:[%s169 + $0x278] sm:$0xff]
      %v376 = vld [vmem:[%s169 + $0x280] sm:$0xff]
      %v377 = vld [vmem:[%s169 + $0x288] sm:$0xff]
      %v378 = vld [vmem:[%s169 + $0x290] sm:$0xff]
      %v379 = vld [vmem:[%s169 + $0x298] sm:$0xff]
      %v380 = vld [vmem:[%s169 + $0x2a0] sm:$0xf]
      %v381 = vld [vmem:[%s169 + $0x2a4] sm:$0xff]
      %v382 = vld [vmem:[%s169 + $0x2ac] sm:$0xff]
      %v383 = vld [vmem:[%s169 + $0x2b4] sm:$0xff]
      %v384 = vld [vmem:[%s169 + $0x2bc] sm:$0xff]
      %v385 = vld [vmem:[%s169 + $0x2c4] sm:$0xff]
      %v386 = vld [vmem:[%s169 + $0x2cc] sm:$0xff]
      %v387 = vld [vmem:[%s169 + $0x2d4] sm:$0xf]
      %v388 = vld [vmem:[%s169 + $0x2d8] sm:$0xff]
      %v389 = vld [vmem:[%s169 + $0x2e0] sm:$0xff]
      %v390 = vld [vmem:[%s169 + $0x2e8] sm:$0xff]
      %v391 = vld [vmem:[%s169 + $0x2f0] sm:$0xff]
      %v392 = vld [vmem:[%s169 + $0x2f8] sm:$0xff]
      %v393 = vld [vmem:[%s169 + $0x300] sm:$0xff]
      %v394 = vld [vmem:[%s169 + $0x308] sm:$0xf]
      %v395 = vld [vmem:[%s169 + $0x30c] sm:$0xff]
      %v396 = vld [vmem:[%s169 + $0x314] sm:$0xff]
      %v397 = vld [vmem:[%s169 + $0x31c] sm:$0xff]
      %v398 = vld [vmem:[%s169 + $0x324] sm:$0xff]
      %v399 = vld [vmem:[%s169 + $0x32c] sm:$0xff]
      %v400 = vld [vmem:[%s169 + $0x334] sm:$0xff]
      %v401 = vld [vmem:[%s169 + $0x33c] sm:$0xf]
      %v402 = vld [vmem:[%s169 + $0x340] sm:$0xff]
      %v403 = vld [vmem:[%s169 + $0x348] sm:$0xff]
      %v404 = vld [vmem:[%s169 + $0x350] sm:$0xff]
      %v405 = vld [vmem:[%s169 + $0x358] sm:$0xff]
      %v406 = vld [vmem:[%s169 + $0x360] sm:$0xff]
      %v407 = vld [vmem:[%s169 + $0x368] sm:$0xff]
      %v408 = vld [vmem:[%s169 + $0x370] sm:$0xf]
      %v409 = vld [vmem:[%s169 + $0x374] sm:$0xff]
      %v410 = vld [vmem:[%s169 + $0x37c] sm:$0xff]
      %v411 = vld [vmem:[%s169 + $0x384] sm:$0xff]
      %v412 = vld [vmem:[%s169 + $0x38c] sm:$0xff]
      %v413 = vld [vmem:[%s169 + $0x394] sm:$0xff]
      %v414 = vld [vmem:[%s169 + $0x39c] sm:$0xff]
      %v415 = vld [vmem:[%s169 + $0x3a4] sm:$0xf]
      %v416 = vld [vmem:[%s169 + $0x3a8] sm:$0xff]
      %v417 = vld [vmem:[%s169 + $0x3b0] sm:$0xff]
      %v418 = vld [vmem:[%s169 + $0x3b8] sm:$0xff]
      %v419 = vld [vmem:[%s169 + $0x3c0] sm:$0xff]
      %v420 = vld [vmem:[%s169 + $0x3c8] sm:$0xff]
      %v421 = vld [vmem:[%s169 + $0x3d0] sm:$0xff]
      %v422 = vld [vmem:[%s169 + $0x3d8] sm:$0xf]
      %v423 = vld [vmem:[%s169 + $0x3dc] sm:$0xff]
      %v424 = vld [vmem:[%s169 + $0x3e4] sm:$0xff]
      %v425 = vld [vmem:[%s169 + $0x3ec] sm:$0xff]
      %v426 = vld [vmem:[%s169 + $0x3f4] sm:$0xff]
      %v427 = vld [vmem:[%s169 + $0x3fc] sm:$0xff]
      %v428 = vld [vmem:[%s169 + $0x404] sm:$0xff]
      %v429 = vld [vmem:[%s169 + $0x40c] sm:$0xf]
      %v430 = vld [vmem:[%s169 + $0x410] sm:$0xff]
      %v431 = vld [vmem:[%s169 + $0x418] sm:$0xff]
      %v432 = vld [vmem:[%s169 + $0x420] sm:$0xff]
      %v433 = vld [vmem:[%s169 + $0x428] sm:$0xff]
      %v434 = vld [vmem:[%s169 + $0x430] sm:$0xff]
      %v435 = vld [vmem:[%s169 + $0x438] sm:$0xff]
      %v436 = vld [vmem:[%s169 + $0x440] sm:$0xf]
      %v437 = vld [vmem:[%s169 + $0x444] sm:$0xff]
      %v438 = vld [vmem:[%s169 + $0x44c] sm:$0xff]
      %v439 = vld [vmem:[%s169 + $0x454] sm:$0xff]
      %v440 = vld [vmem:[%s169 + $0x45c] sm:$0xff]
      %v441 = vld [vmem:[%s169 + $0x464] sm:$0xff]
      %v442 = vld [vmem:[%s169 + $0x46c] sm:$0xff]
      %v443 = vld [vmem:[%s169 + $0x474] sm:$0xf]
      %v444 = vld [vmem:[%s169 + $0x478] sm:$0xff]
      %v445 = vld [vmem:[%s169 + $0x480] sm:$0xff]
      %v446 = vld [vmem:[%s169 + $0x488] sm:$0xff]
      %v447 = vld [vmem:[%s169 + $0x490] sm:$0xff]
      %v448 = vld [vmem:[%s169 + $0x498] sm:$0xff]
      %v449 = vld [vmem:[%s169 + $0x4a0] sm:$0xff]
      %v450 = vld [vmem:[%s169 + $0x4a8] sm:$0xf]
      %v451 = vld [vmem:[%s169 + $0x4ac] sm:$0xff]
      %v452 = vld [vmem:[%s169 + $0x4b4] sm:$0xff]
      %v453 = vld [vmem:[%s169 + $0x4bc] sm:$0xff]
      %v454 = vld [vmem:[%s169 + $0x4c4] sm:$0xff]
      %v455 = vld [vmem:[%s169 + $0x4cc] sm:$0xff]
      %v456 = vld [vmem:[%s169 + $0x4d4] sm:$0xff]
      %v457 = vld [vmem:[%s169 + $0x4dc] sm:$0xf]
      %v458 = vld [vmem:[%s169 + $0x4e0] sm:$0xff]
      %v459 = vld [vmem:[%s169 + $0x4e8] sm:$0xff]
      %v460 = vld [vmem:[%s169 + $0x4f0] sm:$0xff]
      %v461 = vld [vmem:[%s169 + $0x4f8] sm:$0xff]
      %v462 = vld [vmem:[%s169 + $0x500] sm:$0xff]
      %v463 = vld [vmem:[%s169 + $0x508] sm:$0xff]
      %v464 = vld [vmem:[%s169 + $0x510] sm:$0xf]
      %v465 = vld [vmem:[%s169 + $0x514] sm:$0xff]
      %v466 = vld [vmem:[%s169 + $0x51c] sm:$0xff]
      %v467 = vld [vmem:[%s169 + $0x524] sm:$0xff]
      %v468 = vld [vmem:[%s169 + $0x52c] sm:$0xff]
      %v469 = vld [vmem:[%s169 + $0x534] sm:$0xff]
      %v470 = vld [vmem:[%s169 + $0x53c] sm:$0xff]
      %v471 = vld [vmem:[%s169 + $0x544] sm:$0xf]
      %v472 = vld [vmem:[%s169 + $0x548] sm:$0xff]
      %v473 = vld [vmem:[%s169 + $0x550] sm:$0xff]
      %v474 = vld [vmem:[%s169 + $0x558] sm:$0xff]
      %v475 = vld [vmem:[%s169 + $0x560] sm:$0xff]
      %v476 = vld [vmem:[%s169 + $0x568] sm:$0xff]
      %v477 = vld [vmem:[%s169 + $0x570] sm:$0xff]
      %v478 = vld [vmem:[%s169 + $0x578] sm:$0xf]
      %v479 = vld [vmem:[%s169 + $0x57c] sm:$0xff]
      %v480 = vld [vmem:[%s169 + $0x584] sm:$0xff]
      %v481 = vld [vmem:[%s169 + $0x58c] sm:$0xff]
      %v482 = vld [vmem:[%s169 + $0x594] sm:$0xff]
      %v483 = vld [vmem:[%s169 + $0x59c] sm:$0xff]
      %v484 = vld [vmem:[%s169 + $0x5a4] sm:$0xff]
      %v485 = vld [vmem:[%s169 + $0x5ac] sm:$0xf]
      %v486 = vld [vmem:[%s169 + $0x5b0] sm:$0xff]
      %v487 = vld [vmem:[%s169 + $0x5b8] sm:$0xff]
      %v488 = vld [vmem:[%s169 + $0x5c0] sm:$0xff]
      %v489 = vld [vmem:[%s169 + $0x5c8] sm:$0xff]
      %v490 = vld [vmem:[%s169 + $0x5d0] sm:$0xff]
      %v491 = vld [vmem:[%s169 + $0x5d8] sm:$0xff]
      %v492 = vld [vmem:[%s169 + $0x5e0] sm:$0xf]
      %v493 = vld [vmem:[%s169 + $0x5e4] sm:$0xff]
      %v494 = vld [vmem:[%s169 + $0x5ec] sm:$0xff]
      %v495 = vld [vmem:[%s169 + $0x5f4] sm:$0xff]
      %v496 = vld [vmem:[%s169 + $0x5fc] sm:$0xff]
      %v497 = vld [vmem:[%s169 + $0x604] sm:$0xff]
      %v498 = vld [vmem:[%s169 + $0x60c] sm:$0xff]
      %v499 = vld [vmem:[%s169 + $0x614] sm:$0xf]
      %v500 = vld [vmem:[%s169 + $0x618] sm:$0xff]
      %v501 = vld [vmem:[%s169 + $0x620] sm:$0xff]
      %v502 = vld [vmem:[%s169 + $0x628] sm:$0xff]
      %v503 = vld [vmem:[%s169 + $0x630] sm:$0xff]
      %v504 = vld [vmem:[%s169 + $0x638] sm:$0xff]
      %v505 = vld [vmem:[%s169 + $0x640] sm:$0xff]
      %v506 = vld [vmem:[%s169 + $0x648] sm:$0xf]
      %v507 = vld [vmem:[%s169 + $0x64c] sm:$0xff]
      %v508 = vld [vmem:[%s169 + $0x654] sm:$0xff]
      %v509 = vld [vmem:[%s169 + $0x65c] sm:$0xff]
      %v510 = vld [vmem:[%s169 + $0x664] sm:$0xff]
      %v511 = vld [vmem:[%s169 + $0x66c] sm:$0xff]
      %v512 = vld [vmem:[%s169 + $0x674] sm:$0xff]
      %v513 = vld [vmem:[%s169 + $0x67c] sm:$0xf]
      %v626 = vunpack.c.l.b16 %v178
      %v627 = vunpack.c.h.b16 %v178
      %v628 = vunpack.c.l.b16 %v179
      %v629 = vunpack.c.h.b16 %v179
      %v630 = vunpack.c.l.b16 %v180
      %v631 = vunpack.c.h.b16 %v180
      %v632 = vunpack.c.l.b16 %v181
      %v633 = vunpack.c.h.b16 %v181
      %v634 = vunpack.c.l.b16 %v182
      %v635 = vunpack.c.h.b16 %v182
      %v636 = vunpack.c.l.b16 %v183
      %v637 = vunpack.c.h.b16 %v183
      %v638 = vunpack.c.l.b16 %v184
      %v639 = vunpack.c.l.b16 %v185
      %v640 = vunpack.c.h.b16 %v185
      %v641 = vunpack.c.l.b16 %v186
      %v642 = vunpack.c.h.b16 %v186
      %v643 = vunpack.c.l.b16 %v187
      %v644 = vunpack.c.h.b16 %v187
      %v645 = vunpack.c.l.b16 %v188
      %v646 = vunpack.c.h.b16 %v188
      %v647 = vunpack.c.l.b16 %v189
      %v648 = vunpack.c.h.b16 %v189
      %v649 = vunpack.c.l.b16 %v190
      %v650 = vunpack.c.h.b16 %v190
      %v651 = vunpack.c.l.b16 %v191
      %v652 = vunpack.c.l.b16 %v192
      %v653 = vunpack.c.h.b16 %v192
      %v654 = vunpack.c.l.b16 %v193
      %v655 = vunpack.c.h.b16 %v193
      %v656 = vunpack.c.l.b16 %v194
      %v657 = vunpack.c.h.b16 %v194
      %v658 = vunpack.c.l.b16 %v195
      %v659 = vunpack.c.h.b16 %v195
      %v660 = vunpack.c.l.b16 %v196
      %v661 = vunpack.c.h.b16 %v196
      %v662 = vunpack.c.l.b16 %v197
      %v663 = vunpack.c.h.b16 %v197
      %v664 = vunpack.c.l.b16 %v198
      %v665 = vunpack.c.l.b16 %v199
      %v666 = vunpack.c.h.b16 %v199
      %v667 = vunpack.c.l.b16 %v200
      %v668 = vunpack.c.h.b16 %v200
      %v669 = vunpack.c.l.b16 %v201
      %v670 = vunpack.c.h.b16 %v201
      %v671 = vunpack.c.l.b16 %v202
      %v672 = vunpack.c.h.b16 %v202
      %v673 = vunpack.c.l.b16 %v203
      %v674 = vunpack.c.h.b16 %v203
      %v675 = vunpack.c.l.b16 %v204
      %v676 = vunpack.c.h.b16 %v204
      %v677 = vunpack.c.l.b16 %v205
      %v678 = vunpack.c.l.b16 %v206
      %v679 = vunpack.c.h.b16 %v206
      %v680 = vunpack.c.l.b16 %v207
      %v681 = vunpack.c.h.b16 %v207
      %v682 = vunpack.c.l.b16 %v208
      %v683 = vunpack.c.h.b16 %v208
      %v684 = vunpack.c.l.b16 %v209
      %v685 = vunpack.c.h.b16 %v209
      %v686 = vunpack.c.l.b16 %v210
      %v687 = vunpack.c.h.b16 %v210
      %v688 = vunpack.c.l.b16 %v211
      %v689 = vunpack.c.h.b16 %v211
      %v690 = vunpack.c.l.b16 %v212
      %v691 = vunpack.c.l.b16 %v213
      %v692 = vunpack.c.h.b16 %v213
      %v693 = vunpack.c.l.b16 %v214
      %v694 = vunpack.c.h.b16 %v214
      %v695 = vunpack.c.l.b16 %v215
      %v696 = vunpack.c.h.b16 %v215
      %v697 = vunpack.c.l.b16 %v216
      %v698 = vunpack.c.h.b16 %v216
      %v699 = vunpack.c.l.b16 %v217
      %v700 = vunpack.c.h.b16 %v217
      %v701 = vunpack.c.l.b16 %v218
      %v702 = vunpack.c.h.b16 %v218
      %v703 = vunpack.c.l.b16 %v219
      %v704 = vunpack.c.l.b16 %v220
      %v705 = vunpack.c.h.b16 %v220
      %v706 = vunpack.c.l.b16 %v221
      %v707 = vunpack.c.h.b16 %v221
      %v708 = vunpack.c.l.b16 %v222
      %v709 = vunpack.c.h.b16 %v222
      %v710 = vunpack.c.l.b16 %v223
      %v711 = vunpack.c.h.b16 %v223
      %v712 = vunpack.c.l.b16 %v224
      %v713 = vunpack.c.h.b16 %v224
      %v714 = vunpack.c.l.b16 %v225
      %v715 = vunpack.c.h.b16 %v225
      %v716 = vunpack.c.l.b16 %v226
      %v717 = vunpack.c.l.b16 %v227
      %v718 = vunpack.c.h.b16 %v227
      %v719 = vunpack.c.l.b16 %v228
      %v720 = vunpack.c.h.b16 %v228
      %v721 = vunpack.c.l.b16 %v229
      %v722 = vunpack.c.h.b16 %v229
      %v723 = vunpack.c.l.b16 %v230
      %v724 = vunpack.c.h.b16 %v230
      %v725 = vunpack.c.l.b16 %v231
      %v726 = vunpack.c.h.b16 %v231
      %v727 = vunpack.c.l.b16 %v232
      %v728 = vunpack.c.h.b16 %v232
      %v729 = vunpack.c.l.b16 %v233
      %v730 = vunpack.c.l.b16 %v234
      %v731 = vunpack.c.h.b16 %v234
      %v732 = vunpack.c.l.b16 %v235
      %v733 = vunpack.c.h.b16 %v235
      %v734 = vunpack.c.l.b16 %v236
      %v735 = vunpack.c.h.b16 %v236
      %v736 = vunpack.c.l.b16 %v237
      %v737 = vunpack.c.h.b16 %v237
      %v738 = vunpack.c.l.b16 %v238
      %v739 = vunpack.c.h.b16 %v238
      %v740 = vunpack.c.l.b16 %v239
      %v741 = vunpack.c.h.b16 %v239
      %v742 = vunpack.c.l.b16 %v240
      %v743 = vunpack.c.l.b16 %v241
      %v744 = vunpack.c.h.b16 %v241
      %v745 = vunpack.c.l.b16 %v242
      %v746 = vunpack.c.h.b16 %v242
      %v747 = vunpack.c.l.b16 %v243
      %v748 = vunpack.c.h.b16 %v243
      %v749 = vunpack.c.l.b16 %v244
      %v750 = vunpack.c.h.b16 %v244
      %v751 = vunpack.c.l.b16 %v245
      %v752 = vunpack.c.h.b16 %v245
      %v753 = vunpack.c.l.b16 %v246
      %v754 = vunpack.c.h.b16 %v246
      %v755 = vunpack.c.l.b16 %v247
      %v756 = vunpack.c.l.b16 %v248
      %v757 = vunpack.c.h.b16 %v248
      %v758 = vunpack.c.l.b16 %v249
      %v759 = vunpack.c.h.b16 %v249
      %v760 = vunpack.c.l.b16 %v250
      %v761 = vunpack.c.h.b16 %v250
      %v762 = vunpack.c.l.b16 %v251
      %v763 = vunpack.c.h.b16 %v251
      %v764 = vunpack.c.l.b16 %v252
      %v765 = vunpack.c.h.b16 %v252
      %v766 = vunpack.c.l.b16 %v253
      %v767 = vunpack.c.h.b16 %v253
      %v768 = vunpack.c.l.b16 %v254
      %v769 = vunpack.c.l.b16 %v255
      %v770 = vunpack.c.h.b16 %v255
      %v771 = vunpack.c.l.b16 %v256
      %v772 = vunpack.c.h.b16 %v256
      %v773 = vunpack.c.l.b16 %v257
      %v774 = vunpack.c.h.b16 %v257
      %v775 = vunpack.c.l.b16 %v258
      %v776 = vunpack.c.h.b16 %v258
      %v777 = vunpack.c.l.b16 %v259
      %v778 = vunpack.c.h.b16 %v259
      %v779 = vunpack.c.l.b16 %v260
      %v780 = vunpack.c.h.b16 %v260
      %v781 = vunpack.c.l.b16 %v261
      %v782 = vunpack.c.l.b16 %v262
      %v783 = vunpack.c.h.b16 %v262
      %v784 = vunpack.c.l.b16 %v263
      %v785 = vunpack.c.h.b16 %v263
      %v786 = vunpack.c.l.b16 %v264
      %v787 = vunpack.c.h.b16 %v264
      %v788 = vunpack.c.l.b16 %v265
      %v789 = vunpack.c.h.b16 %v265
      %v790 = vunpack.c.l.b16 %v266
      %v791 = vunpack.c.h.b16 %v266
      %v792 = vunpack.c.l.b16 %v267
      %v793 = vunpack.c.h.b16 %v267
      %v794 = vunpack.c.l.b16 %v268
      %v795 = vunpack.c.l.b16 %v269
      %v796 = vunpack.c.h.b16 %v269
      %v797 = vunpack.c.l.b16 %v270
      %v798 = vunpack.c.h.b16 %v270
      %v799 = vunpack.c.l.b16 %v271
      %v800 = vunpack.c.h.b16 %v271
      %v801 = vunpack.c.l.b16 %v272
      %v802 = vunpack.c.h.b16 %v272
      %v803 = vunpack.c.l.b16 %v273
      %v804 = vunpack.c.h.b16 %v273
      %v805 = vunpack.c.l.b16 %v274
      %v806 = vunpack.c.h.b16 %v274
      %v807 = vunpack.c.l.b16 %v275
      %v808 = vunpack.c.l.b16 %v276
      %v809 = vunpack.c.h.b16 %v276
      %v810 = vunpack.c.l.b16 %v277
      %v811 = vunpack.c.h.b16 %v277
      %v812 = vunpack.c.l.b16 %v278
      %v813 = vunpack.c.h.b16 %v278
      %v814 = vunpack.c.l.b16 %v279
      %v815 = vunpack.c.h.b16 %v279
      %v816 = vunpack.c.l.b16 %v280
      %v817 = vunpack.c.h.b16 %v280
      %v818 = vunpack.c.l.b16 %v281
      %v819 = vunpack.c.h.b16 %v281
      %v820 = vunpack.c.l.b16 %v282
      %v821 = vunpack.c.l.b16 %v283
      %v822 = vunpack.c.h.b16 %v283
      %v823 = vunpack.c.l.b16 %v284
      %v824 = vunpack.c.h.b16 %v284
      %v825 = vunpack.c.l.b16 %v285
      %v826 = vunpack.c.h.b16 %v285
      %v827 = vunpack.c.l.b16 %v286
      %v828 = vunpack.c.h.b16 %v286
      %v829 = vunpack.c.l.b16 %v287
      %v830 = vunpack.c.h.b16 %v287
      %v831 = vunpack.c.l.b16 %v288
      %v832 = vunpack.c.h.b16 %v288
      %v833 = vunpack.c.l.b16 %v289
      %v834 = vpack.c.b16 %v639, %v626
      %v835 = vpack.c.b16 %v640, %v627
      %v836 = vpack.c.b16 %v641, %v628
      %v837 = vpack.c.b16 %v642, %v629
      %v838 = vpack.c.b16 %v643, %v630
      %v839 = vpack.c.b16 %v644, %v631
      %v840 = vpack.c.b16 %v645, %v632
      %v841 = vpack.c.b16 %v646, %v633
      %v842 = vpack.c.b16 %v647, %v634
      %v843 = vpack.c.b16 %v648, %v635
      %v844 = vpack.c.b16 %v649, %v636
      %v845 = vpack.c.b16 %v650, %v637
      %v846 = vpack.c.b16 %v651, %v638
      %v847 = vpack.c.b16 %v665, %v652
      %v848 = vpack.c.b16 %v666, %v653
      %v849 = vpack.c.b16 %v667, %v654
      %v850 = vpack.c.b16 %v668, %v655
      %v851 = vpack.c.b16 %v669, %v656
      %v852 = vpack.c.b16 %v670, %v657
      %v853 = vpack.c.b16 %v671, %v658
      %v854 = vpack.c.b16 %v672, %v659
      %v855 = vpack.c.b16 %v673, %v660
      %v856 = vpack.c.b16 %v674, %v661
      %v857 = vpack.c.b16 %v675, %v662
      %v858 = vpack.c.b16 %v676, %v663
      %v859 = vpack.c.b16 %v677, %v664
      %v860 = vpack.c.b16 %v691, %v678
      %v861 = vpack.c.b16 %v692, %v679
      %v862 = vpack.c.b16 %v693, %v680
      %v863 = vpack.c.b16 %v694, %v681
      %v864 = vpack.c.b16 %v695, %v682
      %v865 = vpack.c.b16 %v696, %v683
      %v866 = vpack.c.b16 %v697, %v684
      %v867 = vpack.c.b16 %v698, %v685
      %v868 = vpack.c.b16 %v699, %v686
      %v869 = vpack.c.b16 %v700, %v687
      %v870 = vpack.c.b16 %v701, %v688
      %v871 = vpack.c.b16 %v702, %v689
      %v872 = vpack.c.b16 %v703, %v690
      %v873 = vpack.c.b16 %v717, %v704
      %v874 = vpack.c.b16 %v718, %v705
      %v875 = vpack.c.b16 %v719, %v706
      %v876 = vpack.c.b16 %v720, %v707
      %v877 = vpack.c.b16 %v721, %v708
      %v878 = vpack.c.b16 %v722, %v709
      %v879 = vpack.c.b16 %v723, %v710
      %v880 = vpack.c.b16 %v724, %v711
      %v881 = vpack.c.b16 %v725, %v712
      %v882 = vpack.c.b16 %v726, %v713
      %v883 = vpack.c.b16 %v727, %v714
      %v884 = vpack.c.b16 %v728, %v715
      %v885 = vpack.c.b16 %v729, %v716
      %v886 = vpack.c.b16 %v743, %v730
      %v887 = vpack.c.b16 %v744, %v731
      %v888 = vpack.c.b16 %v745, %v732
      %v889 = vpack.c.b16 %v746, %v733
      %v890 = vpack.c.b16 %v747, %v734
      %v891 = vpack.c.b16 %v748, %v735
      %v892 = vpack.c.b16 %v749, %v736
      %v893 = vpack.c.b16 %v750, %v737
      %v894 = vpack.c.b16 %v751, %v738
      %v895 = vpack.c.b16 %v752, %v739
      %v896 = vpack.c.b16 %v753, %v740
      %v897 = vpack.c.b16 %v754, %v741
      %v898 = vpack.c.b16 %v755, %v742
      %v899 = vpack.c.b16 %v769, %v756
      %v900 = vpack.c.b16 %v770, %v757
      %v901 = vpack.c.b16 %v771, %v758
      %v902 = vpack.c.b16 %v772, %v759
      %v903 = vpack.c.b16 %v773, %v760
      %v904 = vpack.c.b16 %v774, %v761
      %v905 = vpack.c.b16 %v775, %v762
      %v906 = vpack.c.b16 %v776, %v763
      %v907 = vpack.c.b16 %v777, %v764
      %v908 = vpack.c.b16 %v778, %v765
      %v909 = vpack.c.b16 %v779, %v766
      %v910 = vpack.c.b16 %v780, %v767
      %v911 = vpack.c.b16 %v781, %v768
      %v912 = vpack.c.b16 %v795, %v782
      %v913 = vpack.c.b16 %v796, %v783
      %v914 = vpack.c.b16 %v797, %v784
      %v915 = vpack.c.b16 %v798, %v785
      %v916 = vpack.c.b16 %v799, %v786
      %v917 = vpack.c.b16 %v800, %v787
      %v918 = vpack.c.b16 %v801, %v788
      %v919 = vpack.c.b16 %v802, %v789
      %v920 = vpack.c.b16 %v803, %v790
      %v921 = vpack.c.b16 %v804, %v791
      %v922 = vpack.c.b16 %v805, %v792
      %v923 = vpack.c.b16 %v806, %v793
      %v924 = vpack.c.b16 %v807, %v794
      %v925 = vpack.c.b16 %v821, %v808
      %v926 = vpack.c.b16 %v822, %v809
      %v927 = vpack.c.b16 %v823, %v810
      %v928 = vpack.c.b16 %v824, %v811
      %v929 = vpack.c.b16 %v825, %v812
      %v930 = vpack.c.b16 %v826, %v813
      %v931 = vpack.c.b16 %v827, %v814
      %v932 = vpack.c.b16 %v828, %v815
      %v933 = vpack.c.b16 %v829, %v816
      %v934 = vpack.c.b16 %v830, %v817
      %v935 = vpack.c.b16 %v831, %v818
      %v936 = vpack.c.b16 %v832, %v819
      %v937 = vpack.c.b16 %v833, %v820
      %v1258 = vunpack.c.l.b16 %v290
      %v1259 = vunpack.c.h.b16 %v290
      %v1260 = vunpack.c.l.b16 %v291
      %v1261 = vunpack.c.h.b16 %v291
      %v1262 = vunpack.c.l.b16 %v292
      %v1263 = vunpack.c.h.b16 %v292
      %v1264 = vunpack.c.l.b16 %v293
      %v1265 = vunpack.c.h.b16 %v293
      %v1266 = vunpack.c.l.b16 %v294
      %v1267 = vunpack.c.h.b16 %v294
      %v1268 = vunpack.c.l.b16 %v295
      %v1269 = vunpack.c.h.b16 %v295
      %v1270 = vunpack.c.l.b16 %v296
      %v1271 = vunpack.c.l.b16 %v297
      %v1272 = vunpack.c.h.b16 %v297
      %v1273 = vunpack.c.l.b16 %v298
      %v1274 = vunpack.c.h.b16 %v298
      %v1275 = vunpack.c.l.b16 %v299
      %v1276 = vunpack.c.h.b16 %v299
      %v1277 = vunpack.c.l.b16 %v300
      %v1278 = vunpack.c.h.b16 %v300
      %v1279 = vunpack.c.l.b16 %v301
      %v1280 = vunpack.c.h.b16 %v301
      %v1281 = vunpack.c.l.b16 %v302
      %v1282 = vunpack.c.h.b16 %v302
      %v1283 = vunpack.c.l.b16 %v303
      %v1284 = vunpack.c.l.b16 %v304
      %v1285 = vunpack.c.h.b16 %v304
      %v1286 = vunpack.c.l.b16 %v305
      %v1287 = vunpack.c.h.b16 %v305
      %v1288 = vunpack.c.l.b16 %v306
      %v1289 = vunpack.c.h.b16 %v306
      %v1290 = vunpack.c.l.b16 %v307
      %v1291 = vunpack.c.h.b16 %v307
      %v1292 = vunpack.c.l.b16 %v308
      %v1293 = vunpack.c.h.b16 %v308
      %v1294 = vunpack.c.l.b16 %v309
      %v1295 = vunpack.c.h.b16 %v309
      %v1296 = vunpack.c.l.b16 %v310
      %v1297 = vunpack.c.l.b16 %v311
      %v1298 = vunpack.c.h.b16 %v311
      %v1299 = vunpack.c.l.b16 %v312
      %v1300 = vunpack.c.h.b16 %v312
      %v1301 = vunpack.c.l.b16 %v313
      %v1302 = vunpack.c.h.b16 %v313
      %v1303 = vunpack.c.l.b16 %v314
      %v1304 = vunpack.c.h.b16 %v314
      %v1305 = vunpack.c.l.b16 %v315
      %v1306 = vunpack.c.h.b16 %v315
      %v1307 = vunpack.c.l.b16 %v316
      %v1308 = vunpack.c.h.b16 %v316
      %v1309 = vunpack.c.l.b16 %v317
      %v1310 = vunpack.c.l.b16 %v318
      %v1311 = vunpack.c.h.b16 %v318
      %v1312 = vunpack.c.l.b16 %v319
      %v1313 = vunpack.c.h.b16 %v319
      %v1314 = vunpack.c.l.b16 %v320
      %v1315 = vunpack.c.h.b16 %v320
      %v1316 = vunpack.c.l.b16 %v321
      %v1317 = vunpack.c.h.b16 %v321
      %v1318 = vunpack.c.l.b16 %v322
      %v1319 = vunpack.c.h.b16 %v322
      %v1320 = vunpack.c.l.b16 %v323
      %v1321 = vunpack.c.h.b16 %v323
      %v1322 = vunpack.c.l.b16 %v324
      %v1323 = vunpack.c.l.b16 %v325
      %v1324 = vunpack.c.h.b16 %v325
      %v1325 = vunpack.c.l.b16 %v326
      %v1326 = vunpack.c.h.b16 %v326
      %v1327 = vunpack.c.l.b16 %v327
      %v1328 = vunpack.c.h.b16 %v327
      %v1329 = vunpack.c.l.b16 %v328
      %v1330 = vunpack.c.h.b16 %v328
      %v1331 = vunpack.c.l.b16 %v329
      %v1332 = vunpack.c.h.b16 %v329
      %v1333 = vunpack.c.l.b16 %v330
      %v1334 = vunpack.c.h.b16 %v330
      %v1335 = vunpack.c.l.b16 %v331
      %v1336 = vunpack.c.l.b16 %v332
      %v1337 = vunpack.c.h.b16 %v332
      %v1338 = vunpack.c.l.b16 %v333
      %v1339 = vunpack.c.h.b16 %v333
      %v1340 = vunpack.c.l.b16 %v334
      %v1341 = vunpack.c.h.b16 %v334
      %v1342 = vunpack.c.l.b16 %v335
      %v1343 = vunpack.c.h.b16 %v335
      %v1344 = vunpack.c.l.b16 %v336
      %v1345 = vunpack.c.h.b16 %v336
      %v1346 = vunpack.c.l.b16 %v337
      %v1347 = vunpack.c.h.b16 %v337
      %v1348 = vunpack.c.l.b16 %v338
      %v1349 = vunpack.c.l.b16 %v339
      %v1350 = vunpack.c.h.b16 %v339
      %v1351 = vunpack.c.l.b16 %v340
      %v1352 = vunpack.c.h.b16 %v340
      %v1353 = vunpack.c.l.b16 %v341
      %v1354 = vunpack.c.h.b16 %v341
      %v1355 = vunpack.c.l.b16 %v342
      %v1356 = vunpack.c.h.b16 %v342
      %v1357 = vunpack.c.l.b16 %v343
      %v1358 = vunpack.c.h.b16 %v343
      %v1359 = vunpack.c.l.b16 %v344
      %v1360 = vunpack.c.h.b16 %v344
      %v1361 = vunpack.c.l.b16 %v345
      %v1362 = vunpack.c.l.b16 %v346
      %v1363 = vunpack.c.h.b16 %v346
      %v1364 = vunpack.c.l.b16 %v347
      %v1365 = vunpack.c.h.b16 %v347
      %v1366 = vunpack.c.l.b16 %v348
      %v1367 = vunpack.c.h.b16 %v348
      %v1368 = vunpack.c.l.b16 %v349
      %v1369 = vunpack.c.h.b16 %v349
      %v1370 = vunpack.c.l.b16 %v350
      %v1371 = vunpack.c.h.b16 %v350
      %v1372 = vunpack.c.l.b16 %v351
      %v1373 = vunpack.c.h.b16 %v351
      %v1374 = vunpack.c.l.b16 %v352
      %v1375 = vunpack.c.l.b16 %v353
      %v1376 = vunpack.c.h.b16 %v353
      %v1377 = vunpack.c.l.b16 %v354
      %v1378 = vunpack.c.h.b16 %v354
      %v1379 = vunpack.c.l.b16 %v355
      %v1380 = vunpack.c.h.b16 %v355
      %v1381 = vunpack.c.l.b16 %v356
      %v1382 = vunpack.c.h.b16 %v356
      %v1383 = vunpack.c.l.b16 %v357
      %v1384 = vunpack.c.h.b16 %v357
      %v1385 = vunpack.c.l.b16 %v358
      %v1386 = vunpack.c.h.b16 %v358
      %v1387 = vunpack.c.l.b16 %v359
      %v1388 = vunpack.c.l.b16 %v360
      %v1389 = vunpack.c.h.b16 %v360
      %v1390 = vunpack.c.l.b16 %v361
      %v1391 = vunpack.c.h.b16 %v361
      %v1392 = vunpack.c.l.b16 %v362
      %v1393 = vunpack.c.h.b16 %v362
      %v1394 = vunpack.c.l.b16 %v363
      %v1395 = vunpack.c.h.b16 %v363
      %v1396 = vunpack.c.l.b16 %v364
      %v1397 = vunpack.c.h.b16 %v364
      %v1398 = vunpack.c.l.b16 %v365
      %v1399 = vunpack.c.h.b16 %v365
      %v1400 = vunpack.c.l.b16 %v366
      %v1401 = vunpack.c.l.b16 %v367
      %v1402 = vunpack.c.h.b16 %v367
      %v1403 = vunpack.c.l.b16 %v368
      %v1404 = vunpack.c.h.b16 %v368
      %v1405 = vunpack.c.l.b16 %v369
      %v1406 = vunpack.c.h.b16 %v369
      %v1407 = vunpack.c.l.b16 %v370
      %v1408 = vunpack.c.h.b16 %v370
      %v1409 = vunpack.c.l.b16 %v371
      %v1410 = vunpack.c.h.b16 %v371
      %v1411 = vunpack.c.l.b16 %v372
      %v1412 = vunpack.c.h.b16 %v372
      %v1413 = vunpack.c.l.b16 %v373
      %v1414 = vunpack.c.l.b16 %v374
      %v1415 = vunpack.c.h.b16 %v374
      %v1416 = vunpack.c.l.b16 %v375
      %v1417 = vunpack.c.h.b16 %v375
      %v1418 = vunpack.c.l.b16 %v376
      %v1419 = vunpack.c.h.b16 %v376
      %v1420 = vunpack.c.l.b16 %v377
      %v1421 = vunpack.c.h.b16 %v377
      %v1422 = vunpack.c.l.b16 %v378
      %v1423 = vunpack.c.h.b16 %v378
      %v1424 = vunpack.c.l.b16 %v379
      %v1425 = vunpack.c.h.b16 %v379
      %v1426 = vunpack.c.l.b16 %v380
      %v1427 = vunpack.c.l.b16 %v381
      %v1428 = vunpack.c.h.b16 %v381
      %v1429 = vunpack.c.l.b16 %v382
      %v1430 = vunpack.c.h.b16 %v382
      %v1431 = vunpack.c.l.b16 %v383
      %v1432 = vunpack.c.h.b16 %v383
      %v1433 = vunpack.c.l.b16 %v384
      %v1434 = vunpack.c.h.b16 %v384
      %v1435 = vunpack.c.l.b16 %v385
      %v1436 = vunpack.c.h.b16 %v385
      %v1437 = vunpack.c.l.b16 %v386
      %v1438 = vunpack.c.h.b16 %v386
      %v1439 = vunpack.c.l.b16 %v387
      %v1440 = vunpack.c.l.b16 %v388
      %v1441 = vunpack.c.h.b16 %v388
      %v1442 = vunpack.c.l.b16 %v389
      %v1443 = vunpack.c.h.b16 %v389
      %v1444 = vunpack.c.l.b16 %v390
      %v1445 = vunpack.c.h.b16 %v390
      %v1446 = vunpack.c.l.b16 %v391
      %v1447 = vunpack.c.h.b16 %v391
      %v1448 = vunpack.c.l.b16 %v392
      %v1449 = vunpack.c.h.b16 %v392
      %v1450 = vunpack.c.l.b16 %v393
      %v1451 = vunpack.c.h.b16 %v393
      %v1452 = vunpack.c.l.b16 %v394
      %v1453 = vunpack.c.l.b16 %v395
      %v1454 = vunpack.c.h.b16 %v395
      %v1455 = vunpack.c.l.b16 %v396
      %v1456 = vunpack.c.h.b16 %v396
      %v1457 = vunpack.c.l.b16 %v397
      %v1458 = vunpack.c.h.b16 %v397
      %v1459 = vunpack.c.l.b16 %v398
      %v1460 = vunpack.c.h.b16 %v398
      %v1461 = vunpack.c.l.b16 %v399
      %v1462 = vunpack.c.h.b16 %v399
      %v1463 = vunpack.c.l.b16 %v400
      %v1464 = vunpack.c.h.b16 %v400
      %v1465 = vunpack.c.l.b16 %v401
      %v1466 = vunpack.c.l.b16 %v402
      %v1467 = vunpack.c.h.b16 %v402
      %v1468 = vunpack.c.l.b16 %v403
      %v1469 = vunpack.c.h.b16 %v403
      %v1470 = vunpack.c.l.b16 %v404
      %v1471 = vunpack.c.h.b16 %v404
      %v1472 = vunpack.c.l.b16 %v405
      %v1473 = vunpack.c.h.b16 %v405
      %v1474 = vunpack.c.l.b16 %v406
      %v1475 = vunpack.c.h.b16 %v406
      %v1476 = vunpack.c.l.b16 %v407
      %v1477 = vunpack.c.h.b16 %v407
      %v1478 = vunpack.c.l.b16 %v408
      %v1479 = vunpack.c.l.b16 %v409
      %v1480 = vunpack.c.h.b16 %v409
      %v1481 = vunpack.c.l.b16 %v410
      %v1482 = vunpack.c.h.b16 %v410
      %v1483 = vunpack.c.l.b16 %v411
      %v1484 = vunpack.c.h.b16 %v411
      %v1485 = vunpack.c.l.b16 %v412
      %v1486 = vunpack.c.h.b16 %v412
      %v1487 = vunpack.c.l.b16 %v413
      %v1488 = vunpack.c.h.b16 %v413
      %v1489 = vunpack.c.l.b16 %v414
      %v1490 = vunpack.c.h.b16 %v414
      %v1491 = vunpack.c.l.b16 %v415
      %v1492 = vunpack.c.l.b16 %v416
      %v1493 = vunpack.c.h.b16 %v416
      %v1494 = vunpack.c.l.b16 %v417
      %v1495 = vunpack.c.h.b16 %v417
      %v1496 = vunpack.c.l.b16 %v418
      %v1497 = vunpack.c.h.b16 %v418
      %v1498 = vunpack.c.l.b16 %v419
      %v1499 = vunpack.c.h.b16 %v419
      %v1500 = vunpack.c.l.b16 %v420
      %v1501 = vunpack.c.h.b16 %v420
      %v1502 = vunpack.c.l.b16 %v421
      %v1503 = vunpack.c.h.b16 %v421
      %v1504 = vunpack.c.l.b16 %v422
      %v1505 = vunpack.c.l.b16 %v423
      %v1506 = vunpack.c.h.b16 %v423
      %v1507 = vunpack.c.l.b16 %v424
      %v1508 = vunpack.c.h.b16 %v424
      %v1509 = vunpack.c.l.b16 %v425
      %v1510 = vunpack.c.h.b16 %v425
      %v1511 = vunpack.c.l.b16 %v426
      %v1512 = vunpack.c.h.b16 %v426
      %v1513 = vunpack.c.l.b16 %v427
      %v1514 = vunpack.c.h.b16 %v427
      %v1515 = vunpack.c.l.b16 %v428
      %v1516 = vunpack.c.h.b16 %v428
      %v1517 = vunpack.c.l.b16 %v429
      %v1518 = vunpack.c.l.b16 %v430
      %v1519 = vunpack.c.h.b16 %v430
      %v1520 = vunpack.c.l.b16 %v431
      %v1521 = vunpack.c.h.b16 %v431
      %v1522 = vunpack.c.l.b16 %v432
      %v1523 = vunpack.c.h.b16 %v432
      %v1524 = vunpack.c.l.b16 %v433
      %v1525 = vunpack.c.h.b16 %v433
      %v1526 = vunpack.c.l.b16 %v434
      %v1527 = vunpack.c.h.b16 %v434
      %v1528 = vunpack.c.l.b16 %v435
      %v1529 = vunpack.c.h.b16 %v435
      %v1530 = vunpack.c.l.b16 %v436
      %v1531 = vunpack.c.l.b16 %v437
      %v1532 = vunpack.c.h.b16 %v437
      %v1533 = vunpack.c.l.b16 %v438
      %v1534 = vunpack.c.h.b16 %v438
      %v1535 = vunpack.c.l.b16 %v439
      %v1536 = vunpack.c.h.b16 %v439
      %v1537 = vunpack.c.l.b16 %v440
      %v1538 = vunpack.c.h.b16 %v440
      %v1539 = vunpack.c.l.b16 %v441
      %v1540 = vunpack.c.h.b16 %v441
      %v1541 = vunpack.c.l.b16 %v442
      %v1542 = vunpack.c.h.b16 %v442
      %v1543 = vunpack.c.l.b16 %v443
      %v1544 = vunpack.c.l.b16 %v444
      %v1545 = vunpack.c.h.b16 %v444
      %v1546 = vunpack.c.l.b16 %v445
      %v1547 = vunpack.c.h.b16 %v445
      %v1548 = vunpack.c.l.b16 %v446
      %v1549 = vunpack.c.h.b16 %v446
      %v1550 = vunpack.c.l.b16 %v447
      %v1551 = vunpack.c.h.b16 %v447
      %v1552 = vunpack.c.l.b16 %v448
      %v1553 = vunpack.c.h.b16 %v448
      %v1554 = vunpack.c.l.b16 %v449
      %v1555 = vunpack.c.h.b16 %v449
      %v1556 = vunpack.c.l.b16 %v450
      %v1557 = vunpack.c.l.b16 %v451
      %v1558 = vunpack.c.h.b16 %v451
      %v1559 = vunpack.c.l.b16 %v452
      %v1560 = vunpack.c.h.b16 %v452
      %v1561 = vunpack.c.l.b16 %v453
      %v1562 = vunpack.c.h.b16 %v453
      %v1563 = vunpack.c.l.b16 %v454
      %v1564 = vunpack.c.h.b16 %v454
      %v1565 = vunpack.c.l.b16 %v455
      %v1566 = vunpack.c.h.b16 %v455
      %v1567 = vunpack.c.l.b16 %v456
      %v1568 = vunpack.c.h.b16 %v456
      %v1569 = vunpack.c.l.b16 %v457
      %v1570 = vunpack.c.l.b16 %v458
      %v1571 = vunpack.c.h.b16 %v458
      %v1572 = vunpack.c.l.b16 %v459
      %v1573 = vunpack.c.h.b16 %v459
      %v1574 = vunpack.c.l.b16 %v460
      %v1575 = vunpack.c.h.b16 %v460
      %v1576 = vunpack.c.l.b16 %v461
      %v1577 = vunpack.c.h.b16 %v461
      %v1578 = vunpack.c.l.b16 %v462
      %v1579 = vunpack.c.h.b16 %v462
      %v1580 = vunpack.c.l.b16 %v463
      %v1581 = vunpack.c.h.b16 %v463
      %v1582 = vunpack.c.l.b16 %v464
      %v1583 = vunpack.c.l.b16 %v465
      %v1584 = vunpack.c.h.b16 %v465
      %v1585 = vunpack.c.l.b16 %v466
      %v1586 = vunpack.c.h.b16 %v466
      %v1587 = vunpack.c.l.b16 %v467
      %v1588 = vunpack.c.h.b16 %v467
      %v1589 = vunpack.c.l.b16 %v468
      %v1590 = vunpack.c.h.b16 %v468
      %v1591 = vunpack.c.l.b16 %v469
      %v1592 = vunpack.c.h.b16 %v469
      %v1593 = vunpack.c.l.b16 %v470
      %v1594 = vunpack.c.h.b16 %v470
      %v1595 = vunpack.c.l.b16 %v471
      %v1596 = vunpack.c.l.b16 %v472
      %v1597 = vunpack.c.h.b16 %v472
      %v1598 = vunpack.c.l.b16 %v473
      %v1599 = vunpack.c.h.b16 %v473
      %v1600 = vunpack.c.l.b16 %v474
      %v1601 = vunpack.c.h.b16 %v474
      %v1602 = vunpack.c.l.b16 %v475
      %v1603 = vunpack.c.h.b16 %v475
      %v1604 = vunpack.c.l.b16 %v476
      %v1605 = vunpack.c.h.b16 %v476
      %v1606 = vunpack.c.l.b16 %v477
      %v1607 = vunpack.c.h.b16 %v477
      %v1608 = vunpack.c.l.b16 %v478
      %v1609 = vunpack.c.l.b16 %v479
      %v1610 = vunpack.c.h.b16 %v479
      %v1611 = vunpack.c.l.b16 %v480
      %v1612 = vunpack.c.h.b16 %v480
      %v1613 = vunpack.c.l.b16 %v481
      %v1614 = vunpack.c.h.b16 %v481
      %v1615 = vunpack.c.l.b16 %v482
      %v1616 = vunpack.c.h.b16 %v482
      %v1617 = vunpack.c.l.b16 %v483
      %v1618 = vunpack.c.h.b16 %v483
      %v1619 = vunpack.c.l.b16 %v484
      %v1620 = vunpack.c.h.b16 %v484
      %v1621 = vunpack.c.l.b16 %v485
      %v1622 = vunpack.c.l.b16 %v486
      %v1623 = vunpack.c.h.b16 %v486
      %v1624 = vunpack.c.l.b16 %v487
      %v1625 = vunpack.c.h.b16 %v487
      %v1626 = vunpack.c.l.b16 %v488
      %v1627 = vunpack.c.h.b16 %v488
      %v1628 = vunpack.c.l.b16 %v489
      %v1629 = vunpack.c.h.b16 %v489
      %v1630 = vunpack.c.l.b16 %v490
      %v1631 = vunpack.c.h.b16 %v490
      %v1632 = vunpack.c.l.b16 %v491
      %v1633 = vunpack.c.h.b16 %v491
      %v1634 = vunpack.c.l.b16 %v492
      %v1635 = vunpack.c.l.b16 %v493
      %v1636 = vunpack.c.h.b16 %v493
      %v1637 = vunpack.c.l.b16 %v494
      %v1638 = vunpack.c.h.b16 %v494
      %v1639 = vunpack.c.l.b16 %v495
      %v1640 = vunpack.c.h.b16 %v495
      %v1641 = vunpack.c.l.b16 %v496
      %v1642 = vunpack.c.h.b16 %v496
      %v1643 = vunpack.c.l.b16 %v497
      %v1644 = vunpack.c.h.b16 %v497
      %v1645 = vunpack.c.l.b16 %v498
      %v1646 = vunpack.c.h.b16 %v498
      %v1647 = vunpack.c.l.b16 %v499
      %v1648 = vunpack.c.l.b16 %v500
      %v1649 = vunpack.c.h.b16 %v500
      %v1650 = vunpack.c.l.b16 %v501
      %v1651 = vunpack.c.h.b16 %v501
      %v1652 = vunpack.c.l.b16 %v502
      %v1653 = vunpack.c.h.b16 %v502
      %v1654 = vunpack.c.l.b16 %v503
      %v1655 = vunpack.c.h.b16 %v503
      %v1656 = vunpack.c.l.b16 %v504
      %v1657 = vunpack.c.h.b16 %v504
      %v1658 = vunpack.c.l.b16 %v505
      %v1659 = vunpack.c.h.b16 %v505
      %v1660 = vunpack.c.l.b16 %v506
      %v1661 = vunpack.c.l.b16 %v507
      %v1662 = vunpack.c.h.b16 %v507
      %v1663 = vunpack.c.l.b16 %v508
      %v1664 = vunpack.c.h.b16 %v508
      %v1665 = vunpack.c.l.b16 %v509
      %v1666 = vunpack.c.h.b16 %v509
      %v1667 = vunpack.c.l.b16 %v510
      %v1668 = vunpack.c.h.b16 %v510
      %v1669 = vunpack.c.l.b16 %v511
      %v1670 = vunpack.c.h.b16 %v511
      %v1671 = vunpack.c.l.b16 %v512
      %v1672 = vunpack.c.h.b16 %v512
      %v1673 = vunpack.c.l.b16 %v513
      %v1674 = vpack.c.b16 %v1271, %v1258
      %v1675 = vpack.c.b16 %v1272, %v1259
      %v1676 = vpack.c.b16 %v1273, %v1260
      %v1677 = vpack.c.b16 %v1274, %v1261
      %v1678 = vpack.c.b16 %v1275, %v1262
      %v1679 = vpack.c.b16 %v1276, %v1263
      %v1680 = vpack.c.b16 %v1277, %v1264
      %v1681 = vpack.c.b16 %v1278, %v1265
      %v1682 = vpack.c.b16 %v1279, %v1266
      %v1683 = vpack.c.b16 %v1280, %v1267
      %v1684 = vpack.c.b16 %v1281, %v1268
      %v1685 = vpack.c.b16 %v1282, %v1269
      %v1686 = vpack.c.b16 %v1283, %v1270
      %v1687 = vpack.c.b16 %v1297, %v1284
      %v1688 = vpack.c.b16 %v1298, %v1285
      %v1689 = vpack.c.b16 %v1299, %v1286
      %v1690 = vpack.c.b16 %v1300, %v1287
      %v1691 = vpack.c.b16 %v1301, %v1288
      %v1692 = vpack.c.b16 %v1302, %v1289
      %v1693 = vpack.c.b16 %v1303, %v1290
      %v1694 = vpack.c.b16 %v1304, %v1291
      %v1695 = vpack.c.b16 %v1305, %v1292
      %v1696 = vpack.c.b16 %v1306, %v1293
      %v1697 = vpack.c.b16 %v1307, %v1294
      %v1698 = vpack.c.b16 %v1308, %v1295
      %v1699 = vpack.c.b16 %v1309, %v1296
      %v1700 = vpack.c.b16 %v1323, %v1310
      %v1701 = vpack.c.b16 %v1324, %v1311
      %v1702 = vpack.c.b16 %v1325, %v1312
      %v1703 = vpack.c.b16 %v1326, %v1313
      %v1704 = vpack.c.b16 %v1327, %v1314
      %v1705 = vpack.c.b16 %v1328, %v1315
      %v1706 = vpack.c.b16 %v1329, %v1316
      %v1707 = vpack.c.b16 %v1330, %v1317
      %v1708 = vpack.c.b16 %v1331, %v1318
      %v1709 = vpack.c.b16 %v1332, %v1319
      %v1710 = vpack.c.b16 %v1333, %v1320
      %v1711 = vpack.c.b16 %v1334, %v1321
      %v1712 = vpack.c.b16 %v1335, %v1322
      %v1713 = vpack.c.b16 %v1349, %v1336
      %v1714 = vpack.c.b16 %v1350, %v1337
      %v1715 = vpack.c.b16 %v1351, %v1338
      %v1716 = vpack.c.b16 %v1352, %v1339
      %v1717 = vpack.c.b16 %v1353, %v1340
      %v1718 = vpack.c.b16 %v1354, %v1341
      %v1719 = vpack.c.b16 %v1355, %v1342
      %v1720 = vpack.c.b16 %v1356, %v1343
      %v1721 = vpack.c.b16 %v1357, %v1344
      %v1722 = vpack.c.b16 %v1358, %v1345
      %v1723 = vpack.c.b16 %v1359, %v1346
      %v1724 = vpack.c.b16 %v1360, %v1347
      %v1725 = vpack.c.b16 %v1361, %v1348
      %v1726 = vpack.c.b16 %v1375, %v1362
      %v1727 = vpack.c.b16 %v1376, %v1363
      %v1728 = vpack.c.b16 %v1377, %v1364
      %v1729 = vpack.c.b16 %v1378, %v1365
      %v1730 = vpack.c.b16 %v1379, %v1366
      %v1731 = vpack.c.b16 %v1380, %v1367
      %v1732 = vpack.c.b16 %v1381, %v1368
      %v1733 = vpack.c.b16 %v1382, %v1369
      %v1734 = vpack.c.b16 %v1383, %v1370
      %v1735 = vpack.c.b16 %v1384, %v1371
      %v1736 = vpack.c.b16 %v1385, %v1372
      %v1737 = vpack.c.b16 %v1386, %v1373
      %v1738 = vpack.c.b16 %v1387, %v1374
      %v1739 = vpack.c.b16 %v1401, %v1388
      %v1740 = vpack.c.b16 %v1402, %v1389
      %v1741 = vpack.c.b16 %v1403, %v1390
      %v1742 = vpack.c.b16 %v1404, %v1391
      %v1743 = vpack.c.b16 %v1405, %v1392
      %v1744 = vpack.c.b16 %v1406, %v1393
      %v1745 = vpack.c.b16 %v1407, %v1394
      %v1746 = vpack.c.b16 %v1408, %v1395
      %v1747 = vpack.c.b16 %v1409, %v1396
      %v1748 = vpack.c.b16 %v1410, %v1397
      %v1749 = vpack.c.b16 %v1411, %v1398
      %v1750 = vpack.c.b16 %v1412, %v1399
      %v1751 = vpack.c.b16 %v1413, %v1400
      %v1752 = vpack.c.b16 %v1427, %v1414
      %v1753 = vpack.c.b16 %v1428, %v1415
      %v1754 = vpack.c.b16 %v1429, %v1416
      %v1755 = vpack.c.b16 %v1430, %v1417
      %v1756 = vpack.c.b16 %v1431, %v1418
      %v1757 = vpack.c.b16 %v1432, %v1419
      %v1758 = vpack.c.b16 %v1433, %v1420
      %v1759 = vpack.c.b16 %v1434, %v1421
      %v1760 = vpack.c.b16 %v1435, %v1422
      %v1761 = vpack.c.b16 %v1436, %v1423
      %v1762 = vpack.c.b16 %v1437, %v1424
      %v1763 = vpack.c.b16 %v1438, %v1425
      %v1764 = vpack.c.b16 %v1439, %v1426
      %v1765 = vpack.c.b16 %v1453, %v1440
      %v1766 = vpack.c.b16 %v1454, %v1441
      %v1767 = vpack.c.b16 %v1455, %v1442
      %v1768 = vpack.c.b16 %v1456, %v1443
      %v1769 = vpack.c.b16 %v1457, %v1444
      %v1770 = vpack.c.b16 %v1458, %v1445
      %v1771 = vpack.c.b16 %v1459, %v1446
      %v1772 = vpack.c.b16 %v1460, %v1447
      %v1773 = vpack.c.b16 %v1461, %v1448
      %v1774 = vpack.c.b16 %v1462, %v1449
      %v1775 = vpack.c.b16 %v1463, %v1450
      %v1776 = vpack.c.b16 %v1464, %v1451
      %v1777 = vpack.c.b16 %v1465, %v1452
      %v1778 = vpack.c.b16 %v1479, %v1466
      %v1779 = vpack.c.b16 %v1480, %v1467
      %v1780 = vpack.c.b16 %v1481, %v1468
      %v1781 = vpack.c.b16 %v1482, %v1469
      %v1782 = vpack.c.b16 %v1483, %v1470
      %v1783 = vpack.c.b16 %v1484, %v1471
      %v1784 = vpack.c.b16 %v1485, %v1472
      %v1785 = vpack.c.b16 %v1486, %v1473
      %v1786 = vpack.c.b16 %v1487, %v1474
      %v1787 = vpack.c.b16 %v1488, %v1475
      %v1788 = vpack.c.b16 %v1489, %v1476
      %v1789 = vpack.c.b16 %v1490, %v1477
      %v1790 = vpack.c.b16 %v1491, %v1478
      %v1791 = vpack.c.b16 %v1505, %v1492
      %v1792 = vpack.c.b16 %v1506, %v1493
      %v1793 = vpack.c.b16 %v1507, %v1494
      %v1794 = vpack.c.b16 %v1508, %v1495
      %v1795 = vpack.c.b16 %v1509, %v1496
      %v1796 = vpack.c.b16 %v1510, %v1497
      %v1797 = vpack.c.b16 %v1511, %v1498
      %v1798 = vpack.c.b16 %v1512, %v1499
      %v1799 = vpack.c.b16 %v1513, %v1500
      %v1800 = vpack.c.b16 %v1514, %v1501
      %v1801 = vpack.c.b16 %v1515, %v1502
      %v1802 = vpack.c.b16 %v1516, %v1503
      %v1803 = vpack.c.b16 %v1517, %v1504
      %v1804 = vpack.c.b16 %v1531, %v1518
      %v1805 = vpack.c.b16 %v1532, %v1519
      %v1806 = vpack.c.b16 %v1533, %v1520
      %v1807 = vpack.c.b16 %v1534, %v1521
      %v1808 = vpack.c.b16 %v1535, %v1522
      %v1809 = vpack.c.b16 %v1536, %v1523
      %v1810 = vpack.c.b16 %v1537, %v1524
      %v1811 = vpack.c.b16 %v1538, %v1525
      %v1812 = vpack.c.b16 %v1539, %v1526
      %v1813 = vpack.c.b16 %v1540, %v1527
      %v1814 = vpack.c.b16 %v1541, %v1528
      %v1815 = vpack.c.b16 %v1542, %v1529
      %v1816 = vpack.c.b16 %v1543, %v1530
      %v1817 = vpack.c.b16 %v1557, %v1544
      %v1818 = vpack.c.b16 %v1558, %v1545
      %v1819 = vpack.c.b16 %v1559, %v1546
      %v1820 = vpack.c.b16 %v1560, %v1547
      %v1821 = vpack.c.b16 %v1561, %v1548
      %v1822 = vpack.c.b16 %v1562, %v1549
      %v1823 = vpack.c.b16 %v1563, %v1550
      %v1824 = vpack.c.b16 %v1564, %v1551
      %v1825 = vpack.c.b16 %v1565, %v1552
      %v1826 = vpack.c.b16 %v1566, %v1553
      %v1827 = vpack.c.b16 %v1567, %v1554
      %v1828 = vpack.c.b16 %v1568, %v1555
      %v1829 = vpack.c.b16 %v1569, %v1556
      %v1830 = vpack.c.b16 %v1583, %v1570
      %v1831 = vpack.c.b16 %v1584, %v1571
      %v1832 = vpack.c.b16 %v1585, %v1572
      %v1833 = vpack.c.b16 %v1586, %v1573
      %v1834 = vpack.c.b16 %v1587, %v1574
      %v1835 = vpack.c.b16 %v1588, %v1575
      %v1836 = vpack.c.b16 %v1589, %v1576
      %v1837 = vpack.c.b16 %v1590, %v1577
      %v1838 = vpack.c.b16 %v1591, %v1578
      %v1839 = vpack.c.b16 %v1592, %v1579
      %v1840 = vpack.c.b16 %v1593, %v1580
      %v1841 = vpack.c.b16 %v1594, %v1581
      %v1842 = vpack.c.b16 %v1595, %v1582
      %v1843 = vpack.c.b16 %v1609, %v1596
      %v1844 = vpack.c.b16 %v1610, %v1597
      %v1845 = vpack.c.b16 %v1611, %v1598
      %v1846 = vpack.c.b16 %v1612, %v1599
      %v1847 = vpack.c.b16 %v1613, %v1600
      %v1848 = vpack.c.b16 %v1614, %v1601
      %v1849 = vpack.c.b16 %v1615, %v1602
      %v1850 = vpack.c.b16 %v1616, %v1603
      %v1851 = vpack.c.b16 %v1617, %v1604
      %v1852 = vpack.c.b16 %v1618, %v1605
      %v1853 = vpack.c.b16 %v1619, %v1606
      %v1854 = vpack.c.b16 %v1620, %v1607
      %v1855 = vpack.c.b16 %v1621, %v1608
      %v1856 = vpack.c.b16 %v1635, %v1622
      %v1857 = vpack.c.b16 %v1636, %v1623
      %v1858 = vpack.c.b16 %v1637, %v1624
      %v1859 = vpack.c.b16 %v1638, %v1625
      %v1860 = vpack.c.b16 %v1639, %v1626
      %v1861 = vpack.c.b16 %v1640, %v1627
      %v1862 = vpack.c.b16 %v1641, %v1628
      %v1863 = vpack.c.b16 %v1642, %v1629
      %v1864 = vpack.c.b16 %v1643, %v1630
      %v1865 = vpack.c.b16 %v1644, %v1631
      %v1866 = vpack.c.b16 %v1645, %v1632
      %v1867 = vpack.c.b16 %v1646, %v1633
      %v1868 = vpack.c.b16 %v1647, %v1634
      %v1869 = vpack.c.b16 %v1661, %v1648
      %v1870 = vpack.c.b16 %v1662, %v1649
      %v1871 = vpack.c.b16 %v1663, %v1650
      %v1872 = vpack.c.b16 %v1664, %v1651
      %v1873 = vpack.c.b16 %v1665, %v1652
      %v1874 = vpack.c.b16 %v1666, %v1653
      %v1875 = vpack.c.b16 %v1667, %v1654
      %v1876 = vpack.c.b16 %v1668, %v1655
      %v1877 = vpack.c.b16 %v1669, %v1656
      %v1878 = vpack.c.b16 %v1670, %v1657
      %v1879 = vpack.c.b16 %v1671, %v1658
      %v1880 = vpack.c.b16 %v1672, %v1659
      %v1881 = vpack.c.b16 %v1673, %v1660
      %vm2074 = vcmask 261120
      %v2076 = vsel %vm2074, %v846, 0
      %v2079 = vsel %vm2074, %v859, 0
      %v2082 = vsel %vm2074, %v872, 0
      %v2085 = vsel %vm2074, %v885, 0
      %v2088 = vsel %vm2074, %v898, 0
      %v2091 = vsel %vm2074, %v911, 0
      %v2094 = vsel %vm2074, %v924, 0
      %v2097 = vsel %vm2074, %v937, 0
      %v2100 = vsel %vm2074, %v1686, 0
      %v2103 = vsel %vm2074, %v1699, 0
      %v2106 = vsel %vm2074, %v1712, 0
      %v2109 = vsel %vm2074, %v1725, 0
      %v2112 = vsel %vm2074, %v1738, 0
      %v2115 = vsel %vm2074, %v1751, 0
      %v2118 = vsel %vm2074, %v1764, 0
      %v2121 = vsel %vm2074, %v1777, 0
      %v2124 = vsel %vm2074, %v1790, 0
      %v2127 = vsel %vm2074, %v1803, 0
      %v2130 = vsel %vm2074, %v1816, 0
      %v2133 = vsel %vm2074, %v1829, 0
      %v2136 = vsel %vm2074, %v1842, 0
      %v2139 = vsel %vm2074, %v1855, 0
      %v2142 = vsel %vm2074, %v1868, 0
      %v2145 = vsel %vm2074, %v1881, 0
      %2147 = vmatprep.subr.bf16.mxu0 %v1675
      %2148 = vmatpush1.bf16.xpose.msra.mxu0 %v1674
      %2149 = vmatprep.subr.bf16.mxu0 %v1688
      %2150 = vmatpush1.bf16.xpose.msra.mxu0 %v1687
      %2151 = vmatprep.subr.bf16.mxu0 %v1701
      %2152 = vmatpush1.bf16.xpose.msra.mxu0 %v1700
      %2153 = vmatprep.subr.bf16.mxu0 %v1714
      %2154 = vmatpush1.bf16.xpose.msra.mxu0 %v1713
      %2155 = vmatprep.subr.bf16.mxu0 %v1727
      %2156 = vmatpush1.bf16.xpose.msra.mxu0 %v1726
      %2157 = vmatprep.subr.bf16.mxu0 %v1740
      %2158 = vmatpush1.bf16.xpose.msra.mxu0 %v1739
      %2159 = vmatprep.subr.bf16.mxu0 %v1753
      %2160 = vmatpush1.bf16.xpose.msra.mxu0 %v1752
      %2161 = vmatprep.subr.bf16.mxu0 %v1766
      %2162 = vmatpush1.bf16.xpose.msra.mxu0 %v1765
      %2163 = vmatprep.subr.bf16.mxu0 %v1779
      %2164 = vmatpush1.bf16.xpose.msra.mxu0 %v1778
      %2165 = vmatprep.subr.bf16.mxu0 %v1792
      %2166 = vmatpush1.bf16.xpose.msra.mxu0 %v1791
      %2167 = vmatprep.subr.bf16.mxu0 %v1805
      %2168 = vmatpush1.bf16.xpose.msra.mxu0 %v1804
      %2169 = vmatprep.subr.bf16.mxu0 %v1818
      %2170 = vmatpush1.bf16.xpose.msra.mxu0 %v1817
      %2171 = vmatprep.subr.bf16.mxu0 %v1831
      %2172 = vmatpush1.bf16.xpose.msra.mxu0 %v1830
      %2173 = vmatprep.subr.bf16.mxu0 %v1844
      %2174 = vmatpush1.bf16.xpose.msra.mxu0 %v1843
      %2175 = vmatprep.subr.bf16.mxu0 %v1857
      %2176 = vmatpush1.bf16.xpose.msra.mxu0 %v1856
      %2177 = vmatprep.subr.bf16.mxu0 %v1870
      %2178 = vmatpush1.bf16.xpose.msra.mxu0 %v1869
      %2179 = vmatprep.mubr.bf16.mxu0 %v835
      %2180 = vmatmul.mubr.bf16.gmra.mrb[0].mxu0 %v834
      %v2181 = vpop.f32.mrb[0].mxu0
      %v2182 = vadd.f32 0.0, %v2181
      %v2183 = vpop.f32.mrb[0].mxu0
      %v2184 = vadd.f32 0.0, %v2183
      %v2185 = vpop.f32.mrb[0].mxu0
      %v2186 = vpop.f32.mrb[0].mxu0
      %2187 = vmatprep.mubr.bf16.mxu0 %v848
      %2188 = vmatmul.mubr.bf16.gmra.mrb[0].mxu0 %v847
      %v2189 = vpop.f32.mrb[0].mxu0
      %v2190 = vpop.f32.mrb[0].mxu0
      %v2191 = vpop.f32.mrb[0].mxu0
      %v2192 = vpop.f32.mrb[0].mxu0
      %2193 = vmatprep.mubr.bf16.mxu0 %v861
      %2194 = vmatmul.mubr.bf16.gmra.mrb[0].mxu0 %v860
      %v2195 = vpop.f32.mrb[0].mxu0
      %v2196 = vpop.f32.mrb[0].mxu0
      %v2197 = vpop.f32.mrb[0].mxu0
      %v2198 = vpop.f32.mrb[0].mxu0
      %2199 = vmatprep.mubr.bf16.mxu0 %v874
      %2200 = vmatmul.mubr.bf16.gmra.mrb[0].mxu0 %v873
      %v2201 = vpop.f32.mrb[0].mxu0
      %v2202 = vpop.f32.mrb[0].mxu0
      %v2203 = vpop.f32.mrb[0].mxu0
      %v2204 = vpop.f32.mrb[0].mxu0
      %2205 = vmatprep.mubr.bf16.mxu0 %v887
      %2206 = vmatmul.mubr.bf16.gmra.mrb[0].mxu0 %v886
      %v2207 = vpop.f32.mrb[0].mxu0
      %v2208 = vpop.f32.mrb[0].mxu0
      %v2209 = vpop.f32.mrb[0].mxu0
      %v2210 = vpop.f32.mrb[0].mxu0
      %2211 = vmatprep.mubr.bf16.mxu0 %v900
      %2212 = vmatmul.mubr.bf16.gmra.mrb[0].mxu0 %v899
      %v2213 = vpop.f32.mrb[0].mxu0
      %v2214 = vpop.f32.mrb[0].mxu0
      %v2215 = vpop.f32.mrb[0].mxu0
      %v2216 = vpop.f32.mrb[0].mxu0
      %2217 = vmatprep.mubr.bf16.mxu0 %v913
      %2218 = vmatmul.mubr.bf16.gmra.mrb[0].mxu0 %v912
      %v2219 = vpop.f32.mrb[0].mxu0
      %v2220 = vpop.f32.mrb[0].mxu0
      %v2221 = vpop.f32.mrb[0].mxu0
      %v2222 = vpop.f32.mrb[0].mxu0
      %2223 = vmatprep.mubr.bf16.mxu0 %v926
      %2224 = vmatmul.mubr.bf16.gmra.mrb[0].mxu0 %v925
      %v2225 = vpop.f32.mrb[0].mxu0
      %v2226 = vpop.f32.mrb[0].mxu0
      %v2227 = vpop.f32.mrb[0].mxu0
      %v2228 = vpop.f32.mrb[0].mxu0
      %2229 = vdwg.mxu0
      %2230 = vmatprep.subr.bf16.mxu0 %v1677
      %2231 = vmatpush1.bf16.xpose.msra.mxu0 %v1676
      %2232 = vmatprep.subr.bf16.mxu0 %v1690
      %2233 = vmatpush1.bf16.xpose.msra.mxu0 %v1689
      %2234 = vmatprep.subr.bf16.mxu0 %v1703
      %2235 = vmatpush1.bf16.xpose.msra.mxu0 %v1702
      %2236 = vmatprep.subr.bf16.mxu0 %v1716
      %2237 = vmatpush1.bf16.xpose.msra.mxu0 %v1715
      %2238 = vmatprep.subr.bf16.mxu0 %v1729
      %2239 = vmatpush1.bf16.xpose.msra.mxu0 %v1728
      %2240 = vmatprep.subr.bf16.mxu0 %v1742
      %2241 = vmatpush1.bf16.xpose.msra.mxu0 %v1741
      %2242 = vmatprep.subr.bf16.mxu0 %v1755
      %2243 = vmatpush1.bf16.xpose.msra.mxu0 %v1754
      %2244 = vmatprep.subr.bf16.mxu0 %v1768
      %2245 = vmatpush1.bf16.xpose.msra.mxu0 %v1767
      %2246 = vmatprep.subr.bf16.mxu0 %v1781
      %2247 = vmatpush1.bf16.xpose.msra.mxu0 %v1780
      %2248 = vmatprep.subr.bf16.mxu0 %v1794
      %2249 = vmatpush1.bf16.xpose.msra.mxu0 %v1793
      %2250 = vmatprep.subr.bf16.mxu0 %v1807
      %2251 = vmatpush1.bf16.xpose.msra.mxu0 %v1806
      %2252 = vmatprep.subr.bf16.mxu0 %v1820
      %2253 = vmatpush1.bf16.xpose.msra.mxu0 %v1819
      %2254 = vmatprep.subr.bf16.mxu0 %v1833
      %2255 = vmatpush1.bf16.xpose.msra.mxu0 %v1832
      %2256 = vmatprep.subr.bf16.mxu0 %v1846
      %2257 = vmatpush1.bf16.xpose.msra.mxu0 %v1845
      %2258 = vmatprep.subr.bf16.mxu0 %v1859
      %2259 = vmatpush1.bf16.xpose.msra.mxu0 %v1858
      %2260 = vmatprep.subr.bf16.mxu0 %v1872
      %2261 = vmatpush1.bf16.xpose.msra.mxu0 %v1871
      %2262 = vmatprep.mubr.bf16.mxu0 %v837
      %2263 = vmatmul.mubr.bf16.gmra.mrb[0].mxu0 %v836
      %v2264 = vpop.f32.mrb[0].mxu0
      %v2265 = vadd.f32 %v2182, %v2264
      %v2266 = vpop.f32.mrb[0].mxu0
      %v2267 = vadd.f32 %v2184, %v2266
      %v2268 = vpop.f32.mrb[0].mxu0
      %v2269 = vpop.f32.mrb[0].mxu0
      %2270 = vmatprep.mubr.bf16.mxu0 %v850
      %2271 = vmatmul.mubr.bf16.gmra.mrb[0].mxu0 %v849
      %v2272 = vpop.f32.mrb[0].mxu0
      %v2273 = vpop.f32.mrb[0].mxu0
      %v2274 = vpop.f32.mrb[0].mxu0
      %v2275 = vpop.f32.mrb[0].mxu0
      %2276 = vmatprep.mubr.bf16.mxu0 %v863
      %2277 = vmatmul.mubr.bf16.gmra.mrb[0].mxu0 %v862
      %v2278 = vpop.f32.mrb[0].mxu0
      %v2279 = vpop.f32.mrb[0].mxu0
      %v2280 = vpop.f32.mrb[0].mxu0
      %v2281 = vpop.f32.mrb[0].mxu0
      %2282 = vmatprep.mubr.bf16.mxu0 %v876
      %2283 = vmatmul.mubr.bf16.gmra.mrb[0].mxu0 %v875
      %v2284 = vpop.f32.mrb[0].mxu0
      %v2285 = vpop.f32.mrb[0].mxu0
      %v2286 = vpop.f32.mrb[0].mxu0
      %v2287 = vpop.f32.mrb[0].mxu0
      %2288 = vmatprep.mubr.bf16.mxu0 %v889
      %2289 = vmatmul.mubr.bf16.gmra.mrb[0].mxu0 %v888
      %v2290 = vpop.f32.mrb[0].mxu0
      %v2291 = vpop.f32.mrb[0].mxu0
      %v2292 = vpop.f32.mrb[0].mxu0
      %v2293 = vpop.f32.mrb[0].mxu0
      %2294 = vmatprep.mubr.bf16.mxu0 %v902
      %2295 = vmatmul.mubr.bf16.gmra.mrb[0].mxu0 %v901
      %v2296 = vpop.f32.mrb[0].mxu0
      %v2297 = vpop.f32.mrb[0].mxu0
      %v2298 = vpop.f32.mrb[0].mxu0
      %v2299 = vpop.f32.mrb[0].mxu0
      %2300 = vmatprep.mubr.bf16.mxu0 %v915
      %2301 = vmatmul.mubr.bf16.gmra.mrb[0].mxu0 %v914
      %v2302 = vpop.f32.mrb[0].mxu0
      %v2303 = vpop.f32.mrb[0].mxu0
      %v2304 = vpop.f32.mrb[0].mxu0
      %v2305 = vpop.f32.mrb[0].mxu0
      %2306 = vmatprep.mubr.bf16.mxu0 %v928
      %2307 = vmatmul.mubr.bf16.gmra.mrb[0].mxu0 %v927
      %v2308 = vpop.f32.mrb[0].mxu0
      %v2309 = vpop.f32.mrb[0].mxu0
      %v2310 = vpop.f32.mrb[0].mxu0
      %v2311 = vpop.f32.mrb[0].mxu0
      %2312 = vdwg.mxu0
      %2313 = vmatprep.subr.bf16.mxu0 %v1679
      %2314 = vmatpush1.bf16.xpose.msra.mxu0 %v1678
      %2315 = vmatprep.subr.bf16.mxu0 %v1692
      %2316 = vmatpush1.bf16.xpose.msra.mxu0 %v1691
      %2317 = vmatprep.subr.bf16.mxu0 %v1705
      %2318 = vmatpush1.bf16.xpose.msra.mxu0 %v1704
      %2319 = vmatprep.subr.bf16.mxu0 %v1718
      %2320 = vmatpush1.bf16.xpose.msra.mxu0 %v1717
      %2321 = vmatprep.subr.bf16.mxu0 %v1731
      %2322 = vmatpush1.bf16.xpose.msra.mxu0 %v1730
      %2323 = vmatprep.subr.bf16.mxu0 %v1744
      %2324 = vmatpush1.bf16.xpose.msra.mxu0 %v1743
      %2325 = vmatprep.subr.bf16.mxu0 %v1757
      %2326 = vmatpush1.bf16.xpose.msra.mxu0 %v1756
      %2327 = vmatprep.subr.bf16.mxu0 %v1770
      %2328 = vmatpush1.bf16.xpose.msra.mxu0 %v1769
      %2329 = vmatprep.subr.bf16.mxu0 %v1783
      %2330 = vmatpush1.bf16.xpose.msra.mxu0 %v1782
      %2331 = vmatprep.subr.bf16.mxu0 %v1796
      %2332 = vmatpush1.bf16.xpose.msra.mxu0 %v1795
      %2333 = vmatprep.subr.bf16.mxu0 %v1809
      %2334 = vmatpush1.bf16.xpose.msra.mxu0 %v1808
      %2335 = vmatprep.subr.bf16.mxu0 %v1822
      %2336 = vmatpush1.bf16.xpose.msra.mxu0 %v1821
      %2337 = vmatprep.subr.bf16.mxu0 %v1835
      %2338 = vmatpush1.bf16.xpose.msra.mxu0 %v1834
      %2339 = vmatprep.subr.bf16.mxu0 %v1848
      %2340 = vmatpush1.bf16.xpose.msra.mxu0 %v1847
      %2341 = vmatprep.subr.bf16.mxu0 %v1861
      %2342 = vmatpush1.bf16.xpose.msra.mxu0 %v1860
      %2343 = vmatprep.subr.bf16.mxu0 %v1874
      %2344 = vmatpush1.bf16.xpose.msra.mxu0 %v1873
      %2345 = vmatprep.mubr.bf16.mxu0 %v839
      %2346 = vmatmul.mubr.bf16.gmra.mrb[0].mxu0 %v838
      %v2347 = vpop.f32.mrb[0].mxu0
      %v2348 = vadd.f32 %v2265, %v2347
      %v2349 = vpop.f32.mrb[0].mxu0
      %v2350 = vadd.f32 %v2267, %v2349
      %v2351 = vpop.f32.mrb[0].mxu0
      %v2352 = vpop.f32.mrb[0].mxu0
      %2353 = vmatprep.mubr.bf16.mxu0 %v852
      %2354 = vmatmul.mubr.bf16.gmra.mrb[0].mxu0 %v851
      %v2355 = vpop.f32.mrb[0].mxu0
      %v2356 = vpop.f32.mrb[0].mxu0
      %v2357 = vpop.f32.mrb[0].mxu0
      %v2358 = vpop.f32.mrb[0].mxu0
      %2359 = vmatprep.mubr.bf16.mxu0 %v865
      %2360 = vmatmul.mubr.bf16.gmra.mrb[0].mxu0 %v864
      %v2361 = vpop.f32.mrb[0].mxu0
      %v2362 = vpop.f32.mrb[0].mxu0
      %v2363 = vpop.f32.mrb[0].mxu0
      %v2364 = vpop.f32.mrb[0].mxu0
      %2365 = vmatprep.mubr.bf16.mxu0 %v878
      %2366 = vmatmul.mubr.bf16.gmra.mrb[0].mxu0 %v877
      %v2367 = vpop.f32.mrb[0].mxu0
      %v2368 = vpop.f32.mrb[0].mxu0
      %v2369 = vpop.f32.mrb[0].mxu0
      %v2370 = vpop.f32.mrb[0].mxu0
      %2371 = vmatprep.mubr.bf16.mxu0 %v891
      %2372 = vmatmul.mubr.bf16.gmra.mrb[0].mxu0 %v890
      %v2373 = vpop.f32.mrb[0].mxu0
      %v2374 = vpop.f32.mrb[0].mxu0
      %v2375 = vpop.f32.mrb[0].mxu0
      %v2376 = vpop.f32.mrb[0].mxu0
      %2377 = vmatprep.mubr.bf16.mxu0 %v904
      %2378 = vmatmul.mubr.bf16.gmra.mrb[0].mxu0 %v903
      %v2379 = vpop.f32.mrb[0].mxu0
      %v2380 = vpop.f32.mrb[0].mxu0
      %v2381 = vpop.f32.mrb[0].mxu0
      %v2382 = vpop.f32.mrb[0].mxu0
      %2383 = vmatprep.mubr.bf16.mxu0 %v917
      %2384 = vmatmul.mubr.bf16.gmra.mrb[0].mxu0 %v916
      %v2385 = vpop.f32.mrb[0].mxu0
      %v2386 = vpop.f32.mrb[0].mxu0
      %v2387 = vpop.f32.mrb[0].mxu0
      %v2388 = vpop.f32.mrb[0].mxu0
      %2389 = vmatprep.mubr.bf16.mxu0 %v930
      %2390 = vmatmul.mubr.bf16.gmra.mrb[0].mxu0 %v929
      %v2391 = vpop.f32.mrb[0].mxu0
      %v2392 = vpop.f32.mrb[0].mxu0
      %v2393 = vpop.f32.mrb[0].mxu0
      %v2394 = vpop.f32.mrb[0].mxu0
      %2395 = vdwg.mxu0
      %2396 = vmatprep.subr.bf16.mxu0 %v1681
      %2397 = vmatpush1.bf16.xpose.msra.mxu0 %v1680
      %2398 = vmatprep.subr.bf16.mxu0 %v1694
      %2399 = vmatpush1.bf16.xpose.msra.mxu0 %v1693
      %2400 = vmatprep.subr.bf16.mxu0 %v1707
      %2401 = vmatpush1.bf16.xpose.msra.mxu0 %v1706
      %2402 = vmatprep.subr.bf16.mxu0 %v1720
      %2403 = vmatpush1.bf16.xpose.msra.mxu0 %v1719
      %2404 = vmatprep.subr.bf16.mxu0 %v1733
      %2405 = vmatpush1.bf16.xpose.msra.mxu0 %v1732
      %2406 = vmatprep.subr.bf16.mxu0 %v1746
      %2407 = vmatpush1.bf16.xpose.msra.mxu0 %v1745
      %2408 = vmatprep.subr.bf16.mxu0 %v1759
      %2409 = vmatpush1.bf16.xpose.msra.mxu0 %v1758
      %2410 = vmatprep.subr.bf16.mxu0 %v1772
      %2411 = vmatpush1.bf16.xpose.msra.mxu0 %v1771
      %2412 = vmatprep.subr.bf16.mxu0 %v1785
      %2413 = vmatpush1.bf16.xpose.msra.mxu0 %v1784
      %2414 = vmatprep.subr.bf16.mxu0 %v1798
      %2415 = vmatpush1.bf16.xpose.msra.mxu0 %v1797
      %2416 = vmatprep.subr.bf16.mxu0 %v1811
      %2417 = vmatpush1.bf16.xpose.msra.mxu0 %v1810
      %2418 = vmatprep.subr.bf16.mxu0 %v1824
      %2419 = vmatpush1.bf16.xpose.msra.mxu0 %v1823
      %2420 = vmatprep.subr.bf16.mxu0 %v1837
      %2421 = vmatpush1.bf16.xpose.msra.mxu0 %v1836
      %2422 = vmatprep.subr.bf16.mxu0 %v1850
      %2423 = vmatpush1.bf16.xpose.msra.mxu0 %v1849
      %2424 = vmatprep.subr.bf16.mxu0 %v1863
      %2425 = vmatpush1.bf16.xpose.msra.mxu0 %v1862
      %2426 = vmatprep.subr.bf16.mxu0 %v1876
      %2427 = vmatpush1.bf16.xpose.msra.mxu0 %v1875
      %2428 = vmatprep.mubr.bf16.mxu0 %v841
      %2429 = vmatmul.mubr.bf16.gmra.mrb[0].mxu0 %v840
      %v2430 = vpop.f32.mrb[0].mxu0
      %v2431 = vadd.f32 %v2348, %v2430
      %v2432 = vpop.f32.mrb[0].mxu0
      %v2433 = vadd.f32 %v2350, %v2432
      %v2434 = vpop.f32.mrb[0].mxu0
      %v2435 = vpop.f32.mrb[0].mxu0
      %2436 = vmatprep.mubr.bf16.mxu0 %v854
      %2437 = vmatmul.mubr.bf16.gmra.mrb[0].mxu0 %v853
      %v2438 = vpop.f32.mrb[0].mxu0
      %v2439 = vpop.f32.mrb[0].mxu0
      %v2440 = vpop.f32.mrb[0].mxu0
      %v2441 = vpop.f32.mrb[0].mxu0
      %2442 = vmatprep.mubr.bf16.mxu0 %v867
      %2443 = vmatmul.mubr.bf16.gmra.mrb[0].mxu0 %v866
      %v2444 = vpop.f32.mrb[0].mxu0
      %v2445 = vpop.f32.mrb[0].mxu0
      %v2446 = vpop.f32.mrb[0].mxu0
      %v2447 = vpop.f32.mrb[0].mxu0
      %2448 = vmatprep.mubr.bf16.mxu0 %v880
      %2449 = vmatmul.mubr.bf16.gmra.mrb[0].mxu0 %v879
      %v2450 = vpop.f32.mrb[0].mxu0
      %v2451 = vpop.f32.mrb[0].mxu0
      %v2452 = vpop.f32.mrb[0].mxu0
      %v2453 = vpop.f32.mrb[0].mxu0
      %2454 = vmatprep.mubr.bf16.mxu0 %v893
      %2455 = vmatmul.mubr.bf16.gmra.mrb[0].mxu0 %v892
      %v2456 = vpop.f32.mrb[0].mxu0
      %v2457 = vpop.f32.mrb[0].mxu0
      %v2458 = vpop.f32.mrb[0].mxu0
      %v2459 = vpop.f32.mrb[0].mxu0
      %2460 = vmatprep.mubr.bf16.mxu0 %v906
      %2461 = vmatmul.mubr.bf16.gmra.mrb[0].mxu0 %v905
      %v2462 = vpop.f32.mrb[0].mxu0
      %v2463 = vpop.f32.mrb[0].mxu0
      %v2464 = vpop.f32.mrb[0].mxu0
      %v2465 = vpop.f32.mrb[0].mxu0
      %2466 = vmatprep.mubr.bf16.mxu0 %v919
      %2467 = vmatmul.mubr.bf16.gmra.mrb[0].mxu0 %v918
      %v2468 = vpop.f32.mrb[0].mxu0
      %v2469 = vpop.f32.mrb[0].mxu0
      %v2470 = vpop.f32.mrb[0].mxu0
      %v2471 = vpop.f32.mrb[0].mxu0
      %2472 = vmatprep.mubr.bf16.mxu0 %v932
      %2473 = vmatmul.mubr.bf16.gmra.mrb[0].mxu0 %v931
      %v2474 = vpop.f32.mrb[0].mxu0
      %v2475 = vpop.f32.mrb[0].mxu0
      %v2476 = vpop.f32.mrb[0].mxu0
      %v2477 = vpop.f32.mrb[0].mxu0
      %2478 = vdwg.mxu0
      %2479 = vmatprep.subr.bf16.mxu0 %v1683
      %2480 = vmatpush1.bf16.xpose.msra.mxu0 %v1682
      %2481 = vmatprep.subr.bf16.mxu0 %v1696
      %2482 = vmatpush1.bf16.xpose.msra.mxu0 %v1695
      %2483 = vmatprep.subr.bf16.mxu0 %v1709
      %2484 = vmatpush1.bf16.xpose.msra.mxu0 %v1708
      %2485 = vmatprep.subr.bf16.mxu0 %v1722
      %2486 = vmatpush1.bf16.xpose.msra.mxu0 %v1721
      %2487 = vmatprep.subr.bf16.mxu0 %v1735
      %2488 = vmatpush1.bf16.xpose.msra.mxu0 %v1734
      %2489 = vmatprep.subr.bf16.mxu0 %v1748
      %2490 = vmatpush1.bf16.xpose.msra.mxu0 %v1747
      %2491 = vmatprep.subr.bf16.mxu0 %v1761
      %2492 = vmatpush1.bf16.xpose.msra.mxu0 %v1760
      %2493 = vmatprep.subr.bf16.mxu0 %v1774
      %2494 = vmatpush1.bf16.xpose.msra.mxu0 %v1773
      %2495 = vmatprep.subr.bf16.mxu0 %v1787
      %2496 = vmatpush1.bf16.xpose.msra.mxu0 %v1786
      %2497 = vmatprep.subr.bf16.mxu0 %v1800
      %2498 = vmatpush1.bf16.xpose.msra.mxu0 %v1799
      %2499 = vmatprep.subr.bf16.mxu0 %v1813
      %2500 = vmatpush1.bf16.xpose.msra.mxu0 %v1812
      %2501 = vmatprep.subr.bf16.mxu0 %v1826
      %2502 = vmatpush1.bf16.xpose.msra.mxu0 %v1825
      %2503 = vmatprep.subr.bf16.mxu0 %v1839
      %2504 = vmatpush1.bf16.xpose.msra.mxu0 %v1838
      %2505 = vmatprep.subr.bf16.mxu0 %v1852
      %2506 = vmatpush1.bf16.xpose.msra.mxu0 %v1851
      %2507 = vmatprep.subr.bf16.mxu0 %v1865
      %2508 = vmatpush1.bf16.xpose.msra.mxu0 %v1864
      %2509 = vmatprep.subr.bf16.mxu0 %v1878
      %2510 = vmatpush1.bf16.xpose.msra.mxu0 %v1877
      %2511 = vmatprep.mubr.bf16.mxu0 %v843
      %2512 = vmatmul.mubr.bf16.gmra.mrb[0].mxu0 %v842
      %v2513 = vpop.f32.mrb[0].mxu0
      %v2514 = vadd.f32 %v2431, %v2513
      %v2515 = vpop.f32.mrb[0].mxu0
      %v2516 = vadd.f32 %v2433, %v2515
      %v2517 = vpop.f32.mrb[0].mxu0
      %v2518 = vpop.f32.mrb[0].mxu0
      %2519 = vmatprep.mubr.bf16.mxu0 %v856
      %2520 = vmatmul.mubr.bf16.gmra.mrb[0].mxu0 %v855
      %v2521 = vpop.f32.mrb[0].mxu0
      %v2522 = vpop.f32.mrb[0].mxu0
      %v2523 = vpop.f32.mrb[0].mxu0
      %v2524 = vpop.f32.mrb[0].mxu0
      %2525 = vmatprep.mubr.bf16.mxu0 %v869
      %2526 = vmatmul.mubr.bf16.gmra.mrb[0].mxu0 %v868
      %v2527 = vpop.f32.mrb[0].mxu0
      %v2528 = vpop.f32.mrb[0].mxu0
      %v2529 = vpop.f32.mrb[0].mxu0
      %v2530 = vpop.f32.mrb[0].mxu0
      %2531 = vmatprep.mubr.bf16.mxu0 %v882
      %2532 = vmatmul.mubr.bf16.gmra.mrb[0].mxu0 %v881
      %v2533 = vpop.f32.mrb[0].mxu0
      %v2534 = vpop.f32.mrb[0].mxu0
      %v2535 = vpop.f32.mrb[0].mxu0
      %v2536 = vpop.f32.mrb[0].mxu0
      %2537 = vmatprep.mubr.bf16.mxu0 %v895
      %2538 = vmatmul.mubr.bf16.gmra.mrb[0].mxu0 %v894
      %v2539 = vpop.f32.mrb[0].mxu0
      %v2540 = vpop.f32.mrb[0].mxu0
      %v2541 = vpop.f32.mrb[0].mxu0
      %v2542 = vpop.f32.mrb[0].mxu0
      %2543 = vmatprep.mubr.bf16.mxu0 %v908
      %2544 = vmatmul.mubr.bf16.gmra.mrb[0].mxu0 %v907
      %v2545 = vpop.f32.mrb[0].mxu0
      %v2546 = vpop.f32.mrb[0].mxu0
      %v2547 = vpop.f32.mrb[0].mxu0
      %v2548 = vpop.f32.mrb[0].mxu0
      %2549 = vmatprep.mubr.bf16.mxu0 %v921
      %2550 = vmatmul.mubr.bf16.gmra.mrb[0].mxu0 %v920
      %v2551 = vpop.f32.mrb[0].mxu0
      %v2552 = vpop.f32.mrb[0].mxu0
      %v2553 = vpop.f32.mrb[0].mxu0
      %v2554 = vpop.f32.mrb[0].mxu0
      %2555 = vmatprep.mubr.bf16.mxu0 %v934
      %2556 = vmatmul.mubr.bf16.gmra.mrb[0].mxu0 %v933
      %v2557 = vpop.f32.mrb[0].mxu0
      %v2558 = vpop.f32.mrb[0].mxu0
      %v2559 = vpop.f32.mrb[0].mxu0
      %v2560 = vpop.f32.mrb[0].mxu0
      %2561 = vdwg.mxu0
      %2562 = vmatprep.subr.bf16.mxu0 %v1685
      %2563 = vmatpush1.bf16.xpose.msra.mxu0 %v1684
      %2564 = vmatprep.subr.bf16.mxu0 %v1698
      %2565 = vmatpush1.bf16.xpose.msra.mxu0 %v1697
      %2566 = vmatprep.subr.bf16.mxu0 %v1711
      %2567 = vmatpush1.bf16.xpose.msra.mxu0 %v1710
      %2568 = vmatprep.subr.bf16.mxu0 %v1724
      %2569 = vmatpush1.bf16.xpose.msra.mxu0 %v1723
      %2570 = vmatprep.subr.bf16.mxu0 %v1737
      %2571 = vmatpush1.bf16.xpose.msra.mxu0 %v1736
      %2572 = vmatprep.subr.bf16.mxu0 %v1750
      %2573 = vmatpush1.bf16.xpose.msra.mxu0 %v1749
      %2574 = vmatprep.subr.bf16.mxu0 %v1763
      %2575 = vmatpush1.bf16.xpose.msra.mxu0 %v1762
      %2576 = vmatprep.subr.bf16.mxu0 %v1776
      %2577 = vmatpush1.bf16.xpose.msra.mxu0 %v1775
      %2578 = vmatprep.subr.bf16.mxu0 %v1789
      %2579 = vmatpush1.bf16.xpose.msra.mxu0 %v1788
      %2580 = vmatprep.subr.bf16.mxu0 %v1802
      %2581 = vmatpush1.bf16.xpose.msra.mxu0 %v1801
      %2582 = vmatprep.subr.bf16.mxu0 %v1815
      %2583 = vmatpush1.bf16.xpose.msra.mxu0 %v1814
      %2584 = vmatprep.subr.bf16.mxu0 %v1828
      %2585 = vmatpush1.bf16.xpose.msra.mxu0 %v1827
      %2586 = vmatprep.subr.bf16.mxu0 %v1841
      %2587 = vmatpush1.bf16.xpose.msra.mxu0 %v1840
      %2588 = vmatprep.subr.bf16.mxu0 %v1854
      %2589 = vmatpush1.bf16.xpose.msra.mxu0 %v1853
      %2590 = vmatprep.subr.bf16.mxu0 %v1867
      %2591 = vmatpush1.bf16.xpose.msra.mxu0 %v1866
      %2592 = vmatprep.subr.bf16.mxu0 %v1880
      %2593 = vmatpush1.bf16.xpose.msra.mxu0 %v1879
      %2594 = vmatprep.mubr.bf16.mxu0 %v845
      %2595 = vmatmul.mubr.bf16.gmra.mrb[0].mxu0 %v844
      %v2596 = vpop.f32.mrb[0].mxu0
      %v2597 = vadd.f32 %v2514, %v2596
      %v2598 = vpop.f32.mrb[0].mxu0
      %v2599 = vadd.f32 %v2516, %v2598
      %v2600 = vpop.f32.mrb[0].mxu0
      %v2601 = vpop.f32.mrb[0].mxu0
      %2602 = vmatprep.mubr.bf16.mxu0 %v858
      %2603 = vmatmul.mubr.bf16.gmra.mrb[0].mxu0 %v857
      %v2604 = vpop.f32.mrb[0].mxu0
      %v2605 = vpop.f32.mrb[0].mxu0
      %v2606 = vpop.f32.mrb[0].mxu0
      %v2607 = vpop.f32.mrb[0].mxu0
      %2608 = vmatprep.mubr.bf16.mxu0 %v871
      %2609 = vmatmul.mubr.bf16.gmra.mrb[0].mxu0 %v870
      %v2610 = vpop.f32.mrb[0].mxu0
      %v2611 = vpop.f32.mrb[0].mxu0
      %v2612 = vpop.f32.mrb[0].mxu0
      %v2613 = vpop.f32.mrb[0].mxu0
      %2614 = vmatprep.mubr.bf16.mxu0 %v884
      %2615 = vmatmul.mubr.bf16.gmra.mrb[0].mxu0 %v883
      %v2616 = vpop.f32.mrb[0].mxu0
      %v2617 = vpop.f32.mrb[0].mxu0
      %v2618 = vpop.f32.mrb[0].mxu0
      %v2619 = vpop.f32.mrb[0].mxu0
      %2620 = vmatprep.mubr.bf16.mxu0 %v897
      %2621 = vmatmul.mubr.bf16.gmra.mrb[0].mxu0 %v896
      %v2622 = vpop.f32.mrb[0].mxu0
      %v2623 = vpop.f32.mrb[0].mxu0
      %v2624 = vpop.f32.mrb[0].mxu0
      %v2625 = vpop.f32.mrb[0].mxu0
      %2626 = vmatprep.mubr.bf16.mxu0 %v910
      %2627 = vmatmul.mubr.bf16.gmra.mrb[0].mxu0 %v909
      %v2628 = vpop.f32.mrb[0].mxu0
      %v2629 = vpop.f32.mrb[0].mxu0
      %v2630 = vpop.f32.mrb[0].mxu0
      %v2631 = vpop.f32.mrb[0].mxu0
      %2632 = vmatprep.mubr.bf16.mxu0 %v923
      %2633 = vmatmul.mubr.bf16.gmra.mrb[0].mxu0 %v922
      %v2634 = vpop.f32.mrb[0].mxu0
      %v2635 = vpop.f32.mrb[0].mxu0
      %v2636 = vpop.f32.mrb[0].mxu0
      %v2637 = vpop.f32.mrb[0].mxu0
      %2638 = vmatprep.mubr.bf16.mxu0 %v936
      %2639 = vmatmul.mubr.bf16.gmra.mrb[0].mxu0 %v935
      %v2640 = vpop.f32.mrb[0].mxu0
      %v2641 = vpop.f32.mrb[0].mxu0
      %v2642 = vpop.f32.mrb[0].mxu0
      %v2643 = vpop.f32.mrb[0].mxu0
      %2644 = vdwg.mxu0
      %2645 = vmatprep.subr.bf16.mxu0 0
      %2646 = vmatpush1.bf16.xpose.msra.mxu0 %v2100
      %2647 = vmatprep.subr.bf16.mxu0 0
      %2648 = vmatpush1.bf16.xpose.msra.mxu0 %v2103
      %2649 = vmatprep.subr.bf16.mxu0 0
      %2650 = vmatpush1.bf16.xpose.msra.mxu0 %v2106
      %2651 = vmatprep.subr.bf16.mxu0 0
      %2652 = vmatpush1.bf16.xpose.msra.mxu0 %v2109
      %2653 = vmatprep.subr.bf16.mxu0 0
      %2654 = vmatpush1.bf16.xpose.msra.mxu0 %v2112
      %2655 = vmatprep.subr.bf16.mxu0 0
      %2656 = vmatpush1.bf16.xpose.msra.mxu0 %v2115
      %2657 = vmatprep.subr.bf16.mxu0 0
      %2658 = vmatpush1.bf16.xpose.msra.mxu0 %v2118
      %2659 = vmatprep.subr.bf16.mxu0 0
      %2660 = vmatpush1.bf16.xpose.msra.mxu0 %v2121
      %2661 = vmatprep.subr.bf16.mxu0 0
      %2662 = vmatpush1.bf16.xpose.msra.mxu0 %v2124
      %2663 = vmatprep.subr.bf16.mxu0 0
      %2664 = vmatpush1.bf16.xpose.msra.mxu0 %v2127
      %2665 = vmatprep.subr.bf16.mxu0 0
      %2666 = vmatpush1.bf16.xpose.msra.mxu0 %v2130
      %2667 = vmatprep.subr.bf16.mxu0 0
      %2668 = vmatpush1.bf16.xpose.msra.mxu0 %v2133
      %2669 = vmatprep.subr.bf16.mxu0 0
      %2670 = vmatpush1.bf16.xpose.msra.mxu0 %v2136
      %2671 = vmatprep.subr.bf16.mxu0 0
      %2672 = vmatpush1.bf16.xpose.msra.mxu0 %v2139
      %2673 = vmatprep.subr.bf16.mxu0 0
      %2674 = vmatpush1.bf16.xpose.msra.mxu0 %v2142
      %2675 = vmatprep.subr.bf16.mxu0 0
      %2676 = vmatpush1.bf16.xpose.msra.mxu0 %v2145
      %2677 = vmatprep.mubr.bf16.mxu0 0
      %2678 = vmatmul.mubr.bf16.gmra.mrb[0].mxu0 %v2076
      %v2679 = vpop.f32.mrb[0].mxu0
      %v2680 = vadd.f32 %v2597, %v2679
      %v2681 = vpop.f32.mrb[0].mxu0
      %v2682 = vadd.f32 %v2599, %v2681
      %v2683 = vpop.f32.mrb[0].mxu0
      %v2684 = vpop.f32.mrb[0].mxu0
      %2685 = vmatprep.mubr.bf16.mxu0 0
      %2686 = vmatmul.mubr.bf16.gmra.mrb[0].mxu0 %v2079
      %v2687 = vpop.f32.mrb[0].mxu0
      %v2688 = vpop.f32.mrb[0].mxu0
      %v2689 = vpop.f32.mrb[0].mxu0
      %v2690 = vpop.f32.mrb[0].mxu0
      %2691 = vmatprep.mubr.bf16.mxu0 0
      %2692 = vmatmul.mubr.bf16.gmra.mrb[0].mxu0 %v2082
      %v2693 = vpop.f32.mrb[0].mxu0
      %v2694 = vpop.f32.mrb[0].mxu0
      %v2695 = vpop.f32.mrb[0].mxu0
      %v2696 = vpop.f32.mrb[0].mxu0
      %2697 = vmatprep.mubr.bf16.mxu0 0
      %2698 = vmatmul.mubr.bf16.gmra.mrb[0].mxu0 %v2085
      %v2699 = vpop.f32.mrb[0].mxu0
      %v2700 = vpop.f32.mrb[0].mxu0
      %v2701 = vpop.f32.mrb[0].mxu0
      %v2702 = vpop.f32.mrb[0].mxu0
      %2703 = vmatprep.mubr.bf16.mxu0 0
      %2704 = vmatmul.mubr.bf16.gmra.mrb[0].mxu0 %v2088
      %v2705 = vpop.f32.mrb[0].mxu0
      %v2706 = vpop.f32.mrb[0].mxu0
      %v2707 = vpop.f32.mrb[0].mxu0
      %v2708 = vpop.f32.mrb[0].mxu0
      %2709 = vmatprep.mubr.bf16.mxu0 0
      %2710 = vmatmul.mubr.bf16.gmra.mrb[0].mxu0 %v2091
      %v2711 = vpop.f32.mrb[0].mxu0
      %v2712 = vpop.f32.mrb[0].mxu0
      %v2713 = vpop.f32.mrb[0].mxu0
      %v2714 = vpop.f32.mrb[0].mxu0
      %2715 = vmatprep.mubr.bf16.mxu0 0
      %2716 = vmatmul.mubr.bf16.gmra.mrb[0].mxu0 %v2094
      %v2717 = vpop.f32.mrb[0].mxu0
      %v2718 = vpop.f32.mrb[0].mxu0
      %v2719 = vpop.f32.mrb[0].mxu0
      %v2720 = vpop.f32.mrb[0].mxu0
      %2721 = vmatprep.mubr.bf16.mxu0 0
      %2722 = vmatmul.mubr.bf16.gmra.mrb[0].mxu0 %v2097
      %v2723 = vpop.f32.mrb[0].mxu0
      %v2724 = vpop.f32.mrb[0].mxu0
      %v2725 = vpop.f32.mrb[0].mxu0
      %v2726 = vpop.f32.mrb[0].mxu0
      %2727 = vdwg.mxu0
      %v2728 = vld [vmem:[%s2] sm:$0xff]
      %2730 = vset.pattern.permute.xlu0 0
      %2731 = vperm.xlu0 %2730, %v2728
      %v2732 = vpop.permute.xlu0 %2731
      %v2734 = vadd.f32 %v2680, %v2732
      %v2735 = vadd.f32 %v2682, %v2732
      %v2736 = vtanh.pop %v2734
      %v2737 = vtanh.pop %v2735
      %2738 = vst [vmem:[%s175] sm:$0xff] %v2736
      %2739 = vst [vmem:[%s175 + $0x8] sm:$0xff] %v2737
      %s2740 = smul.u32 2, %s14
      %p2741 = scmp.lt.s32.totalorder %s2740, 3
      %s2742 = scalar_select %p2741, %s2740, 3
      %s2743 = smul.addr %s2742, 8
      %s2744 = scalar_lea.vmem %s3, %s2743
      // Predicated region
      $region33: #{generator_forward.55} parent=31 // pred_check
        %p2745 = pneg %p100
      $region34: #{generator_forward.55} parent=31 // pred_check_branch
        %2747 = sbr.rel (%p2745) target = $region36
      $region35: #{generator_forward.55} parent=31 // pred_region
        %s2748 = smul.u32 2, %s14
      $region36: #{generator_forward.55} parent=31 // pred_fallthru
        _
    $region32: #{generator_forward.55} parent=5 // pred_fallthru
      _
    %p2749 = scmp.le.s32.totalorder 2, %s9
    // Predicated region
    $region37: #{generator_forward.55} parent=5 // pred_check
      %p2750 = pneg %p2749
    $region38: #{generator_forward.55} parent=5 // pred_check_branch
      %2752 = sbr.rel (%p2750) target = $region40
    $region39: #{generator_forward.55} parent=5 // pred_region
      %s2753 = ssub.s32 %s9, 2
      // Predicated region
      $region41: #{generator_forward.55} parent=39 // pred_check
        %p2754 = pneg %p106
      $region42: #{generator_forward.55} parent=39 // pred_check_branch
        %2756 = sbr.rel (%p2754) target = $region44
      $region43: #{generator_forward.55} parent=39 // pred_region
        %s2757 = smul.u32 2, %s15
        %p2758 = scmp.lt.s32.totalorder %s2757, 3
        %s2759 = scalar_select %p2758, %s2757, 3
        %s2760 = smul.addr %s2759, 8
        %s2761 = scalar_lea.vmem %s3, %s2760
      $region44: #{generator_forward.55} parent=39 // pred_fallthru
        _
    $region40: #{generator_forward.55} parent=5 // pred_fallthru
      _
  $region6: #{generator_forward.55} parent=0 // loop_footer
    %s13 = sadd.s32 1, %s9
  $region7: #{generator_forward.55} parent=0 // loop_footer_branch
    %8 = sbr.rel target = $region3
  $region8: #{generator_forward.55} parent=0 // loop_exit
    _

</llo_original>
